<compile_context>
chip_gen: v7x
topology: tpu7x:2x2x1
jax: 0.10.0
libtpu: 0.0.40
codegen_flags: <defaults>
</compile_context>

<pallas_src>
import numpy as np
import jax
import jax.numpy as jnp
from jax import lax
from jax.experimental import pallas as pl
from jax.experimental.pallas import tpu as pltpu


def _sign(x):
    """torch.sign semantics (sign(0) == 0) via compare + select (VPU only)."""
    return jnp.where(x > 0, jnp.float32(1.0),
                     jnp.where(x < 0, jnp.float32(-1.0), jnp.float32(0.0)))


def _band_select(ws, wo, pool):
    """Static 0/1 selection tensors used to build the banded conv weights.

    pool=False: (ws, 3, wo)      sel[u, k, w]  = 1 iff u == w + k
    pool=True:  (2, ws, 3, wo)   sel[p, u, k, w] = 1 iff u == 2*w + p + k
                (w is then the *pooled* output column index, p the parity)
    """
    if pool:
        p = np.arange(2)[:, None, None, None]
        u = np.arange(ws)[None, :, None, None]
        k = np.arange(3)[None, None, :, None]
        w = np.arange(wo)[None, None, None, :]
        return (u == 2 * w + p + k).astype(np.float32)
    u = np.arange(ws)[:, None, None]
    k = np.arange(3)[None, :, None]
    w = np.arange(wo)[None, None, :]
    return (u == w + k).astype(np.float32)


def _banded_weight(w_oihw, ws, pool):
    """PyTorch OIHW 3x3 weight -> binarized banded weight for lane-dense conv.

    Activation layout is A[h, u*Cin + ci] (W and C folded into lanes).  Then
      conv[h, w*Cout + co] = sum_kh  A[h+kh, :] @ WB[kh]
    with WB[kh][u*Cin+ci, w*Cout+co] = sign(w)[co, ci, kh, u-w] (0 outside the
    band).  For pooling layers two parity variants (even / odd output column)
    are built so the W-half of MaxPool2d(2,2) is a jnp.maximum of two matmuls.
    """
    cout, cin, _, _ = w_oihw.shape
    wsign = jnp.sign(w_oihw.astype(jnp.float32))       # binarize once, on host
    wo = ws - 2
    if pool:
        sel = _band_select(ws, wo // 2, True)                      # (2,ws,3,wo/2)
        wb = jnp.einsum('pukw,oihk->hpuiwo', sel, wsign)
        return wb.reshape(3, 2, ws * cin, (wo // 2) * cout)
    sel = _band_select(ws, wo, False)                              # (ws,3,wo)
    wb = jnp.einsum('ukw,oihk->huiwo', sel, wsign)
    return wb.reshape(3, ws * cin, wo * cout)


def _hsel(ho):
    """(2, ho//2, ho) 0/1 matrices selecting even / odd conv-output rows."""
    hp = ho // 2
    m = np.zeros((2, hp, ho), np.float32)
    idx = np.arange(hp)
    m[0, idx, 2 * idx] = 1.0
    m[1, idx, 2 * idx + 1] = 1.0
    return m


def _make_kernel(H, W):
    Hp0, Wp0 = H // 2, W // 2          # after features0 pool
    Hp1, Wp1 = Hp0 // 2, Wp0 // 2      # after features1 pool
    H2 = Hp1 - 2                       # features2 output rows
    H3 = H2 - 2                        # features3 output rows
    H4 = H3 - 2                        # features4 output rows
    HI = lax.Precision.HIGHEST

    def conv_rows(src_ref, wb_ref, ho, precision):
        """3x3 valid conv as 3 banded matmuls; returns (ho, Wo*Cout)."""
        y = None
        for kh in range(3):
            lhs = src_ref[kh:kh + ho, :]
            d = jnp.dot(lhs, wb_ref[kh], preferred_element_type=jnp.float32,
                        precision=precision)
            y = d if y is None else y + d
        return y

    def conv_pool(src_ref, wb_ref, hsel_ref, ho, precision):
        """Conv + Hardtanh + MaxPool2d(2,2), with Hardtanh absorbed.

        W-pool parity is baked into wb_ref[:, 0] / wb_ref[:, 1]; H-pool is two
        0/1 selection matmuls.  sign(maxpool(clip(y))) == sign(maxpool(y)).
        """
        ye = None
        yo = None
        for kh in range(3):
            lhs = src_ref[kh:kh + ho, :]
            de = jnp.dot(lhs, wb_ref[kh, 0], preferred_element_type=jnp.float32,
                         precision=precision)
            do = jnp.dot(lhs, wb_ref[kh, 1], preferred_element_type=jnp.float32,
                         precision=precision)
            ye = de if ye is None else ye + de
            yo = do if yo is None else yo + do
        ym = jnp.maximum(ye, yo)                                 # W-direction max
        pe = jnp.dot(hsel_ref[0], ym, preferred_element_type=jnp.float32,
                     precision=precision)
        po = jnp.dot(hsel_ref[1], ym, preferred_element_type=jnp.float32,
                     precision=precision)
        return jnp.maximum(pe, po)                               # H-direction max

    def kernel(x_ref, wb0_ref, wb1_ref, wb2_ref, wb3_ref, wb4_ref,
               hs0_ref, hs1_ref, out_ref, s0, s1, s2, s3, s4):
        # p0: ConstantPad2d(1, value=1) around the raw (NOT binarized) input.
        s0[...] = jnp.full(s0.shape, 1.0, jnp.float32)
        s0[1:1 + H, 3:3 + 3 * W] = x_ref[0]

        # features0: BinarizeConv2d(3->4) + Hardtanh + MaxPool2d(2,2).
        p0 = conv_pool(s0, wb0_ref, hs0_ref, H, HI)        # (H/2, (W/2)*4)

        # features1: ConstantPad2d(1, 1) -> BinarizeConv2d(4->8) + Hardtanh
        #            + MaxPool2d(2,2).  4-channel input is binarized (sign).
        s1[...] = jnp.full(s1.shape, 1.0, jnp.float32)
        s1[1:1 + Hp0, 4:4 + 4 * Wp0] = _sign(p0)
        p1 = conv_pool(s1, wb1_ref, hs1_ref, Hp0, None)    # (H/4, (W/4)*8)

        # features2: BinarizeConv2d(8->16) + Hardtanh (sign absorbed).
        s2[...] = _sign(p1)
        y2 = conv_rows(s2, wb2_ref, H2, None)              # (H2, W2*16)

        # features3: BinarizeConv2d(16->32) + Hardtanh (sign absorbed).
        s3[...] = _sign(y2)
        y3 = conv_rows(s3, wb3_ref, H3, None)              # (H3, W3*32)

        # features4: BinarizeConv2d(32->2) + Hardtanh (explicit clip kept).
        s4[...] = _sign(y3)
        y4 = conv_rows(s4, wb4_ref, H4, None)              # (H4, W4*2)
        out_ref[0] = jnp.clip(y4, -1.0, 1.0).astype(out_ref.dtype)

    return kernel


@jax.jit
def mcnet_forward(x_nchw, weights_oihw):
    """x_nchw: (N, 3, H, W); weights_oihw: 5 PyTorch-layout 3x3 conv weights."""
    N, C, H, W = x_nchw.shape
    assert C == 3 and H % 4 == 0 and W % 4 == 0 and H // 4 >= 8 and W // 4 >= 8
    Hp0, Wp0 = H // 2, W // 2
    Hp1, Wp1 = Hp0 // 2, Wp0 // 2
    H2, W2 = Hp1 - 2, Wp1 - 2
    H3, W3 = H2 - 2, W2 - 2
    H4, W4 = H3 - 2, W3 - 2

    # NCHW -> lane-dense (N, H, W*C) slabs.
    x = jnp.transpose(x_nchw, (0, 2, 3, 1)).astype(jnp.float32).reshape(N, H, W * 3)

    wt0, wt1, wt2, wt3, wt4 = weights_oihw
    wb0 = _banded_weight(wt0, W + 2, True)      # (3, 2, (W+2)*3,   (W/2)*4)
    wb1 = _banded_weight(wt1, Wp0 + 2, True)    # (3, 2, (Wp0+2)*4, (W/4)*8)
    wb2 = _banded_weight(wt2, Wp1, False)       # (3, Wp1*8,  W2*16)
    wb3 = _banded_weight(wt3, W2, False)        # (3, W2*16,  W3*32)
    wb4 = _banded_weight(wt4, W3, False)        # (3, W3*32,  W4*2)
    hsel0 = jnp.asarray(_hsel(H))               # (2, H/2,  H)
    hsel1 = jnp.asarray(_hsel(Hp0))             # (2, H/4,  H/2)

    kernel = _make_kernel(H, W)

    flops = 2 * N * (H * W * 9 * 3 * 4
                     + Hp0 * Wp0 * 9 * 4 * 8
                     + H2 * W2 * 9 * 8 * 16
                     + H3 * W3 * 9 * 16 * 32
                     + H4 * W4 * 9 * 32 * 2)
    bytes_accessed = 4 * (x.size + wb0.size + wb1.size + wb2.size + wb3.size
                          + wb4.size + hsel0.size + hsel1.size + N * H4 * W4 * 2)

    out2d = pl.pallas_call(
        kernel,
        out_shape=jax.ShapeDtypeStruct((N, H4, W4 * 2), jnp.float32),
        grid=(N,),
        in_specs=[
            pl.BlockSpec((1, H, W * 3), lambda i: (i, 0, 0)),
            pl.BlockSpec(wb0.shape, lambda i: (0, 0, 0, 0)),
            pl.BlockSpec(wb1.shape, lambda i: (0, 0, 0, 0)),
            pl.BlockSpec(wb2.shape, lambda i: (0, 0, 0)),
            pl.BlockSpec(wb3.shape, lambda i: (0, 0, 0)),
            pl.BlockSpec(wb4.shape, lambda i: (0, 0, 0)),
            pl.BlockSpec(hsel0.shape, lambda i: (0, 0, 0)),
            pl.BlockSpec(hsel1.shape, lambda i: (0, 0, 0)),
        ],
        out_specs=pl.BlockSpec((1, H4, W4 * 2), lambda i: (i, 0, 0)),
        scratch_shapes=[
            pltpu.VMEM((H + 2, (W + 2) * 3), jnp.float32),      # s0: padded input
            pltpu.VMEM((Hp0 + 2, (Wp0 + 2) * 4), jnp.float32),  # s1: pad + binarized
            pltpu.VMEM((Hp1, Wp1 * 8), jnp.float32),            # s2
            pltpu.VMEM((H2, W2 * 16), jnp.float32),             # s3
            pltpu.VMEM((H3, W3 * 32), jnp.float32),             # s4
        ],
        compiler_params=pltpu.CompilerParams(
            dimension_semantics=("parallel",)),
        cost_estimate=pl.CostEstimate(
            flops=flops, transcendentals=0, bytes_accessed=bytes_accessed),
    )(x, wb0, wb1, wb2, wb3, wb4, hsel0, hsel1)

    # Kernel output columns are (w, c) ordered; PyTorch's x.view(N, -1)
    # flattens NCHW (channel-major), so reorder to (c, h, w) before flattening.
    out_nhwc = out2d.reshape(N, H4, W4, 2)
    return jnp.transpose(out_nhwc, (0, 3, 1, 2)).reshape(N, -1)


if __name__ == "__main__":
    key = jax.random.PRNGKey(0)
    k_in, k0, k1, k2, k3, k4 = jax.random.split(key, 6)

    # CIFAR-like input, NCHW like the PyTorch module: (N=2, C=3, H=32, W=32).
    x = jax.random.normal(k_in, (2, 3, 32, 32), dtype=jnp.float32)

    # Deterministic synthetic conv weights in PyTorch OIHW layout (only the
    # sign matters after binarization).
    weights = [
        0.1 * jax.random.normal(k0, (4, 3, 3, 3), dtype=jnp.float32),
        0.1 * jax.random.normal(k1, (8, 4, 3, 3), dtype=jnp.float32),
        0.1 * jax.random.normal(k2, (16, 8, 3, 3), dtype=jnp.float32),
        0.1 * jax.random.normal(k3, (32, 16, 3, 3), dtype=jnp.float32),
        0.1 * jax.random.normal(k4, (2, 32, 3, 3), dtype=jnp.float32),
    ]

    out = jax.block_until_ready(mcnet_forward(x, weights))

    # 32 -> pad 34 -> conv 32 -> pool 16 -> pad 18 -> conv 16 -> pool 8
    #    -> conv 6 -> conv 4 -> conv 2 ; flatten: 2 * 2 * 2 = 8 features.
    assert out.shape == (2, 8), out.shape
    assert bool(jnp.all(jnp.isfinite(out)))
    assert bool(jnp.all(jnp.abs(out) <= 1.0 + 1e-6))   # Hardtanh range
    print("KERNEL_OK")
</pallas_src>

<mosaic_0001>
module attributes {stable_mosaic.version = 11 : i64} {
  func.func @kernel(%arg0: i32, %arg1: memref<1x32x96xf32, #tpu.memory_space<vmem>>, %arg2: memref<3x2x102x64xf32, #tpu.memory_space<vmem>>, %arg3: memref<3x2x72x64xf32, #tpu.memory_space<vmem>>, %arg4: memref<3x64x96xf32, #tpu.memory_space<vmem>>, %arg5: memref<3x96x128xf32, #tpu.memory_space<vmem>>, %arg6: memref<3x128x4xf32, #tpu.memory_space<vmem>>, %arg7: memref<2x16x32xf32, #tpu.memory_space<vmem>>, %arg8: memref<2x8x16xf32, #tpu.memory_space<vmem>>, %arg9: memref<1x2x4xf32, #tpu.memory_space<vmem>>, %arg10: memref<34x102xf32, #tpu.memory_space<vmem>>, %arg11: memref<18x72xf32, #tpu.memory_space<vmem>>, %arg12: memref<8x64xf32, #tpu.memory_space<vmem>>, %arg13: memref<6x96xf32, #tpu.memory_space<vmem>>, %arg14: memref<4x128xf32, #tpu.memory_space<vmem>>) attributes {dimension_semantics = [#tpu.dimension_semantics<parallel>], iteration_bounds = array<i64: 2>, scalar_prefetch = 0 : i64, scratch_operands = 5 : i64, tpu.core_type = #tpu.core_type<tc>, window_params = [{transform_indices = @transform_0, window_bounds = array<i64: 1, 32, 96>}, {pipeline_mode = #tpu.pipeline_mode<synchronous>, transform_indices = @transform_1, window_bounds = array<i64: 3, 2, 102, 64>}, {pipeline_mode = #tpu.pipeline_mode<synchronous>, transform_indices = @transform_2, window_bounds = array<i64: 3, 2, 72, 64>}, {pipeline_mode = #tpu.pipeline_mode<synchronous>, transform_indices = @transform_3, window_bounds = array<i64: 3, 64, 96>}, {pipeline_mode = #tpu.pipeline_mode<synchronous>, transform_indices = @transform_4, window_bounds = array<i64: 3, 96, 128>}, {pipeline_mode = #tpu.pipeline_mode<synchronous>, transform_indices = @transform_5, window_bounds = array<i64: 3, 128, 4>}, {pipeline_mode = #tpu.pipeline_mode<synchronous>, transform_indices = @transform_6, window_bounds = array<i64: 2, 16, 32>}, {pipeline_mode = #tpu.pipeline_mode<synchronous>, transform_indices = @transform_7, window_bounds = array<i64: 2, 8, 16>}, {transform_indices = @transform_8, window_bounds = array<i64: 1, 2, 4>}]} {
    %cst = arith.constant 1.000000e+00 : f32
    %0 = vector.broadcast %cst : f32 to vector<34x102xf32>
    %c0 = arith.constant 0 : index
    %c0_0 = arith.constant 0 : index
    %1 = vector.load %arg10[%c0, %c0_0] : memref<34x102xf32, #tpu.memory_space<vmem>>, vector<34x102xf32>
    tpu.vector_store %arg10[%c0, %c0_0], %0 {strides = array<i32>} : memref<34x102xf32, #tpu.memory_space<vmem>>, vector<34x102xf32>,
    %c0_1 = arith.constant 0 : index
    %c0_2 = arith.constant 0 : index
    %c0_3 = arith.constant 0 : index
    %2 = vector.load %arg1[%c0_1, %c0_2, %c0_3] : memref<1x32x96xf32, #tpu.memory_space<vmem>>, vector<1x32x96xf32>
    %3 = vector.shape_cast %2 : vector<1x32x96xf32> to vector<32x96xf32>
    %c1 = arith.constant 1 : index
    %c3 = arith.constant 3 : index
    %4 = vector.load %arg10[%c1, %c3] : memref<34x102xf32, #tpu.memory_space<vmem>>, vector<32x96xf32>
    tpu.vector_store %arg10[%c1, %c3], %3 {strides = array<i32>} : memref<34x102xf32, #tpu.memory_space<vmem>>, vector<32x96xf32>,
    %c0_4 = arith.constant 0 : index
    %c0_5 = arith.constant 0 : index
    %5 = vector.load %arg10[%c0_4, %c0_5] : memref<34x102xf32, #tpu.memory_space<vmem>>, vector<32x102xf32>
    %c0_6 = arith.constant 0 : index
    %c0_7 = arith.constant 0 : index
    %c0_8 = arith.constant 0 : index
    %c0_9 = arith.constant 0 : index
    %6 = vector.load %arg2[%c0_6, %c0_7, %c0_8, %c0_9] : memref<3x2x102x64xf32, #tpu.memory_space<vmem>>, vector<1x1x102x64xf32>
    %7 = vector.shape_cast %6 : vector<1x1x102x64xf32> to vector<102x64xf32>
    %cst_10 = arith.constant dense<0.000000e+00> : vector<32x64xf32>
    %8 = tpu.matmul %5, %7, %cst_10 {dimension_numbers = #tpu.dot_dimension_numbers<[1], [0], [0], [1], [0, 0, 1, 1], [], []>, precision = #tpu.contract_precision<fp32>} : vector<32x102xf32>, vector<102x64xf32>, vector<32x64xf32> -> vector<32x64xf32>
    %c0_11 = arith.constant 0 : index
    %c1_12 = arith.constant 1 : index
    %c0_13 = arith.constant 0 : index
    %c0_14 = arith.constant 0 : index
    %9 = vector.load %arg2[%c0_11, %c1_12, %c0_13, %c0_14] : memref<3x2x102x64xf32, #tpu.memory_space<vmem>>, vector<1x1x102x64xf32>
    %10 = vector.shape_cast %9 : vector<1x1x102x64xf32> to vector<102x64xf32>
    %cst_15 = arith.constant dense<0.000000e+00> : vector<32x64xf32>
    %11 = tpu.matmul %5, %10, %cst_15 {dimension_numbers = #tpu.dot_dimension_numbers<[1], [0], [0], [1], [0, 0, 1, 1], [], []>, precision = #tpu.contract_precision<fp32>} : vector<32x102xf32>, vector<102x64xf32>, vector<32x64xf32> -> vector<32x64xf32>
    %c1_16 = arith.constant 1 : index
    %c0_17 = arith.constant 0 : index
    %12 = vector.load %arg10[%c1_16, %c0_17] : memref<34x102xf32, #tpu.memory_space<vmem>>, vector<32x102xf32>
    %c1_18 = arith.constant 1 : index
    %c0_19 = arith.constant 0 : index
    %c0_20 = arith.constant 0 : index
    %c0_21 = arith.constant 0 : index
    %13 = vector.load %arg2[%c1_18, %c0_19, %c0_20, %c0_21] : memref<3x2x102x64xf32, #tpu.memory_space<vmem>>, vector<1x1x102x64xf32>
    %14 = vector.shape_cast %13 : vector<1x1x102x64xf32> to vector<102x64xf32>
    %cst_22 = arith.constant dense<0.000000e+00> : vector<32x64xf32>
    %15 = tpu.matmul %12, %14, %cst_22 {dimension_numbers = #tpu.dot_dimension_numbers<[1], [0], [0], [1], [0, 0, 1, 1], [], []>, precision = #tpu.contract_precision<fp32>} : vector<32x102xf32>, vector<102x64xf32>, vector<32x64xf32> -> vector<32x64xf32>
    %c1_23 = arith.constant 1 : index
    %c1_24 = arith.constant 1 : index
    %c0_25 = arith.constant 0 : index
    %c0_26 = arith.constant 0 : index
    %16 = vector.load %arg2[%c1_23, %c1_24, %c0_25, %c0_26] : memref<3x2x102x64xf32, #tpu.memory_space<vmem>>, vector<1x1x102x64xf32>
    %17 = vector.shape_cast %16 : vector<1x1x102x64xf32> to vector<102x64xf32>
    %cst_27 = arith.constant dense<0.000000e+00> : vector<32x64xf32>
    %18 = tpu.matmul %12, %17, %cst_27 {dimension_numbers = #tpu.dot_dimension_numbers<[1], [0], [0], [1], [0, 0, 1, 1], [], []>, precision = #tpu.contract_precision<fp32>} : vector<32x102xf32>, vector<102x64xf32>, vector<32x64xf32> -> vector<32x64xf32>
    %19 = arith.addf %8, %15 : vector<32x64xf32>
    %20 = arith.addf %11, %18 : vector<32x64xf32>
    %c2 = arith.constant 2 : index
    %c0_28 = arith.constant 0 : index
    %21 = vector.load %arg10[%c2, %c0_28] : memref<34x102xf32, #tpu.memory_space<vmem>>, vector<32x102xf32>
    %c2_29 = arith.constant 2 : index
    %c0_30 = arith.constant 0 : index
    %c0_31 = arith.constant 0 : index
    %c0_32 = arith.constant 0 : index
    %22 = vector.load %arg2[%c2_29, %c0_30, %c0_31, %c0_32] : memref<3x2x102x64xf32, #tpu.memory_space<vmem>>, vector<1x1x102x64xf32>
    %23 = vector.shape_cast %22 : vector<1x1x102x64xf32> to vector<102x64xf32>
    %cst_33 = arith.constant dense<0.000000e+00> : vector<32x64xf32>
    %24 = tpu.matmul %21, %23, %cst_33 {dimension_numbers = #tpu.dot_dimension_numbers<[1], [0], [0], [1], [0, 0, 1, 1], [], []>, precision = #tpu.contract_precision<fp32>} : vector<32x102xf32>, vector<102x64xf32>, vector<32x64xf32> -> vector<32x64xf32>
    %c2_34 = arith.constant 2 : index
    %c1_35 = arith.constant 1 : index
    %c0_36 = arith.constant 0 : index
    %c0_37 = arith.constant 0 : index
    %25 = vector.load %arg2[%c2_34, %c1_35, %c0_36, %c0_37] : memref<3x2x102x64xf32, #tpu.memory_space<vmem>>, vector<1x1x102x64xf32>
    %26 = vector.shape_cast %25 : vector<1x1x102x64xf32> to vector<102x64xf32>
    %cst_38 = arith.constant dense<0.000000e+00> : vector<32x64xf32>
    %27 = tpu.matmul %21, %26, %cst_38 {dimension_numbers = #tpu.dot_dimension_numbers<[1], [0], [0], [1], [0, 0, 1, 1], [], []>, precision = #tpu.contract_precision<fp32>} : vector<32x102xf32>, vector<102x64xf32>, vector<32x64xf32> -> vector<32x64xf32>
    %28 = arith.addf %19, %24 : vector<32x64xf32>
    %29 = arith.addf %20, %27 : vector<32x64xf32>
    %30 = arith.maximumf %28, %29 : vector<32x64xf32>
    %c0_39 = arith.constant 0 : index
    %c0_40 = arith.constant 0 : index
    %c0_41 = arith.constant 0 : index
    %31 = vector.load %arg7[%c0_39, %c0_40, %c0_41] : memref<2x16x32xf32, #tpu.memory_space<vmem>>, vector<1x16x32xf32>
    %32 = vector.shape_cast %31 : vector<1x16x32xf32> to vector<16x32xf32>
    %cst_42 = arith.constant dense<0.000000e+00> : vector<16x64xf32>
    %33 = tpu.matmul %32, %30, %cst_42 {dimension_numbers = #tpu.dot_dimension_numbers<[1], [0], [0], [1], [0, 0, 1, 1], [], []>, precision = #tpu.contract_precision<fp32>} : vector<16x32xf32>, vector<32x64xf32>, vector<16x64xf32> -> vector<16x64xf32>
    %c1_43 = arith.constant 1 : index
    %c0_44 = arith.constant 0 : index
    %c0_45 = arith.constant 0 : index
    %34 = vector.load %arg7[%c1_43, %c0_44, %c0_45] : memref<2x16x32xf32, #tpu.memory_space<vmem>>, vector<1x16x32xf32>
    %35 = vector.shape_cast %34 : vector<1x16x32xf32> to vector<16x32xf32>
    %cst_46 = arith.constant dense<0.000000e+00> : vector<16x64xf32>
    %36 = tpu.matmul %35, %30, %cst_46 {dimension_numbers = #tpu.dot_dimension_numbers<[1], [0], [0], [1], [0, 0, 1, 1], [], []>, precision = #tpu.contract_precision<fp32>} : vector<16x32xf32>, vector<32x64xf32>, vector<16x64xf32> -> vector<16x64xf32>
    %37 = arith.maximumf %33, %36 : vector<16x64xf32>
    %cst_47 = arith.constant 1.000000e+00 : f32
    %38 = vector.broadcast %cst_47 : f32 to vector<18x72xf32>
    %c0_48 = arith.constant 0 : index
    %c0_49 = arith.constant 0 : index
    %39 = vector.load %arg11[%c0_48, %c0_49] : memref<18x72xf32, #tpu.memory_space<vmem>>, vector<18x72xf32>
    tpu.vector_store %arg11[%c0_48, %c0_49], %38 {strides = array<i32>} : memref<18x72xf32, #tpu.memory_space<vmem>>, vector<18x72xf32>,
    %cst_50 = arith.constant 0.000000e+00 : f32
    %40 = vector.broadcast %cst_50 : f32 to vector<16x64xf32>
    %41 = arith.cmpf ogt, %37, %40 : vector<16x64xf32>
    %cst_51 = arith.constant 0.000000e+00 : f32
    %42 = vector.broadcast %cst_51 : f32 to vector<16x64xf32>
    %43 = arith.cmpf olt, %37, %42 : vector<16x64xf32>
    %cst_52 = arith.constant -1.000000e+00 : f32
    %cst_53 = arith.constant 0.000000e+00 : f32
    %44 = vector.broadcast %cst_52 : f32 to vector<16x64xf32>
    %45 = vector.broadcast %cst_53 : f32 to vector<16x64xf32>
    %46 = arith.select %43, %44, %45 : vector<16x64xi1>, vector<16x64xf32>
    %cst_54 = arith.constant 1.000000e+00 : f32
    %47 = vector.broadcast %cst_54 : f32 to vector<16x64xf32>
    %48 = arith.select %41, %47, %46 : vector<16x64xi1>, vector<16x64xf32>
    %c1_55 = arith.constant 1 : index
    %c4 = arith.constant 4 : index
    %49 = vector.load %arg11[%c1_55, %c4] : memref<18x72xf32, #tpu.memory_space<vmem>>, vector<16x64xf32>
    tpu.vector_store %arg11[%c1_55, %c4], %48 {strides = array<i32>} : memref<18x72xf32, #tpu.memory_space<vmem>>, vector<16x64xf32>,
    %c0_56 = arith.constant 0 : index
    %c0_57 = arith.constant 0 : index
    %50 = vector.load %arg11[%c0_56, %c0_57] : memref<18x72xf32, #tpu.memory_space<vmem>>, vector<16x72xf32>
    %c0_58 = arith.constant 0 : index
    %c0_59 = arith.constant 0 : index
    %c0_60 = arith.constant 0 : index
    %c0_61 = arith.constant 0 : index
    %51 = vector.load %arg3[%c0_58, %c0_59, %c0_60, %c0_61] : memref<3x2x72x64xf32, #tpu.memory_space<vmem>>, vector<1x1x72x64xf32>
    %52 = vector.shape_cast %51 : vector<1x1x72x64xf32> to vector<72x64xf32>
    %cst_62 = arith.constant dense<0.000000e+00> : vector<16x64xf32>
    %53 = tpu.matmul %50, %52, %cst_62 {dimension_numbers = #tpu.dot_dimension_numbers<[1], [0], [0], [1], [0, 0, 1, 1], [], []>} : vector<16x72xf32>, vector<72x64xf32>, vector<16x64xf32> -> vector<16x64xf32>
    %c0_63 = arith.constant 0 : index
    %c1_64 = arith.constant 1 : index
    %c0_65 = arith.constant 0 : index
    %c0_66 = arith.constant 0 : index
    %54 = vector.load %arg3[%c0_63, %c1_64, %c0_65, %c0_66] : memref<3x2x72x64xf32, #tpu.memory_space<vmem>>, vector<1x1x72x64xf32>
    %55 = vector.shape_cast %54 : vector<1x1x72x64xf32> to vector<72x64xf32>
    %cst_67 = arith.constant dense<0.000000e+00> : vector<16x64xf32>
    %56 = tpu.matmul %50, %55, %cst_67 {dimension_numbers = #tpu.dot_dimension_numbers<[1], [0], [0], [1], [0, 0, 1, 1], [], []>} : vector<16x72xf32>, vector<72x64xf32>, vector<16x64xf32> -> vector<16x64xf32>
    %c1_68 = arith.constant 1 : index
    %c0_69 = arith.constant 0 : index
    %57 = vector.load %arg11[%c1_68, %c0_69] : memref<18x72xf32, #tpu.memory_space<vmem>>, vector<16x72xf32>
    %c1_70 = arith.constant 1 : index
    %c0_71 = arith.constant 0 : index
    %c0_72 = arith.constant 0 : index
    %c0_73 = arith.constant 0 : index
    %58 = vector.load %arg3[%c1_70, %c0_71, %c0_72, %c0_73] : memref<3x2x72x64xf32, #tpu.memory_space<vmem>>, vector<1x1x72x64xf32>
    %59 = vector.shape_cast %58 : vector<1x1x72x64xf32> to vector<72x64xf32>
    %cst_74 = arith.constant dense<0.000000e+00> : vector<16x64xf32>
    %60 = tpu.matmul %57, %59, %cst_74 {dimension_numbers = #tpu.dot_dimension_numbers<[1], [0], [0], [1], [0, 0, 1, 1], [], []>} : vector<16x72xf32>, vector<72x64xf32>, vector<16x64xf32> -> vector<16x64xf32>
    %c1_75 = arith.constant 1 : index
    %c1_76 = arith.constant 1 : index
    %c0_77 = arith.constant 0 : index
    %c0_78 = arith.constant 0 : index
    %61 = vector.load %arg3[%c1_75, %c1_76, %c0_77, %c0_78] : memref<3x2x72x64xf32, #tpu.memory_space<vmem>>, vector<1x1x72x64xf32>
    %62 = vector.shape_cast %61 : vector<1x1x72x64xf32> to vector<72x64xf32>
    %cst_79 = arith.constant dense<0.000000e+00> : vector<16x64xf32>
    %63 = tpu.matmul %57, %62, %cst_79 {dimension_numbers = #tpu.dot_dimension_numbers<[1], [0], [0], [1], [0, 0, 1, 1], [], []>} : vector<16x72xf32>, vector<72x64xf32>, vector<16x64xf32> -> vector<16x64xf32>
    %64 = arith.addf %53, %60 : vector<16x64xf32>
    %65 = arith.addf %56, %63 : vector<16x64xf32>
    %c2_80 = arith.constant 2 : index
    %c0_81 = arith.constant 0 : index
    %66 = vector.load %arg11[%c2_80, %c0_81] : memref<18x72xf32, #tpu.memory_space<vmem>>, vector<16x72xf32>
    %c2_82 = arith.constant 2 : index
    %c0_83 = arith.constant 0 : index
    %c0_84 = arith.constant 0 : index
    %c0_85 = arith.constant 0 : index
    %67 = vector.load %arg3[%c2_82, %c0_83, %c0_84, %c0_85] : memref<3x2x72x64xf32, #tpu.memory_space<vmem>>, vector<1x1x72x64xf32>
    %68 = vector.shape_cast %67 : vector<1x1x72x64xf32> to vector<72x64xf32>
    %cst_86 = arith.constant dense<0.000000e+00> : vector<16x64xf32>
    %69 = tpu.matmul %66, %68, %cst_86 {dimension_numbers = #tpu.dot_dimension_numbers<[1], [0], [0], [1], [0, 0, 1, 1], [], []>} : vector<16x72xf32>, vector<72x64xf32>, vector<16x64xf32> -> vector<16x64xf32>
    %c2_87 = arith.constant 2 : index
    %c1_88 = arith.constant 1 : index
    %c0_89 = arith.constant 0 : index
    %c0_90 = arith.constant 0 : index
    %70 = vector.load %arg3[%c2_87, %c1_88, %c0_89, %c0_90] : memref<3x2x72x64xf32, #tpu.memory_space<vmem>>, vector<1x1x72x64xf32>
    %71 = vector.shape_cast %70 : vector<1x1x72x64xf32> to vector<72x64xf32>
    %cst_91 = arith.constant dense<0.000000e+00> : vector<16x64xf32>
    %72 = tpu.matmul %66, %71, %cst_91 {dimension_numbers = #tpu.dot_dimension_numbers<[1], [0], [0], [1], [0, 0, 1, 1], [], []>} : vector<16x72xf32>, vector<72x64xf32>, vector<16x64xf32> -> vector<16x64xf32>
    %73 = arith.addf %64, %69 : vector<16x64xf32>
    %74 = arith.addf %65, %72 : vector<16x64xf32>
    %75 = arith.maximumf %73, %74 : vector<16x64xf32>
    %c0_92 = arith.constant 0 : index
    %c0_93 = arith.constant 0 : index
    %c0_94 = arith.constant 0 : index
    %76 = vector.load %arg8[%c0_92, %c0_93, %c0_94] : memref<2x8x16xf32, #tpu.memory_space<vmem>>, vector<1x8x16xf32>
    %77 = vector.shape_cast %76 : vector<1x8x16xf32> to vector<8x16xf32>
    %cst_95 = arith.constant dense<0.000000e+00> : vector<8x64xf32>
    %78 = tpu.matmul %77, %75, %cst_95 {dimension_numbers = #tpu.dot_dimension_numbers<[1], [0], [0], [1], [0, 0, 1, 1], [], []>} : vector<8x16xf32>, vector<16x64xf32>, vector<8x64xf32> -> vector<8x64xf32>
    %c1_96 = arith.constant 1 : index
    %c0_97 = arith.constant 0 : index
    %c0_98 = arith.constant 0 : index
    %79 = vector.load %arg8[%c1_96, %c0_97, %c0_98] : memref<2x8x16xf32, #tpu.memory_space<vmem>>, vector<1x8x16xf32>
    %80 = vector.shape_cast %79 : vector<1x8x16xf32> to vector<8x16xf32>
    %cst_99 = arith.constant dense<0.000000e+00> : vector<8x64xf32>
    %81 = tpu.matmul %80, %75, %cst_99 {dimension_numbers = #tpu.dot_dimension_numbers<[1], [0], [0], [1], [0, 0, 1, 1], [], []>} : vector<8x16xf32>, vector<16x64xf32>, vector<8x64xf32> -> vector<8x64xf32>
    %82 = arith.maximumf %78, %81 : vector<8x64xf32>
    %cst_100 = arith.constant 0.000000e+00 : f32
    %83 = vector.broadcast %cst_100 : f32 to vector<8x64xf32>
    %84 = arith.cmpf ogt, %82, %83 : vector<8x64xf32>
    %cst_101 = arith.constant 0.000000e+00 : f32
    %85 = vector.broadcast %cst_101 : f32 to vector<8x64xf32>
    %86 = arith.cmpf olt, %82, %85 : vector<8x64xf32>
    %cst_102 = arith.constant -1.000000e+00 : f32
    %cst_103 = arith.constant 0.000000e+00 : f32
    %87 = vector.broadcast %cst_102 : f32 to vector<8x64xf32>
    %88 = vector.broadcast %cst_103 : f32 to vector<8x64xf32>
    %89 = arith.select %86, %87, %88 : vector<8x64xi1>, vector<8x64xf32>
    %cst_104 = arith.constant 1.000000e+00 : f32
    %90 = vector.broadcast %cst_104 : f32 to vector<8x64xf32>
    %91 = arith.select %84, %90, %89 : vector<8x64xi1>, vector<8x64xf32>
    %c0_105 = arith.constant 0 : index
    %c0_106 = arith.constant 0 : index
    %92 = vector.load %arg12[%c0_105, %c0_106] : memref<8x64xf32, #tpu.memory_space<vmem>>, vector<8x64xf32>
    tpu.vector_store %arg12[%c0_105, %c0_106], %91 {strides = array<i32>} : memref<8x64xf32, #tpu.memory_space<vmem>>, vector<8x64xf32>,
    %c0_107 = arith.constant 0 : index
    %c0_108 = arith.constant 0 : index
    %93 = vector.load %arg12[%c0_107, %c0_108] : memref<8x64xf32, #tpu.memory_space<vmem>>, vector<6x64xf32>
    %c0_109 = arith.constant 0 : index
    %c0_110 = arith.constant 0 : index
    %c0_111 = arith.constant 0 : index
    %94 = vector.load %arg4[%c0_109, %c0_110, %c0_111] : memref<3x64x96xf32, #tpu.memory_space<vmem>>, vector<1x64x96xf32>
    %95 = vector.shape_cast %94 : vector<1x64x96xf32> to vector<64x96xf32>
    %cst_112 = arith.constant dense<0.000000e+00> : vector<6x96xf32>
    %96 = tpu.matmul %93, %95, %cst_112 {dimension_numbers = #tpu.dot_dimension_numbers<[1], [0], [0], [1], [0, 0, 1, 1], [], []>} : vector<6x64xf32>, vector<64x96xf32>, vector<6x96xf32> -> vector<6x96xf32>
    %c1_113 = arith.constant 1 : index
    %c0_114 = arith.constant 0 : index
    %97 = vector.load %arg12[%c1_113, %c0_114] : memref<8x64xf32, #tpu.memory_space<vmem>>, vector<6x64xf32>
    %c1_115 = arith.constant 1 : index
    %c0_116 = arith.constant 0 : index
    %c0_117 = arith.constant 0 : index
    %98 = vector.load %arg4[%c1_115, %c0_116, %c0_117] : memref<3x64x96xf32, #tpu.memory_space<vmem>>, vector<1x64x96xf32>
    %99 = vector.shape_cast %98 : vector<1x64x96xf32> to vector<64x96xf32>
    %cst_118 = arith.constant dense<0.000000e+00> : vector<6x96xf32>
    %100 = tpu.matmul %97, %99, %cst_118 {dimension_numbers = #tpu.dot_dimension_numbers<[1], [0], [0], [1], [0, 0, 1, 1], [], []>} : vector<6x64xf32>, vector<64x96xf32>, vector<6x96xf32> -> vector<6x96xf32>
    %101 = arith.addf %96, %100 : vector<6x96xf32>
    %c2_119 = arith.constant 2 : index
    %c0_120 = arith.constant 0 : index
    %102 = vector.load %arg12[%c2_119, %c0_120] : memref<8x64xf32, #tpu.memory_space<vmem>>, vector<6x64xf32>
    %c2_121 = arith.constant 2 : index
    %c0_122 = arith.constant 0 : index
    %c0_123 = arith.constant 0 : index
    %103 = vector.load %arg4[%c2_121, %c0_122, %c0_123] : memref<3x64x96xf32, #tpu.memory_space<vmem>>, vector<1x64x96xf32>
    %104 = vector.shape_cast %103 : vector<1x64x96xf32> to vector<64x96xf32>
    %cst_124 = arith.constant dense<0.000000e+00> : vector<6x96xf32>
    %105 = tpu.matmul %102, %104, %cst_124 {dimension_numbers = #tpu.dot_dimension_numbers<[1], [0], [0], [1], [0, 0, 1, 1], [], []>} : vector<6x64xf32>, vector<64x96xf32>, vector<6x96xf32> -> vector<6x96xf32>
    %106 = arith.addf %101, %105 : vector<6x96xf32>
    %cst_125 = arith.constant 0.000000e+00 : f32
    %107 = vector.broadcast %cst_125 : f32 to vector<6x96xf32>
    %108 = arith.cmpf ogt, %106, %107 : vector<6x96xf32>
    %cst_126 = arith.constant 0.000000e+00 : f32
    %109 = vector.broadcast %cst_126 : f32 to vector<6x96xf32>
    %110 = arith.cmpf olt, %106, %109 : vector<6x96xf32>
    %cst_127 = arith.constant -1.000000e+00 : f32
    %cst_128 = arith.constant 0.000000e+00 : f32
    %111 = vector.broadcast %cst_127 : f32 to vector<6x96xf32>
    %112 = vector.broadcast %cst_128 : f32 to vector<6x96xf32>
    %113 = arith.select %110, %111, %112 : vector<6x96xi1>, vector<6x96xf32>
    %cst_129 = arith.constant 1.000000e+00 : f32
    %114 = vector.broadcast %cst_129 : f32 to vector<6x96xf32>
    %115 = arith.select %108, %114, %113 : vector<6x96xi1>, vector<6x96xf32>
    %c0_130 = arith.constant 0 : index
    %c0_131 = arith.constant 0 : index
    %116 = vector.load %arg13[%c0_130, %c0_131] : memref<6x96xf32, #tpu.memory_space<vmem>>, vector<6x96xf32>
    tpu.vector_store %arg13[%c0_130, %c0_131], %115 {strides = array<i32>} : memref<6x96xf32, #tpu.memory_space<vmem>>, vector<6x96xf32>,
    %c0_132 = arith.constant 0 : index
    %c0_133 = arith.constant 0 : index
    %117 = vector.load %arg13[%c0_132, %c0_133] : memref<6x96xf32, #tpu.memory_space<vmem>>, vector<4x96xf32>
    %c0_134 = arith.constant 0 : index
    %c0_135 = arith.constant 0 : index
    %c0_136 = arith.constant 0 : index
    %118 = vector.load %arg5[%c0_134, %c0_135, %c0_136] : memref<3x96x128xf32, #tpu.memory_space<vmem>>, vector<1x96x128xf32>
    %119 = vector.shape_cast %118 : vector<1x96x128xf32> to vector<96x128xf32>
    %cst_137 = arith.constant dense<0.000000e+00> : vector<4x128xf32>
    %120 = tpu.matmul %117, %119, %cst_137 {dimension_numbers = #tpu.dot_dimension_numbers<[1], [0], [0], [1], [0, 0, 1, 1], [], []>} : vector<4x96xf32>, vector<96x128xf32>, vector<4x128xf32> -> vector<4x128xf32>
    %c1_138 = arith.constant 1 : index
    %c0_139 = arith.constant 0 : index
    %121 = vector.load %arg13[%c1_138, %c0_139] : memref<6x96xf32, #tpu.memory_space<vmem>>, vector<4x96xf32>
    %c1_140 = arith.constant 1 : index
    %c0_141 = arith.constant 0 : index
    %c0_142 = arith.constant 0 : index
    %122 = vector.load %arg5[%c1_140, %c0_141, %c0_142] : memref<3x96x128xf32, #tpu.memory_space<vmem>>, vector<1x96x128xf32>
    %123 = vector.shape_cast %122 : vector<1x96x128xf32> to vector<96x128xf32>
    %cst_143 = arith.constant dense<0.000000e+00> : vector<4x128xf32>
    %124 = tpu.matmul %121, %123, %cst_143 {dimension_numbers = #tpu.dot_dimension_numbers<[1], [0], [0], [1], [0, 0, 1, 1], [], []>} : vector<4x96xf32>, vector<96x128xf32>, vector<4x128xf32> -> vector<4x128xf32>
    %125 = arith.addf %120, %124 : vector<4x128xf32>
    %c2_144 = arith.constant 2 : index
    %c0_145 = arith.constant 0 : index
    %126 = vector.load %arg13[%c2_144, %c0_145] : memref<6x96xf32, #tpu.memory_space<vmem>>, vector<4x96xf32>
    %c2_146 = arith.constant 2 : index
    %c0_147 = arith.constant 0 : index
    %c0_148 = arith.constant 0 : index
    %127 = vector.load %arg5[%c2_146, %c0_147, %c0_148] : memref<3x96x128xf32, #tpu.memory_space<vmem>>, vector<1x96x128xf32>
    %128 = vector.shape_cast %127 : vector<1x96x128xf32> to vector<96x128xf32>
    %cst_149 = arith.constant dense<0.000000e+00> : vector<4x128xf32>
    %129 = tpu.matmul %126, %128, %cst_149 {dimension_numbers = #tpu.dot_dimension_numbers<[1], [0], [0], [1], [0, 0, 1, 1], [], []>} : vector<4x96xf32>, vector<96x128xf32>, vector<4x128xf32> -> vector<4x128xf32>
    %130 = arith.addf %125, %129 : vector<4x128xf32>
    %cst_150 = arith.constant 0.000000e+00 : f32
    %131 = vector.broadcast %cst_150 : f32 to vector<4x128xf32>
    %132 = arith.cmpf ogt, %130, %131 : vector<4x128xf32>
    %cst_151 = arith.constant 0.000000e+00 : f32
    %133 = vector.broadcast %cst_151 : f32 to vector<4x128xf32>
    %134 = arith.cmpf olt, %130, %133 : vector<4x128xf32>
    %cst_152 = arith.constant -1.000000e+00 : f32
    %cst_153 = arith.constant 0.000000e+00 : f32
    %135 = vector.broadcast %cst_152 : f32 to vector<4x128xf32>
    %136 = vector.broadcast %cst_153 : f32 to vector<4x128xf32>
    %137 = arith.select %134, %135, %136 : vector<4x128xi1>, vector<4x128xf32>
    %cst_154 = arith.constant 1.000000e+00 : f32
    %138 = vector.broadcast %cst_154 : f32 to vector<4x128xf32>
    %139 = arith.select %132, %138, %137 : vector<4x128xi1>, vector<4x128xf32>
    %c0_155 = arith.constant 0 : index
    %c0_156 = arith.constant 0 : index
    %140 = vector.load %arg14[%c0_155, %c0_156] : memref<4x128xf32, #tpu.memory_space<vmem>>, vector<4x128xf32>
    tpu.vector_store %arg14[%c0_155, %c0_156], %139 {strides = array<i32>} : memref<4x128xf32, #tpu.memory_space<vmem>>, vector<4x128xf32>,
    %c0_157 = arith.constant 0 : index
    %c0_158 = arith.constant 0 : index
    %141 = vector.load %arg14[%c0_157, %c0_158] : memref<4x128xf32, #tpu.memory_space<vmem>>, vector<2x128xf32>
    %c0_159 = arith.constant 0 : index
    %c0_160 = arith.constant 0 : index
    %c0_161 = arith.constant 0 : index
    %142 = vector.load %arg6[%c0_159, %c0_160, %c0_161] : memref<3x128x4xf32, #tpu.memory_space<vmem>>, vector<1x128x4xf32>
    %143 = vector.shape_cast %142 : vector<1x128x4xf32> to vector<128x4xf32>
    %cst_162 = arith.constant dense<0.000000e+00> : vector<2x4xf32>
    %144 = tpu.matmul %141, %143, %cst_162 {dimension_numbers = #tpu.dot_dimension_numbers<[1], [0], [0], [1], [0, 0, 1, 1], [], []>} : vector<2x128xf32>, vector<128x4xf32>, vector<2x4xf32> -> vector<2x4xf32>
    %c1_163 = arith.constant 1 : index
    %c0_164 = arith.constant 0 : index
    %145 = vector.load %arg14[%c1_163, %c0_164] : memref<4x128xf32, #tpu.memory_space<vmem>>, vector<2x128xf32>
    %c1_165 = arith.constant 1 : index
    %c0_166 = arith.constant 0 : index
    %c0_167 = arith.constant 0 : index
    %146 = vector.load %arg6[%c1_165, %c0_166, %c0_167] : memref<3x128x4xf32, #tpu.memory_space<vmem>>, vector<1x128x4xf32>
    %147 = vector.shape_cast %146 : vector<1x128x4xf32> to vector<128x4xf32>
    %cst_168 = arith.constant dense<0.000000e+00> : vector<2x4xf32>
    %148 = tpu.matmul %145, %147, %cst_168 {dimension_numbers = #tpu.dot_dimension_numbers<[1], [0], [0], [1], [0, 0, 1, 1], [], []>} : vector<2x128xf32>, vector<128x4xf32>, vector<2x4xf32> -> vector<2x4xf32>
    %149 = arith.addf %144, %148 : vector<2x4xf32>
    %c2_169 = arith.constant 2 : index
    %c0_170 = arith.constant 0 : index
    %150 = vector.load %arg14[%c2_169, %c0_170] : memref<4x128xf32, #tpu.memory_space<vmem>>, vector<2x128xf32>
    %c2_171 = arith.constant 2 : index
    %c0_172 = arith.constant 0 : index
    %c0_173 = arith.constant 0 : index
    %151 = vector.load %arg6[%c2_171, %c0_172, %c0_173] : memref<3x128x4xf32, #tpu.memory_space<vmem>>, vector<1x128x4xf32>
    %152 = vector.shape_cast %151 : vector<1x128x4xf32> to vector<128x4xf32>
    %cst_174 = arith.constant dense<0.000000e+00> : vector<2x4xf32>
    %153 = tpu.matmul %150, %152, %cst_174 {dimension_numbers = #tpu.dot_dimension_numbers<[1], [0], [0], [1], [0, 0, 1, 1], [], []>} : vector<2x128xf32>, vector<128x4xf32>, vector<2x4xf32> -> vector<2x4xf32>
    %154 = arith.addf %149, %153 : vector<2x4xf32>
    %cst_175 = arith.constant -1.000000e+00 : f32
    %cst_176 = arith.constant 1.000000e+00 : f32
    %155 = vector.broadcast %cst_175 : f32 to vector<2x4xf32>
    %156 = arith.maximumf %155, %154 : vector<2x4xf32>
    %157 = vector.broadcast %cst_176 : f32 to vector<2x4xf32>
    %158 = arith.minimumf %157, %156 : vector<2x4xf32>
    %c0_177 = arith.constant 0 : index
    %c0_178 = arith.constant 0 : index
    %c0_179 = arith.constant 0 : index
    %159 = vector.load %arg9[%c0_177, %c0_178, %c0_179] : memref<1x2x4xf32, #tpu.memory_space<vmem>>, vector<1x2x4xf32>
    %160 = vector.shape_cast %159 : vector<1x2x4xf32> to vector<2x4xf32>
    %161 = vector.shape_cast %158 : vector<2x4xf32> to vector<1x2x4xf32>
    tpu.vector_store %arg9[%c0_177, %c0_178, %c0_179], %161 {strides = array<i32>} : memref<1x2x4xf32, #tpu.memory_space<vmem>>, vector<1x2x4xf32>,
    return
  }
  func.func @transform_0(%arg0: i32) -> (i32, i32, i32) {
    %c0_i32 = arith.constant 0 : i32
    %c0_i32_0 = arith.constant 0 : i32
    %c0_i32_1 = arith.constant 0 : i32
    return %arg0, %c0_i32, %c0_i32_0 : i32, i32, i32
  }
  func.func @transform_1(%arg0: i32) -> (i32, i32, i32, i32) {
    %c0_i32 = arith.constant 0 : i32
    %c0_i32_0 = arith.constant 0 : i32
    %c0_i32_1 = arith.constant 0 : i32
    %c0_i32_2 = arith.constant 0 : i32
    %c0_i32_3 = arith.constant 0 : i32
    return %c0_i32, %c0_i32_0, %c0_i32_1, %c0_i32_2 : i32, i32, i32, i32
  }
  func.func @transform_2(%arg0: i32) -> (i32, i32, i32, i32) {
    %c0_i32 = arith.constant 0 : i32
    %c0_i32_0 = arith.constant 0 : i32
    %c0_i32_1 = arith.constant 0 : i32
    %c0_i32_2 = arith.constant 0 : i32
    %c0_i32_3 = arith.constant 0 : i32
    return %c0_i32, %c0_i32_0, %c0_i32_1, %c0_i32_2 : i32, i32, i32, i32
  }
  func.func @transform_3(%arg0: i32) -> (i32, i32, i32) {
    %c0_i32 = arith.constant 0 : i32
    %c0_i32_0 = arith.constant 0 : i32
    %c0_i32_1 = arith.constant 0 : i32
    %c0_i32_2 = arith.constant 0 : i32
    return %c0_i32, %c0_i32_0, %c0_i32_1 : i32, i32, i32
  }
  func.func @transform_4(%arg0: i32) -> (i32, i32, i32) {
    %c0_i32 = arith.constant 0 : i32
    %c0_i32_0 = arith.constant 0 : i32
    %c0_i32_1 = arith.constant 0 : i32
    %c0_i32_2 = arith.constant 0 : i32
    return %c0_i32, %c0_i32_0, %c0_i32_1 : i32, i32, i32
  }
  func.func @transform_5(%arg0: i32) -> (i32, i32, i32) {
    %c0_i32 = arith.constant 0 : i32
    %c0_i32_0 = arith.constant 0 : i32
    %c0_i32_1 = arith.constant 0 : i32
    %c0_i32_2 = arith.constant 0 : i32
    return %c0_i32, %c0_i32_0, %c0_i32_1 : i32, i32, i32
  }
  func.func @transform_6(%arg0: i32) -> (i32, i32, i32) {
    %c0_i32 = arith.constant 0 : i32
    %c0_i32_0 = arith.constant 0 : i32
    %c0_i32_1 = arith.constant 0 : i32
    %c0_i32_2 = arith.constant 0 : i32
    return %c0_i32, %c0_i32_0, %c0_i32_1 : i32, i32, i32
  }
  func.func @transform_7(%arg0: i32) -> (i32, i32, i32) {
    %c0_i32 = arith.constant 0 : i32
    %c0_i32_0 = arith.constant 0 : i32
    %c0_i32_1 = arith.constant 0 : i32
    %c0_i32_2 = arith.constant 0 : i32
    return %c0_i32, %c0_i32_0, %c0_i32_1 : i32, i32, i32
  }
  func.func @transform_8(%arg0: i32) -> (i32, i32, i32) {
    %c0_i32 = arith.constant 0 : i32
    %c0_i32_0 = arith.constant 0 : i32
    %c0_i32_1 = arith.constant 0 : i32
    return %arg0, %c0_i32, %c0_i32_0 : i32, i32, i32
  }
}

</mosaic_0001>

<llo_original>
// kernel: mcnet_forward.1
$region0: #{mcnet_forward.1}
  #allocation0 [shape = 'u32[]', space=smem, size = 0x4, offset = 0x4, fixed_abs, tag = 'smem constant byte address 0x4 - core index']
  #allocation1 [shape = 'u32[144,128]{1,0:T(1,128)}', space=vmem, size = 0x12000, scoped, tag = 'internal scratch']
  #allocation2 [shape = 'f32[34,102]{1,0:T(8,128)}', space=vmem, size = 0x5000, scoped, tag = 'scratch operand']
  #allocation3 [shape = 'f32[18,72]{1,0:T(8,128)}', space=vmem, size = 0x3000, scoped, tag = 'scratch operand']
  #allocation4 [shape = 'f32[8,64]{1,0:T(8,128)}', space=vmem, size = 0x1000, scoped, tag = 'scratch operand']
  #allocation5 [shape = 'f32[6,96]{1,0:T(8,128)}', space=vmem, size = 0x1000, scoped, tag = 'scratch operand']
  #allocation6 [shape = 'f32[4,128]{1,0:T(4,128)}', space=vmem, size = 0x800, scoped, tag = 'scratch operand']
  %s0 = inlined_call_operand.vmem [shape: f32[2,32,96], index: 0, kind: input, shape index: {}]
  %s1 = inlined_call_operand.vmem [shape: f32[3,2,102,64], index: 1, kind: input, shape index: {}]
  %s2 = inlined_call_operand.vmem [shape: f32[3,2,72,64], index: 2, kind: input, shape index: {}]
  %s3 = inlined_call_operand.vmem [shape: f32[3,64,96], index: 3, kind: input, shape index: {}]
  %s4 = inlined_call_operand.vmem [shape: f32[3,96,128], index: 4, kind: input, shape index: {}]
  %s5 = inlined_call_operand.vmem [shape: f32[3,128,4], index: 5, kind: input, shape index: {}]
  %s6 = inlined_call_operand.vmem [shape: f32[2,16,32], index: 6, kind: input, shape index: {}]
  %s7 = inlined_call_operand.vmem [shape: f32[2,8,16], index: 7, kind: input, shape index: {}]
  %s8 = inlined_call_operand.vmem [shape: f32[2,2,4], index: 8, kind: output, shape index: {}]
  %s9 = sld [smem:[#allocation0]]
  $region65: #{mcnet_forward.1} parent=0
    _
  %s11 = ssub.s32 1, %s9
  %s12 = scalar_select 0, %s11, %s9
  loop: start=0, step=1, limit=4
  $region2: #{mcnet_forward.1} parent=0 // loop_pre_header
    _
  $region3: #{mcnet_forward.1} parent=0 // loop_header
    %s14 = sphi 0, %s18
    %p15 = scmp.ge.s32.totalorder %s14, 4
    %s24 = sphi 0, %s26
    %s27 = sphi 0, %s24
    %s28 = sphi 0, %s27
    %s44 = sphi 0, %s28
    %s48 = sphi 0, %s48
    %s50 = sphi 0, %s48
    %s51 = sphi 0, %s50
    %s65 = sphi 0, %s51
    %s69 = sphi 0, %s69
    %s71 = sphi 0, %s69
    %s72 = sphi 0, %s71
    %s86 = sphi 0, %s72
    %s90 = sphi 0, %s90
    %s92 = sphi 0, %s90
    %s93 = sphi 0, %s92
    %s107 = sphi 0, %s93
    %s111 = sphi 0, %s111
    %s113 = sphi 0, %s111
    %s114 = sphi 0, %s113
    %s128 = sphi 0, %s114
    %s132 = sphi 0, %s132
    %s134 = sphi 0, %s132
    %s135 = sphi 0, %s134
    %s149 = sphi 0, %s135
    %s153 = sphi 0, %s153
    %s155 = sphi 0, %s153
    %s156 = sphi 0, %s155
    %s170 = sphi 0, %s156
    %s174 = sphi 0, %s174
    %s176 = sphi 0, %s174
    %s177 = sphi 0, %s176
    %s191 = sphi 0, %s177
    %s197 = sphi 0, %s199
    %s200 = sphi 0, %s197
    %s201 = sphi 0, %s200
    %s217 = sphi 0, %s201
  $region4: #{mcnet_forward.1} parent=0 // loop_header_branch
    %17 = sbr.rel (%p15) target = $region8
  $region5: #{mcnet_forward.1} parent=0 // loop_body
    %s19 = ssub.s32 %s14, 1
    %s20 = ssub.s32 %s14, 2
    %s21 = sadd.s32 %s14, 1
    %s22 = ssub.s32 %s14, %s21
    %p23 = scmp.eq.s32.totalorder %s22, 0
    %s25 = sadd.s32 %s24, 1
    %s26 = scalar_select %p23, %s24, %s25
    %p29 = pneg %p23
    %p30 = scmp.eq.s32.totalorder %s14, 1
    %p31 = por %p29, %p30
    %p32 = scmp.ne.s32.totalorder %s24, %s27
    %p33 = scmp.eq.s32.totalorder %s14, 0
    %p34 = por %p32, %p33
    %p35 = scmp.ne.s32.totalorder %s24, %s27
    %p36 = scmp.eq.s32.totalorder %s19, 1
    %p37 = por %p35, %p36
    %p38 = scmp.ne.s32.totalorder %s27, %s28
    %p39 = scmp.eq.s32.totalorder %s19, 0
    %p40 = por %p38, %p39
    %p41 = scmp.ne.s32.totalorder %s27, %s28
    %p42 = scmp.eq.s32.totalorder %s20, 1
    %p43 = por %p41, %p42
    %p45 = scmp.ne.s32.totalorder %s28, %s44
    %p46 = scmp.eq.s32.totalorder %s20, 0
    %p47 = por %p45, %p46
    %s49 = sadd.s32 %s48, 1
    %p52 = scmp.eq.s32.totalorder %s14, 1
    %p53 = scmp.ne.s32.totalorder %s48, %s50
    %p54 = scmp.eq.s32.totalorder %s14, 0
    %p55 = por %p53, %p54
    %p56 = scmp.ne.s32.totalorder %s48, %s50
    %p57 = scmp.eq.s32.totalorder %s19, 1
    %p58 = por %p56, %p57
    %p59 = scmp.ne.s32.totalorder %s50, %s51
    %p60 = scmp.eq.s32.totalorder %s19, 0
    %p61 = por %p59, %p60
    %p62 = scmp.ne.s32.totalorder %s50, %s51
    %p63 = scmp.eq.s32.totalorder %s20, 1
    %p64 = por %p62, %p63
    %p66 = scmp.ne.s32.totalorder %s51, %s65
    %p67 = scmp.eq.s32.totalorder %s20, 0
    %p68 = por %p66, %p67
    %s70 = sadd.s32 %s69, 1
    %p73 = scmp.eq.s32.totalorder %s14, 1
    %p74 = scmp.ne.s32.totalorder %s69, %s71
    %p75 = scmp.eq.s32.totalorder %s14, 0
    %p76 = por %p74, %p75
    %p77 = scmp.ne.s32.totalorder %s69, %s71
    %p78 = scmp.eq.s32.totalorder %s19, 1
    %p79 = por %p77, %p78
    %p80 = scmp.ne.s32.totalorder %s71, %s72
    %p81 = scmp.eq.s32.totalorder %s19, 0
    %p82 = por %p80, %p81
    %p83 = scmp.ne.s32.totalorder %s71, %s72
    %p84 = scmp.eq.s32.totalorder %s20, 1
    %p85 = por %p83, %p84
    %p87 = scmp.ne.s32.totalorder %s72, %s86
    %p88 = scmp.eq.s32.totalorder %s20, 0
    %p89 = por %p87, %p88
    %s91 = sadd.s32 %s90, 1
    %p94 = scmp.eq.s32.totalorder %s14, 1
    %p95 = scmp.ne.s32.totalorder %s90, %s92
    %p96 = scmp.eq.s32.totalorder %s14, 0
    %p97 = por %p95, %p96
    %p98 = scmp.ne.s32.totalorder %s90, %s92
    %p99 = scmp.eq.s32.totalorder %s19, 1
    %p100 = por %p98, %p99
    %p101 = scmp.ne.s32.totalorder %s92, %s93
    %p102 = scmp.eq.s32.totalorder %s19, 0
    %p103 = por %p101, %p102
    %p104 = scmp.ne.s32.totalorder %s92, %s93
    %p105 = scmp.eq.s32.totalorder %s20, 1
    %p106 = por %p104, %p105
    %p108 = scmp.ne.s32.totalorder %s93, %s107
    %p109 = scmp.eq.s32.totalorder %s20, 0
    %p110 = por %p108, %p109
    %s112 = sadd.s32 %s111, 1
    %p115 = scmp.eq.s32.totalorder %s14, 1
    %p116 = scmp.ne.s32.totalorder %s111, %s113
    %p117 = scmp.eq.s32.totalorder %s14, 0
    %p118 = por %p116, %p117
    %p119 = scmp.ne.s32.totalorder %s111, %s113
    %p120 = scmp.eq.s32.totalorder %s19, 1
    %p121 = por %p119, %p120
    %p122 = scmp.ne.s32.totalorder %s113, %s114
    %p123 = scmp.eq.s32.totalorder %s19, 0
    %p124 = por %p122, %p123
    %p125 = scmp.ne.s32.totalorder %s113, %s114
    %p126 = scmp.eq.s32.totalorder %s20, 1
    %p127 = por %p125, %p126
    %p129 = scmp.ne.s32.totalorder %s114, %s128
    %p130 = scmp.eq.s32.totalorder %s20, 0
    %p131 = por %p129, %p130
    %s133 = sadd.s32 %s132, 1
    %p136 = scmp.eq.s32.totalorder %s14, 1
    %p137 = scmp.ne.s32.totalorder %s132, %s134
    %p138 = scmp.eq.s32.totalorder %s14, 0
    %p139 = por %p137, %p138
    %p140 = scmp.ne.s32.totalorder %s132, %s134
    %p141 = scmp.eq.s32.totalorder %s19, 1
    %p142 = por %p140, %p141
    %p143 = scmp.ne.s32.totalorder %s134, %s135
    %p144 = scmp.eq.s32.totalorder %s19, 0
    %p145 = por %p143, %p144
    %p146 = scmp.ne.s32.totalorder %s134, %s135
    %p147 = scmp.eq.s32.totalorder %s20, 1
    %p148 = por %p146, %p147
    %p150 = scmp.ne.s32.totalorder %s135, %s149
    %p151 = scmp.eq.s32.totalorder %s20, 0
    %p152 = por %p150, %p151
    %s154 = sadd.s32 %s153, 1
    %p157 = scmp.eq.s32.totalorder %s14, 1
    %p158 = scmp.ne.s32.totalorder %s153, %s155
    %p159 = scmp.eq.s32.totalorder %s14, 0
    %p160 = por %p158, %p159
    %p161 = scmp.ne.s32.totalorder %s153, %s155
    %p162 = scmp.eq.s32.totalorder %s19, 1
    %p163 = por %p161, %p162
    %p164 = scmp.ne.s32.totalorder %s155, %s156
    %p165 = scmp.eq.s32.totalorder %s19, 0
    %p166 = por %p164, %p165
    %p167 = scmp.ne.s32.totalorder %s155, %s156
    %p168 = scmp.eq.s32.totalorder %s20, 1
    %p169 = por %p167, %p168
    %p171 = scmp.ne.s32.totalorder %s156, %s170
    %p172 = scmp.eq.s32.totalorder %s20, 0
    %p173 = por %p171, %p172
    %s175 = sadd.s32 %s174, 1
    %p178 = scmp.eq.s32.totalorder %s14, 1
    %p179 = scmp.ne.s32.totalorder %s174, %s176
    %p180 = scmp.eq.s32.totalorder %s14, 0
    %p181 = por %p179, %p180
    %p182 = scmp.ne.s32.totalorder %s174, %s176
    %p183 = scmp.eq.s32.totalorder %s19, 1
    %p184 = por %p182, %p183
    %p185 = scmp.ne.s32.totalorder %s176, %s177
    %p186 = scmp.eq.s32.totalorder %s19, 0
    %p187 = por %p185, %p186
    %p188 = scmp.ne.s32.totalorder %s176, %s177
    %p189 = scmp.eq.s32.totalorder %s20, 1
    %p190 = por %p188, %p189
    %p192 = scmp.ne.s32.totalorder %s177, %s191
    %p193 = scmp.eq.s32.totalorder %s20, 0
    %p194 = por %p192, %p193
    %s195 = ssub.s32 %s14, %s21
    %p196 = scmp.eq.s32.totalorder %s195, 0
    %s198 = sadd.s32 %s197, 1
    %s199 = scalar_select %p196, %s197, %s198
    %p202 = pneg %p196
    %p203 = scmp.eq.s32.totalorder %s14, 1
    %p204 = por %p202, %p203
    %p205 = scmp.ne.s32.totalorder %s197, %s200
    %p206 = scmp.eq.s32.totalorder %s14, 0
    %p207 = por %p205, %p206
    %p208 = scmp.ne.s32.totalorder %s197, %s200
    %p209 = scmp.eq.s32.totalorder %s19, 1
    %p210 = por %p208, %p209
    %p211 = scmp.ne.s32.totalorder %s200, %s201
    %p212 = scmp.eq.s32.totalorder %s19, 0
    %p213 = por %p211, %p212
    %p214 = scmp.ne.s32.totalorder %s200, %s201
    %p215 = scmp.eq.s32.totalorder %s20, 1
    %p216 = por %p214, %p215
    %p218 = scmp.ne.s32.totalorder %s201, %s217
    %p219 = scmp.eq.s32.totalorder %s20, 0
    %p220 = por %p218, %p219
    %p221 = scmp.le.s32.totalorder 1, %s14
    %p222 = scmp.lt.s32.totalorder %s14, 3
    %p223 = pnand %p221, %p222
    %p224 = pneg %p223
    // Predicated region
    $region9: #{mcnet_forward.1} parent=5 // pred_check
      _
    $region10: #{mcnet_forward.1} parent=5 // pred_check_branch
      %226 = sbr.rel (%p223) target = $region12
    $region11: #{mcnet_forward.1} parent=5 // pred_region
      %s227 = ssub.s32 %s14, 1
      // Predicated region
      $region13: #{mcnet_forward.1} parent=11 // pred_check
        %p228 = pneg %p61
      $region14: #{mcnet_forward.1} parent=11 // pred_check_branch
        %230 = sbr.rel (%p228) target = $region16
      $region15: #{mcnet_forward.1} parent=11 // pred_region
        _
      $region16: #{mcnet_forward.1} parent=11 // pred_fallthru
        _
      // Predicated region
      $region17: #{mcnet_forward.1} parent=11 // pred_check
        %p231 = pneg %p82
      $region18: #{mcnet_forward.1} parent=11 // pred_check_branch
        %233 = sbr.rel (%p231) target = $region20
      $region19: #{mcnet_forward.1} parent=11 // pred_region
        _
      $region20: #{mcnet_forward.1} parent=11 // pred_fallthru
        _
      // Predicated region
      $region21: #{mcnet_forward.1} parent=11 // pred_check
        %p234 = pneg %p103
      $region22: #{mcnet_forward.1} parent=11 // pred_check_branch
        %236 = sbr.rel (%p234) target = $region24
      $region23: #{mcnet_forward.1} parent=11 // pred_region
        _
      $region24: #{mcnet_forward.1} parent=11 // pred_fallthru
        _
      // Predicated region
      $region25: #{mcnet_forward.1} parent=11 // pred_check
        %p237 = pneg %p124
      $region26: #{mcnet_forward.1} parent=11 // pred_check_branch
        %239 = sbr.rel (%p237) target = $region28
      $region27: #{mcnet_forward.1} parent=11 // pred_region
        _
      $region28: #{mcnet_forward.1} parent=11 // pred_fallthru
        _
      // Predicated region
      $region29: #{mcnet_forward.1} parent=11 // pred_check
        %p240 = pneg %p145
      $region30: #{mcnet_forward.1} parent=11 // pred_check_branch
        %242 = sbr.rel (%p240) target = $region32
      $region31: #{mcnet_forward.1} parent=11 // pred_region
        _
      $region32: #{mcnet_forward.1} parent=11 // pred_fallthru
        _
      // Predicated region
      $region33: #{mcnet_forward.1} parent=11 // pred_check
        %p243 = pneg %p166
      $region34: #{mcnet_forward.1} parent=11 // pred_check_branch
        %245 = sbr.rel (%p243) target = $region36
      $region35: #{mcnet_forward.1} parent=11 // pred_region
        _
      $region36: #{mcnet_forward.1} parent=11 // pred_fallthru
        _
      // Predicated region
      $region37: #{mcnet_forward.1} parent=11 // pred_check
        %p246 = pneg %p187
      $region38: #{mcnet_forward.1} parent=11 // pred_check_branch
        %248 = sbr.rel (%p246) target = $region40
      $region39: #{mcnet_forward.1} parent=11 // pred_region
        _
      $region40: #{mcnet_forward.1} parent=11 // pred_fallthru
        _
    $region12: #{mcnet_forward.1} parent=5 // pred_fallthru
      _
    %p249 = scmp.lt.s32.totalorder %s14, 2
    // Predicated region
    $region41: #{mcnet_forward.1} parent=5 // pred_check
      %p250 = pneg %p249
    $region42: #{mcnet_forward.1} parent=5 // pred_check_branch
      %252 = sbr.rel (%p250) target = $region44
    $region43: #{mcnet_forward.1} parent=5 // pred_region
      // Predicated region
      $region45: #{mcnet_forward.1} parent=43 // pred_check
        %p253 = pneg %p34
      $region46: #{mcnet_forward.1} parent=43 // pred_check_branch
        %255 = sbr.rel (%p253) target = $region48
      $region47: #{mcnet_forward.1} parent=43 // pred_region
        %p256 = scmp.lt.s32.totalorder %s14, 1
        %s257 = scalar_select %p256, %s14, 1
        %s258 = smul.addr %s257, 4
        %s259 = smul.addr %s258, 8
        %s260 = scalar_lea.vmem %s0, %s259
      $region48: #{mcnet_forward.1} parent=43 // pred_fallthru
        _
    $region44: #{mcnet_forward.1} parent=5 // pred_fallthru
      _
    %p261 = scmp.le.s32.totalorder 1, %s14
    %p262 = scmp.lt.s32.totalorder %s14, 3
    %p263 = pnand %p261, %p262
    %p264 = pneg %p263
    // Predicated region
    $region49: #{mcnet_forward.1} parent=5 // pred_check
      _
    $region50: #{mcnet_forward.1} parent=5 // pred_check_branch
      %266 = sbr.rel (%p263) target = $region52
    $region51: #{mcnet_forward.1} parent=5 // pred_region
      %s267 = ssub.s32 %s14, 1
      %p268 = scmp.lt.s32.totalorder %s19, 1
      %s269 = scalar_select %p268, %s19, 1
      %s270 = smul.addr %s269, 4
      %s271 = smul.addr %s270, 8
      %s272 = scalar_lea.vmem %s0, %s271
      %p273 = pneg %p40
      %p274 = pneg %p37
      %p275 = pneg %p61
      %p276 = pneg %p58
      %p277 = pneg %p82
      %p278 = pneg %p79
      %p279 = pneg %p103
      %p280 = pneg %p100
      %p281 = pneg %p124
      %p282 = pneg %p121
      %p283 = pneg %p145
      %p284 = pneg %p142
      %p285 = pneg %p166
      %p286 = pneg %p163
      %p287 = pneg %p187
      %p288 = pneg %p184
      %p289 = pneg %p213
      %p290 = pneg %p210
      %p291 = scmp.lt.s32.totalorder %s19, 1
      %s292 = scalar_select %p291, %s19, 1
      %s293 = smul.addr %s292, 2
      %s294 = scalar_lea.vmem %s8, %s293
      %p295 = scmp.lt.s32.totalorder %s19, 1
      %s296 = scalar_select %p295, %s19, 1
      %s297 = smul.addr %s296, 4
      %s298 = smul.addr %s297, 8
      %s299 = scalar_lea.vmem %s0, %s298
      %p300 = scmp.lt.s32.totalorder %s19, 1
      %s301 = scalar_select %p300, %s19, 1
      %s302 = smul.addr %s301, 2
      %s303 = scalar_lea.vmem %s8, %s302
      %vm304 = vcmask 834560
      %305 = vst.msk [vmem:[#allocation2] sm:$0xff] %vm304, 1.0
      %306 = vst.msk [vmem:[#allocation2 + $0x8] sm:$0xff] %vm304, 1.0
      %307 = vst.msk [vmem:[#allocation2 + $0x10] sm:$0xff] %vm304, 1.0
      %308 = vst.msk [vmem:[#allocation2 + $0x18] sm:$0xff] %vm304, 1.0
      %vm309 = vcmask 828416
      %310 = vst.msk [vmem:[#allocation2 + $0x20] sm:$0x3] %vm309, 1.0
      %v311 = vld [vmem:[%s299] sm:$0xff]
      %v312 = vld [vmem:[%s299 + $0x8] sm:$0xff]
      %v313 = vld [vmem:[%s299 + $0x10] sm:$0xff]
      %v314 = vld [vmem:[%s299 + $0x18] sm:$0xff]
      %319 = vrot.lane.b32.xlu0 %v311, 3
      %v320 = vpop.permute.xlu0 %319
      %321 = vrot.lane.b32.xlu0 %v312, 3
      %v322 = vpop.permute.xlu0 %321
      %323 = vrot.lane.b32.xlu0 %v313, 3
      %v324 = vpop.permute.xlu0 %323
      %325 = vrot.lane.b32.xlu0 %v314, 3
      %v326 = vpop.permute.xlu0 %325
      %vm331 = vcmask 810008
      %332 = vst.msk [vmem:[#allocation2 + $0x1] sm:$0xff] %vm331, %v320
      %333 = vst.msk [vmem:[#allocation2 + $0x9] sm:$0xff] %vm331, %v322
      %334 = vst.msk [vmem:[#allocation2 + $0x11] sm:$0xff] %vm331, %v324
      %335 = vst.msk [vmem:[#allocation2 + $0x19] sm:$0xff] %vm331, %v326
      %v336 = vld [vmem:[#allocation2] sm:$0xff]
      %v337 = vld [vmem:[#allocation2 + $0x8] sm:$0xff]
      %v338 = vld [vmem:[#allocation2 + $0x10] sm:$0xff]
      %v339 = vld [vmem:[#allocation2 + $0x18] sm:$0xff]
      %v340 = vld [vmem:[%s1] sm:$0xff]
      %v341 = vld [vmem:[%s1 + $0x8] sm:$0xff]
      %v342 = vld [vmem:[%s1 + $0x10] sm:$0xff]
      %v343 = vld [vmem:[%s1 + $0x18] sm:$0xff]
      %v344 = vld [vmem:[%s1 + $0x20] sm:$0xff]
      %v345 = vld [vmem:[%s1 + $0x28] sm:$0xff]
      %v346 = vld [vmem:[%s1 + $0x30] sm:$0xff]
      %v347 = vld [vmem:[%s1 + $0x38] sm:$0xff]
      %v348 = vld [vmem:[%s1 + $0x40] sm:$0xff]
      %v349 = vld [vmem:[%s1 + $0x48] sm:$0xff]
      %v350 = vld [vmem:[%s1 + $0x50] sm:$0xff]
      %v351 = vld [vmem:[%s1 + $0x58] sm:$0xff]
      %v352 = vld [vmem:[%s1 + $0x60] sm:$0x3f]
      %s353 = scalar_lea.vmem %s1, 104
      %v354 = vld [vmem:[%s353] sm:$0xff]
      %v355 = vld [vmem:[%s353 + $0x8] sm:$0xff]
      %v356 = vld [vmem:[%s353 + $0x10] sm:$0xff]
      %v357 = vld [vmem:[%s353 + $0x18] sm:$0xff]
      %v358 = vld [vmem:[%s353 + $0x20] sm:$0xff]
      %v359 = vld [vmem:[%s353 + $0x28] sm:$0xff]
      %v360 = vld [vmem:[%s353 + $0x30] sm:$0xff]
      %v361 = vld [vmem:[%s353 + $0x38] sm:$0xff]
      %v362 = vld [vmem:[%s353 + $0x40] sm:$0xff]
      %v363 = vld [vmem:[%s353 + $0x48] sm:$0xff]
      %v364 = vld [vmem:[%s353 + $0x50] sm:$0xff]
      %v365 = vld [vmem:[%s353 + $0x58] sm:$0xff]
      %v366 = vld [vmem:[%s353 + $0x60] sm:$0x3f]
      %v367 = vld [vmem:[#allocation2 + $0x1] sm:$0xff]
      %v368 = vld [vmem:[#allocation2 + $0x9] sm:$0xff]
      %v369 = vld [vmem:[#allocation2 + $0x11] sm:$0xff]
      %v370 = vld [vmem:[#allocation2 + $0x19] sm:$0xff]
      %s371 = scalar_lea.vmem %s1, 208
      %v372 = vld [vmem:[%s371] sm:$0xff]
      %v373 = vld [vmem:[%s371 + $0x8] sm:$0xff]
      %v374 = vld [vmem:[%s371 + $0x10] sm:$0xff]
      %v375 = vld [vmem:[%s371 + $0x18] sm:$0xff]
      %v376 = vld [vmem:[%s371 + $0x20] sm:$0xff]
      %v377 = vld [vmem:[%s371 + $0x28] sm:$0xff]
      %v378 = vld [vmem:[%s371 + $0x30] sm:$0xff]
      %v379 = vld [vmem:[%s371 + $0x38] sm:$0xff]
      %v380 = vld [vmem:[%s371 + $0x40] sm:$0xff]
      %v381 = vld [vmem:[%s371 + $0x48] sm:$0xff]
      %v382 = vld [vmem:[%s371 + $0x50] sm:$0xff]
      %v383 = vld [vmem:[%s371 + $0x58] sm:$0xff]
      %v384 = vld [vmem:[%s371 + $0x60] sm:$0x3f]
      %v386 = vsel %vm304, %v367, 0
      %v389 = vsel %vm304, %v368, 0
      %v392 = vsel %vm304, %v369, 0
      %v395 = vsel %vm304, %v370, 0
      %vm397 = vcmask 1045504
      %v399 = vsel %vm397, %v384, 0
      %401 = vmatprep.subr.mxu0 0.0
      %v402 = vand.u32 %v372, 4294901760
      %403 = vmatpush1.msra.mxu0 %v402
      %404 = vmatprep.subr.mxu0 0.0
      %v405 = vand.u32 %v373, 4294901760
      %406 = vmatpush1.msra.mxu0 %v405
      %407 = vmatprep.subr.mxu0 0.0
      %v408 = vand.u32 %v374, 4294901760
      %409 = vmatpush1.msra.mxu0 %v408
      %410 = vmatprep.subr.mxu0 0.0
      %v411 = vand.u32 %v375, 4294901760
      %412 = vmatpush1.msra.mxu0 %v411
      %413 = vmatprep.subr.mxu0 0.0
      %v414 = vand.u32 %v376, 4294901760
      %415 = vmatpush1.msra.mxu0 %v414
      %416 = vmatprep.subr.mxu0 0.0
      %v417 = vand.u32 %v377, 4294901760
      %418 = vmatpush1.msra.mxu0 %v417
      %419 = vmatprep.subr.mxu0 0.0
      %v420 = vand.u32 %v378, 4294901760
      %421 = vmatpush1.msra.mxu0 %v420
      %422 = vmatprep.subr.mxu0 0.0
      %v423 = vand.u32 %v379, 4294901760
      %424 = vmatpush1.msra.mxu0 %v423
      %425 = vmatprep.subr.mxu0 0.0
      %v426 = vand.u32 %v380, 4294901760
      %427 = vmatpush1.msra.mxu0 %v426
      %428 = vmatprep.subr.mxu0 0.0
      %v429 = vand.u32 %v381, 4294901760
      %430 = vmatpush1.msra.mxu0 %v429
      %431 = vmatprep.subr.mxu0 0.0
      %v432 = vand.u32 %v382, 4294901760
      %433 = vmatpush1.msra.mxu0 %v432
      %434 = vmatprep.subr.mxu0 0.0
      %v435 = vand.u32 %v383, 4294901760
      %436 = vmatpush1.msra.mxu0 %v435
      %437 = vmatprep.subr.mxu0 0.0
      %v438 = vand.u32 %v399, 4294901760
      %439 = vmatpush1.msra.mxu0 %v438
      %440 = vmatprep.subr.mxu0 0.0
      %441 = vmatpush1.msra.mxu0 0.0
      %442 = vmatprep.subr.mxu0 0.0
      %443 = vmatpush1.msra.mxu0 0.0
      %444 = vmatprep.subr.mxu0 0.0
      %445 = vmatpush1.msra.mxu0 0.0
      %446 = vmatprep.subr.mxu0 0.0
      %447 = vmatpush1.msra.mxu0 0.0
      %448 = vmatprep.subr.mxu0 0.0
      %449 = vmatpush1.msra.mxu0 0.0
      %450 = vmatprep.subr.mxu0 0.0
      %451 = vmatpush1.msra.mxu0 0.0
      %452 = vmatprep.subr.mxu0 0.0
      %453 = vmatpush1.msra.mxu0 0.0
      %454 = vmatprep.subr.mxu0 0.0
      %455 = vmatpush1.msra.mxu0 0.0
      %456 = vmatprep.subr.mxu0 0.0
      %457 = vmatpush1.msra.mxu0 0.0
      %458 = vmatprep.subr.mxu0 0.0
      %459 = vmatpush1.msra.mxu0 0.0
      %460 = vmatprep.subr.mxu0 0.0
      %461 = vmatpush1.msra.mxu0 0.0
      %462 = vmatprep.subr.mxu0 0.0
      %463 = vmatpush1.msra.mxu0 0.0
      %464 = vmatprep.subr.mxu0 0.0
      %465 = vmatpush1.msra.mxu0 0.0
      %466 = vmatprep.subr.mxu0 0.0
      %467 = vmatpush1.msra.mxu0 0.0
      %468 = vmatprep.subr.mxu0 0.0
      %469 = vmatpush1.msra.mxu0 0.0
      %470 = vmatprep.subr.mxu0 0.0
      %471 = vmatpush1.msra.mxu0 0.0
      %472 = vmatprep.subr.mxu0 0.0
      %473 = vmatpush1.msra.mxu0 0.0
      %474 = vmatprep.subr.mxu0 0.0
      %475 = vmatpush1.msra.mxu0 0.0
      %476 = vmatprep.subr.mxu0 0.0
      %477 = vmatpush1.msra.mxu0 0.0
      %478 = vmatprep.mubr.f32.mxu0 0.0
      %v479 = vand.u32 %v386, 4294901760
      %v480 = vsub.f32 %v386, %v479
      %v481 = vand.u32 %v480, 4294901760
      %v482 = vsub.f32 %v480, %v481
      %v483 = vand.u32 %v482, 4294901760
      %484 = vmatmul.mubr.f32.gmra.mrb[0].mxu0 %v483
      %v485 = vpop.f32.mrb[0].mxu0
      %v486 = vadd.f32 0.0, %v485
      %v487 = vpop.f32.mrb[0].mxu0
      %488 = vmatprep.mubr.f32.mxu0 0.0
      %v489 = vand.u32 %v389, 4294901760
      %v490 = vsub.f32 %v389, %v489
      %v491 = vand.u32 %v490, 4294901760
      %v492 = vsub.f32 %v490, %v491
      %v493 = vand.u32 %v492, 4294901760
      %494 = vmatmul.mubr.f32.gmra.mrb[0].mxu0 %v493
      %v495 = vpop.f32.mrb[0].mxu0
      %v496 = vadd.f32 0.0, %v495
      %v497 = vpop.f32.mrb[0].mxu0
      %498 = vmatprep.mubr.f32.mxu0 0.0
      %v499 = vand.u32 %v392, 4294901760
      %v500 = vsub.f32 %v392, %v499
      %v501 = vand.u32 %v500, 4294901760
      %v502 = vsub.f32 %v500, %v501
      %v503 = vand.u32 %v502, 4294901760
      %504 = vmatmul.mubr.f32.gmra.mrb[0].mxu0 %v503
      %v505 = vpop.f32.mrb[0].mxu0
      %v506 = vadd.f32 0.0, %v505
      %v507 = vpop.f32.mrb[0].mxu0
      %508 = vmatprep.mubr.f32.mxu0 0.0
      %v509 = vand.u32 %v395, 4294901760
      %v510 = vsub.f32 %v395, %v509
      %v511 = vand.u32 %v510, 4294901760
      %v512 = vsub.f32 %v510, %v511
      %v513 = vand.u32 %v512, 4294901760
      %514 = vmatmul.mubr.f32.gmra.mrb[0].mxu0 %v513
      %v515 = vpop.f32.mrb[0].mxu0
      %v516 = vadd.f32 0.0, %v515
      %v517 = vpop.f32.mrb[0].mxu0
      %518 = vdwg.mxu0
      %519 = vmatprep.subr.mxu0 0.0
      %v520 = vand.u32 %v372, 4294901760
      %v521 = vsub.f32 %v372, %v520
      %v522 = vand.u32 %v521, 4294901760
      %v523 = vsub.f32 %v521, %v522
      %v524 = vand.u32 %v523, 4294901760
      %525 = vmatpush1.msra.mxu0 %v524
      %526 = vmatprep.subr.mxu0 0.0
      %v527 = vand.u32 %v373, 4294901760
      %v528 = vsub.f32 %v373, %v527
      %v529 = vand.u32 %v528, 4294901760
      %v530 = vsub.f32 %v528, %v529
      %v531 = vand.u32 %v530, 4294901760
      %532 = vmatpush1.msra.mxu0 %v531
      %533 = vmatprep.subr.mxu0 0.0
      %v534 = vand.u32 %v374, 4294901760
      %v535 = vsub.f32 %v374, %v534
      %v536 = vand.u32 %v535, 4294901760
      %v537 = vsub.f32 %v535, %v536
      %v538 = vand.u32 %v537, 4294901760
      %539 = vmatpush1.msra.mxu0 %v538
      %540 = vmatprep.subr.mxu0 0.0
      %v541 = vand.u32 %v375, 4294901760
      %v542 = vsub.f32 %v375, %v541
      %v543 = vand.u32 %v542, 4294901760
      %v544 = vsub.f32 %v542, %v543
      %v545 = vand.u32 %v544, 4294901760
      %546 = vmatpush1.msra.mxu0 %v545
      %547 = vmatprep.subr.mxu0 0.0
      %v548 = vand.u32 %v376, 4294901760
      %v549 = vsub.f32 %v376, %v548
      %v550 = vand.u32 %v549, 4294901760
      %v551 = vsub.f32 %v549, %v550
      %v552 = vand.u32 %v551, 4294901760
      %553 = vmatpush1.msra.mxu0 %v552
      %554 = vmatprep.subr.mxu0 0.0
      %v555 = vand.u32 %v377, 4294901760
      %v556 = vsub.f32 %v377, %v555
      %v557 = vand.u32 %v556, 4294901760
      %v558 = vsub.f32 %v556, %v557
      %v559 = vand.u32 %v558, 4294901760
      %560 = vmatpush1.msra.mxu0 %v559
      %561 = vmatprep.subr.mxu0 0.0
      %v562 = vand.u32 %v378, 4294901760
      %v563 = vsub.f32 %v378, %v562
      %v564 = vand.u32 %v563, 4294901760
      %v565 = vsub.f32 %v563, %v564
      %v566 = vand.u32 %v565, 4294901760
      %567 = vmatpush1.msra.mxu0 %v566
      %568 = vmatprep.subr.mxu0 0.0
      %v569 = vand.u32 %v379, 4294901760
      %v570 = vsub.f32 %v379, %v569
      %v571 = vand.u32 %v570, 4294901760
      %v572 = vsub.f32 %v570, %v571
      %v573 = vand.u32 %v572, 4294901760
      %574 = vmatpush1.msra.mxu0 %v573
      %575 = vmatprep.subr.mxu0 0.0
      %v576 = vand.u32 %v380, 4294901760
      %v577 = vsub.f32 %v380, %v576
      %v578 = vand.u32 %v577, 4294901760
      %v579 = vsub.f32 %v577, %v578
      %v580 = vand.u32 %v579, 4294901760
      %581 = vmatpush1.msra.mxu0 %v580
      %582 = vmatprep.subr.mxu0 0.0
      %v583 = vand.u32 %v381, 4294901760
      %v584 = vsub.f32 %v381, %v583
      %v585 = vand.u32 %v584, 4294901760
      %v586 = vsub.f32 %v584, %v585
      %v587 = vand.u32 %v586, 4294901760
      %588 = vmatpush1.msra.mxu0 %v587
      %589 = vmatprep.subr.mxu0 0.0
      %v590 = vand.u32 %v382, 4294901760
      %v591 = vsub.f32 %v382, %v590
      %v592 = vand.u32 %v591, 4294901760
      %v593 = vsub.f32 %v591, %v592
      %v594 = vand.u32 %v593, 4294901760
      %595 = vmatpush1.msra.mxu0 %v594
      %596 = vmatprep.subr.mxu0 0.0
      %v597 = vand.u32 %v383, 4294901760
      %v598 = vsub.f32 %v383, %v597
      %v599 = vand.u32 %v598, 4294901760
      %v600 = vsub.f32 %v598, %v599
      %v601 = vand.u32 %v600, 4294901760
      %602 = vmatpush1.msra.mxu0 %v601
      %603 = vmatprep.subr.mxu0 0.0
      %v604 = vand.u32 %v399, 4294901760
      %v605 = vsub.f32 %v399, %v604
      %v606 = vand.u32 %v605, 4294901760
      %v607 = vsub.f32 %v605, %v606
      %v608 = vand.u32 %v607, 4294901760
      %609 = vmatpush1.msra.mxu0 %v608
      %610 = vmatprep.subr.mxu0 0.0
      %611 = vmatpush1.msra.mxu0 0.0
      %612 = vmatprep.subr.mxu0 0.0
      %613 = vmatpush1.msra.mxu0 0.0
      %614 = vmatprep.subr.mxu0 0.0
      %615 = vmatpush1.msra.mxu0 0.0
      %616 = vmatprep.subr.mxu0 0.0
      %617 = vmatpush1.msra.mxu0 0.0
      %618 = vmatprep.subr.mxu0 0.0
      %619 = vmatpush1.msra.mxu0 0.0
      %620 = vmatprep.subr.mxu0 0.0
      %621 = vmatpush1.msra.mxu0 0.0
      %622 = vmatprep.subr.mxu0 0.0
      %623 = vmatpush1.msra.mxu0 0.0
      %624 = vmatprep.subr.mxu0 0.0
      %625 = vmatpush1.msra.mxu0 0.0
      %626 = vmatprep.subr.mxu0 0.0
      %627 = vmatpush1.msra.mxu0 0.0
      %628 = vmatprep.subr.mxu0 0.0
      %629 = vmatpush1.msra.mxu0 0.0
      %630 = vmatprep.subr.mxu0 0.0
      %631 = vmatpush1.msra.mxu0 0.0
      %632 = vmatprep.subr.mxu0 0.0
      %633 = vmatpush1.msra.mxu0 0.0
      %634 = vmatprep.subr.mxu0 0.0
      %635 = vmatpush1.msra.mxu0 0.0
      %636 = vmatprep.subr.mxu0 0.0
      %637 = vmatpush1.msra.mxu0 0.0
      %638 = vmatprep.subr.mxu0 0.0
      %639 = vmatpush1.msra.mxu0 0.0
      %640 = vmatprep.subr.mxu0 0.0
      %641 = vmatpush1.msra.mxu0 0.0
      %642 = vmatprep.subr.mxu0 0.0
      %643 = vmatpush1.msra.mxu0 0.0
      %644 = vmatprep.subr.mxu0 0.0
      %645 = vmatpush1.msra.mxu0 0.0
      %646 = vmatprep.subr.mxu0 0.0
      %647 = vmatpush1.msra.mxu0 0.0
      %648 = vmatprep.mubr.f32.mxu0 0.0
      %v649 = vand.u32 %v386, 4294901760
      %650 = vmatmul.mubr.f32.gmra.mrb[0].mxu0 %v649
      %v651 = vpop.f32.mrb[0].mxu0
      %v652 = vadd.f32 %v486, %v651
      %v653 = vpop.f32.mrb[0].mxu0
      %654 = vmatprep.mubr.f32.mxu0 0.0
      %v655 = vand.u32 %v389, 4294901760
      %656 = vmatmul.mubr.f32.gmra.mrb[0].mxu0 %v655
      %v657 = vpop.f32.mrb[0].mxu0
      %v658 = vadd.f32 %v496, %v657
      %v659 = vpop.f32.mrb[0].mxu0
      %660 = vmatprep.mubr.f32.mxu0 0.0
      %v661 = vand.u32 %v392, 4294901760
      %662 = vmatmul.mubr.f32.gmra.mrb[0].mxu0 %v661
      %v663 = vpop.f32.mrb[0].mxu0
      %v664 = vadd.f32 %v506, %v663
      %v665 = vpop.f32.mrb[0].mxu0
      %666 = vmatprep.mubr.f32.mxu0 0.0
      %v667 = vand.u32 %v395, 4294901760
      %668 = vmatmul.mubr.f32.gmra.mrb[0].mxu0 %v667
      %v669 = vpop.f32.mrb[0].mxu0
      %v670 = vadd.f32 %v516, %v669
      %v671 = vpop.f32.mrb[0].mxu0
      %672 = vdwg.mxu0
      %673 = vmatprep.subr.mxu0 0.0
      %v674 = vand.u32 %v372, 4294901760
      %v675 = vsub.f32 %v372, %v674
      %676 = vmatpush1.msra.mxu0 %v675
      %677 = vmatprep.subr.mxu0 0.0
      %v678 = vand.u32 %v373, 4294901760
      %v679 = vsub.f32 %v373, %v678
      %680 = vmatpush1.msra.mxu0 %v679
      %681 = vmatprep.subr.mxu0 0.0
      %v682 = vand.u32 %v374, 4294901760
      %v683 = vsub.f32 %v374, %v682
      %684 = vmatpush1.msra.mxu0 %v683
      %685 = vmatprep.subr.mxu0 0.0
      %v686 = vand.u32 %v375, 4294901760
      %v687 = vsub.f32 %v375, %v686
      %688 = vmatpush1.msra.mxu0 %v687
      %689 = vmatprep.subr.mxu0 0.0
      %v690 = vand.u32 %v376, 4294901760
      %v691 = vsub.f32 %v376, %v690
      %692 = vmatpush1.msra.mxu0 %v691
      %693 = vmatprep.subr.mxu0 0.0
      %v694 = vand.u32 %v377, 4294901760
      %v695 = vsub.f32 %v377, %v694
      %696 = vmatpush1.msra.mxu0 %v695
      %697 = vmatprep.subr.mxu0 0.0
      %v698 = vand.u32 %v378, 4294901760
      %v699 = vsub.f32 %v378, %v698
      %700 = vmatpush1.msra.mxu0 %v699
      %701 = vmatprep.subr.mxu0 0.0
      %v702 = vand.u32 %v379, 4294901760
      %v703 = vsub.f32 %v379, %v702
      %704 = vmatpush1.msra.mxu0 %v703
      %705 = vmatprep.subr.mxu0 0.0
      %v706 = vand.u32 %v380, 4294901760
      %v707 = vsub.f32 %v380, %v706
      %708 = vmatpush1.msra.mxu0 %v707
      %709 = vmatprep.subr.mxu0 0.0
      %v710 = vand.u32 %v381, 4294901760
      %v711 = vsub.f32 %v381, %v710
      %712 = vmatpush1.msra.mxu0 %v711
      %713 = vmatprep.subr.mxu0 0.0
      %v714 = vand.u32 %v382, 4294901760
      %v715 = vsub.f32 %v382, %v714
      %716 = vmatpush1.msra.mxu0 %v715
      %717 = vmatprep.subr.mxu0 0.0
      %v718 = vand.u32 %v383, 4294901760
      %v719 = vsub.f32 %v383, %v718
      %720 = vmatpush1.msra.mxu0 %v719
      %721 = vmatprep.subr.mxu0 0.0
      %v722 = vand.u32 %v399, 4294901760
      %v723 = vsub.f32 %v399, %v722
      %724 = vmatpush1.msra.mxu0 %v723
      %725 = vmatprep.subr.mxu0 0.0
      %726 = vmatpush1.msra.mxu0 0.0
      %727 = vmatprep.subr.mxu0 0.0
      %728 = vmatpush1.msra.mxu0 0.0
      %729 = vmatprep.subr.mxu0 0.0
      %730 = vmatpush1.msra.mxu0 0.0
      %731 = vmatprep.subr.mxu0 0.0
      %732 = vmatpush1.msra.mxu0 0.0
      %733 = vmatprep.subr.mxu0 0.0
      %734 = vmatpush1.msra.mxu0 0.0
      %735 = vmatprep.subr.mxu0 0.0
      %736 = vmatpush1.msra.mxu0 0.0
      %737 = vmatprep.subr.mxu0 0.0
      %738 = vmatpush1.msra.mxu0 0.0
      %739 = vmatprep.subr.mxu0 0.0
      %740 = vmatpush1.msra.mxu0 0.0
      %741 = vmatprep.subr.mxu0 0.0
      %742 = vmatpush1.msra.mxu0 0.0
      %743 = vmatprep.subr.mxu0 0.0
      %744 = vmatpush1.msra.mxu0 0.0
      %745 = vmatprep.subr.mxu0 0.0
      %746 = vmatpush1.msra.mxu0 0.0
      %747 = vmatprep.subr.mxu0 0.0
      %748 = vmatpush1.msra.mxu0 0.0
      %749 = vmatprep.subr.mxu0 0.0
      %750 = vmatpush1.msra.mxu0 0.0
      %751 = vmatprep.subr.mxu0 0.0
      %752 = vmatpush1.msra.mxu0 0.0
      %753 = vmatprep.subr.mxu0 0.0
      %754 = vmatpush1.msra.mxu0 0.0
      %755 = vmatprep.subr.mxu0 0.0
      %756 = vmatpush1.msra.mxu0 0.0
      %757 = vmatprep.subr.mxu0 0.0
      %758 = vmatpush1.msra.mxu0 0.0
      %759 = vmatprep.subr.mxu0 0.0
      %760 = vmatpush1.msra.mxu0 0.0
      %761 = vmatprep.subr.mxu0 0.0
      %762 = vmatpush1.msra.mxu0 0.0
      %763 = vmatprep.mubr.f32.mxu0 0.0
      %v764 = vand.u32 %v386, 4294901760
      %v765 = vsub.f32 %v386, %v764
      %766 = vmatmul.mubr.f32.gmra.mrb[0].mxu0 %v765
      %v767 = vpop.f32.mrb[0].mxu0
      %v768 = vadd.f32 %v652, %v767
      %v769 = vpop.f32.mrb[0].mxu0
      %770 = vmatprep.mubr.f32.mxu0 0.0
      %v771 = vand.u32 %v389, 4294901760
      %v772 = vsub.f32 %v389, %v771
      %773 = vmatmul.mubr.f32.gmra.mrb[0].mxu0 %v772
      %v774 = vpop.f32.mrb[0].mxu0
      %v775 = vadd.f32 %v658, %v774
      %v776 = vpop.f32.mrb[0].mxu0
      %777 = vmatprep.mubr.f32.mxu0 0.0
      %v778 = vand.u32 %v392, 4294901760
      %v779 = vsub.f32 %v392, %v778
      %780 = vmatmul.mubr.f32.gmra.mrb[0].mxu0 %v779
      %v781 = vpop.f32.mrb[0].mxu0
      %v782 = vadd.f32 %v664, %v781
      %v783 = vpop.f32.mrb[0].mxu0
      %784 = vmatprep.mubr.f32.mxu0 0.0
      %v785 = vand.u32 %v395, 4294901760
      %v786 = vsub.f32 %v395, %v785
      %787 = vmatmul.mubr.f32.gmra.mrb[0].mxu0 %v786
      %v788 = vpop.f32.mrb[0].mxu0
      %v789 = vadd.f32 %v670, %v788
      %v790 = vpop.f32.mrb[0].mxu0
      %791 = vdwg.mxu0
      %792 = vmatprep.subr.mxu0 0.0
      %v793 = vand.u32 %v372, 4294901760
      %794 = vmatpush1.msra.mxu0 %v793
      %795 = vmatprep.subr.mxu0 0.0
      %v796 = vand.u32 %v373, 4294901760
      %797 = vmatpush1.msra.mxu0 %v796
      %798 = vmatprep.subr.mxu0 0.0
      %v799 = vand.u32 %v374, 4294901760
      %800 = vmatpush1.msra.mxu0 %v799
      %801 = vmatprep.subr.mxu0 0.0
      %v802 = vand.u32 %v375, 4294901760
      %803 = vmatpush1.msra.mxu0 %v802
      %804 = vmatprep.subr.mxu0 0.0
      %v805 = vand.u32 %v376, 4294901760
      %806 = vmatpush1.msra.mxu0 %v805
      %807 = vmatprep.subr.mxu0 0.0
      %v808 = vand.u32 %v377, 4294901760
      %809 = vmatpush1.msra.mxu0 %v808
      %810 = vmatprep.subr.mxu0 0.0
      %v811 = vand.u32 %v378, 4294901760
      %812 = vmatpush1.msra.mxu0 %v811
      %813 = vmatprep.subr.mxu0 0.0
      %v814 = vand.u32 %v379, 4294901760
      %815 = vmatpush1.msra.mxu0 %v814
      %816 = vmatprep.subr.mxu0 0.0
      %v817 = vand.u32 %v380, 4294901760
      %818 = vmatpush1.msra.mxu0 %v817
      %819 = vmatprep.subr.mxu0 0.0
      %v820 = vand.u32 %v381, 4294901760
      %821 = vmatpush1.msra.mxu0 %v820
      %822 = vmatprep.subr.mxu0 0.0
      %v823 = vand.u32 %v382, 4294901760
      %824 = vmatpush1.msra.mxu0 %v823
      %825 = vmatprep.subr.mxu0 0.0
      %v826 = vand.u32 %v383, 4294901760
      %827 = vmatpush1.msra.mxu0 %v826
      %828 = vmatprep.subr.mxu0 0.0
      %v829 = vand.u32 %v399, 4294901760
      %830 = vmatpush1.msra.mxu0 %v829
      %831 = vmatprep.subr.mxu0 0.0
      %832 = vmatpush1.msra.mxu0 0.0
      %833 = vmatprep.subr.mxu0 0.0
      %834 = vmatpush1.msra.mxu0 0.0
      %835 = vmatprep.subr.mxu0 0.0
      %836 = vmatpush1.msra.mxu0 0.0
      %837 = vmatprep.subr.mxu0 0.0
      %838 = vmatpush1.msra.mxu0 0.0
      %839 = vmatprep.subr.mxu0 0.0
      %840 = vmatpush1.msra.mxu0 0.0
      %841 = vmatprep.subr.mxu0 0.0
      %842 = vmatpush1.msra.mxu0 0.0
      %843 = vmatprep.subr.mxu0 0.0
      %844 = vmatpush1.msra.mxu0 0.0
      %845 = vmatprep.subr.mxu0 0.0
      %846 = vmatpush1.msra.mxu0 0.0
      %847 = vmatprep.subr.mxu0 0.0
      %848 = vmatpush1.msra.mxu0 0.0
      %849 = vmatprep.subr.mxu0 0.0
      %850 = vmatpush1.msra.mxu0 0.0
      %851 = vmatprep.subr.mxu0 0.0
      %852 = vmatpush1.msra.mxu0 0.0
      %853 = vmatprep.subr.mxu0 0.0
      %854 = vmatpush1.msra.mxu0 0.0
      %855 = vmatprep.subr.mxu0 0.0
      %856 = vmatpush1.msra.mxu0 0.0
      %857 = vmatprep.subr.mxu0 0.0
      %858 = vmatpush1.msra.mxu0 0.0
      %859 = vmatprep.subr.mxu0 0.0
      %860 = vmatpush1.msra.mxu0 0.0
      %861 = vmatprep.subr.mxu0 0.0
      %862 = vmatpush1.msra.mxu0 0.0
      %863 = vmatprep.subr.mxu0 0.0
      %864 = vmatpush1.msra.mxu0 0.0
      %865 = vmatprep.subr.mxu0 0.0
      %866 = vmatpush1.msra.mxu0 0.0
      %867 = vmatprep.subr.mxu0 0.0
      %868 = vmatpush1.msra.mxu0 0.0
      %869 = vmatprep.mubr.f32.mxu0 0.0
      %v870 = vand.u32 %v386, 4294901760
      %v871 = vsub.f32 %v386, %v870
      %v872 = vand.u32 %v871, 4294901760
      %873 = vmatmul.mubr.f32.gmra.mrb[0].mxu0 %v872
      %v874 = vpop.f32.mrb[0].mxu0
      %v875 = vadd.f32 %v768, %v874
      %v876 = vpop.f32.mrb[0].mxu0
      %877 = vmatprep.mubr.f32.mxu0 0.0
      %v878 = vand.u32 %v389, 4294901760
      %v879 = vsub.f32 %v389, %v878
      %v880 = vand.u32 %v879, 4294901760
      %881 = vmatmul.mubr.f32.gmra.mrb[0].mxu0 %v880
      %v882 = vpop.f32.mrb[0].mxu0
      %v883 = vadd.f32 %v775, %v882
      %v884 = vpop.f32.mrb[0].mxu0
      %885 = vmatprep.mubr.f32.mxu0 0.0
      %v886 = vand.u32 %v392, 4294901760
      %v887 = vsub.f32 %v392, %v886
      %v888 = vand.u32 %v887, 4294901760
      %889 = vmatmul.mubr.f32.gmra.mrb[0].mxu0 %v888
      %v890 = vpop.f32.mrb[0].mxu0
      %v891 = vadd.f32 %v782, %v890
      %v892 = vpop.f32.mrb[0].mxu0
      %893 = vmatprep.mubr.f32.mxu0 0.0
      %v894 = vand.u32 %v395, 4294901760
      %v895 = vsub.f32 %v395, %v894
      %v896 = vand.u32 %v895, 4294901760
      %897 = vmatmul.mubr.f32.gmra.mrb[0].mxu0 %v896
      %v898 = vpop.f32.mrb[0].mxu0
      %v899 = vadd.f32 %v789, %v898
      %v900 = vpop.f32.mrb[0].mxu0
      %901 = vdwg.mxu0
      %902 = vmatprep.subr.mxu0 0.0
      %v903 = vand.u32 %v372, 4294901760
      %v904 = vsub.f32 %v372, %v903
      %v905 = vand.u32 %v904, 4294901760
      %906 = vmatpush1.msra.mxu0 %v905
      %907 = vmatprep.subr.mxu0 0.0
      %v908 = vand.u32 %v373, 4294901760
      %v909 = vsub.f32 %v373, %v908
      %v910 = vand.u32 %v909, 4294901760
      %911 = vmatpush1.msra.mxu0 %v910
      %912 = vmatprep.subr.mxu0 0.0
      %v913 = vand.u32 %v374, 4294901760
      %v914 = vsub.f32 %v374, %v913
      %v915 = vand.u32 %v914, 4294901760
      %916 = vmatpush1.msra.mxu0 %v915
      %917 = vmatprep.subr.mxu0 0.0
      %v918 = vand.u32 %v375, 4294901760
      %v919 = vsub.f32 %v375, %v918
      %v920 = vand.u32 %v919, 4294901760
      %921 = vmatpush1.msra.mxu0 %v920
      %922 = vmatprep.subr.mxu0 0.0
      %v923 = vand.u32 %v376, 4294901760
      %v924 = vsub.f32 %v376, %v923
      %v925 = vand.u32 %v924, 4294901760
      %926 = vmatpush1.msra.mxu0 %v925
      %927 = vmatprep.subr.mxu0 0.0
      %v928 = vand.u32 %v377, 4294901760
      %v929 = vsub.f32 %v377, %v928
      %v930 = vand.u32 %v929, 4294901760
      %931 = vmatpush1.msra.mxu0 %v930
      %932 = vmatprep.subr.mxu0 0.0
      %v933 = vand.u32 %v378, 4294901760
      %v934 = vsub.f32 %v378, %v933
      %v935 = vand.u32 %v934, 4294901760
      %936 = vmatpush1.msra.mxu0 %v935
      %937 = vmatprep.subr.mxu0 0.0
      %v938 = vand.u32 %v379, 4294901760
      %v939 = vsub.f32 %v379, %v938
      %v940 = vand.u32 %v939, 4294901760
      %941 = vmatpush1.msra.mxu0 %v940
      %942 = vmatprep.subr.mxu0 0.0
      %v943 = vand.u32 %v380, 4294901760
      %v944 = vsub.f32 %v380, %v943
      %v945 = vand.u32 %v944, 4294901760
      %946 = vmatpush1.msra.mxu0 %v945
      %947 = vmatprep.subr.mxu0 0.0
      %v948 = vand.u32 %v381, 4294901760
      %v949 = vsub.f32 %v381, %v948
      %v950 = vand.u32 %v949, 4294901760
      %951 = vmatpush1.msra.mxu0 %v950
      %952 = vmatprep.subr.mxu0 0.0
      %v953 = vand.u32 %v382, 4294901760
      %v954 = vsub.f32 %v382, %v953
      %v955 = vand.u32 %v954, 4294901760
      %956 = vmatpush1.msra.mxu0 %v955
      %957 = vmatprep.subr.mxu0 0.0
      %v958 = vand.u32 %v383, 4294901760
      %v959 = vsub.f32 %v383, %v958
      %v960 = vand.u32 %v959, 4294901760
      %961 = vmatpush1.msra.mxu0 %v960
      %962 = vmatprep.subr.mxu0 0.0
      %v963 = vand.u32 %v399, 4294901760
      %v964 = vsub.f32 %v399, %v963
      %v965 = vand.u32 %v964, 4294901760
      %966 = vmatpush1.msra.mxu0 %v965
      %967 = vmatprep.subr.mxu0 0.0
      %968 = vmatpush1.msra.mxu0 0.0
      %969 = vmatprep.subr.mxu0 0.0
      %970 = vmatpush1.msra.mxu0 0.0
      %971 = vmatprep.subr.mxu0 0.0
      %972 = vmatpush1.msra.mxu0 0.0
      %973 = vmatprep.subr.mxu0 0.0
      %974 = vmatpush1.msra.mxu0 0.0
      %975 = vmatprep.subr.mxu0 0.0
      %976 = vmatpush1.msra.mxu0 0.0
      %977 = vmatprep.subr.mxu0 0.0
      %978 = vmatpush1.msra.mxu0 0.0
      %979 = vmatprep.subr.mxu0 0.0
      %980 = vmatpush1.msra.mxu0 0.0
      %981 = vmatprep.subr.mxu0 0.0
      %982 = vmatpush1.msra.mxu0 0.0
      %983 = vmatprep.subr.mxu0 0.0
      %984 = vmatpush1.msra.mxu0 0.0
      %985 = vmatprep.subr.mxu0 0.0
      %986 = vmatpush1.msra.mxu0 0.0
      %987 = vmatprep.subr.mxu0 0.0
      %988 = vmatpush1.msra.mxu0 0.0
      %989 = vmatprep.subr.mxu0 0.0
      %990 = vmatpush1.msra.mxu0 0.0
      %991 = vmatprep.subr.mxu0 0.0
      %992 = vmatpush1.msra.mxu0 0.0
      %993 = vmatprep.subr.mxu0 0.0
      %994 = vmatpush1.msra.mxu0 0.0
      %995 = vmatprep.subr.mxu0 0.0
      %996 = vmatpush1.msra.mxu0 0.0
      %997 = vmatprep.subr.mxu0 0.0
      %998 = vmatpush1.msra.mxu0 0.0
      %999 = vmatprep.subr.mxu0 0.0
      %1000 = vmatpush1.msra.mxu0 0.0
      %1001 = vmatprep.subr.mxu0 0.0
      %1002 = vmatpush1.msra.mxu0 0.0
      %1003 = vmatprep.subr.mxu0 0.0
      %1004 = vmatpush1.msra.mxu0 0.0
      %1005 = vmatprep.mubr.f32.mxu0 0.0
      %v1006 = vand.u32 %v386, 4294901760
      %1007 = vmatmul.mubr.f32.gmra.mrb[0].mxu0 %v1006
      %v1008 = vpop.f32.mrb[0].mxu0
      %v1009 = vadd.f32 %v875, %v1008
      %v1010 = vpop.f32.mrb[0].mxu0
      %1011 = vmatprep.mubr.f32.mxu0 0.0
      %v1012 = vand.u32 %v389, 4294901760
      %1013 = vmatmul.mubr.f32.gmra.mrb[0].mxu0 %v1012
      %v1014 = vpop.f32.mrb[0].mxu0
      %v1015 = vadd.f32 %v883, %v1014
      %v1016 = vpop.f32.mrb[0].mxu0
      %1017 = vmatprep.mubr.f32.mxu0 0.0
      %v1018 = vand.u32 %v392, 4294901760
      %1019 = vmatmul.mubr.f32.gmra.mrb[0].mxu0 %v1018
      %v1020 = vpop.f32.mrb[0].mxu0
      %v1021 = vadd.f32 %v891, %v1020
      %v1022 = vpop.f32.mrb[0].mxu0
      %1023 = vmatprep.mubr.f32.mxu0 0.0
      %v1024 = vand.u32 %v395, 4294901760
      %1025 = vmatmul.mubr.f32.gmra.mrb[0].mxu0 %v1024
      %v1026 = vpop.f32.mrb[0].mxu0
      %v1027 = vadd.f32 %v899, %v1026
      %v1028 = vpop.f32.mrb[0].mxu0
      %1029 = vdwg.mxu0
      %1030 = vmatprep.subr.mxu0 0.0
      %v1031 = vand.u32 %v372, 4294901760
      %1032 = vmatpush1.msra.mxu0 %v1031
      %1033 = vmatprep.subr.mxu0 0.0
      %v1034 = vand.u32 %v373, 4294901760
      %1035 = vmatpush1.msra.mxu0 %v1034
      %1036 = vmatprep.subr.mxu0 0.0
      %v1037 = vand.u32 %v374, 4294901760
      %1038 = vmatpush1.msra.mxu0 %v1037
      %1039 = vmatprep.subr.mxu0 0.0
      %v1040 = vand.u32 %v375, 4294901760
      %1041 = vmatpush1.msra.mxu0 %v1040
      %1042 = vmatprep.subr.mxu0 0.0
      %v1043 = vand.u32 %v376, 4294901760
      %1044 = vmatpush1.msra.mxu0 %v1043
      %1045 = vmatprep.subr.mxu0 0.0
      %v1046 = vand.u32 %v377, 4294901760
      %1047 = vmatpush1.msra.mxu0 %v1046
      %1048 = vmatprep.subr.mxu0 0.0
      %v1049 = vand.u32 %v378, 4294901760
      %1050 = vmatpush1.msra.mxu0 %v1049
      %1051 = vmatprep.subr.mxu0 0.0
      %v1052 = vand.u32 %v379, 4294901760
      %1053 = vmatpush1.msra.mxu0 %v1052
      %1054 = vmatprep.subr.mxu0 0.0
      %v1055 = vand.u32 %v380, 4294901760
      %1056 = vmatpush1.msra.mxu0 %v1055
      %1057 = vmatprep.subr.mxu0 0.0
      %v1058 = vand.u32 %v381, 4294901760
      %1059 = vmatpush1.msra.mxu0 %v1058
      %1060 = vmatprep.subr.mxu0 0.0
      %v1061 = vand.u32 %v382, 4294901760
      %1062 = vmatpush1.msra.mxu0 %v1061
      %1063 = vmatprep.subr.mxu0 0.0
      %v1064 = vand.u32 %v383, 4294901760
      %1065 = vmatpush1.msra.mxu0 %v1064
      %1066 = vmatprep.subr.mxu0 0.0
      %v1067 = vand.u32 %v399, 4294901760
      %1068 = vmatpush1.msra.mxu0 %v1067
      %1069 = vmatprep.subr.mxu0 0.0
      %1070 = vmatpush1.msra.mxu0 0.0
      %1071 = vmatprep.subr.mxu0 0.0
      %1072 = vmatpush1.msra.mxu0 0.0
      %1073 = vmatprep.subr.mxu0 0.0
      %1074 = vmatpush1.msra.mxu0 0.0
      %1075 = vmatprep.subr.mxu0 0.0
      %1076 = vmatpush1.msra.mxu0 0.0
      %1077 = vmatprep.subr.mxu0 0.0
      %1078 = vmatpush1.msra.mxu0 0.0
      %1079 = vmatprep.subr.mxu0 0.0
      %1080 = vmatpush1.msra.mxu0 0.0
      %1081 = vmatprep.subr.mxu0 0.0
      %1082 = vmatpush1.msra.mxu0 0.0
      %1083 = vmatprep.subr.mxu0 0.0
      %1084 = vmatpush1.msra.mxu0 0.0
      %1085 = vmatprep.subr.mxu0 0.0
      %1086 = vmatpush1.msra.mxu0 0.0
      %1087 = vmatprep.subr.mxu0 0.0
      %1088 = vmatpush1.msra.mxu0 0.0
      %1089 = vmatprep.subr.mxu0 0.0
      %1090 = vmatpush1.msra.mxu0 0.0
      %1091 = vmatprep.subr.mxu0 0.0
      %1092 = vmatpush1.msra.mxu0 0.0
      %1093 = vmatprep.subr.mxu0 0.0
      %1094 = vmatpush1.msra.mxu0 0.0
      %1095 = vmatprep.subr.mxu0 0.0
      %1096 = vmatpush1.msra.mxu0 0.0
      %1097 = vmatprep.subr.mxu0 0.0
      %1098 = vmatpush1.msra.mxu0 0.0
      %1099 = vmatprep.subr.mxu0 0.0
      %1100 = vmatpush1.msra.mxu0 0.0
      %1101 = vmatprep.subr.mxu0 0.0
      %1102 = vmatpush1.msra.mxu0 0.0
      %1103 = vmatprep.subr.mxu0 0.0
      %1104 = vmatpush1.msra.mxu0 0.0
      %1105 = vmatprep.subr.mxu0 0.0
      %1106 = vmatpush1.msra.mxu0 0.0
      %1107 = vmatprep.mubr.f32.mxu0 0.0
      %v1108 = vand.u32 %v386, 4294901760
      %1109 = vmatmul.mubr.f32.gmra.mrb[0].mxu0 %v1108
      %v1110 = vpop.f32.mrb[0].mxu0
      %v1111 = vadd.f32 %v1009, %v1110
      %v1112 = vpop.f32.mrb[0].mxu0
      %1113 = vmatprep.mubr.f32.mxu0 0.0
      %v1114 = vand.u32 %v389, 4294901760
      %1115 = vmatmul.mubr.f32.gmra.mrb[0].mxu0 %v1114
      %v1116 = vpop.f32.mrb[0].mxu0
      %v1117 = vadd.f32 %v1015, %v1116
      %v1118 = vpop.f32.mrb[0].mxu0
      %1119 = vmatprep.mubr.f32.mxu0 0.0
      %v1120 = vand.u32 %v392, 4294901760
      %1121 = vmatmul.mubr.f32.gmra.mrb[0].mxu0 %v1120
      %v1122 = vpop.f32.mrb[0].mxu0
      %v1123 = vadd.f32 %v1021, %v1122
      %v1124 = vpop.f32.mrb[0].mxu0
      %1125 = vmatprep.mubr.f32.mxu0 0.0
      %v1126 = vand.u32 %v395, 4294901760
      %1127 = vmatmul.mubr.f32.gmra.mrb[0].mxu0 %v1126
      %v1128 = vpop.f32.mrb[0].mxu0
      %v1129 = vadd.f32 %v1027, %v1128
      %v1130 = vpop.f32.mrb[0].mxu0
      %1131 = vdwg.mxu0
      %s1132 = scalar_lea.vmem %s1, 312
      %v1133 = vld [vmem:[%s1132] sm:$0xff]
      %v1134 = vld [vmem:[%s1132 + $0x8] sm:$0xff]
      %v1135 = vld [vmem:[%s1132 + $0x10] sm:$0xff]
      %v1136 = vld [vmem:[%s1132 + $0x18] sm:$0xff]
      %v1137 = vld [vmem:[%s1132 + $0x20] sm:$0xff]
      %v1138 = vld [vmem:[%s1132 + $0x28] sm:$0xff]
      %v1139 = vld [vmem:[%s1132 + $0x30] sm:$0xff]
      %v1140 = vld [vmem:[%s1132 + $0x38] sm:$0xff]
      %v1141 = vld [vmem:[%s1132 + $0x40] sm:$0xff]
      %v1142 = vld [vmem:[%s1132 + $0x48] sm:$0xff]
      %v1143 = vld [vmem:[%s1132 + $0x50] sm:$0xff]
      %v1144 = vld [vmem:[%s1132 + $0x58] sm:$0xff]
      %v1145 = vld [vmem:[%s1132 + $0x60] sm:$0x3f]
      %v1147 = vsel %vm397, %v1145, 0
      %1149 = vmatprep.subr.mxu0 0.0
      %v1150 = vand.u32 %v1133, 4294901760
      %1151 = vmatpush1.msra.mxu0 %v1150
      %1152 = vmatprep.subr.mxu0 0.0
      %v1153 = vand.u32 %v1134, 4294901760
      %1154 = vmatpush1.msra.mxu0 %v1153
      %1155 = vmatprep.subr.mxu0 0.0
      %v1156 = vand.u32 %v1135, 4294901760
      %1157 = vmatpush1.msra.mxu0 %v1156
      %1158 = vmatprep.subr.mxu0 0.0
      %v1159 = vand.u32 %v1136, 4294901760
      %1160 = vmatpush1.msra.mxu0 %v1159
      %1161 = vmatprep.subr.mxu0 0.0
      %v1162 = vand.u32 %v1137, 4294901760
      %1163 = vmatpush1.msra.mxu0 %v1162
      %1164 = vmatprep.subr.mxu0 0.0
      %v1165 = vand.u32 %v1138, 4294901760
      %1166 = vmatpush1.msra.mxu0 %v1165
      %1167 = vmatprep.subr.mxu0 0.0
      %v1168 = vand.u32 %v1139, 4294901760
      %1169 = vmatpush1.msra.mxu0 %v1168
      %1170 = vmatprep.subr.mxu0 0.0
      %v1171 = vand.u32 %v1140, 4294901760
      %1172 = vmatpush1.msra.mxu0 %v1171
      %1173 = vmatprep.subr.mxu0 0.0
      %v1174 = vand.u32 %v1141, 4294901760
      %1175 = vmatpush1.msra.mxu0 %v1174
      %1176 = vmatprep.subr.mxu0 0.0
      %v1177 = vand.u32 %v1142, 4294901760
      %1178 = vmatpush1.msra.mxu0 %v1177
      %1179 = vmatprep.subr.mxu0 0.0
      %v1180 = vand.u32 %v1143, 4294901760
      %1181 = vmatpush1.msra.mxu0 %v1180
      %1182 = vmatprep.subr.mxu0 0.0
      %v1183 = vand.u32 %v1144, 4294901760
      %1184 = vmatpush1.msra.mxu0 %v1183
      %1185 = vmatprep.subr.mxu0 0.0
      %v1186 = vand.u32 %v1147, 4294901760
      %1187 = vmatpush1.msra.mxu0 %v1186
      %1188 = vmatprep.subr.mxu0 0.0
      %1189 = vmatpush1.msra.mxu0 0.0
      %1190 = vmatprep.subr.mxu0 0.0
      %1191 = vmatpush1.msra.mxu0 0.0
      %1192 = vmatprep.subr.mxu0 0.0
      %1193 = vmatpush1.msra.mxu0 0.0
      %1194 = vmatprep.subr.mxu0 0.0
      %1195 = vmatpush1.msra.mxu0 0.0
      %1196 = vmatprep.subr.mxu0 0.0
      %1197 = vmatpush1.msra.mxu0 0.0
      %1198 = vmatprep.subr.mxu0 0.0
      %1199 = vmatpush1.msra.mxu0 0.0
      %1200 = vmatprep.subr.mxu0 0.0
      %1201 = vmatpush1.msra.mxu0 0.0
      %1202 = vmatprep.subr.mxu0 0.0
      %1203 = vmatpush1.msra.mxu0 0.0
      %1204 = vmatprep.subr.mxu0 0.0
      %1205 = vmatpush1.msra.mxu0 0.0
      %1206 = vmatprep.subr.mxu0 0.0
      %1207 = vmatpush1.msra.mxu0 0.0
      %1208 = vmatprep.subr.mxu0 0.0
      %1209 = vmatpush1.msra.mxu0 0.0
      %1210 = vmatprep.subr.mxu0 0.0
      %1211 = vmatpush1.msra.mxu0 0.0
      %1212 = vmatprep.subr.mxu0 0.0
      %1213 = vmatpush1.msra.mxu0 0.0
      %1214 = vmatprep.subr.mxu0 0.0
      %1215 = vmatpush1.msra.mxu0 0.0
      %1216 = vmatprep.subr.mxu0 0.0
      %1217 = vmatpush1.msra.mxu0 0.0
      %1218 = vmatprep.subr.mxu0 0.0
      %1219 = vmatpush1.msra.mxu0 0.0
      %1220 = vmatprep.subr.mxu0 0.0
      %1221 = vmatpush1.msra.mxu0 0.0
      %1222 = vmatprep.subr.mxu0 0.0
      %1223 = vmatpush1.msra.mxu0 0.0
      %1224 = vmatprep.subr.mxu0 0.0
      %1225 = vmatpush1.msra.mxu0 0.0
      %1226 = vmatprep.mubr.f32.mxu0 0.0
      %v1227 = vand.u32 %v386, 4294901760
      %v1228 = vsub.f32 %v386, %v1227
      %v1229 = vand.u32 %v1228, 4294901760
      %v1230 = vsub.f32 %v1228, %v1229
      %v1231 = vand.u32 %v1230, 4294901760
      %1232 = vmatmul.mubr.f32.gmra.mrb[0].mxu0 %v1231
      %v1233 = vpop.f32.mrb[0].mxu0
      %v1234 = vadd.f32 0.0, %v1233
      %v1235 = vpop.f32.mrb[0].mxu0
      %1236 = vmatprep.mubr.f32.mxu0 0.0
      %v1237 = vand.u32 %v389, 4294901760
      %v1238 = vsub.f32 %v389, %v1237
      %v1239 = vand.u32 %v1238, 4294901760
      %v1240 = vsub.f32 %v1238, %v1239
      %v1241 = vand.u32 %v1240, 4294901760
      %1242 = vmatmul.mubr.f32.gmra.mrb[0].mxu0 %v1241
      %v1243 = vpop.f32.mrb[0].mxu0
      %v1244 = vadd.f32 0.0, %v1243
      %v1245 = vpop.f32.mrb[0].mxu0
      %1246 = vmatprep.mubr.f32.mxu0 0.0
      %v1247 = vand.u32 %v392, 4294901760
      %v1248 = vsub.f32 %v392, %v1247
      %v1249 = vand.u32 %v1248, 4294901760
      %v1250 = vsub.f32 %v1248, %v1249
      %v1251 = vand.u32 %v1250, 4294901760
      %1252 = vmatmul.mubr.f32.gmra.mrb[0].mxu0 %v1251
      %v1253 = vpop.f32.mrb[0].mxu0
      %v1254 = vadd.f32 0.0, %v1253
      %v1255 = vpop.f32.mrb[0].mxu0
      %1256 = vmatprep.mubr.f32.mxu0 0.0
      %v1257 = vand.u32 %v395, 4294901760
      %v1258 = vsub.f32 %v395, %v1257
      %v1259 = vand.u32 %v1258, 4294901760
      %v1260 = vsub.f32 %v1258, %v1259
      %v1261 = vand.u32 %v1260, 4294901760
      %1262 = vmatmul.mubr.f32.gmra.mrb[0].mxu0 %v1261
      %v1263 = vpop.f32.mrb[0].mxu0
      %v1264 = vadd.f32 0.0, %v1263
      %v1265 = vpop.f32.mrb[0].mxu0
      %1266 = vdwg.mxu0
      %1267 = vmatprep.subr.mxu0 0.0
      %v1268 = vand.u32 %v1133, 4294901760
      %v1269 = vsub.f32 %v1133, %v1268
      %v1270 = vand.u32 %v1269, 4294901760
      %v1271 = vsub.f32 %v1269, %v1270
      %v1272 = vand.u32 %v1271, 4294901760
      %1273 = vmatpush1.msra.mxu0 %v1272
      %1274 = vmatprep.subr.mxu0 0.0
      %v1275 = vand.u32 %v1134, 4294901760
      %v1276 = vsub.f32 %v1134, %v1275
      %v1277 = vand.u32 %v1276, 4294901760
      %v1278 = vsub.f32 %v1276, %v1277
      %v1279 = vand.u32 %v1278, 4294901760
      %1280 = vmatpush1.msra.mxu0 %v1279
      %1281 = vmatprep.subr.mxu0 0.0
      %v1282 = vand.u32 %v1135, 4294901760
      %v1283 = vsub.f32 %v1135, %v1282
      %v1284 = vand.u32 %v1283, 4294901760
      %v1285 = vsub.f32 %v1283, %v1284
      %v1286 = vand.u32 %v1285, 4294901760
      %1287 = vmatpush1.msra.mxu0 %v1286
      %1288 = vmatprep.subr.mxu0 0.0
      %v1289 = vand.u32 %v1136, 4294901760
      %v1290 = vsub.f32 %v1136, %v1289
      %v1291 = vand.u32 %v1290, 4294901760
      %v1292 = vsub.f32 %v1290, %v1291
      %v1293 = vand.u32 %v1292, 4294901760
      %1294 = vmatpush1.msra.mxu0 %v1293
      %1295 = vmatprep.subr.mxu0 0.0
      %v1296 = vand.u32 %v1137, 4294901760
      %v1297 = vsub.f32 %v1137, %v1296
      %v1298 = vand.u32 %v1297, 4294901760
      %v1299 = vsub.f32 %v1297, %v1298
      %v1300 = vand.u32 %v1299, 4294901760
      %1301 = vmatpush1.msra.mxu0 %v1300
      %1302 = vmatprep.subr.mxu0 0.0
      %v1303 = vand.u32 %v1138, 4294901760
      %v1304 = vsub.f32 %v1138, %v1303
      %v1305 = vand.u32 %v1304, 4294901760
      %v1306 = vsub.f32 %v1304, %v1305
      %v1307 = vand.u32 %v1306, 4294901760
      %1308 = vmatpush1.msra.mxu0 %v1307
      %1309 = vmatprep.subr.mxu0 0.0
      %v1310 = vand.u32 %v1139, 4294901760
      %v1311 = vsub.f32 %v1139, %v1310
      %v1312 = vand.u32 %v1311, 4294901760
      %v1313 = vsub.f32 %v1311, %v1312
      %v1314 = vand.u32 %v1313, 4294901760
      %1315 = vmatpush1.msra.mxu0 %v1314
      %1316 = vmatprep.subr.mxu0 0.0
      %v1317 = vand.u32 %v1140, 4294901760
      %v1318 = vsub.f32 %v1140, %v1317
      %v1319 = vand.u32 %v1318, 4294901760
      %v1320 = vsub.f32 %v1318, %v1319
      %v1321 = vand.u32 %v1320, 4294901760
      %1322 = vmatpush1.msra.mxu0 %v1321
      %1323 = vmatprep.subr.mxu0 0.0
      %v1324 = vand.u32 %v1141, 4294901760
      %v1325 = vsub.f32 %v1141, %v1324
      %v1326 = vand.u32 %v1325, 4294901760
      %v1327 = vsub.f32 %v1325, %v1326
      %v1328 = vand.u32 %v1327, 4294901760
      %1329 = vmatpush1.msra.mxu0 %v1328
      %1330 = vmatprep.subr.mxu0 0.0
      %v1331 = vand.u32 %v1142, 4294901760
      %v1332 = vsub.f32 %v1142, %v1331
      %v1333 = vand.u32 %v1332, 4294901760
      %v1334 = vsub.f32 %v1332, %v1333
      %v1335 = vand.u32 %v1334, 4294901760
      %1336 = vmatpush1.msra.mxu0 %v1335
      %1337 = vmatprep.subr.mxu0 0.0
      %v1338 = vand.u32 %v1143, 4294901760
      %v1339 = vsub.f32 %v1143, %v1338
      %v1340 = vand.u32 %v1339, 4294901760
      %v1341 = vsub.f32 %v1339, %v1340
      %v1342 = vand.u32 %v1341, 4294901760
      %1343 = vmatpush1.msra.mxu0 %v1342
      %1344 = vmatprep.subr.mxu0 0.0
      %v1345 = vand.u32 %v1144, 4294901760
      %v1346 = vsub.f32 %v1144, %v1345
      %v1347 = vand.u32 %v1346, 4294901760
      %v1348 = vsub.f32 %v1346, %v1347
      %v1349 = vand.u32 %v1348, 4294901760
      %1350 = vmatpush1.msra.mxu0 %v1349
      %1351 = vmatprep.subr.mxu0 0.0
      %v1352 = vand.u32 %v1147, 4294901760
      %v1353 = vsub.f32 %v1147, %v1352
      %v1354 = vand.u32 %v1353, 4294901760
      %v1355 = vsub.f32 %v1353, %v1354
      %v1356 = vand.u32 %v1355, 4294901760
      %1357 = vmatpush1.msra.mxu0 %v1356
      %1358 = vmatprep.subr.mxu0 0.0
      %1359 = vmatpush1.msra.mxu0 0.0
      %1360 = vmatprep.subr.mxu0 0.0
      %1361 = vmatpush1.msra.mxu0 0.0
      %1362 = vmatprep.subr.mxu0 0.0
      %1363 = vmatpush1.msra.mxu0 0.0
      %1364 = vmatprep.subr.mxu0 0.0
      %1365 = vmatpush1.msra.mxu0 0.0
      %1366 = vmatprep.subr.mxu0 0.0
      %1367 = vmatpush1.msra.mxu0 0.0
      %1368 = vmatprep.subr.mxu0 0.0
      %1369 = vmatpush1.msra.mxu0 0.0
      %1370 = vmatprep.subr.mxu0 0.0
      %1371 = vmatpush1.msra.mxu0 0.0
      %1372 = vmatprep.subr.mxu0 0.0
      %1373 = vmatpush1.msra.mxu0 0.0
      %1374 = vmatprep.subr.mxu0 0.0
      %1375 = vmatpush1.msra.mxu0 0.0
      %1376 = vmatprep.subr.mxu0 0.0
      %1377 = vmatpush1.msra.mxu0 0.0
      %1378 = vmatprep.subr.mxu0 0.0
      %1379 = vmatpush1.msra.mxu0 0.0
      %1380 = vmatprep.subr.mxu0 0.0
      %1381 = vmatpush1.msra.mxu0 0.0
      %1382 = vmatprep.subr.mxu0 0.0
      %1383 = vmatpush1.msra.mxu0 0.0
      %1384 = vmatprep.subr.mxu0 0.0
      %1385 = vmatpush1.msra.mxu0 0.0
      %1386 = vmatprep.subr.mxu0 0.0
      %1387 = vmatpush1.msra.mxu0 0.0
      %1388 = vmatprep.subr.mxu0 0.0
      %1389 = vmatpush1.msra.mxu0 0.0
      %1390 = vmatprep.subr.mxu0 0.0
      %1391 = vmatpush1.msra.mxu0 0.0
      %1392 = vmatprep.subr.mxu0 0.0
      %1393 = vmatpush1.msra.mxu0 0.0
      %1394 = vmatprep.subr.mxu0 0.0
      %1395 = vmatpush1.msra.mxu0 0.0
      %1396 = vmatprep.mubr.f32.mxu0 0.0
      %v1397 = vand.u32 %v386, 4294901760
      %1398 = vmatmul.mubr.f32.gmra.mrb[0].mxu0 %v1397
      %v1399 = vpop.f32.mrb[0].mxu0
      %v1400 = vadd.f32 %v1234, %v1399
      %v1401 = vpop.f32.mrb[0].mxu0
      %1402 = vmatprep.mubr.f32.mxu0 0.0
      %v1403 = vand.u32 %v389, 4294901760
      %1404 = vmatmul.mubr.f32.gmra.mrb[0].mxu0 %v1403
      %v1405 = vpop.f32.mrb[0].mxu0
      %v1406 = vadd.f32 %v1244, %v1405
      %v1407 = vpop.f32.mrb[0].mxu0
      %1408 = vmatprep.mubr.f32.mxu0 0.0
      %v1409 = vand.u32 %v392, 4294901760
      %1410 = vmatmul.mubr.f32.gmra.mrb[0].mxu0 %v1409
      %v1411 = vpop.f32.mrb[0].mxu0
      %v1412 = vadd.f32 %v1254, %v1411
      %v1413 = vpop.f32.mrb[0].mxu0
      %1414 = vmatprep.mubr.f32.mxu0 0.0
      %v1415 = vand.u32 %v395, 4294901760
      %1416 = vmatmul.mubr.f32.gmra.mrb[0].mxu0 %v1415
      %v1417 = vpop.f32.mrb[0].mxu0
      %v1418 = vadd.f32 %v1264, %v1417
      %v1419 = vpop.f32.mrb[0].mxu0
      %1420 = vdwg.mxu0
      %1421 = vmatprep.subr.mxu0 0.0
      %v1422 = vand.u32 %v1133, 4294901760
      %v1423 = vsub.f32 %v1133, %v1422
      %1424 = vmatpush1.msra.mxu0 %v1423
      %1425 = vmatprep.subr.mxu0 0.0
      %v1426 = vand.u32 %v1134, 4294901760
      %v1427 = vsub.f32 %v1134, %v1426
      %1428 = vmatpush1.msra.mxu0 %v1427
      %1429 = vmatprep.subr.mxu0 0.0
      %v1430 = vand.u32 %v1135, 4294901760
      %v1431 = vsub.f32 %v1135, %v1430
      %1432 = vmatpush1.msra.mxu0 %v1431
      %1433 = vmatprep.subr.mxu0 0.0
      %v1434 = vand.u32 %v1136, 4294901760
      %v1435 = vsub.f32 %v1136, %v1434
      %1436 = vmatpush1.msra.mxu0 %v1435
      %1437 = vmatprep.subr.mxu0 0.0
      %v1438 = vand.u32 %v1137, 4294901760
      %v1439 = vsub.f32 %v1137, %v1438
      %1440 = vmatpush1.msra.mxu0 %v1439
      %1441 = vmatprep.subr.mxu0 0.0
      %v1442 = vand.u32 %v1138, 4294901760
      %v1443 = vsub.f32 %v1138, %v1442
      %1444 = vmatpush1.msra.mxu0 %v1443
      %1445 = vmatprep.subr.mxu0 0.0
      %v1446 = vand.u32 %v1139, 4294901760
      %v1447 = vsub.f32 %v1139, %v1446
      %1448 = vmatpush1.msra.mxu0 %v1447
      %1449 = vmatprep.subr.mxu0 0.0
      %v1450 = vand.u32 %v1140, 4294901760
      %v1451 = vsub.f32 %v1140, %v1450
      %1452 = vmatpush1.msra.mxu0 %v1451
      %1453 = vmatprep.subr.mxu0 0.0
      %v1454 = vand.u32 %v1141, 4294901760
      %v1455 = vsub.f32 %v1141, %v1454
      %1456 = vmatpush1.msra.mxu0 %v1455
      %1457 = vmatprep.subr.mxu0 0.0
      %v1458 = vand.u32 %v1142, 4294901760
      %v1459 = vsub.f32 %v1142, %v1458
      %1460 = vmatpush1.msra.mxu0 %v1459
      %1461 = vmatprep.subr.mxu0 0.0
      %v1462 = vand.u32 %v1143, 4294901760
      %v1463 = vsub.f32 %v1143, %v1462
      %1464 = vmatpush1.msra.mxu0 %v1463
      %1465 = vmatprep.subr.mxu0 0.0
      %v1466 = vand.u32 %v1144, 4294901760
      %v1467 = vsub.f32 %v1144, %v1466
      %1468 = vmatpush1.msra.mxu0 %v1467
      %1469 = vmatprep.subr.mxu0 0.0
      %v1470 = vand.u32 %v1147, 4294901760
      %v1471 = vsub.f32 %v1147, %v1470
      %1472 = vmatpush1.msra.mxu0 %v1471
      %1473 = vmatprep.subr.mxu0 0.0
      %1474 = vmatpush1.msra.mxu0 0.0
      %1475 = vmatprep.subr.mxu0 0.0
      %1476 = vmatpush1.msra.mxu0 0.0
      %1477 = vmatprep.subr.mxu0 0.0
      %1478 = vmatpush1.msra.mxu0 0.0
      %1479 = vmatprep.subr.mxu0 0.0
      %1480 = vmatpush1.msra.mxu0 0.0
      %1481 = vmatprep.subr.mxu0 0.0
      %1482 = vmatpush1.msra.mxu0 0.0
      %1483 = vmatprep.subr.mxu0 0.0
      %1484 = vmatpush1.msra.mxu0 0.0
      %1485 = vmatprep.subr.mxu0 0.0
      %1486 = vmatpush1.msra.mxu0 0.0
      %1487 = vmatprep.subr.mxu0 0.0
      %1488 = vmatpush1.msra.mxu0 0.0
      %1489 = vmatprep.subr.mxu0 0.0
      %1490 = vmatpush1.msra.mxu0 0.0
      %1491 = vmatprep.subr.mxu0 0.0
      %1492 = vmatpush1.msra.mxu0 0.0
      %1493 = vmatprep.subr.mxu0 0.0
      %1494 = vmatpush1.msra.mxu0 0.0
      %1495 = vmatprep.subr.mxu0 0.0
      %1496 = vmatpush1.msra.mxu0 0.0
      %1497 = vmatprep.subr.mxu0 0.0
      %1498 = vmatpush1.msra.mxu0 0.0
      %1499 = vmatprep.subr.mxu0 0.0
      %1500 = vmatpush1.msra.mxu0 0.0
      %1501 = vmatprep.subr.mxu0 0.0
      %1502 = vmatpush1.msra.mxu0 0.0
      %1503 = vmatprep.subr.mxu0 0.0
      %1504 = vmatpush1.msra.mxu0 0.0
      %1505 = vmatprep.subr.mxu0 0.0
      %1506 = vmatpush1.msra.mxu0 0.0
      %1507 = vmatprep.subr.mxu0 0.0
      %1508 = vmatpush1.msra.mxu0 0.0
      %1509 = vmatprep.subr.mxu0 0.0
      %1510 = vmatpush1.msra.mxu0 0.0
      %1511 = vmatprep.mubr.f32.mxu0 0.0
      %v1512 = vand.u32 %v386, 4294901760
      %v1513 = vsub.f32 %v386, %v1512
      %1514 = vmatmul.mubr.f32.gmra.mrb[0].mxu0 %v1513
      %v1515 = vpop.f32.mrb[0].mxu0
      %v1516 = vadd.f32 %v1400, %v1515
      %v1517 = vpop.f32.mrb[0].mxu0
      %1518 = vmatprep.mubr.f32.mxu0 0.0
      %v1519 = vand.u32 %v389, 4294901760
      %v1520 = vsub.f32 %v389, %v1519
      %1521 = vmatmul.mubr.f32.gmra.mrb[0].mxu0 %v1520
      %v1522 = vpop.f32.mrb[0].mxu0
      %v1523 = vadd.f32 %v1406, %v1522
      %v1524 = vpop.f32.mrb[0].mxu0
      %1525 = vmatprep.mubr.f32.mxu0 0.0
      %v1526 = vand.u32 %v392, 4294901760
      %v1527 = vsub.f32 %v392, %v1526
      %1528 = vmatmul.mubr.f32.gmra.mrb[0].mxu0 %v1527
      %v1529 = vpop.f32.mrb[0].mxu0
      %v1530 = vadd.f32 %v1412, %v1529
      %v1531 = vpop.f32.mrb[0].mxu0
      %1532 = vmatprep.mubr.f32.mxu0 0.0
      %v1533 = vand.u32 %v395, 4294901760
      %v1534 = vsub.f32 %v395, %v1533
      %1535 = vmatmul.mubr.f32.gmra.mrb[0].mxu0 %v1534
      %v1536 = vpop.f32.mrb[0].mxu0
      %v1537 = vadd.f32 %v1418, %v1536
      %v1538 = vpop.f32.mrb[0].mxu0
      %1539 = vdwg.mxu0
      %1540 = vmatprep.subr.mxu0 0.0
      %v1541 = vand.u32 %v1133, 4294901760
      %1542 = vmatpush1.msra.mxu0 %v1541
      %1543 = vmatprep.subr.mxu0 0.0
      %v1544 = vand.u32 %v1134, 4294901760
      %1545 = vmatpush1.msra.mxu0 %v1544
      %1546 = vmatprep.subr.mxu0 0.0
      %v1547 = vand.u32 %v1135, 4294901760
      %1548 = vmatpush1.msra.mxu0 %v1547
      %1549 = vmatprep.subr.mxu0 0.0
      %v1550 = vand.u32 %v1136, 4294901760
      %1551 = vmatpush1.msra.mxu0 %v1550
      %1552 = vmatprep.subr.mxu0 0.0
      %v1553 = vand.u32 %v1137, 4294901760
      %1554 = vmatpush1.msra.mxu0 %v1553
      %1555 = vmatprep.subr.mxu0 0.0
      %v1556 = vand.u32 %v1138, 4294901760
      %1557 = vmatpush1.msra.mxu0 %v1556
      %1558 = vmatprep.subr.mxu0 0.0
      %v1559 = vand.u32 %v1139, 4294901760
      %1560 = vmatpush1.msra.mxu0 %v1559
      %1561 = vmatprep.subr.mxu0 0.0
      %v1562 = vand.u32 %v1140, 4294901760
      %1563 = vmatpush1.msra.mxu0 %v1562
      %1564 = vmatprep.subr.mxu0 0.0
      %v1565 = vand.u32 %v1141, 4294901760
      %1566 = vmatpush1.msra.mxu0 %v1565
      %1567 = vmatprep.subr.mxu0 0.0
      %v1568 = vand.u32 %v1142, 4294901760
      %1569 = vmatpush1.msra.mxu0 %v1568
      %1570 = vmatprep.subr.mxu0 0.0
      %v1571 = vand.u32 %v1143, 4294901760
      %1572 = vmatpush1.msra.mxu0 %v1571
      %1573 = vmatprep.subr.mxu0 0.0
      %v1574 = vand.u32 %v1144, 4294901760
      %1575 = vmatpush1.msra.mxu0 %v1574
      %1576 = vmatprep.subr.mxu0 0.0
      %v1577 = vand.u32 %v1147, 4294901760
      %1578 = vmatpush1.msra.mxu0 %v1577
      %1579 = vmatprep.subr.mxu0 0.0
      %1580 = vmatpush1.msra.mxu0 0.0
      %1581 = vmatprep.subr.mxu0 0.0
      %1582 = vmatpush1.msra.mxu0 0.0
      %1583 = vmatprep.subr.mxu0 0.0
      %1584 = vmatpush1.msra.mxu0 0.0
      %1585 = vmatprep.subr.mxu0 0.0
      %1586 = vmatpush1.msra.mxu0 0.0
      %1587 = vmatprep.subr.mxu0 0.0
      %1588 = vmatpush1.msra.mxu0 0.0
      %1589 = vmatprep.subr.mxu0 0.0
      %1590 = vmatpush1.msra.mxu0 0.0
      %1591 = vmatprep.subr.mxu0 0.0
      %1592 = vmatpush1.msra.mxu0 0.0
      %1593 = vmatprep.subr.mxu0 0.0
      %1594 = vmatpush1.msra.mxu0 0.0
      %1595 = vmatprep.subr.mxu0 0.0
      %1596 = vmatpush1.msra.mxu0 0.0
      %1597 = vmatprep.subr.mxu0 0.0
      %1598 = vmatpush1.msra.mxu0 0.0
      %1599 = vmatprep.subr.mxu0 0.0
      %1600 = vmatpush1.msra.mxu0 0.0
      %1601 = vmatprep.subr.mxu0 0.0
      %1602 = vmatpush1.msra.mxu0 0.0
      %1603 = vmatprep.subr.mxu0 0.0
      %1604 = vmatpush1.msra.mxu0 0.0
      %1605 = vmatprep.subr.mxu0 0.0
      %1606 = vmatpush1.msra.mxu0 0.0
      %1607 = vmatprep.subr.mxu0 0.0
      %1608 = vmatpush1.msra.mxu0 0.0
      %1609 = vmatprep.subr.mxu0 0.0
      %1610 = vmatpush1.msra.mxu0 0.0
      %1611 = vmatprep.subr.mxu0 0.0
      %1612 = vmatpush1.msra.mxu0 0.0
      %1613 = vmatprep.subr.mxu0 0.0
      %1614 = vmatpush1.msra.mxu0 0.0
      %1615 = vmatprep.subr.mxu0 0.0
      %1616 = vmatpush1.msra.mxu0 0.0
      %1617 = vmatprep.mubr.f32.mxu0 0.0
      %v1618 = vand.u32 %v386, 4294901760
      %v1619 = vsub.f32 %v386, %v1618
      %v1620 = vand.u32 %v1619, 4294901760
      %1621 = vmatmul.mubr.f32.gmra.mrb[0].mxu0 %v1620
      %v1622 = vpop.f32.mrb[0].mxu0
      %v1623 = vadd.f32 %v1516, %v1622
      %v1624 = vpop.f32.mrb[0].mxu0
      %1625 = vmatprep.mubr.f32.mxu0 0.0
      %v1626 = vand.u32 %v389, 4294901760
      %v1627 = vsub.f32 %v389, %v1626
      %v1628 = vand.u32 %v1627, 4294901760
      %1629 = vmatmul.mubr.f32.gmra.mrb[0].mxu0 %v1628
      %v1630 = vpop.f32.mrb[0].mxu0
      %v1631 = vadd.f32 %v1523, %v1630
      %v1632 = vpop.f32.mrb[0].mxu0
      %1633 = vmatprep.mubr.f32.mxu0 0.0
      %v1634 = vand.u32 %v392, 4294901760
      %v1635 = vsub.f32 %v392, %v1634
      %v1636 = vand.u32 %v1635, 4294901760
      %1637 = vmatmul.mubr.f32.gmra.mrb[0].mxu0 %v1636
      %v1638 = vpop.f32.mrb[0].mxu0
      %v1639 = vadd.f32 %v1530, %v1638
      %v1640 = vpop.f32.mrb[0].mxu0
      %1641 = vmatprep.mubr.f32.mxu0 0.0
      %v1642 = vand.u32 %v395, 4294901760
      %v1643 = vsub.f32 %v395, %v1642
      %v1644 = vand.u32 %v1643, 4294901760
      %1645 = vmatmul.mubr.f32.gmra.mrb[0].mxu0 %v1644
      %v1646 = vpop.f32.mrb[0].mxu0
      %v1647 = vadd.f32 %v1537, %v1646
      %v1648 = vpop.f32.mrb[0].mxu0
      %1649 = vdwg.mxu0
      %1650 = vmatprep.subr.mxu0 0.0
      %v1651 = vand.u32 %v1133, 4294901760
      %v1652 = vsub.f32 %v1133, %v1651
      %v1653 = vand.u32 %v1652, 4294901760
      %1654 = vmatpush1.msra.mxu0 %v1653
      %1655 = vmatprep.subr.mxu0 0.0
      %v1656 = vand.u32 %v1134, 4294901760
      %v1657 = vsub.f32 %v1134, %v1656
      %v1658 = vand.u32 %v1657, 4294901760
      %1659 = vmatpush1.msra.mxu0 %v1658
      %1660 = vmatprep.subr.mxu0 0.0
      %v1661 = vand.u32 %v1135, 4294901760
      %v1662 = vsub.f32 %v1135, %v1661
      %v1663 = vand.u32 %v1662, 4294901760
      %1664 = vmatpush1.msra.mxu0 %v1663
      %1665 = vmatprep.subr.mxu0 0.0
      %v1666 = vand.u32 %v1136, 4294901760
      %v1667 = vsub.f32 %v1136, %v1666
      %v1668 = vand.u32 %v1667, 4294901760
      %1669 = vmatpush1.msra.mxu0 %v1668
      %1670 = vmatprep.subr.mxu0 0.0
      %v1671 = vand.u32 %v1137, 4294901760
      %v1672 = vsub.f32 %v1137, %v1671
      %v1673 = vand.u32 %v1672, 4294901760
      %1674 = vmatpush1.msra.mxu0 %v1673
      %1675 = vmatprep.subr.mxu0 0.0
      %v1676 = vand.u32 %v1138, 4294901760
      %v1677 = vsub.f32 %v1138, %v1676
      %v1678 = vand.u32 %v1677, 4294901760
      %1679 = vmatpush1.msra.mxu0 %v1678
      %1680 = vmatprep.subr.mxu0 0.0
      %v1681 = vand.u32 %v1139, 4294901760
      %v1682 = vsub.f32 %v1139, %v1681
      %v1683 = vand.u32 %v1682, 4294901760
      %1684 = vmatpush1.msra.mxu0 %v1683
      %1685 = vmatprep.subr.mxu0 0.0
      %v1686 = vand.u32 %v1140, 4294901760
      %v1687 = vsub.f32 %v1140, %v1686
      %v1688 = vand.u32 %v1687, 4294901760
      %1689 = vmatpush1.msra.mxu0 %v1688
      %1690 = vmatprep.subr.mxu0 0.0
      %v1691 = vand.u32 %v1141, 4294901760
      %v1692 = vsub.f32 %v1141, %v1691
      %v1693 = vand.u32 %v1692, 4294901760
      %1694 = vmatpush1.msra.mxu0 %v1693
      %1695 = vmatprep.subr.mxu0 0.0
      %v1696 = vand.u32 %v1142, 4294901760
      %v1697 = vsub.f32 %v1142, %v1696
      %v1698 = vand.u32 %v1697, 4294901760
      %1699 = vmatpush1.msra.mxu0 %v1698
      %1700 = vmatprep.subr.mxu0 0.0
      %v1701 = vand.u32 %v1143, 4294901760
      %v1702 = vsub.f32 %v1143, %v1701
      %v1703 = vand.u32 %v1702, 4294901760
      %1704 = vmatpush1.msra.mxu0 %v1703
      %1705 = vmatprep.subr.mxu0 0.0
      %v1706 = vand.u32 %v1144, 4294901760
      %v1707 = vsub.f32 %v1144, %v1706
      %v1708 = vand.u32 %v1707, 4294901760
      %1709 = vmatpush1.msra.mxu0 %v1708
      %1710 = vmatprep.subr.mxu0 0.0
      %v1711 = vand.u32 %v1147, 4294901760
      %v1712 = vsub.f32 %v1147, %v1711
      %v1713 = vand.u32 %v1712, 4294901760
      %1714 = vmatpush1.msra.mxu0 %v1713
      %1715 = vmatprep.subr.mxu0 0.0
      %1716 = vmatpush1.msra.mxu0 0.0
      %1717 = vmatprep.subr.mxu0 0.0
      %1718 = vmatpush1.msra.mxu0 0.0
      %1719 = vmatprep.subr.mxu0 0.0
      %1720 = vmatpush1.msra.mxu0 0.0
      %1721 = vmatprep.subr.mxu0 0.0
      %1722 = vmatpush1.msra.mxu0 0.0
      %1723 = vmatprep.subr.mxu0 0.0
      %1724 = vmatpush1.msra.mxu0 0.0
      %1725 = vmatprep.subr.mxu0 0.0
      %1726 = vmatpush1.msra.mxu0 0.0
      %1727 = vmatprep.subr.mxu0 0.0
      %1728 = vmatpush1.msra.mxu0 0.0
      %1729 = vmatprep.subr.mxu0 0.0
      %1730 = vmatpush1.msra.mxu0 0.0
      %1731 = vmatprep.subr.mxu0 0.0
      %1732 = vmatpush1.msra.mxu0 0.0
      %1733 = vmatprep.subr.mxu0 0.0
      %1734 = vmatpush1.msra.mxu0 0.0
      %1735 = vmatprep.subr.mxu0 0.0
      %1736 = vmatpush1.msra.mxu0 0.0
      %1737 = vmatprep.subr.mxu0 0.0
      %1738 = vmatpush1.msra.mxu0 0.0
      %1739 = vmatprep.subr.mxu0 0.0
      %1740 = vmatpush1.msra.mxu0 0.0
      %1741 = vmatprep.subr.mxu0 0.0
      %1742 = vmatpush1.msra.mxu0 0.0
      %1743 = vmatprep.subr.mxu0 0.0
      %1744 = vmatpush1.msra.mxu0 0.0
      %1745 = vmatprep.subr.mxu0 0.0
      %1746 = vmatpush1.msra.mxu0 0.0
      %1747 = vmatprep.subr.mxu0 0.0
      %1748 = vmatpush1.msra.mxu0 0.0
      %1749 = vmatprep.subr.mxu0 0.0
      %1750 = vmatpush1.msra.mxu0 0.0
      %1751 = vmatprep.subr.mxu0 0.0
      %1752 = vmatpush1.msra.mxu0 0.0
      %1753 = vmatprep.mubr.f32.mxu0 0.0
      %v1754 = vand.u32 %v386, 4294901760
      %1755 = vmatmul.mubr.f32.gmra.mrb[0].mxu0 %v1754
      %v1756 = vpop.f32.mrb[0].mxu0
      %v1757 = vadd.f32 %v1623, %v1756
      %v1758 = vpop.f32.mrb[0].mxu0
      %1759 = vmatprep.mubr.f32.mxu0 0.0
      %v1760 = vand.u32 %v389, 4294901760
      %1761 = vmatmul.mubr.f32.gmra.mrb[0].mxu0 %v1760
      %v1762 = vpop.f32.mrb[0].mxu0
      %v1763 = vadd.f32 %v1631, %v1762
      %v1764 = vpop.f32.mrb[0].mxu0
      %1765 = vmatprep.mubr.f32.mxu0 0.0
      %v1766 = vand.u32 %v392, 4294901760
      %1767 = vmatmul.mubr.f32.gmra.mrb[0].mxu0 %v1766
      %v1768 = vpop.f32.mrb[0].mxu0
      %v1769 = vadd.f32 %v1639, %v1768
      %v1770 = vpop.f32.mrb[0].mxu0
      %1771 = vmatprep.mubr.f32.mxu0 0.0
      %v1772 = vand.u32 %v395, 4294901760
      %1773 = vmatmul.mubr.f32.gmra.mrb[0].mxu0 %v1772
      %v1774 = vpop.f32.mrb[0].mxu0
      %v1775 = vadd.f32 %v1647, %v1774
      %v1776 = vpop.f32.mrb[0].mxu0
      %1777 = vdwg.mxu0
      %1778 = vmatprep.subr.mxu0 0.0
      %v1779 = vand.u32 %v1133, 4294901760
      %1780 = vmatpush1.msra.mxu0 %v1779
      %1781 = vmatprep.subr.mxu0 0.0
      %v1782 = vand.u32 %v1134, 4294901760
      %1783 = vmatpush1.msra.mxu0 %v1782
      %1784 = vmatprep.subr.mxu0 0.0
      %v1785 = vand.u32 %v1135, 4294901760
      %1786 = vmatpush1.msra.mxu0 %v1785
      %1787 = vmatprep.subr.mxu0 0.0
      %v1788 = vand.u32 %v1136, 4294901760
      %1789 = vmatpush1.msra.mxu0 %v1788
      %1790 = vmatprep.subr.mxu0 0.0
      %v1791 = vand.u32 %v1137, 4294901760
      %1792 = vmatpush1.msra.mxu0 %v1791
      %1793 = vmatprep.subr.mxu0 0.0
      %v1794 = vand.u32 %v1138, 4294901760
      %1795 = vmatpush1.msra.mxu0 %v1794
      %1796 = vmatprep.subr.mxu0 0.0
      %v1797 = vand.u32 %v1139, 4294901760
      %1798 = vmatpush1.msra.mxu0 %v1797
      %1799 = vmatprep.subr.mxu0 0.0
      %v1800 = vand.u32 %v1140, 4294901760
      %1801 = vmatpush1.msra.mxu0 %v1800
      %1802 = vmatprep.subr.mxu0 0.0
      %v1803 = vand.u32 %v1141, 4294901760
      %1804 = vmatpush1.msra.mxu0 %v1803
      %1805 = vmatprep.subr.mxu0 0.0
      %v1806 = vand.u32 %v1142, 4294901760
      %1807 = vmatpush1.msra.mxu0 %v1806
      %1808 = vmatprep.subr.mxu0 0.0
      %v1809 = vand.u32 %v1143, 4294901760
      %1810 = vmatpush1.msra.mxu0 %v1809
      %1811 = vmatprep.subr.mxu0 0.0
      %v1812 = vand.u32 %v1144, 4294901760
      %1813 = vmatpush1.msra.mxu0 %v1812
      %1814 = vmatprep.subr.mxu0 0.0
      %v1815 = vand.u32 %v1147, 4294901760
      %1816 = vmatpush1.msra.mxu0 %v1815
      %1817 = vmatprep.subr.mxu0 0.0
      %1818 = vmatpush1.msra.mxu0 0.0
      %1819 = vmatprep.subr.mxu0 0.0
      %1820 = vmatpush1.msra.mxu0 0.0
      %1821 = vmatprep.subr.mxu0 0.0
      %1822 = vmatpush1.msra.mxu0 0.0
      %1823 = vmatprep.subr.mxu0 0.0
      %1824 = vmatpush1.msra.mxu0 0.0
      %1825 = vmatprep.subr.mxu0 0.0
      %1826 = vmatpush1.msra.mxu0 0.0
      %1827 = vmatprep.subr.mxu0 0.0
      %1828 = vmatpush1.msra.mxu0 0.0
      %1829 = vmatprep.subr.mxu0 0.0
      %1830 = vmatpush1.msra.mxu0 0.0
      %1831 = vmatprep.subr.mxu0 0.0
      %1832 = vmatpush1.msra.mxu0 0.0
      %1833 = vmatprep.subr.mxu0 0.0
      %1834 = vmatpush1.msra.mxu0 0.0
      %1835 = vmatprep.subr.mxu0 0.0
      %1836 = vmatpush1.msra.mxu0 0.0
      %1837 = vmatprep.subr.mxu0 0.0
      %1838 = vmatpush1.msra.mxu0 0.0
      %1839 = vmatprep.subr.mxu0 0.0
      %1840 = vmatpush1.msra.mxu0 0.0
      %1841 = vmatprep.subr.mxu0 0.0
      %1842 = vmatpush1.msra.mxu0 0.0
      %1843 = vmatprep.subr.mxu0 0.0
      %1844 = vmatpush1.msra.mxu0 0.0
      %1845 = vmatprep.subr.mxu0 0.0
      %1846 = vmatpush1.msra.mxu0 0.0
      %1847 = vmatprep.subr.mxu0 0.0
      %1848 = vmatpush1.msra.mxu0 0.0
      %1849 = vmatprep.subr.mxu0 0.0
      %1850 = vmatpush1.msra.mxu0 0.0
      %1851 = vmatprep.subr.mxu0 0.0
      %1852 = vmatpush1.msra.mxu0 0.0
      %1853 = vmatprep.subr.mxu0 0.0
      %1854 = vmatpush1.msra.mxu0 0.0
      %1855 = vmatprep.mubr.f32.mxu0 0.0
      %v1856 = vand.u32 %v386, 4294901760
      %1857 = vmatmul.mubr.f32.gmra.mrb[0].mxu0 %v1856
      %v1858 = vpop.f32.mrb[0].mxu0
      %v1859 = vadd.f32 %v1757, %v1858
      %v1860 = vpop.f32.mrb[0].mxu0
      %1861 = vmatprep.mubr.f32.mxu0 0.0
      %v1862 = vand.u32 %v389, 4294901760
      %1863 = vmatmul.mubr.f32.gmra.mrb[0].mxu0 %v1862
      %v1864 = vpop.f32.mrb[0].mxu0
      %v1865 = vadd.f32 %v1763, %v1864
      %v1866 = vpop.f32.mrb[0].mxu0
      %1867 = vmatprep.mubr.f32.mxu0 0.0
      %v1868 = vand.u32 %v392, 4294901760
      %1869 = vmatmul.mubr.f32.gmra.mrb[0].mxu0 %v1868
      %v1870 = vpop.f32.mrb[0].mxu0
      %v1871 = vadd.f32 %v1769, %v1870
      %v1872 = vpop.f32.mrb[0].mxu0
      %1873 = vmatprep.mubr.f32.mxu0 0.0
      %v1874 = vand.u32 %v395, 4294901760
      %1875 = vmatmul.mubr.f32.gmra.mrb[0].mxu0 %v1874
      %v1876 = vpop.f32.mrb[0].mxu0
      %v1877 = vadd.f32 %v1775, %v1876
      %v1878 = vpop.f32.mrb[0].mxu0
      %1879 = vdwg.mxu0
      %v1881 = vsel %vm304, %v336, 0
      %v1884 = vsel %vm304, %v337, 0
      %v1887 = vsel %vm304, %v338, 0
      %v1890 = vsel %vm304, %v339, 0
      %v1893 = vsel %vm397, %v352, 0
      %1895 = vmatprep.subr.mxu0 0.0
      %v1896 = vand.u32 %v340, 4294901760
      %1897 = vmatpush1.msra.mxu0 %v1896
      %1898 = vmatprep.subr.mxu0 0.0
      %v1899 = vand.u32 %v341, 4294901760
      %1900 = vmatpush1.msra.mxu0 %v1899
      %1901 = vmatprep.subr.mxu0 0.0
      %v1902 = vand.u32 %v342, 4294901760
      %1903 = vmatpush1.msra.mxu0 %v1902
      %1904 = vmatprep.subr.mxu0 0.0
      %v1905 = vand.u32 %v343, 4294901760
      %1906 = vmatpush1.msra.mxu0 %v1905
      %1907 = vmatprep.subr.mxu0 0.0
      %v1908 = vand.u32 %v344, 4294901760
      %1909 = vmatpush1.msra.mxu0 %v1908
      %1910 = vmatprep.subr.mxu0 0.0
      %v1911 = vand.u32 %v345, 4294901760
      %1912 = vmatpush1.msra.mxu0 %v1911
      %1913 = vmatprep.subr.mxu0 0.0
      %v1914 = vand.u32 %v346, 4294901760
      %1915 = vmatpush1.msra.mxu0 %v1914
      %1916 = vmatprep.subr.mxu0 0.0
      %v1917 = vand.u32 %v347, 4294901760
      %1918 = vmatpush1.msra.mxu0 %v1917
      %1919 = vmatprep.subr.mxu0 0.0
      %v1920 = vand.u32 %v348, 4294901760
      %1921 = vmatpush1.msra.mxu0 %v1920
      %1922 = vmatprep.subr.mxu0 0.0
      %v1923 = vand.u32 %v349, 4294901760
      %1924 = vmatpush1.msra.mxu0 %v1923
      %1925 = vmatprep.subr.mxu0 0.0
      %v1926 = vand.u32 %v350, 4294901760
      %1927 = vmatpush1.msra.mxu0 %v1926
      %1928 = vmatprep.subr.mxu0 0.0
      %v1929 = vand.u32 %v351, 4294901760
      %1930 = vmatpush1.msra.mxu0 %v1929
      %1931 = vmatprep.subr.mxu0 0.0
      %v1932 = vand.u32 %v1893, 4294901760
      %1933 = vmatpush1.msra.mxu0 %v1932
      %1934 = vmatprep.subr.mxu0 0.0
      %1935 = vmatpush1.msra.mxu0 0.0
      %1936 = vmatprep.subr.mxu0 0.0
      %1937 = vmatpush1.msra.mxu0 0.0
      %1938 = vmatprep.subr.mxu0 0.0
      %1939 = vmatpush1.msra.mxu0 0.0
      %1940 = vmatprep.subr.mxu0 0.0
      %1941 = vmatpush1.msra.mxu0 0.0
      %1942 = vmatprep.subr.mxu0 0.0
      %1943 = vmatpush1.msra.mxu0 0.0
      %1944 = vmatprep.subr.mxu0 0.0
      %1945 = vmatpush1.msra.mxu0 0.0
      %1946 = vmatprep.subr.mxu0 0.0
      %1947 = vmatpush1.msra.mxu0 0.0
      %1948 = vmatprep.subr.mxu0 0.0
      %1949 = vmatpush1.msra.mxu0 0.0
      %1950 = vmatprep.subr.mxu0 0.0
      %1951 = vmatpush1.msra.mxu0 0.0
      %1952 = vmatprep.subr.mxu0 0.0
      %1953 = vmatpush1.msra.mxu0 0.0
      %1954 = vmatprep.subr.mxu0 0.0
      %1955 = vmatpush1.msra.mxu0 0.0
      %1956 = vmatprep.subr.mxu0 0.0
      %1957 = vmatpush1.msra.mxu0 0.0
      %1958 = vmatprep.subr.mxu0 0.0
      %1959 = vmatpush1.msra.mxu0 0.0
      %1960 = vmatprep.subr.mxu0 0.0
      %1961 = vmatpush1.msra.mxu0 0.0
      %1962 = vmatprep.subr.mxu0 0.0
      %1963 = vmatpush1.msra.mxu0 0.0
      %1964 = vmatprep.subr.mxu0 0.0
      %1965 = vmatpush1.msra.mxu0 0.0
      %1966 = vmatprep.subr.mxu0 0.0
      %1967 = vmatpush1.msra.mxu0 0.0
      %1968 = vmatprep.subr.mxu0 0.0
      %1969 = vmatpush1.msra.mxu0 0.0
      %1970 = vmatprep.subr.mxu0 0.0
      %1971 = vmatpush1.msra.mxu0 0.0
      %1972 = vmatprep.mubr.f32.mxu0 0.0
      %v1973 = vand.u32 %v1881, 4294901760
      %v1974 = vsub.f32 %v1881, %v1973
      %v1975 = vand.u32 %v1974, 4294901760
      %v1976 = vsub.f32 %v1974, %v1975
      %v1977 = vand.u32 %v1976, 4294901760
      %1978 = vmatmul.mubr.f32.gmra.mrb[0].mxu0 %v1977
      %v1979 = vpop.f32.mrb[0].mxu0
      %v1980 = vadd.f32 %v1111, %v1979
      %v1981 = vpop.f32.mrb[0].mxu0
      %1982 = vmatprep.mubr.f32.mxu0 0.0
      %v1983 = vand.u32 %v1884, 4294901760
      %v1984 = vsub.f32 %v1884, %v1983
      %v1985 = vand.u32 %v1984, 4294901760
      %v1986 = vsub.f32 %v1984, %v1985
      %v1987 = vand.u32 %v1986, 4294901760
      %1988 = vmatmul.mubr.f32.gmra.mrb[0].mxu0 %v1987
      %v1989 = vpop.f32.mrb[0].mxu0
      %v1990 = vadd.f32 %v1117, %v1989
      %v1991 = vpop.f32.mrb[0].mxu0
      %1992 = vmatprep.mubr.f32.mxu0 0.0
      %v1993 = vand.u32 %v1887, 4294901760
      %v1994 = vsub.f32 %v1887, %v1993
      %v1995 = vand.u32 %v1994, 4294901760
      %v1996 = vsub.f32 %v1994, %v1995
      %v1997 = vand.u32 %v1996, 4294901760
      %1998 = vmatmul.mubr.f32.gmra.mrb[0].mxu0 %v1997
      %v1999 = vpop.f32.mrb[0].mxu0
      %v2000 = vadd.f32 %v1123, %v1999
      %v2001 = vpop.f32.mrb[0].mxu0
      %2002 = vmatprep.mubr.f32.mxu0 0.0
      %v2003 = vand.u32 %v1890, 4294901760
      %v2004 = vsub.f32 %v1890, %v2003
      %v2005 = vand.u32 %v2004, 4294901760
      %v2006 = vsub.f32 %v2004, %v2005
      %v2007 = vand.u32 %v2006, 4294901760
      %2008 = vmatmul.mubr.f32.gmra.mrb[0].mxu0 %v2007
      %v2009 = vpop.f32.mrb[0].mxu0
      %v2010 = vadd.f32 %v1129, %v2009
      %v2011 = vpop.f32.mrb[0].mxu0
      %2012 = vdwg.mxu0
      %2013 = vmatprep.subr.mxu0 0.0
      %v2014 = vand.u32 %v340, 4294901760
      %v2015 = vsub.f32 %v340, %v2014
      %v2016 = vand.u32 %v2015, 4294901760
      %v2017 = vsub.f32 %v2015, %v2016
      %v2018 = vand.u32 %v2017, 4294901760
      %2019 = vmatpush1.msra.mxu0 %v2018
      %2020 = vmatprep.subr.mxu0 0.0
      %v2021 = vand.u32 %v341, 4294901760
      %v2022 = vsub.f32 %v341, %v2021
      %v2023 = vand.u32 %v2022, 4294901760
      %v2024 = vsub.f32 %v2022, %v2023
      %v2025 = vand.u32 %v2024, 4294901760
      %2026 = vmatpush1.msra.mxu0 %v2025
      %2027 = vmatprep.subr.mxu0 0.0
      %v2028 = vand.u32 %v342, 4294901760
      %v2029 = vsub.f32 %v342, %v2028
      %v2030 = vand.u32 %v2029, 4294901760
      %v2031 = vsub.f32 %v2029, %v2030
      %v2032 = vand.u32 %v2031, 4294901760
      %2033 = vmatpush1.msra.mxu0 %v2032
      %2034 = vmatprep.subr.mxu0 0.0
      %v2035 = vand.u32 %v343, 4294901760
      %v2036 = vsub.f32 %v343, %v2035
      %v2037 = vand.u32 %v2036, 4294901760
      %v2038 = vsub.f32 %v2036, %v2037
      %v2039 = vand.u32 %v2038, 4294901760
      %2040 = vmatpush1.msra.mxu0 %v2039
      %2041 = vmatprep.subr.mxu0 0.0
      %v2042 = vand.u32 %v344, 4294901760
      %v2043 = vsub.f32 %v344, %v2042
      %v2044 = vand.u32 %v2043, 4294901760
      %v2045 = vsub.f32 %v2043, %v2044
      %v2046 = vand.u32 %v2045, 4294901760
      %2047 = vmatpush1.msra.mxu0 %v2046
      %2048 = vmatprep.subr.mxu0 0.0
      %v2049 = vand.u32 %v345, 4294901760
      %v2050 = vsub.f32 %v345, %v2049
      %v2051 = vand.u32 %v2050, 4294901760
      %v2052 = vsub.f32 %v2050, %v2051
      %v2053 = vand.u32 %v2052, 4294901760
      %2054 = vmatpush1.msra.mxu0 %v2053
      %2055 = vmatprep.subr.mxu0 0.0
      %v2056 = vand.u32 %v346, 4294901760
      %v2057 = vsub.f32 %v346, %v2056
      %v2058 = vand.u32 %v2057, 4294901760
      %v2059 = vsub.f32 %v2057, %v2058
      %v2060 = vand.u32 %v2059, 4294901760
      %2061 = vmatpush1.msra.mxu0 %v2060
      %2062 = vmatprep.subr.mxu0 0.0
      %v2063 = vand.u32 %v347, 4294901760
      %v2064 = vsub.f32 %v347, %v2063
      %v2065 = vand.u32 %v2064, 4294901760
      %v2066 = vsub.f32 %v2064, %v2065
      %v2067 = vand.u32 %v2066, 4294901760
      %2068 = vmatpush1.msra.mxu0 %v2067
      %2069 = vmatprep.subr.mxu0 0.0
      %v2070 = vand.u32 %v348, 4294901760
      %v2071 = vsub.f32 %v348, %v2070
      %v2072 = vand.u32 %v2071, 4294901760
      %v2073 = vsub.f32 %v2071, %v2072
      %v2074 = vand.u32 %v2073, 4294901760
      %2075 = vmatpush1.msra.mxu0 %v2074
      %2076 = vmatprep.subr.mxu0 0.0
      %v2077 = vand.u32 %v349, 4294901760
      %v2078 = vsub.f32 %v349, %v2077
      %v2079 = vand.u32 %v2078, 4294901760
      %v2080 = vsub.f32 %v2078, %v2079
      %v2081 = vand.u32 %v2080, 4294901760
      %2082 = vmatpush1.msra.mxu0 %v2081
      %2083 = vmatprep.subr.mxu0 0.0
      %v2084 = vand.u32 %v350, 4294901760
      %v2085 = vsub.f32 %v350, %v2084
      %v2086 = vand.u32 %v2085, 4294901760
      %v2087 = vsub.f32 %v2085, %v2086
      %v2088 = vand.u32 %v2087, 4294901760
      %2089 = vmatpush1.msra.mxu0 %v2088
      %2090 = vmatprep.subr.mxu0 0.0
      %v2091 = vand.u32 %v351, 4294901760
      %v2092 = vsub.f32 %v351, %v2091
      %v2093 = vand.u32 %v2092, 4294901760
      %v2094 = vsub.f32 %v2092, %v2093
      %v2095 = vand.u32 %v2094, 4294901760
      %2096 = vmatpush1.msra.mxu0 %v2095
      %2097 = vmatprep.subr.mxu0 0.0
      %v2098 = vand.u32 %v1893, 4294901760
      %v2099 = vsub.f32 %v1893, %v2098
      %v2100 = vand.u32 %v2099, 4294901760
      %v2101 = vsub.f32 %v2099, %v2100
      %v2102 = vand.u32 %v2101, 4294901760
      %2103 = vmatpush1.msra.mxu0 %v2102
      %2104 = vmatprep.subr.mxu0 0.0
      %2105 = vmatpush1.msra.mxu0 0.0
      %2106 = vmatprep.subr.mxu0 0.0
      %2107 = vmatpush1.msra.mxu0 0.0
      %2108 = vmatprep.subr.mxu0 0.0
      %2109 = vmatpush1.msra.mxu0 0.0
      %2110 = vmatprep.subr.mxu0 0.0
      %2111 = vmatpush1.msra.mxu0 0.0
      %2112 = vmatprep.subr.mxu0 0.0
      %2113 = vmatpush1.msra.mxu0 0.0
      %2114 = vmatprep.subr.mxu0 0.0
      %2115 = vmatpush1.msra.mxu0 0.0
      %2116 = vmatprep.subr.mxu0 0.0
      %2117 = vmatpush1.msra.mxu0 0.0
      %2118 = vmatprep.subr.mxu0 0.0
      %2119 = vmatpush1.msra.mxu0 0.0
      %2120 = vmatprep.subr.mxu0 0.0
      %2121 = vmatpush1.msra.mxu0 0.0
      %2122 = vmatprep.subr.mxu0 0.0
      %2123 = vmatpush1.msra.mxu0 0.0
      %2124 = vmatprep.subr.mxu0 0.0
      %2125 = vmatpush1.msra.mxu0 0.0
      %2126 = vmatprep.subr.mxu0 0.0
      %2127 = vmatpush1.msra.mxu0 0.0
      %2128 = vmatprep.subr.mxu0 0.0
      %2129 = vmatpush1.msra.mxu0 0.0
      %2130 = vmatprep.subr.mxu0 0.0
      %2131 = vmatpush1.msra.mxu0 0.0
      %2132 = vmatprep.subr.mxu0 0.0
      %2133 = vmatpush1.msra.mxu0 0.0
      %2134 = vmatprep.subr.mxu0 0.0
      %2135 = vmatpush1.msra.mxu0 0.0
      %2136 = vmatprep.subr.mxu0 0.0
      %2137 = vmatpush1.msra.mxu0 0.0
      %2138 = vmatprep.subr.mxu0 0.0
      %2139 = vmatpush1.msra.mxu0 0.0
      %2140 = vmatprep.subr.mxu0 0.0
      %2141 = vmatpush1.msra.mxu0 0.0
      %2142 = vmatprep.mubr.f32.mxu0 0.0
      %v2143 = vand.u32 %v1881, 4294901760
      %2144 = vmatmul.mubr.f32.gmra.mrb[0].mxu0 %v2143
      %v2145 = vpop.f32.mrb[0].mxu0
      %v2146 = vadd.f32 %v1980, %v2145
      %v2147 = vpop.f32.mrb[0].mxu0
      %2148 = vmatprep.mubr.f32.mxu0 0.0
      %v2149 = vand.u32 %v1884, 4294901760
      %2150 = vmatmul.mubr.f32.gmra.mrb[0].mxu0 %v2149
      %v2151 = vpop.f32.mrb[0].mxu0
      %v2152 = vadd.f32 %v1990, %v2151
      %v2153 = vpop.f32.mrb[0].mxu0
      %2154 = vmatprep.mubr.f32.mxu0 0.0
      %v2155 = vand.u32 %v1887, 4294901760
      %2156 = vmatmul.mubr.f32.gmra.mrb[0].mxu0 %v2155
      %v2157 = vpop.f32.mrb[0].mxu0
      %v2158 = vadd.f32 %v2000, %v2157
      %v2159 = vpop.f32.mrb[0].mxu0
      %2160 = vmatprep.mubr.f32.mxu0 0.0
      %v2161 = vand.u32 %v1890, 4294901760
      %2162 = vmatmul.mubr.f32.gmra.mrb[0].mxu0 %v2161
      %v2163 = vpop.f32.mrb[0].mxu0
      %v2164 = vadd.f32 %v2010, %v2163
      %v2165 = vpop.f32.mrb[0].mxu0
      %2166 = vdwg.mxu0
      %2167 = vmatprep.subr.mxu0 0.0
      %v2168 = vand.u32 %v340, 4294901760
      %v2169 = vsub.f32 %v340, %v2168
      %2170 = vmatpush1.msra.mxu0 %v2169
      %2171 = vmatprep.subr.mxu0 0.0
      %v2172 = vand.u32 %v341, 4294901760
      %v2173 = vsub.f32 %v341, %v2172
      %2174 = vmatpush1.msra.mxu0 %v2173
      %2175 = vmatprep.subr.mxu0 0.0
      %v2176 = vand.u32 %v342, 4294901760
      %v2177 = vsub.f32 %v342, %v2176
      %2178 = vmatpush1.msra.mxu0 %v2177
      %2179 = vmatprep.subr.mxu0 0.0
      %v2180 = vand.u32 %v343, 4294901760
      %v2181 = vsub.f32 %v343, %v2180
      %2182 = vmatpush1.msra.mxu0 %v2181
      %2183 = vmatprep.subr.mxu0 0.0
      %v2184 = vand.u32 %v344, 4294901760
      %v2185 = vsub.f32 %v344, %v2184
      %2186 = vmatpush1.msra.mxu0 %v2185
      %2187 = vmatprep.subr.mxu0 0.0
      %v2188 = vand.u32 %v345, 4294901760
      %v2189 = vsub.f32 %v345, %v2188
      %2190 = vmatpush1.msra.mxu0 %v2189
      %2191 = vmatprep.subr.mxu0 0.0
      %v2192 = vand.u32 %v346, 4294901760
      %v2193 = vsub.f32 %v346, %v2192
      %2194 = vmatpush1.msra.mxu0 %v2193
      %2195 = vmatprep.subr.mxu0 0.0
      %v2196 = vand.u32 %v347, 4294901760
      %v2197 = vsub.f32 %v347, %v2196
      %2198 = vmatpush1.msra.mxu0 %v2197
      %2199 = vmatprep.subr.mxu0 0.0
      %v2200 = vand.u32 %v348, 4294901760
      %v2201 = vsub.f32 %v348, %v2200
      %2202 = vmatpush1.msra.mxu0 %v2201
      %2203 = vmatprep.subr.mxu0 0.0
      %v2204 = vand.u32 %v349, 4294901760
      %v2205 = vsub.f32 %v349, %v2204
      %2206 = vmatpush1.msra.mxu0 %v2205
      %2207 = vmatprep.subr.mxu0 0.0
      %v2208 = vand.u32 %v350, 4294901760
      %v2209 = vsub.f32 %v350, %v2208
      %2210 = vmatpush1.msra.mxu0 %v2209
      %2211 = vmatprep.subr.mxu0 0.0
      %v2212 = vand.u32 %v351, 4294901760
      %v2213 = vsub.f32 %v351, %v2212
      %2214 = vmatpush1.msra.mxu0 %v2213
      %2215 = vmatprep.subr.mxu0 0.0
      %v2216 = vand.u32 %v1893, 4294901760
      %v2217 = vsub.f32 %v1893, %v2216
      %2218 = vmatpush1.msra.mxu0 %v2217
      %2219 = vmatprep.subr.mxu0 0.0
      %2220 = vmatpush1.msra.mxu0 0.0
      %2221 = vmatprep.subr.mxu0 0.0
      %2222 = vmatpush1.msra.mxu0 0.0
      %2223 = vmatprep.subr.mxu0 0.0
      %2224 = vmatpush1.msra.mxu0 0.0
      %2225 = vmatprep.subr.mxu0 0.0
      %2226 = vmatpush1.msra.mxu0 0.0
      %2227 = vmatprep.subr.mxu0 0.0
      %2228 = vmatpush1.msra.mxu0 0.0
      %2229 = vmatprep.subr.mxu0 0.0
      %2230 = vmatpush1.msra.mxu0 0.0
      %2231 = vmatprep.subr.mxu0 0.0
      %2232 = vmatpush1.msra.mxu0 0.0
      %2233 = vmatprep.subr.mxu0 0.0
      %2234 = vmatpush1.msra.mxu0 0.0
      %2235 = vmatprep.subr.mxu0 0.0
      %2236 = vmatpush1.msra.mxu0 0.0
      %2237 = vmatprep.subr.mxu0 0.0
      %2238 = vmatpush1.msra.mxu0 0.0
      %2239 = vmatprep.subr.mxu0 0.0
      %2240 = vmatpush1.msra.mxu0 0.0
      %2241 = vmatprep.subr.mxu0 0.0
      %2242 = vmatpush1.msra.mxu0 0.0
      %2243 = vmatprep.subr.mxu0 0.0
      %2244 = vmatpush1.msra.mxu0 0.0
      %2245 = vmatprep.subr.mxu0 0.0
      %2246 = vmatpush1.msra.mxu0 0.0
      %2247 = vmatprep.subr.mxu0 0.0
      %2248 = vmatpush1.msra.mxu0 0.0
      %2249 = vmatprep.subr.mxu0 0.0
      %2250 = vmatpush1.msra.mxu0 0.0
      %2251 = vmatprep.subr.mxu0 0.0
      %2252 = vmatpush1.msra.mxu0 0.0
      %2253 = vmatprep.subr.mxu0 0.0
      %2254 = vmatpush1.msra.mxu0 0.0
      %2255 = vmatprep.subr.mxu0 0.0
      %2256 = vmatpush1.msra.mxu0 0.0
      %2257 = vmatprep.mubr.f32.mxu0 0.0
      %v2258 = vand.u32 %v1881, 4294901760
      %v2259 = vsub.f32 %v1881, %v2258
      %2260 = vmatmul.mubr.f32.gmra.mrb[0].mxu0 %v2259
      %v2261 = vpop.f32.mrb[0].mxu0
      %v2262 = vadd.f32 %v2146, %v2261
      %v2263 = vpop.f32.mrb[0].mxu0
      %2264 = vmatprep.mubr.f32.mxu0 0.0
      %v2265 = vand.u32 %v1884, 4294901760
      %v2266 = vsub.f32 %v1884, %v2265
      %2267 = vmatmul.mubr.f32.gmra.mrb[0].mxu0 %v2266
      %v2268 = vpop.f32.mrb[0].mxu0
      %v2269 = vadd.f32 %v2152, %v2268
      %v2270 = vpop.f32.mrb[0].mxu0
      %2271 = vmatprep.mubr.f32.mxu0 0.0
      %v2272 = vand.u32 %v1887, 4294901760
      %v2273 = vsub.f32 %v1887, %v2272
      %2274 = vmatmul.mubr.f32.gmra.mrb[0].mxu0 %v2273
      %v2275 = vpop.f32.mrb[0].mxu0
      %v2276 = vadd.f32 %v2158, %v2275
      %v2277 = vpop.f32.mrb[0].mxu0
      %2278 = vmatprep.mubr.f32.mxu0 0.0
      %v2279 = vand.u32 %v1890, 4294901760
      %v2280 = vsub.f32 %v1890, %v2279
      %2281 = vmatmul.mubr.f32.gmra.mrb[0].mxu0 %v2280
      %v2282 = vpop.f32.mrb[0].mxu0
      %v2283 = vadd.f32 %v2164, %v2282
      %v2284 = vpop.f32.mrb[0].mxu0
      %2285 = vdwg.mxu0
      %2286 = vmatprep.subr.mxu0 0.0
      %v2287 = vand.u32 %v340, 4294901760
      %2288 = vmatpush1.msra.mxu0 %v2287
      %2289 = vmatprep.subr.mxu0 0.0
      %v2290 = vand.u32 %v341, 4294901760
      %2291 = vmatpush1.msra.mxu0 %v2290
      %2292 = vmatprep.subr.mxu0 0.0
      %v2293 = vand.u32 %v342, 4294901760
      %2294 = vmatpush1.msra.mxu0 %v2293
      %2295 = vmatprep.subr.mxu0 0.0
      %v2296 = vand.u32 %v343, 4294901760
      %2297 = vmatpush1.msra.mxu0 %v2296
      %2298 = vmatprep.subr.mxu0 0.0
      %v2299 = vand.u32 %v344, 4294901760
      %2300 = vmatpush1.msra.mxu0 %v2299
      %2301 = vmatprep.subr.mxu0 0.0
      %v2302 = vand.u32 %v345, 4294901760
      %2303 = vmatpush1.msra.mxu0 %v2302
      %2304 = vmatprep.subr.mxu0 0.0
      %v2305 = vand.u32 %v346, 4294901760
      %2306 = vmatpush1.msra.mxu0 %v2305
      %2307 = vmatprep.subr.mxu0 0.0
      %v2308 = vand.u32 %v347, 4294901760
      %2309 = vmatpush1.msra.mxu0 %v2308
      %2310 = vmatprep.subr.mxu0 0.0
      %v2311 = vand.u32 %v348, 4294901760
      %2312 = vmatpush1.msra.mxu0 %v2311
      %2313 = vmatprep.subr.mxu0 0.0
      %v2314 = vand.u32 %v349, 4294901760
      %2315 = vmatpush1.msra.mxu0 %v2314
      %2316 = vmatprep.subr.mxu0 0.0
      %v2317 = vand.u32 %v350, 4294901760
      %2318 = vmatpush1.msra.mxu0 %v2317
      %2319 = vmatprep.subr.mxu0 0.0
      %v2320 = vand.u32 %v351, 4294901760
      %2321 = vmatpush1.msra.mxu0 %v2320
      %2322 = vmatprep.subr.mxu0 0.0
      %v2323 = vand.u32 %v1893, 4294901760
      %2324 = vmatpush1.msra.mxu0 %v2323
      %2325 = vmatprep.subr.mxu0 0.0
      %2326 = vmatpush1.msra.mxu0 0.0
      %2327 = vmatprep.subr.mxu0 0.0
      %2328 = vmatpush1.msra.mxu0 0.0
      %2329 = vmatprep.subr.mxu0 0.0
      %2330 = vmatpush1.msra.mxu0 0.0
      %2331 = vmatprep.subr.mxu0 0.0
      %2332 = vmatpush1.msra.mxu0 0.0
      %2333 = vmatprep.subr.mxu0 0.0
      %2334 = vmatpush1.msra.mxu0 0.0
      %2335 = vmatprep.subr.mxu0 0.0
      %2336 = vmatpush1.msra.mxu0 0.0
      %2337 = vmatprep.subr.mxu0 0.0
      %2338 = vmatpush1.msra.mxu0 0.0
      %2339 = vmatprep.subr.mxu0 0.0
      %2340 = vmatpush1.msra.mxu0 0.0
      %2341 = vmatprep.subr.mxu0 0.0
      %2342 = vmatpush1.msra.mxu0 0.0
      %2343 = vmatprep.subr.mxu0 0.0
      %2344 = vmatpush1.msra.mxu0 0.0
      %2345 = vmatprep.subr.mxu0 0.0
      %2346 = vmatpush1.msra.mxu0 0.0
      %2347 = vmatprep.subr.mxu0 0.0
      %2348 = vmatpush1.msra.mxu0 0.0
      %2349 = vmatprep.subr.mxu0 0.0
      %2350 = vmatpush1.msra.mxu0 0.0
      %2351 = vmatprep.subr.mxu0 0.0
      %2352 = vmatpush1.msra.mxu0 0.0
      %2353 = vmatprep.subr.mxu0 0.0
      %2354 = vmatpush1.msra.mxu0 0.0
      %2355 = vmatprep.subr.mxu0 0.0
      %2356 = vmatpush1.msra.mxu0 0.0
      %2357 = vmatprep.subr.mxu0 0.0
      %2358 = vmatpush1.msra.mxu0 0.0
      %2359 = vmatprep.subr.mxu0 0.0
      %2360 = vmatpush1.msra.mxu0 0.0
      %2361 = vmatprep.subr.mxu0 0.0
      %2362 = vmatpush1.msra.mxu0 0.0
      %2363 = vmatprep.mubr.f32.mxu0 0.0
      %v2364 = vand.u32 %v1881, 4294901760
      %v2365 = vsub.f32 %v1881, %v2364
      %v2366 = vand.u32 %v2365, 4294901760
      %2367 = vmatmul.mubr.f32.gmra.mrb[0].mxu0 %v2366
      %v2368 = vpop.f32.mrb[0].mxu0
      %v2369 = vadd.f32 %v2262, %v2368
      %v2370 = vpop.f32.mrb[0].mxu0
      %2371 = vmatprep.mubr.f32.mxu0 0.0
      %v2372 = vand.u32 %v1884, 4294901760
      %v2373 = vsub.f32 %v1884, %v2372
      %v2374 = vand.u32 %v2373, 4294901760
      %2375 = vmatmul.mubr.f32.gmra.mrb[0].mxu0 %v2374
      %v2376 = vpop.f32.mrb[0].mxu0
      %v2377 = vadd.f32 %v2269, %v2376
      %v2378 = vpop.f32.mrb[0].mxu0
      %2379 = vmatprep.mubr.f32.mxu0 0.0
      %v2380 = vand.u32 %v1887, 4294901760
      %v2381 = vsub.f32 %v1887, %v2380
      %v2382 = vand.u32 %v2381, 4294901760
      %2383 = vmatmul.mubr.f32.gmra.mrb[0].mxu0 %v2382
      %v2384 = vpop.f32.mrb[0].mxu0
      %v2385 = vadd.f32 %v2276, %v2384
      %v2386 = vpop.f32.mrb[0].mxu0
      %2387 = vmatprep.mubr.f32.mxu0 0.0
      %v2388 = vand.u32 %v1890, 4294901760
      %v2389 = vsub.f32 %v1890, %v2388
      %v2390 = vand.u32 %v2389, 4294901760
      %2391 = vmatmul.mubr.f32.gmra.mrb[0].mxu0 %v2390
      %v2392 = vpop.f32.mrb[0].mxu0
      %v2393 = vadd.f32 %v2283, %v2392
      %v2394 = vpop.f32.mrb[0].mxu0
      %2395 = vdwg.mxu0
      %2396 = vmatprep.subr.mxu0 0.0
      %v2397 = vand.u32 %v340, 4294901760
      %v2398 = vsub.f32 %v340, %v2397
      %v2399 = vand.u32 %v2398, 4294901760
      %2400 = vmatpush1.msra.mxu0 %v2399
      %2401 = vmatprep.subr.mxu0 0.0
      %v2402 = vand.u32 %v341, 4294901760
      %v2403 = vsub.f32 %v341, %v2402
      %v2404 = vand.u32 %v2403, 4294901760
      %2405 = vmatpush1.msra.mxu0 %v2404
      %2406 = vmatprep.subr.mxu0 0.0
      %v2407 = vand.u32 %v342, 4294901760
      %v2408 = vsub.f32 %v342, %v2407
      %v2409 = vand.u32 %v2408, 4294901760
      %2410 = vmatpush1.msra.mxu0 %v2409
      %2411 = vmatprep.subr.mxu0 0.0
      %v2412 = vand.u32 %v343, 4294901760
      %v2413 = vsub.f32 %v343, %v2412
      %v2414 = vand.u32 %v2413, 4294901760
      %2415 = vmatpush1.msra.mxu0 %v2414
      %2416 = vmatprep.subr.mxu0 0.0
      %v2417 = vand.u32 %v344, 4294901760
      %v2418 = vsub.f32 %v344, %v2417
      %v2419 = vand.u32 %v2418, 4294901760
      %2420 = vmatpush1.msra.mxu0 %v2419
      %2421 = vmatprep.subr.mxu0 0.0
      %v2422 = vand.u32 %v345, 4294901760
      %v2423 = vsub.f32 %v345, %v2422
      %v2424 = vand.u32 %v2423, 4294901760
      %2425 = vmatpush1.msra.mxu0 %v2424
      %2426 = vmatprep.subr.mxu0 0.0
      %v2427 = vand.u32 %v346, 4294901760
      %v2428 = vsub.f32 %v346, %v2427
      %v2429 = vand.u32 %v2428, 4294901760
      %2430 = vmatpush1.msra.mxu0 %v2429
      %2431 = vmatprep.subr.mxu0 0.0
      %v2432 = vand.u32 %v347, 4294901760
      %v2433 = vsub.f32 %v347, %v2432
      %v2434 = vand.u32 %v2433, 4294901760
      %2435 = vmatpush1.msra.mxu0 %v2434
      %2436 = vmatprep.subr.mxu0 0.0
      %v2437 = vand.u32 %v348, 4294901760
      %v2438 = vsub.f32 %v348, %v2437
      %v2439 = vand.u32 %v2438, 4294901760
      %2440 = vmatpush1.msra.mxu0 %v2439
      %2441 = vmatprep.subr.mxu0 0.0
      %v2442 = vand.u32 %v349, 4294901760
      %v2443 = vsub.f32 %v349, %v2442
      %v2444 = vand.u32 %v2443, 4294901760
      %2445 = vmatpush1.msra.mxu0 %v2444
      %2446 = vmatprep.subr.mxu0 0.0
      %v2447 = vand.u32 %v350, 4294901760
      %v2448 = vsub.f32 %v350, %v2447
      %v2449 = vand.u32 %v2448, 4294901760
      %2450 = vmatpush1.msra.mxu0 %v2449
      %2451 = vmatprep.subr.mxu0 0.0
      %v2452 = vand.u32 %v351, 4294901760
      %v2453 = vsub.f32 %v351, %v2452
      %v2454 = vand.u32 %v2453, 4294901760
      %2455 = vmatpush1.msra.mxu0 %v2454
      %2456 = vmatprep.subr.mxu0 0.0
      %v2457 = vand.u32 %v1893, 4294901760
      %v2458 = vsub.f32 %v1893, %v2457
      %v2459 = vand.u32 %v2458, 4294901760
      %2460 = vmatpush1.msra.mxu0 %v2459
      %2461 = vmatprep.subr.mxu0 0.0
      %2462 = vmatpush1.msra.mxu0 0.0
      %2463 = vmatprep.subr.mxu0 0.0
      %2464 = vmatpush1.msra.mxu0 0.0
      %2465 = vmatprep.subr.mxu0 0.0
      %2466 = vmatpush1.msra.mxu0 0.0
      %2467 = vmatprep.subr.mxu0 0.0
      %2468 = vmatpush1.msra.mxu0 0.0
      %2469 = vmatprep.subr.mxu0 0.0
      %2470 = vmatpush1.msra.mxu0 0.0
      %2471 = vmatprep.subr.mxu0 0.0
      %2472 = vmatpush1.msra.mxu0 0.0
      %2473 = vmatprep.subr.mxu0 0.0
      %2474 = vmatpush1.msra.mxu0 0.0
      %2475 = vmatprep.subr.mxu0 0.0
      %2476 = vmatpush1.msra.mxu0 0.0
      %2477 = vmatprep.subr.mxu0 0.0
      %2478 = vmatpush1.msra.mxu0 0.0
      %2479 = vmatprep.subr.mxu0 0.0
      %2480 = vmatpush1.msra.mxu0 0.0
      %2481 = vmatprep.subr.mxu0 0.0
      %2482 = vmatpush1.msra.mxu0 0.0
      %2483 = vmatprep.subr.mxu0 0.0
      %2484 = vmatpush1.msra.mxu0 0.0
      %2485 = vmatprep.subr.mxu0 0.0
      %2486 = vmatpush1.msra.mxu0 0.0
      %2487 = vmatprep.subr.mxu0 0.0
      %2488 = vmatpush1.msra.mxu0 0.0
      %2489 = vmatprep.subr.mxu0 0.0
      %2490 = vmatpush1.msra.mxu0 0.0
      %2491 = vmatprep.subr.mxu0 0.0
      %2492 = vmatpush1.msra.mxu0 0.0
      %2493 = vmatprep.subr.mxu0 0.0
      %2494 = vmatpush1.msra.mxu0 0.0
      %2495 = vmatprep.subr.mxu0 0.0
      %2496 = vmatpush1.msra.mxu0 0.0
      %2497 = vmatprep.subr.mxu0 0.0
      %2498 = vmatpush1.msra.mxu0 0.0
      %2499 = vmatprep.mubr.f32.mxu0 0.0
      %v2500 = vand.u32 %v1881, 4294901760
      %2501 = vmatmul.mubr.f32.gmra.mrb[0].mxu0 %v2500
      %v2502 = vpop.f32.mrb[0].mxu0
      %v2503 = vadd.f32 %v2369, %v2502
      %v2504 = vpop.f32.mrb[0].mxu0
      %2505 = vmatprep.mubr.f32.mxu0 0.0
      %v2506 = vand.u32 %v1884, 4294901760
      %2507 = vmatmul.mubr.f32.gmra.mrb[0].mxu0 %v2506
      %v2508 = vpop.f32.mrb[0].mxu0
      %v2509 = vadd.f32 %v2377, %v2508
      %v2510 = vpop.f32.mrb[0].mxu0
      %2511 = vmatprep.mubr.f32.mxu0 0.0
      %v2512 = vand.u32 %v1887, 4294901760
      %2513 = vmatmul.mubr.f32.gmra.mrb[0].mxu0 %v2512
      %v2514 = vpop.f32.mrb[0].mxu0
      %v2515 = vadd.f32 %v2385, %v2514
      %v2516 = vpop.f32.mrb[0].mxu0
      %2517 = vmatprep.mubr.f32.mxu0 0.0
      %v2518 = vand.u32 %v1890, 4294901760
      %2519 = vmatmul.mubr.f32.gmra.mrb[0].mxu0 %v2518
      %v2520 = vpop.f32.mrb[0].mxu0
      %v2521 = vadd.f32 %v2393, %v2520
      %v2522 = vpop.f32.mrb[0].mxu0
      %2523 = vdwg.mxu0
      %2524 = vmatprep.subr.mxu0 0.0
      %v2525 = vand.u32 %v340, 4294901760
      %2526 = vmatpush1.msra.mxu0 %v2525
      %2527 = vmatprep.subr.mxu0 0.0
      %v2528 = vand.u32 %v341, 4294901760
      %2529 = vmatpush1.msra.mxu0 %v2528
      %2530 = vmatprep.subr.mxu0 0.0
      %v2531 = vand.u32 %v342, 4294901760
      %2532 = vmatpush1.msra.mxu0 %v2531
      %2533 = vmatprep.subr.mxu0 0.0
      %v2534 = vand.u32 %v343, 4294901760
      %2535 = vmatpush1.msra.mxu0 %v2534
      %2536 = vmatprep.subr.mxu0 0.0
      %v2537 = vand.u32 %v344, 4294901760
      %2538 = vmatpush1.msra.mxu0 %v2537
      %2539 = vmatprep.subr.mxu0 0.0
      %v2540 = vand.u32 %v345, 4294901760
      %2541 = vmatpush1.msra.mxu0 %v2540
      %2542 = vmatprep.subr.mxu0 0.0
      %v2543 = vand.u32 %v346, 4294901760
      %2544 = vmatpush1.msra.mxu0 %v2543
      %2545 = vmatprep.subr.mxu0 0.0
      %v2546 = vand.u32 %v347, 4294901760
      %2547 = vmatpush1.msra.mxu0 %v2546
      %2548 = vmatprep.subr.mxu0 0.0
      %v2549 = vand.u32 %v348, 4294901760
      %2550 = vmatpush1.msra.mxu0 %v2549
      %2551 = vmatprep.subr.mxu0 0.0
      %v2552 = vand.u32 %v349, 4294901760
      %2553 = vmatpush1.msra.mxu0 %v2552
      %2554 = vmatprep.subr.mxu0 0.0
      %v2555 = vand.u32 %v350, 4294901760
      %2556 = vmatpush1.msra.mxu0 %v2555
      %2557 = vmatprep.subr.mxu0 0.0
      %v2558 = vand.u32 %v351, 4294901760
      %2559 = vmatpush1.msra.mxu0 %v2558
      %2560 = vmatprep.subr.mxu0 0.0
      %v2561 = vand.u32 %v1893, 4294901760
      %2562 = vmatpush1.msra.mxu0 %v2561
      %2563 = vmatprep.subr.mxu0 0.0
      %2564 = vmatpush1.msra.mxu0 0.0
      %2565 = vmatprep.subr.mxu0 0.0
      %2566 = vmatpush1.msra.mxu0 0.0
      %2567 = vmatprep.subr.mxu0 0.0
      %2568 = vmatpush1.msra.mxu0 0.0
      %2569 = vmatprep.subr.mxu0 0.0
      %2570 = vmatpush1.msra.mxu0 0.0
      %2571 = vmatprep.subr.mxu0 0.0
      %2572 = vmatpush1.msra.mxu0 0.0
      %2573 = vmatprep.subr.mxu0 0.0
      %2574 = vmatpush1.msra.mxu0 0.0
      %2575 = vmatprep.subr.mxu0 0.0
      %2576 = vmatpush1.msra.mxu0 0.0
      %2577 = vmatprep.subr.mxu0 0.0
      %2578 = vmatpush1.msra.mxu0 0.0
      %2579 = vmatprep.subr.mxu0 0.0
      %2580 = vmatpush1.msra.mxu0 0.0
      %2581 = vmatprep.subr.mxu0 0.0
      %2582 = vmatpush1.msra.mxu0 0.0
      %2583 = vmatprep.subr.mxu0 0.0
      %2584 = vmatpush1.msra.mxu0 0.0
      %2585 = vmatprep.subr.mxu0 0.0
      %2586 = vmatpush1.msra.mxu0 0.0
      %2587 = vmatprep.subr.mxu0 0.0
      %2588 = vmatpush1.msra.mxu0 0.0
      %2589 = vmatprep.subr.mxu0 0.0
      %2590 = vmatpush1.msra.mxu0 0.0
      %2591 = vmatprep.subr.mxu0 0.0
      %2592 = vmatpush1.msra.mxu0 0.0
      %2593 = vmatprep.subr.mxu0 0.0
      %2594 = vmatpush1.msra.mxu0 0.0
      %2595 = vmatprep.subr.mxu0 0.0
      %2596 = vmatpush1.msra.mxu0 0.0
      %2597 = vmatprep.subr.mxu0 0.0
      %2598 = vmatpush1.msra.mxu0 0.0
      %2599 = vmatprep.subr.mxu0 0.0
      %2600 = vmatpush1.msra.mxu0 0.0
      %2601 = vmatprep.mubr.f32.mxu0 0.0
      %v2602 = vand.u32 %v1881, 4294901760
      %2603 = vmatmul.mubr.f32.gmra.mrb[0].mxu0 %v2602
      %v2604 = vpop.f32.mrb[0].mxu0
      %v2605 = vadd.f32 %v2503, %v2604
      %v2606 = vpop.f32.mrb[0].mxu0
      %2607 = vmatprep.mubr.f32.mxu0 0.0
      %v2608 = vand.u32 %v1884, 4294901760
      %2609 = vmatmul.mubr.f32.gmra.mrb[0].mxu0 %v2608
      %v2610 = vpop.f32.mrb[0].mxu0
      %v2611 = vadd.f32 %v2509, %v2610
      %v2612 = vpop.f32.mrb[0].mxu0
      %2613 = vmatprep.mubr.f32.mxu0 0.0
      %v2614 = vand.u32 %v1887, 4294901760
      %2615 = vmatmul.mubr.f32.gmra.mrb[0].mxu0 %v2614
      %v2616 = vpop.f32.mrb[0].mxu0
      %v2617 = vadd.f32 %v2515, %v2616
      %v2618 = vpop.f32.mrb[0].mxu0
      %2619 = vmatprep.mubr.f32.mxu0 0.0
      %v2620 = vand.u32 %v1890, 4294901760
      %2621 = vmatmul.mubr.f32.gmra.mrb[0].mxu0 %v2620
      %v2622 = vpop.f32.mrb[0].mxu0
      %v2623 = vadd.f32 %v2521, %v2622
      %v2624 = vpop.f32.mrb[0].mxu0
      %2625 = vdwg.mxu0
      %v2627 = vsel %vm397, %v366, 0
      %2629 = vmatprep.subr.mxu0 0.0
      %v2630 = vand.u32 %v354, 4294901760
      %2631 = vmatpush1.msra.mxu0 %v2630
      %2632 = vmatprep.subr.mxu0 0.0
      %v2633 = vand.u32 %v355, 4294901760
      %2634 = vmatpush1.msra.mxu0 %v2633
      %2635 = vmatprep.subr.mxu0 0.0
      %v2636 = vand.u32 %v356, 4294901760
      %2637 = vmatpush1.msra.mxu0 %v2636
      %2638 = vmatprep.subr.mxu0 0.0
      %v2639 = vand.u32 %v357, 4294901760
      %2640 = vmatpush1.msra.mxu0 %v2639
      %2641 = vmatprep.subr.mxu0 0.0
      %v2642 = vand.u32 %v358, 4294901760
      %2643 = vmatpush1.msra.mxu0 %v2642
      %2644 = vmatprep.subr.mxu0 0.0
      %v2645 = vand.u32 %v359, 4294901760
      %2646 = vmatpush1.msra.mxu0 %v2645
      %2647 = vmatprep.subr.mxu0 0.0
      %v2648 = vand.u32 %v360, 4294901760
      %2649 = vmatpush1.msra.mxu0 %v2648
      %2650 = vmatprep.subr.mxu0 0.0
      %v2651 = vand.u32 %v361, 4294901760
      %2652 = vmatpush1.msra.mxu0 %v2651
      %2653 = vmatprep.subr.mxu0 0.0
      %v2654 = vand.u32 %v362, 4294901760
      %2655 = vmatpush1.msra.mxu0 %v2654
      %2656 = vmatprep.subr.mxu0 0.0
      %v2657 = vand.u32 %v363, 4294901760
      %2658 = vmatpush1.msra.mxu0 %v2657
      %2659 = vmatprep.subr.mxu0 0.0
      %v2660 = vand.u32 %v364, 4294901760
      %2661 = vmatpush1.msra.mxu0 %v2660
      %2662 = vmatprep.subr.mxu0 0.0
      %v2663 = vand.u32 %v365, 4294901760
      %2664 = vmatpush1.msra.mxu0 %v2663
      %2665 = vmatprep.subr.mxu0 0.0
      %v2666 = vand.u32 %v2627, 4294901760
      %2667 = vmatpush1.msra.mxu0 %v2666
      %2668 = vmatprep.subr.mxu0 0.0
      %2669 = vmatpush1.msra.mxu0 0.0
      %2670 = vmatprep.subr.mxu0 0.0
      %2671 = vmatpush1.msra.mxu0 0.0
      %2672 = vmatprep.subr.mxu0 0.0
      %2673 = vmatpush1.msra.mxu0 0.0
      %2674 = vmatprep.subr.mxu0 0.0
      %2675 = vmatpush1.msra.mxu0 0.0
      %2676 = vmatprep.subr.mxu0 0.0
      %2677 = vmatpush1.msra.mxu0 0.0
      %2678 = vmatprep.subr.mxu0 0.0
      %2679 = vmatpush1.msra.mxu0 0.0
      %2680 = vmatprep.subr.mxu0 0.0
      %2681 = vmatpush1.msra.mxu0 0.0
      %2682 = vmatprep.subr.mxu0 0.0
      %2683 = vmatpush1.msra.mxu0 0.0
      %2684 = vmatprep.subr.mxu0 0.0
      %2685 = vmatpush1.msra.mxu0 0.0
      %2686 = vmatprep.subr.mxu0 0.0
      %2687 = vmatpush1.msra.mxu0 0.0
      %2688 = vmatprep.subr.mxu0 0.0
      %2689 = vmatpush1.msra.mxu0 0.0
      %2690 = vmatprep.subr.mxu0 0.0
      %2691 = vmatpush1.msra.mxu0 0.0
      %2692 = vmatprep.subr.mxu0 0.0
      %2693 = vmatpush1.msra.mxu0 0.0
      %2694 = vmatprep.subr.mxu0 0.0
      %2695 = vmatpush1.msra.mxu0 0.0
      %2696 = vmatprep.subr.mxu0 0.0
      %2697 = vmatpush1.msra.mxu0 0.0
      %2698 = vmatprep.subr.mxu0 0.0
      %2699 = vmatpush1.msra.mxu0 0.0
      %2700 = vmatprep.subr.mxu0 0.0
      %2701 = vmatpush1.msra.mxu0 0.0
      %2702 = vmatprep.subr.mxu0 0.0
      %2703 = vmatpush1.msra.mxu0 0.0
      %2704 = vmatprep.subr.mxu0 0.0
      %2705 = vmatpush1.msra.mxu0 0.0
      %2706 = vmatprep.mubr.f32.mxu0 0.0
      %v2707 = vand.u32 %v1881, 4294901760
      %v2708 = vsub.f32 %v1881, %v2707
      %v2709 = vand.u32 %v2708, 4294901760
      %v2710 = vsub.f32 %v2708, %v2709
      %v2711 = vand.u32 %v2710, 4294901760
      %2712 = vmatmul.mubr.f32.gmra.mrb[0].mxu0 %v2711
      %v2713 = vpop.f32.mrb[0].mxu0
      %v2714 = vadd.f32 %v1859, %v2713
      %v2715 = vpop.f32.mrb[0].mxu0
      %2716 = vmatprep.mubr.f32.mxu0 0.0
      %v2717 = vand.u32 %v1884, 4294901760
      %v2718 = vsub.f32 %v1884, %v2717
      %v2719 = vand.u32 %v2718, 4294901760
      %v2720 = vsub.f32 %v2718, %v2719
      %v2721 = vand.u32 %v2720, 4294901760
      %2722 = vmatmul.mubr.f32.gmra.mrb[0].mxu0 %v2721
      %v2723 = vpop.f32.mrb[0].mxu0
      %v2724 = vadd.f32 %v1865, %v2723
      %v2725 = vpop.f32.mrb[0].mxu0
      %2726 = vmatprep.mubr.f32.mxu0 0.0
      %v2727 = vand.u32 %v1887, 4294901760
      %v2728 = vsub.f32 %v1887, %v2727
      %v2729 = vand.u32 %v2728, 4294901760
      %v2730 = vsub.f32 %v2728, %v2729
      %v2731 = vand.u32 %v2730, 4294901760
      %2732 = vmatmul.mubr.f32.gmra.mrb[0].mxu0 %v2731
      %v2733 = vpop.f32.mrb[0].mxu0
      %v2734 = vadd.f32 %v1871, %v2733
      %v2735 = vpop.f32.mrb[0].mxu0
      %2736 = vmatprep.mubr.f32.mxu0 0.0
      %v2737 = vand.u32 %v1890, 4294901760
      %v2738 = vsub.f32 %v1890, %v2737
      %v2739 = vand.u32 %v2738, 4294901760
      %v2740 = vsub.f32 %v2738, %v2739
      %v2741 = vand.u32 %v2740, 4294901760
      %2742 = vmatmul.mubr.f32.gmra.mrb[0].mxu0 %v2741
      %v2743 = vpop.f32.mrb[0].mxu0
      %v2744 = vadd.f32 %v1877, %v2743
      %v2745 = vpop.f32.mrb[0].mxu0
      %2746 = vdwg.mxu0
      %2747 = vmatprep.subr.mxu0 0.0
      %v2748 = vand.u32 %v354, 4294901760
      %v2749 = vsub.f32 %v354, %v2748
      %v2750 = vand.u32 %v2749, 4294901760
      %v2751 = vsub.f32 %v2749, %v2750
      %v2752 = vand.u32 %v2751, 4294901760
      %2753 = vmatpush1.msra.mxu0 %v2752
      %2754 = vmatprep.subr.mxu0 0.0
      %v2755 = vand.u32 %v355, 4294901760
      %v2756 = vsub.f32 %v355, %v2755
      %v2757 = vand.u32 %v2756, 4294901760
      %v2758 = vsub.f32 %v2756, %v2757
      %v2759 = vand.u32 %v2758, 4294901760
      %2760 = vmatpush1.msra.mxu0 %v2759
      %2761 = vmatprep.subr.mxu0 0.0
      %v2762 = vand.u32 %v356, 4294901760
      %v2763 = vsub.f32 %v356, %v2762
      %v2764 = vand.u32 %v2763, 4294901760
      %v2765 = vsub.f32 %v2763, %v2764
      %v2766 = vand.u32 %v2765, 4294901760
      %2767 = vmatpush1.msra.mxu0 %v2766
      %2768 = vmatprep.subr.mxu0 0.0
      %v2769 = vand.u32 %v357, 4294901760
      %v2770 = vsub.f32 %v357, %v2769
      %v2771 = vand.u32 %v2770, 4294901760
      %v2772 = vsub.f32 %v2770, %v2771
      %v2773 = vand.u32 %v2772, 4294901760
      %2774 = vmatpush1.msra.mxu0 %v2773
      %2775 = vmatprep.subr.mxu0 0.0
      %v2776 = vand.u32 %v358, 4294901760
      %v2777 = vsub.f32 %v358, %v2776
      %v2778 = vand.u32 %v2777, 4294901760
      %v2779 = vsub.f32 %v2777, %v2778
      %v2780 = vand.u32 %v2779, 4294901760
      %2781 = vmatpush1.msra.mxu0 %v2780
      %2782 = vmatprep.subr.mxu0 0.0
      %v2783 = vand.u32 %v359, 4294901760
      %v2784 = vsub.f32 %v359, %v2783
      %v2785 = vand.u32 %v2784, 4294901760
      %v2786 = vsub.f32 %v2784, %v2785
      %v2787 = vand.u32 %v2786, 4294901760
      %2788 = vmatpush1.msra.mxu0 %v2787
      %2789 = vmatprep.subr.mxu0 0.0
      %v2790 = vand.u32 %v360, 4294901760
      %v2791 = vsub.f32 %v360, %v2790
      %v2792 = vand.u32 %v2791, 4294901760
      %v2793 = vsub.f32 %v2791, %v2792
      %v2794 = vand.u32 %v2793, 4294901760
      %2795 = vmatpush1.msra.mxu0 %v2794
      %2796 = vmatprep.subr.mxu0 0.0
      %v2797 = vand.u32 %v361, 4294901760
      %v2798 = vsub.f32 %v361, %v2797
      %v2799 = vand.u32 %v2798, 4294901760
      %v2800 = vsub.f32 %v2798, %v2799
      %v2801 = vand.u32 %v2800, 4294901760
      %2802 = vmatpush1.msra.mxu0 %v2801
      %2803 = vmatprep.subr.mxu0 0.0
      %v2804 = vand.u32 %v362, 4294901760
      %v2805 = vsub.f32 %v362, %v2804
      %v2806 = vand.u32 %v2805, 4294901760
      %v2807 = vsub.f32 %v2805, %v2806
      %v2808 = vand.u32 %v2807, 4294901760
      %2809 = vmatpush1.msra.mxu0 %v2808
      %2810 = vmatprep.subr.mxu0 0.0
      %v2811 = vand.u32 %v363, 4294901760
      %v2812 = vsub.f32 %v363, %v2811
      %v2813 = vand.u32 %v2812, 4294901760
      %v2814 = vsub.f32 %v2812, %v2813
      %v2815 = vand.u32 %v2814, 4294901760
      %2816 = vmatpush1.msra.mxu0 %v2815
      %2817 = vmatprep.subr.mxu0 0.0
      %v2818 = vand.u32 %v364, 4294901760
      %v2819 = vsub.f32 %v364, %v2818
      %v2820 = vand.u32 %v2819, 4294901760
      %v2821 = vsub.f32 %v2819, %v2820
      %v2822 = vand.u32 %v2821, 4294901760
      %2823 = vmatpush1.msra.mxu0 %v2822
      %2824 = vmatprep.subr.mxu0 0.0
      %v2825 = vand.u32 %v365, 4294901760
      %v2826 = vsub.f32 %v365, %v2825
      %v2827 = vand.u32 %v2826, 4294901760
      %v2828 = vsub.f32 %v2826, %v2827
      %v2829 = vand.u32 %v2828, 4294901760
      %2830 = vmatpush1.msra.mxu0 %v2829
      %2831 = vmatprep.subr.mxu0 0.0
      %v2832 = vand.u32 %v2627, 4294901760
      %v2833 = vsub.f32 %v2627, %v2832
      %v2834 = vand.u32 %v2833, 4294901760
      %v2835 = vsub.f32 %v2833, %v2834
      %v2836 = vand.u32 %v2835, 4294901760
      %2837 = vmatpush1.msra.mxu0 %v2836
      %2838 = vmatprep.subr.mxu0 0.0
      %2839 = vmatpush1.msra.mxu0 0.0
      %2840 = vmatprep.subr.mxu0 0.0
      %2841 = vmatpush1.msra.mxu0 0.0
      %2842 = vmatprep.subr.mxu0 0.0
      %2843 = vmatpush1.msra.mxu0 0.0
      %2844 = vmatprep.subr.mxu0 0.0
      %2845 = vmatpush1.msra.mxu0 0.0
      %2846 = vmatprep.subr.mxu0 0.0
      %2847 = vmatpush1.msra.mxu0 0.0
      %2848 = vmatprep.subr.mxu0 0.0
      %2849 = vmatpush1.msra.mxu0 0.0
      %2850 = vmatprep.subr.mxu0 0.0
      %2851 = vmatpush1.msra.mxu0 0.0
      %2852 = vmatprep.subr.mxu0 0.0
      %2853 = vmatpush1.msra.mxu0 0.0
      %2854 = vmatprep.subr.mxu0 0.0
      %2855 = vmatpush1.msra.mxu0 0.0
      %2856 = vmatprep.subr.mxu0 0.0
      %2857 = vmatpush1.msra.mxu0 0.0
      %2858 = vmatprep.subr.mxu0 0.0
      %2859 = vmatpush1.msra.mxu0 0.0
      %2860 = vmatprep.subr.mxu0 0.0
      %2861 = vmatpush1.msra.mxu0 0.0
      %2862 = vmatprep.subr.mxu0 0.0
      %2863 = vmatpush1.msra.mxu0 0.0
      %2864 = vmatprep.subr.mxu0 0.0
      %2865 = vmatpush1.msra.mxu0 0.0
      %2866 = vmatprep.subr.mxu0 0.0
      %2867 = vmatpush1.msra.mxu0 0.0
      %2868 = vmatprep.subr.mxu0 0.0
      %2869 = vmatpush1.msra.mxu0 0.0
      %2870 = vmatprep.subr.mxu0 0.0
      %2871 = vmatpush1.msra.mxu0 0.0
      %2872 = vmatprep.subr.mxu0 0.0
      %2873 = vmatpush1.msra.mxu0 0.0
      %2874 = vmatprep.subr.mxu0 0.0
      %2875 = vmatpush1.msra.mxu0 0.0
      %2876 = vmatprep.mubr.f32.mxu0 0.0
      %v2877 = vand.u32 %v1881, 4294901760
      %2878 = vmatmul.mubr.f32.gmra.mrb[0].mxu0 %v2877
      %v2879 = vpop.f32.mrb[0].mxu0
      %v2880 = vadd.f32 %v2714, %v2879
      %v2881 = vpop.f32.mrb[0].mxu0
      %2882 = vmatprep.mubr.f32.mxu0 0.0
      %v2883 = vand.u32 %v1884, 4294901760
      %2884 = vmatmul.mubr.f32.gmra.mrb[0].mxu0 %v2883
      %v2885 = vpop.f32.mrb[0].mxu0
      %v2886 = vadd.f32 %v2724, %v2885
      %v2887 = vpop.f32.mrb[0].mxu0
      %2888 = vmatprep.mubr.f32.mxu0 0.0
      %v2889 = vand.u32 %v1887, 4294901760
      %2890 = vmatmul.mubr.f32.gmra.mrb[0].mxu0 %v2889
      %v2891 = vpop.f32.mrb[0].mxu0
      %v2892 = vadd.f32 %v2734, %v2891
      %v2893 = vpop.f32.mrb[0].mxu0
      %2894 = vmatprep.mubr.f32.mxu0 0.0
      %v2895 = vand.u32 %v1890, 4294901760
      %2896 = vmatmul.mubr.f32.gmra.mrb[0].mxu0 %v2895
      %v2897 = vpop.f32.mrb[0].mxu0
      %v2898 = vadd.f32 %v2744, %v2897
      %v2899 = vpop.f32.mrb[0].mxu0
      %2900 = vdwg.mxu0
      %2901 = vmatprep.subr.mxu0 0.0
      %v2902 = vand.u32 %v354, 4294901760
      %v2903 = vsub.f32 %v354, %v2902
      %2904 = vmatpush1.msra.mxu0 %v2903
      %2905 = vmatprep.subr.mxu0 0.0
      %v2906 = vand.u32 %v355, 4294901760
      %v2907 = vsub.f32 %v355, %v2906
      %2908 = vmatpush1.msra.mxu0 %v2907
      %2909 = vmatprep.subr.mxu0 0.0
      %v2910 = vand.u32 %v356, 4294901760
      %v2911 = vsub.f32 %v356, %v2910
      %2912 = vmatpush1.msra.mxu0 %v2911
      %2913 = vmatprep.subr.mxu0 0.0
      %v2914 = vand.u32 %v357, 4294901760
      %v2915 = vsub.f32 %v357, %v2914
      %2916 = vmatpush1.msra.mxu0 %v2915
      %2917 = vmatprep.subr.mxu0 0.0
      %v2918 = vand.u32 %v358, 4294901760
      %v2919 = vsub.f32 %v358, %v2918
      %2920 = vmatpush1.msra.mxu0 %v2919
      %2921 = vmatprep.subr.mxu0 0.0
      %v2922 = vand.u32 %v359, 4294901760
      %v2923 = vsub.f32 %v359, %v2922
      %2924 = vmatpush1.msra.mxu0 %v2923
      %2925 = vmatprep.subr.mxu0 0.0
      %v2926 = vand.u32 %v360, 4294901760
      %v2927 = vsub.f32 %v360, %v2926
      %2928 = vmatpush1.msra.mxu0 %v2927
      %2929 = vmatprep.subr.mxu0 0.0
      %v2930 = vand.u32 %v361, 4294901760
      %v2931 = vsub.f32 %v361, %v2930
      %2932 = vmatpush1.msra.mxu0 %v2931
      %2933 = vmatprep.subr.mxu0 0.0
      %v2934 = vand.u32 %v362, 4294901760
      %v2935 = vsub.f32 %v362, %v2934
      %2936 = vmatpush1.msra.mxu0 %v2935
      %2937 = vmatprep.subr.mxu0 0.0
      %v2938 = vand.u32 %v363, 4294901760
      %v2939 = vsub.f32 %v363, %v2938
      %2940 = vmatpush1.msra.mxu0 %v2939
      %2941 = vmatprep.subr.mxu0 0.0
      %v2942 = vand.u32 %v364, 4294901760
      %v2943 = vsub.f32 %v364, %v2942
      %2944 = vmatpush1.msra.mxu0 %v2943
      %2945 = vmatprep.subr.mxu0 0.0
      %v2946 = vand.u32 %v365, 4294901760
      %v2947 = vsub.f32 %v365, %v2946
      %2948 = vmatpush1.msra.mxu0 %v2947
      %2949 = vmatprep.subr.mxu0 0.0
      %v2950 = vand.u32 %v2627, 4294901760
      %v2951 = vsub.f32 %v2627, %v2950
      %2952 = vmatpush1.msra.mxu0 %v2951
      %2953 = vmatprep.subr.mxu0 0.0
      %2954 = vmatpush1.msra.mxu0 0.0
      %2955 = vmatprep.subr.mxu0 0.0
      %2956 = vmatpush1.msra.mxu0 0.0
      %2957 = vmatprep.subr.mxu0 0.0
      %2958 = vmatpush1.msra.mxu0 0.0
      %2959 = vmatprep.subr.mxu0 0.0
      %2960 = vmatpush1.msra.mxu0 0.0
      %2961 = vmatprep.subr.mxu0 0.0
      %2962 = vmatpush1.msra.mxu0 0.0
      %2963 = vmatprep.subr.mxu0 0.0
      %2964 = vmatpush1.msra.mxu0 0.0
      %2965 = vmatprep.subr.mxu0 0.0
      %2966 = vmatpush1.msra.mxu0 0.0
      %2967 = vmatprep.subr.mxu0 0.0
      %2968 = vmatpush1.msra.mxu0 0.0
      %2969 = vmatprep.subr.mxu0 0.0
      %2970 = vmatpush1.msra.mxu0 0.0
      %2971 = vmatprep.subr.mxu0 0.0
      %2972 = vmatpush1.msra.mxu0 0.0
      %2973 = vmatprep.subr.mxu0 0.0
      %2974 = vmatpush1.msra.mxu0 0.0
      %2975 = vmatprep.subr.mxu0 0.0
      %2976 = vmatpush1.msra.mxu0 0.0
      %2977 = vmatprep.subr.mxu0 0.0
      %2978 = vmatpush1.msra.mxu0 0.0
      %2979 = vmatprep.subr.mxu0 0.0
      %2980 = vmatpush1.msra.mxu0 0.0
      %2981 = vmatprep.subr.mxu0 0.0
      %2982 = vmatpush1.msra.mxu0 0.0
      %2983 = vmatprep.subr.mxu0 0.0
      %2984 = vmatpush1.msra.mxu0 0.0
      %2985 = vmatprep.subr.mxu0 0.0
      %2986 = vmatpush1.msra.mxu0 0.0
      %2987 = vmatprep.subr.mxu0 0.0
      %2988 = vmatpush1.msra.mxu0 0.0
      %2989 = vmatprep.subr.mxu0 0.0
      %2990 = vmatpush1.msra.mxu0 0.0
      %2991 = vmatprep.mubr.f32.mxu0 0.0
      %v2992 = vand.u32 %v1881, 4294901760
      %v2993 = vsub.f32 %v1881, %v2992
      %2994 = vmatmul.mubr.f32.gmra.mrb[0].mxu0 %v2993
      %v2995 = vpop.f32.mrb[0].mxu0
      %v2996 = vadd.f32 %v2880, %v2995
      %v2997 = vpop.f32.mrb[0].mxu0
      %2998 = vmatprep.mubr.f32.mxu0 0.0
      %v2999 = vand.u32 %v1884, 4294901760
      %v3000 = vsub.f32 %v1884, %v2999
      %3001 = vmatmul.mubr.f32.gmra.mrb[0].mxu0 %v3000
      %v3002 = vpop.f32.mrb[0].mxu0
      %v3003 = vadd.f32 %v2886, %v3002
      %v3004 = vpop.f32.mrb[0].mxu0
      %3005 = vmatprep.mubr.f32.mxu0 0.0
      %v3006 = vand.u32 %v1887, 4294901760
      %v3007 = vsub.f32 %v1887, %v3006
      %3008 = vmatmul.mubr.f32.gmra.mrb[0].mxu0 %v3007
      %v3009 = vpop.f32.mrb[0].mxu0
      %v3010 = vadd.f32 %v2892, %v3009
      %v3011 = vpop.f32.mrb[0].mxu0
      %3012 = vmatprep.mubr.f32.mxu0 0.0
      %v3013 = vand.u32 %v1890, 4294901760
      %v3014 = vsub.f32 %v1890, %v3013
      %3015 = vmatmul.mubr.f32.gmra.mrb[0].mxu0 %v3014
      %v3016 = vpop.f32.mrb[0].mxu0
      %v3017 = vadd.f32 %v2898, %v3016
      %v3018 = vpop.f32.mrb[0].mxu0
      %3019 = vdwg.mxu0
      %3020 = vmatprep.subr.mxu0 0.0
      %v3021 = vand.u32 %v354, 4294901760
      %3022 = vmatpush1.msra.mxu0 %v3021
      %3023 = vmatprep.subr.mxu0 0.0
      %v3024 = vand.u32 %v355, 4294901760
      %3025 = vmatpush1.msra.mxu0 %v3024
      %3026 = vmatprep.subr.mxu0 0.0
      %v3027 = vand.u32 %v356, 4294901760
      %3028 = vmatpush1.msra.mxu0 %v3027
      %3029 = vmatprep.subr.mxu0 0.0
      %v3030 = vand.u32 %v357, 4294901760
      %3031 = vmatpush1.msra.mxu0 %v3030
      %3032 = vmatprep.subr.mxu0 0.0
      %v3033 = vand.u32 %v358, 4294901760
      %3034 = vmatpush1.msra.mxu0 %v3033
      %3035 = vmatprep.subr.mxu0 0.0
      %v3036 = vand.u32 %v359, 4294901760
      %3037 = vmatpush1.msra.mxu0 %v3036
      %3038 = vmatprep.subr.mxu0 0.0
      %v3039 = vand.u32 %v360, 4294901760
      %3040 = vmatpush1.msra.mxu0 %v3039
      %3041 = vmatprep.subr.mxu0 0.0
      %v3042 = vand.u32 %v361, 4294901760
      %3043 = vmatpush1.msra.mxu0 %v3042
      %3044 = vmatprep.subr.mxu0 0.0
      %v3045 = vand.u32 %v362, 4294901760
      %3046 = vmatpush1.msra.mxu0 %v3045
      %3047 = vmatprep.subr.mxu0 0.0
      %v3048 = vand.u32 %v363, 4294901760
      %3049 = vmatpush1.msra.mxu0 %v3048
      %3050 = vmatprep.subr.mxu0 0.0
      %v3051 = vand.u32 %v364, 4294901760
      %3052 = vmatpush1.msra.mxu0 %v3051
      %3053 = vmatprep.subr.mxu0 0.0
      %v3054 = vand.u32 %v365, 4294901760
      %3055 = vmatpush1.msra.mxu0 %v3054
      %3056 = vmatprep.subr.mxu0 0.0
      %v3057 = vand.u32 %v2627, 4294901760
      %3058 = vmatpush1.msra.mxu0 %v3057
      %3059 = vmatprep.subr.mxu0 0.0
      %3060 = vmatpush1.msra.mxu0 0.0
      %3061 = vmatprep.subr.mxu0 0.0
      %3062 = vmatpush1.msra.mxu0 0.0
      %3063 = vmatprep.subr.mxu0 0.0
      %3064 = vmatpush1.msra.mxu0 0.0
      %3065 = vmatprep.subr.mxu0 0.0
      %3066 = vmatpush1.msra.mxu0 0.0
      %3067 = vmatprep.subr.mxu0 0.0
      %3068 = vmatpush1.msra.mxu0 0.0
      %3069 = vmatprep.subr.mxu0 0.0
      %3070 = vmatpush1.msra.mxu0 0.0
      %3071 = vmatprep.subr.mxu0 0.0
      %3072 = vmatpush1.msra.mxu0 0.0
      %3073 = vmatprep.subr.mxu0 0.0
      %3074 = vmatpush1.msra.mxu0 0.0
      %3075 = vmatprep.subr.mxu0 0.0
      %3076 = vmatpush1.msra.mxu0 0.0
      %3077 = vmatprep.subr.mxu0 0.0
      %3078 = vmatpush1.msra.mxu0 0.0
      %3079 = vmatprep.subr.mxu0 0.0
      %3080 = vmatpush1.msra.mxu0 0.0
      %3081 = vmatprep.subr.mxu0 0.0
      %3082 = vmatpush1.msra.mxu0 0.0
      %3083 = vmatprep.subr.mxu0 0.0
      %3084 = vmatpush1.msra.mxu0 0.0
      %3085 = vmatprep.subr.mxu0 0.0
      %3086 = vmatpush1.msra.mxu0 0.0
      %3087 = vmatprep.subr.mxu0 0.0
      %3088 = vmatpush1.msra.mxu0 0.0
      %3089 = vmatprep.subr.mxu0 0.0
      %3090 = vmatpush1.msra.mxu0 0.0
      %3091 = vmatprep.subr.mxu0 0.0
      %3092 = vmatpush1.msra.mxu0 0.0
      %3093 = vmatprep.subr.mxu0 0.0
      %3094 = vmatpush1.msra.mxu0 0.0
      %3095 = vmatprep.subr.mxu0 0.0
      %3096 = vmatpush1.msra.mxu0 0.0
      %3097 = vmatprep.mubr.f32.mxu0 0.0
      %v3098 = vand.u32 %v1881, 4294901760
      %v3099 = vsub.f32 %v1881, %v3098
      %v3100 = vand.u32 %v3099, 4294901760
      %3101 = vmatmul.mubr.f32.gmra.mrb[0].mxu0 %v3100
      %v3102 = vpop.f32.mrb[0].mxu0
      %v3103 = vadd.f32 %v2996, %v3102
      %v3104 = vpop.f32.mrb[0].mxu0
      %3105 = vmatprep.mubr.f32.mxu0 0.0
      %v3106 = vand.u32 %v1884, 4294901760
      %v3107 = vsub.f32 %v1884, %v3106
      %v3108 = vand.u32 %v3107, 4294901760
      %3109 = vmatmul.mubr.f32.gmra.mrb[0].mxu0 %v3108
      %v3110 = vpop.f32.mrb[0].mxu0
      %v3111 = vadd.f32 %v3003, %v3110
      %v3112 = vpop.f32.mrb[0].mxu0
      %3113 = vmatprep.mubr.f32.mxu0 0.0
      %v3114 = vand.u32 %v1887, 4294901760
      %v3115 = vsub.f32 %v1887, %v3114
      %v3116 = vand.u32 %v3115, 4294901760
      %3117 = vmatmul.mubr.f32.gmra.mrb[0].mxu0 %v3116
      %v3118 = vpop.f32.mrb[0].mxu0
      %v3119 = vadd.f32 %v3010, %v3118
      %v3120 = vpop.f32.mrb[0].mxu0
      %3121 = vmatprep.mubr.f32.mxu0 0.0
      %v3122 = vand.u32 %v1890, 4294901760
      %v3123 = vsub.f32 %v1890, %v3122
      %v3124 = vand.u32 %v3123, 4294901760
      %3125 = vmatmul.mubr.f32.gmra.mrb[0].mxu0 %v3124
      %v3126 = vpop.f32.mrb[0].mxu0
      %v3127 = vadd.f32 %v3017, %v3126
      %v3128 = vpop.f32.mrb[0].mxu0
      %3129 = vdwg.mxu0
      %3130 = vmatprep.subr.mxu0 0.0
      %v3131 = vand.u32 %v354, 4294901760
      %v3132 = vsub.f32 %v354, %v3131
      %v3133 = vand.u32 %v3132, 4294901760
      %3134 = vmatpush1.msra.mxu0 %v3133
      %3135 = vmatprep.subr.mxu0 0.0
      %v3136 = vand.u32 %v355, 4294901760
      %v3137 = vsub.f32 %v355, %v3136
      %v3138 = vand.u32 %v3137, 4294901760
      %3139 = vmatpush1.msra.mxu0 %v3138
      %3140 = vmatprep.subr.mxu0 0.0
      %v3141 = vand.u32 %v356, 4294901760
      %v3142 = vsub.f32 %v356, %v3141
      %v3143 = vand.u32 %v3142, 4294901760
      %3144 = vmatpush1.msra.mxu0 %v3143
      %3145 = vmatprep.subr.mxu0 0.0
      %v3146 = vand.u32 %v357, 4294901760
      %v3147 = vsub.f32 %v357, %v3146
      %v3148 = vand.u32 %v3147, 4294901760
      %3149 = vmatpush1.msra.mxu0 %v3148
      %3150 = vmatprep.subr.mxu0 0.0
      %v3151 = vand.u32 %v358, 4294901760
      %v3152 = vsub.f32 %v358, %v3151
      %v3153 = vand.u32 %v3152, 4294901760
      %3154 = vmatpush1.msra.mxu0 %v3153
      %3155 = vmatprep.subr.mxu0 0.0
      %v3156 = vand.u32 %v359, 4294901760
      %v3157 = vsub.f32 %v359, %v3156
      %v3158 = vand.u32 %v3157, 4294901760
      %3159 = vmatpush1.msra.mxu0 %v3158
      %3160 = vmatprep.subr.mxu0 0.0
      %v3161 = vand.u32 %v360, 4294901760
      %v3162 = vsub.f32 %v360, %v3161
      %v3163 = vand.u32 %v3162, 4294901760
      %3164 = vmatpush1.msra.mxu0 %v3163
      %3165 = vmatprep.subr.mxu0 0.0
      %v3166 = vand.u32 %v361, 4294901760
      %v3167 = vsub.f32 %v361, %v3166
      %v3168 = vand.u32 %v3167, 4294901760
      %3169 = vmatpush1.msra.mxu0 %v3168
      %3170 = vmatprep.subr.mxu0 0.0
      %v3171 = vand.u32 %v362, 4294901760
      %v3172 = vsub.f32 %v362, %v3171
      %v3173 = vand.u32 %v3172, 4294901760
      %3174 = vmatpush1.msra.mxu0 %v3173
      %3175 = vmatprep.subr.mxu0 0.0
      %v3176 = vand.u32 %v363, 4294901760
      %v3177 = vsub.f32 %v363, %v3176
      %v3178 = vand.u32 %v3177, 4294901760
      %3179 = vmatpush1.msra.mxu0 %v3178
      %3180 = vmatprep.subr.mxu0 0.0
      %v3181 = vand.u32 %v364, 4294901760
      %v3182 = vsub.f32 %v364, %v3181
      %v3183 = vand.u32 %v3182, 4294901760
      %3184 = vmatpush1.msra.mxu0 %v3183
      %3185 = vmatprep.subr.mxu0 0.0
      %v3186 = vand.u32 %v365, 4294901760
      %v3187 = vsub.f32 %v365, %v3186
      %v3188 = vand.u32 %v3187, 4294901760
      %3189 = vmatpush1.msra.mxu0 %v3188
      %3190 = vmatprep.subr.mxu0 0.0
      %v3191 = vand.u32 %v2627, 4294901760
      %v3192 = vsub.f32 %v2627, %v3191
      %v3193 = vand.u32 %v3192, 4294901760
      %3194 = vmatpush1.msra.mxu0 %v3193
      %3195 = vmatprep.subr.mxu0 0.0
      %3196 = vmatpush1.msra.mxu0 0.0
      %3197 = vmatprep.subr.mxu0 0.0
      %3198 = vmatpush1.msra.mxu0 0.0
      %3199 = vmatprep.subr.mxu0 0.0
      %3200 = vmatpush1.msra.mxu0 0.0
      %3201 = vmatprep.subr.mxu0 0.0
      %3202 = vmatpush1.msra.mxu0 0.0
      %3203 = vmatprep.subr.mxu0 0.0
      %3204 = vmatpush1.msra.mxu0 0.0
      %3205 = vmatprep.subr.mxu0 0.0
      %3206 = vmatpush1.msra.mxu0 0.0
      %3207 = vmatprep.subr.mxu0 0.0
      %3208 = vmatpush1.msra.mxu0 0.0
      %3209 = vmatprep.subr.mxu0 0.0
      %3210 = vmatpush1.msra.mxu0 0.0
      %3211 = vmatprep.subr.mxu0 0.0
      %3212 = vmatpush1.msra.mxu0 0.0
      %3213 = vmatprep.subr.mxu0 0.0
      %3214 = vmatpush1.msra.mxu0 0.0
      %3215 = vmatprep.subr.mxu0 0.0
      %3216 = vmatpush1.msra.mxu0 0.0
      %3217 = vmatprep.subr.mxu0 0.0
      %3218 = vmatpush1.msra.mxu0 0.0
      %3219 = vmatprep.subr.mxu0 0.0
      %3220 = vmatpush1.msra.mxu0 0.0
      %3221 = vmatprep.subr.mxu0 0.0
      %3222 = vmatpush1.msra.mxu0 0.0
      %3223 = vmatprep.subr.mxu0 0.0
      %3224 = vmatpush1.msra.mxu0 0.0
      %3225 = vmatprep.subr.mxu0 0.0
      %3226 = vmatpush1.msra.mxu0 0.0
      %3227 = vmatprep.subr.mxu0 0.0
      %3228 = vmatpush1.msra.mxu0 0.0
      %3229 = vmatprep.subr.mxu0 0.0
      %3230 = vmatpush1.msra.mxu0 0.0
      %3231 = vmatprep.subr.mxu0 0.0
      %3232 = vmatpush1.msra.mxu0 0.0
      %3233 = vmatprep.mubr.f32.mxu0 0.0
      %v3234 = vand.u32 %v1881, 4294901760
      %3235 = vmatmul.mubr.f32.gmra.mrb[0].mxu0 %v3234
      %v3236 = vpop.f32.mrb[0].mxu0
      %v3237 = vadd.f32 %v3103, %v3236
      %v3238 = vpop.f32.mrb[0].mxu0
      %3239 = vmatprep.mubr.f32.mxu0 0.0
      %v3240 = vand.u32 %v1884, 4294901760
      %3241 = vmatmul.mubr.f32.gmra.mrb[0].mxu0 %v3240
      %v3242 = vpop.f32.mrb[0].mxu0
      %v3243 = vadd.f32 %v3111, %v3242
      %v3244 = vpop.f32.mrb[0].mxu0
      %3245 = vmatprep.mubr.f32.mxu0 0.0
      %v3246 = vand.u32 %v1887, 4294901760
      %3247 = vmatmul.mubr.f32.gmra.mrb[0].mxu0 %v3246
      %v3248 = vpop.f32.mrb[0].mxu0
      %v3249 = vadd.f32 %v3119, %v3248
      %v3250 = vpop.f32.mrb[0].mxu0
      %3251 = vmatprep.mubr.f32.mxu0 0.0
      %v3252 = vand.u32 %v1890, 4294901760
      %3253 = vmatmul.mubr.f32.gmra.mrb[0].mxu0 %v3252
      %v3254 = vpop.f32.mrb[0].mxu0
      %v3255 = vadd.f32 %v3127, %v3254
      %v3256 = vpop.f32.mrb[0].mxu0
      %3257 = vdwg.mxu0
      %3258 = vmatprep.subr.mxu0 0.0
      %v3259 = vand.u32 %v354, 4294901760
      %3260 = vmatpush1.msra.mxu0 %v3259
      %3261 = vmatprep.subr.mxu0 0.0
      %v3262 = vand.u32 %v355, 4294901760
      %3263 = vmatpush1.msra.mxu0 %v3262
      %3264 = vmatprep.subr.mxu0 0.0
      %v3265 = vand.u32 %v356, 4294901760
      %3266 = vmatpush1.msra.mxu0 %v3265
      %3267 = vmatprep.subr.mxu0 0.0
      %v3268 = vand.u32 %v357, 4294901760
      %3269 = vmatpush1.msra.mxu0 %v3268
      %3270 = vmatprep.subr.mxu0 0.0
      %v3271 = vand.u32 %v358, 4294901760
      %3272 = vmatpush1.msra.mxu0 %v3271
      %3273 = vmatprep.subr.mxu0 0.0
      %v3274 = vand.u32 %v359, 4294901760
      %3275 = vmatpush1.msra.mxu0 %v3274
      %3276 = vmatprep.subr.mxu0 0.0
      %v3277 = vand.u32 %v360, 4294901760
      %3278 = vmatpush1.msra.mxu0 %v3277
      %3279 = vmatprep.subr.mxu0 0.0
      %v3280 = vand.u32 %v361, 4294901760
      %3281 = vmatpush1.msra.mxu0 %v3280
      %3282 = vmatprep.subr.mxu0 0.0
      %v3283 = vand.u32 %v362, 4294901760
      %3284 = vmatpush1.msra.mxu0 %v3283
      %3285 = vmatprep.subr.mxu0 0.0
      %v3286 = vand.u32 %v363, 4294901760
      %3287 = vmatpush1.msra.mxu0 %v3286
      %3288 = vmatprep.subr.mxu0 0.0
      %v3289 = vand.u32 %v364, 4294901760
      %3290 = vmatpush1.msra.mxu0 %v3289
      %3291 = vmatprep.subr.mxu0 0.0
      %v3292 = vand.u32 %v365, 4294901760
      %3293 = vmatpush1.msra.mxu0 %v3292
      %3294 = vmatprep.subr.mxu0 0.0
      %v3295 = vand.u32 %v2627, 4294901760
      %3296 = vmatpush1.msra.mxu0 %v3295
      %3297 = vmatprep.subr.mxu0 0.0
      %3298 = vmatpush1.msra.mxu0 0.0
      %3299 = vmatprep.subr.mxu0 0.0
      %3300 = vmatpush1.msra.mxu0 0.0
      %3301 = vmatprep.subr.mxu0 0.0
      %3302 = vmatpush1.msra.mxu0 0.0
      %3303 = vmatprep.subr.mxu0 0.0
      %3304 = vmatpush1.msra.mxu0 0.0
      %3305 = vmatprep.subr.mxu0 0.0
      %3306 = vmatpush1.msra.mxu0 0.0
      %3307 = vmatprep.subr.mxu0 0.0
      %3308 = vmatpush1.msra.mxu0 0.0
      %3309 = vmatprep.subr.mxu0 0.0
      %3310 = vmatpush1.msra.mxu0 0.0
      %3311 = vmatprep.subr.mxu0 0.0
      %3312 = vmatpush1.msra.mxu0 0.0
      %3313 = vmatprep.subr.mxu0 0.0
      %3314 = vmatpush1.msra.mxu0 0.0
      %3315 = vmatprep.subr.mxu0 0.0
      %3316 = vmatpush1.msra.mxu0 0.0
      %3317 = vmatprep.subr.mxu0 0.0
      %3318 = vmatpush1.msra.mxu0 0.0
      %3319 = vmatprep.subr.mxu0 0.0
      %3320 = vmatpush1.msra.mxu0 0.0
      %3321 = vmatprep.subr.mxu0 0.0
      %3322 = vmatpush1.msra.mxu0 0.0
      %3323 = vmatprep.subr.mxu0 0.0
      %3324 = vmatpush1.msra.mxu0 0.0
      %3325 = vmatprep.subr.mxu0 0.0
      %3326 = vmatpush1.msra.mxu0 0.0
      %3327 = vmatprep.subr.mxu0 0.0
      %3328 = vmatpush1.msra.mxu0 0.0
      %3329 = vmatprep.subr.mxu0 0.0
      %3330 = vmatpush1.msra.mxu0 0.0
      %3331 = vmatprep.subr.mxu0 0.0
      %3332 = vmatpush1.msra.mxu0 0.0
      %3333 = vmatprep.subr.mxu0 0.0
      %3334 = vmatpush1.msra.mxu0 0.0
      %3335 = vmatprep.mubr.f32.mxu0 0.0
      %v3336 = vand.u32 %v1881, 4294901760
      %3337 = vmatmul.mubr.f32.gmra.mrb[0].mxu0 %v3336
      %v3338 = vpop.f32.mrb[0].mxu0
      %v3339 = vadd.f32 %v3237, %v3338
      %v3340 = vpop.f32.mrb[0].mxu0
      %3341 = vmatprep.mubr.f32.mxu0 0.0
      %v3342 = vand.u32 %v1884, 4294901760
      %3343 = vmatmul.mubr.f32.gmra.mrb[0].mxu0 %v3342
      %v3344 = vpop.f32.mrb[0].mxu0
      %v3345 = vadd.f32 %v3243, %v3344
      %v3346 = vpop.f32.mrb[0].mxu0
      %3347 = vmatprep.mubr.f32.mxu0 0.0
      %v3348 = vand.u32 %v1887, 4294901760
      %3349 = vmatmul.mubr.f32.gmra.mrb[0].mxu0 %v3348
      %v3350 = vpop.f32.mrb[0].mxu0
      %v3351 = vadd.f32 %v3249, %v3350
      %v3352 = vpop.f32.mrb[0].mxu0
      %3353 = vmatprep.mubr.f32.mxu0 0.0
      %v3354 = vand.u32 %v1890, 4294901760
      %3355 = vmatmul.mubr.f32.gmra.mrb[0].mxu0 %v3354
      %v3356 = vpop.f32.mrb[0].mxu0
      %v3357 = vadd.f32 %v3255, %v3356
      %v3358 = vpop.f32.mrb[0].mxu0
      %3359 = vdwg.mxu0
      %v3360 = vld [vmem:[#allocation2 + $0x2] sm:$0xff]
      %v3361 = vld [vmem:[#allocation2 + $0xa] sm:$0xff]
      %v3362 = vld [vmem:[#allocation2 + $0x12] sm:$0xff]
      %v3363 = vld [vmem:[#allocation2 + $0x1a] sm:$0xff]
      %s3364 = scalar_lea.vmem %s1, 416
      %v3365 = vld [vmem:[%s3364] sm:$0xff]
      %v3366 = vld [vmem:[%s3364 + $0x8] sm:$0xff]
      %v3367 = vld [vmem:[%s3364 + $0x10] sm:$0xff]
      %v3368 = vld [vmem:[%s3364 + $0x18] sm:$0xff]
      %v3369 = vld [vmem:[%s3364 + $0x20] sm:$0xff]
      %v3370 = vld [vmem:[%s3364 + $0x28] sm:$0xff]
      %v3371 = vld [vmem:[%s3364 + $0x30] sm:$0xff]
      %v3372 = vld [vmem:[%s3364 + $0x38] sm:$0xff]
      %v3373 = vld [vmem:[%s3364 + $0x40] sm:$0xff]
      %v3374 = vld [vmem:[%s3364 + $0x48] sm:$0xff]
      %v3375 = vld [vmem:[%s3364 + $0x50] sm:$0xff]
      %v3376 = vld [vmem:[%s3364 + $0x58] sm:$0xff]
      %v3377 = vld [vmem:[%s3364 + $0x60] sm:$0x3f]
      %v3379 = vsel %vm304, %v3360, 0
      %v3382 = vsel %vm304, %v3361, 0
      %v3385 = vsel %vm304, %v3362, 0
      %v3388 = vsel %vm304, %v3363, 0
      %v3391 = vsel %vm397, %v3377, 0
      %3393 = vmatprep.subr.mxu0 0.0
      %v3394 = vand.u32 %v3365, 4294901760
      %3395 = vmatpush1.msra.mxu0 %v3394
      %3396 = vmatprep.subr.mxu0 0.0
      %v3397 = vand.u32 %v3366, 4294901760
      %3398 = vmatpush1.msra.mxu0 %v3397
      %3399 = vmatprep.subr.mxu0 0.0
      %v3400 = vand.u32 %v3367, 4294901760
      %3401 = vmatpush1.msra.mxu0 %v3400
      %3402 = vmatprep.subr.mxu0 0.0
      %v3403 = vand.u32 %v3368, 4294901760
      %3404 = vmatpush1.msra.mxu0 %v3403
      %3405 = vmatprep.subr.mxu0 0.0
      %v3406 = vand.u32 %v3369, 4294901760
      %3407 = vmatpush1.msra.mxu0 %v3406
      %3408 = vmatprep.subr.mxu0 0.0
      %v3409 = vand.u32 %v3370, 4294901760
      %3410 = vmatpush1.msra.mxu0 %v3409
      %3411 = vmatprep.subr.mxu0 0.0
      %v3412 = vand.u32 %v3371, 4294901760
      %3413 = vmatpush1.msra.mxu0 %v3412
      %3414 = vmatprep.subr.mxu0 0.0
      %v3415 = vand.u32 %v3372, 4294901760
      %3416 = vmatpush1.msra.mxu0 %v3415
      %3417 = vmatprep.subr.mxu0 0.0
      %v3418 = vand.u32 %v3373, 4294901760
      %3419 = vmatpush1.msra.mxu0 %v3418
      %3420 = vmatprep.subr.mxu0 0.0
      %v3421 = vand.u32 %v3374, 4294901760
      %3422 = vmatpush1.msra.mxu0 %v3421
      %3423 = vmatprep.subr.mxu0 0.0
      %v3424 = vand.u32 %v3375, 4294901760
      %3425 = vmatpush1.msra.mxu0 %v3424
      %3426 = vmatprep.subr.mxu0 0.0
      %v3427 = vand.u32 %v3376, 4294901760
      %3428 = vmatpush1.msra.mxu0 %v3427
      %3429 = vmatprep.subr.mxu0 0.0
      %v3430 = vand.u32 %v3391, 4294901760
      %3431 = vmatpush1.msra.mxu0 %v3430
      %3432 = vmatprep.subr.mxu0 0.0
      %3433 = vmatpush1.msra.mxu0 0.0
      %3434 = vmatprep.subr.mxu0 0.0
      %3435 = vmatpush1.msra.mxu0 0.0
      %3436 = vmatprep.subr.mxu0 0.0
      %3437 = vmatpush1.msra.mxu0 0.0
      %3438 = vmatprep.subr.mxu0 0.0
      %3439 = vmatpush1.msra.mxu0 0.0
      %3440 = vmatprep.subr.mxu0 0.0
      %3441 = vmatpush1.msra.mxu0 0.0
      %3442 = vmatprep.subr.mxu0 0.0
      %3443 = vmatpush1.msra.mxu0 0.0
      %3444 = vmatprep.subr.mxu0 0.0
      %3445 = vmatpush1.msra.mxu0 0.0
      %3446 = vmatprep.subr.mxu0 0.0
      %3447 = vmatpush1.msra.mxu0 0.0
      %3448 = vmatprep.subr.mxu0 0.0
      %3449 = vmatpush1.msra.mxu0 0.0
      %3450 = vmatprep.subr.mxu0 0.0
      %3451 = vmatpush1.msra.mxu0 0.0
      %3452 = vmatprep.subr.mxu0 0.0
      %3453 = vmatpush1.msra.mxu0 0.0
      %3454 = vmatprep.subr.mxu0 0.0
      %3455 = vmatpush1.msra.mxu0 0.0
      %3456 = vmatprep.subr.mxu0 0.0
      %3457 = vmatpush1.msra.mxu0 0.0
      %3458 = vmatprep.subr.mxu0 0.0
      %3459 = vmatpush1.msra.mxu0 0.0
      %3460 = vmatprep.subr.mxu0 0.0
      %3461 = vmatpush1.msra.mxu0 0.0
      %3462 = vmatprep.subr.mxu0 0.0
      %3463 = vmatpush1.msra.mxu0 0.0
      %3464 = vmatprep.subr.mxu0 0.0
      %3465 = vmatpush1.msra.mxu0 0.0
      %3466 = vmatprep.subr.mxu0 0.0
      %3467 = vmatpush1.msra.mxu0 0.0
      %3468 = vmatprep.subr.mxu0 0.0
      %3469 = vmatpush1.msra.mxu0 0.0
      %3470 = vmatprep.mubr.f32.mxu0 0.0
      %v3471 = vand.u32 %v3379, 4294901760
      %v3472 = vsub.f32 %v3379, %v3471
      %v3473 = vand.u32 %v3472, 4294901760
      %v3474 = vsub.f32 %v3472, %v3473
      %v3475 = vand.u32 %v3474, 4294901760
      %3476 = vmatmul.mubr.f32.gmra.mrb[0].mxu0 %v3475
      %v3477 = vpop.f32.mrb[0].mxu0
      %v3478 = vadd.f32 0.0, %v3477
      %v3479 = vpop.f32.mrb[0].mxu0
      %3480 = vmatprep.mubr.f32.mxu0 0.0
      %v3481 = vand.u32 %v3382, 4294901760
      %v3482 = vsub.f32 %v3382, %v3481
      %v3483 = vand.u32 %v3482, 4294901760
      %v3484 = vsub.f32 %v3482, %v3483
      %v3485 = vand.u32 %v3484, 4294901760
      %3486 = vmatmul.mubr.f32.gmra.mrb[0].mxu0 %v3485
      %v3487 = vpop.f32.mrb[0].mxu0
      %v3488 = vadd.f32 0.0, %v3487
      %v3489 = vpop.f32.mrb[0].mxu0
      %3490 = vmatprep.mubr.f32.mxu0 0.0
      %v3491 = vand.u32 %v3385, 4294901760
      %v3492 = vsub.f32 %v3385, %v3491
      %v3493 = vand.u32 %v3492, 4294901760
      %v3494 = vsub.f32 %v3492, %v3493
      %v3495 = vand.u32 %v3494, 4294901760
      %3496 = vmatmul.mubr.f32.gmra.mrb[0].mxu0 %v3495
      %v3497 = vpop.f32.mrb[0].mxu0
      %v3498 = vadd.f32 0.0, %v3497
      %v3499 = vpop.f32.mrb[0].mxu0
      %3500 = vmatprep.mubr.f32.mxu0 0.0
      %v3501 = vand.u32 %v3388, 4294901760
      %v3502 = vsub.f32 %v3388, %v3501
      %v3503 = vand.u32 %v3502, 4294901760
      %v3504 = vsub.f32 %v3502, %v3503
      %v3505 = vand.u32 %v3504, 4294901760
      %3506 = vmatmul.mubr.f32.gmra.mrb[0].mxu0 %v3505
      %v3507 = vpop.f32.mrb[0].mxu0
      %v3508 = vadd.f32 0.0, %v3507
      %v3509 = vpop.f32.mrb[0].mxu0
      %3510 = vdwg.mxu0
      %3511 = vmatprep.subr.mxu0 0.0
      %v3512 = vand.u32 %v3365, 4294901760
      %v3513 = vsub.f32 %v3365, %v3512
      %v3514 = vand.u32 %v3513, 4294901760
      %v3515 = vsub.f32 %v3513, %v3514
      %v3516 = vand.u32 %v3515, 4294901760
      %3517 = vmatpush1.msra.mxu0 %v3516
      %3518 = vmatprep.subr.mxu0 0.0
      %v3519 = vand.u32 %v3366, 4294901760
      %v3520 = vsub.f32 %v3366, %v3519
      %v3521 = vand.u32 %v3520, 4294901760
      %v3522 = vsub.f32 %v3520, %v3521
      %v3523 = vand.u32 %v3522, 4294901760
      %3524 = vmatpush1.msra.mxu0 %v3523
      %3525 = vmatprep.subr.mxu0 0.0
      %v3526 = vand.u32 %v3367, 4294901760
      %v3527 = vsub.f32 %v3367, %v3526
      %v3528 = vand.u32 %v3527, 4294901760
      %v3529 = vsub.f32 %v3527, %v3528
      %v3530 = vand.u32 %v3529, 4294901760
      %3531 = vmatpush1.msra.mxu0 %v3530
      %3532 = vmatprep.subr.mxu0 0.0
      %v3533 = vand.u32 %v3368, 4294901760
      %v3534 = vsub.f32 %v3368, %v3533
      %v3535 = vand.u32 %v3534, 4294901760
      %v3536 = vsub.f32 %v3534, %v3535
      %v3537 = vand.u32 %v3536, 4294901760
      %3538 = vmatpush1.msra.mxu0 %v3537
      %3539 = vmatprep.subr.mxu0 0.0
      %v3540 = vand.u32 %v3369, 4294901760
      %v3541 = vsub.f32 %v3369, %v3540
      %v3542 = vand.u32 %v3541, 4294901760
      %v3543 = vsub.f32 %v3541, %v3542
      %v3544 = vand.u32 %v3543, 4294901760
      %3545 = vmatpush1.msra.mxu0 %v3544
      %3546 = vmatprep.subr.mxu0 0.0
      %v3547 = vand.u32 %v3370, 4294901760
      %v3548 = vsub.f32 %v3370, %v3547
      %v3549 = vand.u32 %v3548, 4294901760
      %v3550 = vsub.f32 %v3548, %v3549
      %v3551 = vand.u32 %v3550, 4294901760
      %3552 = vmatpush1.msra.mxu0 %v3551
      %3553 = vmatprep.subr.mxu0 0.0
      %v3554 = vand.u32 %v3371, 4294901760
      %v3555 = vsub.f32 %v3371, %v3554
      %v3556 = vand.u32 %v3555, 4294901760
      %v3557 = vsub.f32 %v3555, %v3556
      %v3558 = vand.u32 %v3557, 4294901760
      %3559 = vmatpush1.msra.mxu0 %v3558
      %3560 = vmatprep.subr.mxu0 0.0
      %v3561 = vand.u32 %v3372, 4294901760
      %v3562 = vsub.f32 %v3372, %v3561
      %v3563 = vand.u32 %v3562, 4294901760
      %v3564 = vsub.f32 %v3562, %v3563
      %v3565 = vand.u32 %v3564, 4294901760
      %3566 = vmatpush1.msra.mxu0 %v3565
      %3567 = vmatprep.subr.mxu0 0.0
      %v3568 = vand.u32 %v3373, 4294901760
      %v3569 = vsub.f32 %v3373, %v3568
      %v3570 = vand.u32 %v3569, 4294901760
      %v3571 = vsub.f32 %v3569, %v3570
      %v3572 = vand.u32 %v3571, 4294901760
      %3573 = vmatpush1.msra.mxu0 %v3572
      %3574 = vmatprep.subr.mxu0 0.0
      %v3575 = vand.u32 %v3374, 4294901760
      %v3576 = vsub.f32 %v3374, %v3575
      %v3577 = vand.u32 %v3576, 4294901760
      %v3578 = vsub.f32 %v3576, %v3577
      %v3579 = vand.u32 %v3578, 4294901760
      %3580 = vmatpush1.msra.mxu0 %v3579
      %3581 = vmatprep.subr.mxu0 0.0
      %v3582 = vand.u32 %v3375, 4294901760
      %v3583 = vsub.f32 %v3375, %v3582
      %v3584 = vand.u32 %v3583, 4294901760
      %v3585 = vsub.f32 %v3583, %v3584
      %v3586 = vand.u32 %v3585, 4294901760
      %3587 = vmatpush1.msra.mxu0 %v3586
      %3588 = vmatprep.subr.mxu0 0.0
      %v3589 = vand.u32 %v3376, 4294901760
      %v3590 = vsub.f32 %v3376, %v3589
      %v3591 = vand.u32 %v3590, 4294901760
      %v3592 = vsub.f32 %v3590, %v3591
      %v3593 = vand.u32 %v3592, 4294901760
      %3594 = vmatpush1.msra.mxu0 %v3593
      %3595 = vmatprep.subr.mxu0 0.0
      %v3596 = vand.u32 %v3391, 4294901760
      %v3597 = vsub.f32 %v3391, %v3596
      %v3598 = vand.u32 %v3597, 4294901760
      %v3599 = vsub.f32 %v3597, %v3598
      %v3600 = vand.u32 %v3599, 4294901760
      %3601 = vmatpush1.msra.mxu0 %v3600
      %3602 = vmatprep.subr.mxu0 0.0
      %3603 = vmatpush1.msra.mxu0 0.0
      %3604 = vmatprep.subr.mxu0 0.0
      %3605 = vmatpush1.msra.mxu0 0.0
      %3606 = vmatprep.subr.mxu0 0.0
      %3607 = vmatpush1.msra.mxu0 0.0
      %3608 = vmatprep.subr.mxu0 0.0
      %3609 = vmatpush1.msra.mxu0 0.0
      %3610 = vmatprep.subr.mxu0 0.0
      %3611 = vmatpush1.msra.mxu0 0.0
      %3612 = vmatprep.subr.mxu0 0.0
      %3613 = vmatpush1.msra.mxu0 0.0
      %3614 = vmatprep.subr.mxu0 0.0
      %3615 = vmatpush1.msra.mxu0 0.0
      %3616 = vmatprep.subr.mxu0 0.0
      %3617 = vmatpush1.msra.mxu0 0.0
      %3618 = vmatprep.subr.mxu0 0.0
      %3619 = vmatpush1.msra.mxu0 0.0
      %3620 = vmatprep.subr.mxu0 0.0
      %3621 = vmatpush1.msra.mxu0 0.0
      %3622 = vmatprep.subr.mxu0 0.0
      %3623 = vmatpush1.msra.mxu0 0.0
      %3624 = vmatprep.subr.mxu0 0.0
      %3625 = vmatpush1.msra.mxu0 0.0
      %3626 = vmatprep.subr.mxu0 0.0
      %3627 = vmatpush1.msra.mxu0 0.0
      %3628 = vmatprep.subr.mxu0 0.0
      %3629 = vmatpush1.msra.mxu0 0.0
      %3630 = vmatprep.subr.mxu0 0.0
      %3631 = vmatpush1.msra.mxu0 0.0
      %3632 = vmatprep.subr.mxu0 0.0
      %3633 = vmatpush1.msra.mxu0 0.0
      %3634 = vmatprep.subr.mxu0 0.0
      %3635 = vmatpush1.msra.mxu0 0.0
      %3636 = vmatprep.subr.mxu0 0.0
      %3637 = vmatpush1.msra.mxu0 0.0
      %3638 = vmatprep.subr.mxu0 0.0
      %3639 = vmatpush1.msra.mxu0 0.0
      %3640 = vmatprep.mubr.f32.mxu0 0.0
      %v3641 = vand.u32 %v3379, 4294901760
      %3642 = vmatmul.mubr.f32.gmra.mrb[0].mxu0 %v3641
      %v3643 = vpop.f32.mrb[0].mxu0
      %v3644 = vadd.f32 %v3478, %v3643
      %v3645 = vpop.f32.mrb[0].mxu0
      %3646 = vmatprep.mubr.f32.mxu0 0.0
      %v3647 = vand.u32 %v3382, 4294901760
      %3648 = vmatmul.mubr.f32.gmra.mrb[0].mxu0 %v3647
      %v3649 = vpop.f32.mrb[0].mxu0
      %v3650 = vadd.f32 %v3488, %v3649
      %v3651 = vpop.f32.mrb[0].mxu0
      %3652 = vmatprep.mubr.f32.mxu0 0.0
      %v3653 = vand.u32 %v3385, 4294901760
      %3654 = vmatmul.mubr.f32.gmra.mrb[0].mxu0 %v3653
      %v3655 = vpop.f32.mrb[0].mxu0
      %v3656 = vadd.f32 %v3498, %v3655
      %v3657 = vpop.f32.mrb[0].mxu0
      %3658 = vmatprep.mubr.f32.mxu0 0.0
      %v3659 = vand.u32 %v3388, 4294901760
      %3660 = vmatmul.mubr.f32.gmra.mrb[0].mxu0 %v3659
      %v3661 = vpop.f32.mrb[0].mxu0
      %v3662 = vadd.f32 %v3508, %v3661
      %v3663 = vpop.f32.mrb[0].mxu0
      %3664 = vdwg.mxu0
      %3665 = vmatprep.subr.mxu0 0.0
      %v3666 = vand.u32 %v3365, 4294901760
      %v3667 = vsub.f32 %v3365, %v3666
      %3668 = vmatpush1.msra.mxu0 %v3667
      %3669 = vmatprep.subr.mxu0 0.0
      %v3670 = vand.u32 %v3366, 4294901760
      %v3671 = vsub.f32 %v3366, %v3670
      %3672 = vmatpush1.msra.mxu0 %v3671
      %3673 = vmatprep.subr.mxu0 0.0
      %v3674 = vand.u32 %v3367, 4294901760
      %v3675 = vsub.f32 %v3367, %v3674
      %3676 = vmatpush1.msra.mxu0 %v3675
      %3677 = vmatprep.subr.mxu0 0.0
      %v3678 = vand.u32 %v3368, 4294901760
      %v3679 = vsub.f32 %v3368, %v3678
      %3680 = vmatpush1.msra.mxu0 %v3679
      %3681 = vmatprep.subr.mxu0 0.0
      %v3682 = vand.u32 %v3369, 4294901760
      %v3683 = vsub.f32 %v3369, %v3682
      %3684 = vmatpush1.msra.mxu0 %v3683
      %3685 = vmatprep.subr.mxu0 0.0
      %v3686 = vand.u32 %v3370, 4294901760
      %v3687 = vsub.f32 %v3370, %v3686
      %3688 = vmatpush1.msra.mxu0 %v3687
      %3689 = vmatprep.subr.mxu0 0.0
      %v3690 = vand.u32 %v3371, 4294901760
      %v3691 = vsub.f32 %v3371, %v3690
      %3692 = vmatpush1.msra.mxu0 %v3691
      %3693 = vmatprep.subr.mxu0 0.0
      %v3694 = vand.u32 %v3372, 4294901760
      %v3695 = vsub.f32 %v3372, %v3694
      %3696 = vmatpush1.msra.mxu0 %v3695
      %3697 = vmatprep.subr.mxu0 0.0
      %v3698 = vand.u32 %v3373, 4294901760
      %v3699 = vsub.f32 %v3373, %v3698
      %3700 = vmatpush1.msra.mxu0 %v3699
      %3701 = vmatprep.subr.mxu0 0.0
      %v3702 = vand.u32 %v3374, 4294901760
      %v3703 = vsub.f32 %v3374, %v3702
      %3704 = vmatpush1.msra.mxu0 %v3703
      %3705 = vmatprep.subr.mxu0 0.0
      %v3706 = vand.u32 %v3375, 4294901760
      %v3707 = vsub.f32 %v3375, %v3706
      %3708 = vmatpush1.msra.mxu0 %v3707
      %3709 = vmatprep.subr.mxu0 0.0
      %v3710 = vand.u32 %v3376, 4294901760
      %v3711 = vsub.f32 %v3376, %v3710
      %3712 = vmatpush1.msra.mxu0 %v3711
      %3713 = vmatprep.subr.mxu0 0.0
      %v3714 = vand.u32 %v3391, 4294901760
      %v3715 = vsub.f32 %v3391, %v3714
      %3716 = vmatpush1.msra.mxu0 %v3715
      %3717 = vmatprep.subr.mxu0 0.0
      %3718 = vmatpush1.msra.mxu0 0.0
      %3719 = vmatprep.subr.mxu0 0.0
      %3720 = vmatpush1.msra.mxu0 0.0
      %3721 = vmatprep.subr.mxu0 0.0
      %3722 = vmatpush1.msra.mxu0 0.0
      %3723 = vmatprep.subr.mxu0 0.0
      %3724 = vmatpush1.msra.mxu0 0.0
      %3725 = vmatprep.subr.mxu0 0.0
      %3726 = vmatpush1.msra.mxu0 0.0
      %3727 = vmatprep.subr.mxu0 0.0
      %3728 = vmatpush1.msra.mxu0 0.0
      %3729 = vmatprep.subr.mxu0 0.0
      %3730 = vmatpush1.msra.mxu0 0.0
      %3731 = vmatprep.subr.mxu0 0.0
      %3732 = vmatpush1.msra.mxu0 0.0
      %3733 = vmatprep.subr.mxu0 0.0
      %3734 = vmatpush1.msra.mxu0 0.0
      %3735 = vmatprep.subr.mxu0 0.0
      %3736 = vmatpush1.msra.mxu0 0.0
      %3737 = vmatprep.subr.mxu0 0.0
      %3738 = vmatpush1.msra.mxu0 0.0
      %3739 = vmatprep.subr.mxu0 0.0
      %3740 = vmatpush1.msra.mxu0 0.0
      %3741 = vmatprep.subr.mxu0 0.0
      %3742 = vmatpush1.msra.mxu0 0.0
      %3743 = vmatprep.subr.mxu0 0.0
      %3744 = vmatpush1.msra.mxu0 0.0
      %3745 = vmatprep.subr.mxu0 0.0
      %3746 = vmatpush1.msra.mxu0 0.0
      %3747 = vmatprep.subr.mxu0 0.0
      %3748 = vmatpush1.msra.mxu0 0.0
      %3749 = vmatprep.subr.mxu0 0.0
      %3750 = vmatpush1.msra.mxu0 0.0
      %3751 = vmatprep.subr.mxu0 0.0
      %3752 = vmatpush1.msra.mxu0 0.0
      %3753 = vmatprep.subr.mxu0 0.0
      %3754 = vmatpush1.msra.mxu0 0.0
      %3755 = vmatprep.mubr.f32.mxu0 0.0
      %v3756 = vand.u32 %v3379, 4294901760
      %v3757 = vsub.f32 %v3379, %v3756
      %3758 = vmatmul.mubr.f32.gmra.mrb[0].mxu0 %v3757
      %v3759 = vpop.f32.mrb[0].mxu0
      %v3760 = vadd.f32 %v3644, %v3759
      %v3761 = vpop.f32.mrb[0].mxu0
      %3762 = vmatprep.mubr.f32.mxu0 0.0
      %v3763 = vand.u32 %v3382, 4294901760
      %v3764 = vsub.f32 %v3382, %v3763
      %3765 = vmatmul.mubr.f32.gmra.mrb[0].mxu0 %v3764
      %v3766 = vpop.f32.mrb[0].mxu0
      %v3767 = vadd.f32 %v3650, %v3766
      %v3768 = vpop.f32.mrb[0].mxu0
      %3769 = vmatprep.mubr.f32.mxu0 0.0
      %v3770 = vand.u32 %v3385, 4294901760
      %v3771 = vsub.f32 %v3385, %v3770
      %3772 = vmatmul.mubr.f32.gmra.mrb[0].mxu0 %v3771
      %v3773 = vpop.f32.mrb[0].mxu0
      %v3774 = vadd.f32 %v3656, %v3773
      %v3775 = vpop.f32.mrb[0].mxu0
      %3776 = vmatprep.mubr.f32.mxu0 0.0
      %v3777 = vand.u32 %v3388, 4294901760
      %v3778 = vsub.f32 %v3388, %v3777
      %3779 = vmatmul.mubr.f32.gmra.mrb[0].mxu0 %v3778
      %v3780 = vpop.f32.mrb[0].mxu0
      %v3781 = vadd.f32 %v3662, %v3780
      %v3782 = vpop.f32.mrb[0].mxu0
      %3783 = vdwg.mxu0
      %3784 = vmatprep.subr.mxu0 0.0
      %v3785 = vand.u32 %v3365, 4294901760
      %3786 = vmatpush1.msra.mxu0 %v3785
      %3787 = vmatprep.subr.mxu0 0.0
      %v3788 = vand.u32 %v3366, 4294901760
      %3789 = vmatpush1.msra.mxu0 %v3788
      %3790 = vmatprep.subr.mxu0 0.0
      %v3791 = vand.u32 %v3367, 4294901760
      %3792 = vmatpush1.msra.mxu0 %v3791
      %3793 = vmatprep.subr.mxu0 0.0
      %v3794 = vand.u32 %v3368, 4294901760
      %3795 = vmatpush1.msra.mxu0 %v3794
      %3796 = vmatprep.subr.mxu0 0.0
      %v3797 = vand.u32 %v3369, 4294901760
      %3798 = vmatpush1.msra.mxu0 %v3797
      %3799 = vmatprep.subr.mxu0 0.0
      %v3800 = vand.u32 %v3370, 4294901760
      %3801 = vmatpush1.msra.mxu0 %v3800
      %3802 = vmatprep.subr.mxu0 0.0
      %v3803 = vand.u32 %v3371, 4294901760
      %3804 = vmatpush1.msra.mxu0 %v3803
      %3805 = vmatprep.subr.mxu0 0.0
      %v3806 = vand.u32 %v3372, 4294901760
      %3807 = vmatpush1.msra.mxu0 %v3806
      %3808 = vmatprep.subr.mxu0 0.0
      %v3809 = vand.u32 %v3373, 4294901760
      %3810 = vmatpush1.msra.mxu0 %v3809
      %3811 = vmatprep.subr.mxu0 0.0
      %v3812 = vand.u32 %v3374, 4294901760
      %3813 = vmatpush1.msra.mxu0 %v3812
      %3814 = vmatprep.subr.mxu0 0.0
      %v3815 = vand.u32 %v3375, 4294901760
      %3816 = vmatpush1.msra.mxu0 %v3815
      %3817 = vmatprep.subr.mxu0 0.0
      %v3818 = vand.u32 %v3376, 4294901760
      %3819 = vmatpush1.msra.mxu0 %v3818
      %3820 = vmatprep.subr.mxu0 0.0
      %v3821 = vand.u32 %v3391, 4294901760
      %3822 = vmatpush1.msra.mxu0 %v3821
      %3823 = vmatprep.subr.mxu0 0.0
      %3824 = vmatpush1.msra.mxu0 0.0
      %3825 = vmatprep.subr.mxu0 0.0
      %3826 = vmatpush1.msra.mxu0 0.0
      %3827 = vmatprep.subr.mxu0 0.0
      %3828 = vmatpush1.msra.mxu0 0.0
      %3829 = vmatprep.subr.mxu0 0.0
      %3830 = vmatpush1.msra.mxu0 0.0
      %3831 = vmatprep.subr.mxu0 0.0
      %3832 = vmatpush1.msra.mxu0 0.0
      %3833 = vmatprep.subr.mxu0 0.0
      %3834 = vmatpush1.msra.mxu0 0.0
      %3835 = vmatprep.subr.mxu0 0.0
      %3836 = vmatpush1.msra.mxu0 0.0
      %3837 = vmatprep.subr.mxu0 0.0
      %3838 = vmatpush1.msra.mxu0 0.0
      %3839 = vmatprep.subr.mxu0 0.0
      %3840 = vmatpush1.msra.mxu0 0.0
      %3841 = vmatprep.subr.mxu0 0.0
      %3842 = vmatpush1.msra.mxu0 0.0
      %3843 = vmatprep.subr.mxu0 0.0
      %3844 = vmatpush1.msra.mxu0 0.0
      %3845 = vmatprep.subr.mxu0 0.0
      %3846 = vmatpush1.msra.mxu0 0.0
      %3847 = vmatprep.subr.mxu0 0.0
      %3848 = vmatpush1.msra.mxu0 0.0
      %3849 = vmatprep.subr.mxu0 0.0
      %3850 = vmatpush1.msra.mxu0 0.0
      %3851 = vmatprep.subr.mxu0 0.0
      %3852 = vmatpush1.msra.mxu0 0.0
      %3853 = vmatprep.subr.mxu0 0.0
      %3854 = vmatpush1.msra.mxu0 0.0
      %3855 = vmatprep.subr.mxu0 0.0
      %3856 = vmatpush1.msra.mxu0 0.0
      %3857 = vmatprep.subr.mxu0 0.0
      %3858 = vmatpush1.msra.mxu0 0.0
      %3859 = vmatprep.subr.mxu0 0.0
      %3860 = vmatpush1.msra.mxu0 0.0
      %3861 = vmatprep.mubr.f32.mxu0 0.0
      %v3862 = vand.u32 %v3379, 4294901760
      %v3863 = vsub.f32 %v3379, %v3862
      %v3864 = vand.u32 %v3863, 4294901760
      %3865 = vmatmul.mubr.f32.gmra.mrb[0].mxu0 %v3864
      %v3866 = vpop.f32.mrb[0].mxu0
      %v3867 = vadd.f32 %v3760, %v3866
      %v3868 = vpop.f32.mrb[0].mxu0
      %3869 = vmatprep.mubr.f32.mxu0 0.0
      %v3870 = vand.u32 %v3382, 4294901760
      %v3871 = vsub.f32 %v3382, %v3870
      %v3872 = vand.u32 %v3871, 4294901760
      %3873 = vmatmul.mubr.f32.gmra.mrb[0].mxu0 %v3872
      %v3874 = vpop.f32.mrb[0].mxu0
      %v3875 = vadd.f32 %v3767, %v3874
      %v3876 = vpop.f32.mrb[0].mxu0
      %3877 = vmatprep.mubr.f32.mxu0 0.0
      %v3878 = vand.u32 %v3385, 4294901760
      %v3879 = vsub.f32 %v3385, %v3878
      %v3880 = vand.u32 %v3879, 4294901760
      %3881 = vmatmul.mubr.f32.gmra.mrb[0].mxu0 %v3880
      %v3882 = vpop.f32.mrb[0].mxu0
      %v3883 = vadd.f32 %v3774, %v3882
      %v3884 = vpop.f32.mrb[0].mxu0
      %3885 = vmatprep.mubr.f32.mxu0 0.0
      %v3886 = vand.u32 %v3388, 4294901760
      %v3887 = vsub.f32 %v3388, %v3886
      %v3888 = vand.u32 %v3887, 4294901760
      %3889 = vmatmul.mubr.f32.gmra.mrb[0].mxu0 %v3888
      %v3890 = vpop.f32.mrb[0].mxu0
      %v3891 = vadd.f32 %v3781, %v3890
      %v3892 = vpop.f32.mrb[0].mxu0
      %3893 = vdwg.mxu0
      %3894 = vmatprep.subr.mxu0 0.0
      %v3895 = vand.u32 %v3365, 4294901760
      %v3896 = vsub.f32 %v3365, %v3895
      %v3897 = vand.u32 %v3896, 4294901760
      %3898 = vmatpush1.msra.mxu0 %v3897
      %3899 = vmatprep.subr.mxu0 0.0
      %v3900 = vand.u32 %v3366, 4294901760
      %v3901 = vsub.f32 %v3366, %v3900
      %v3902 = vand.u32 %v3901, 4294901760
      %3903 = vmatpush1.msra.mxu0 %v3902
      %3904 = vmatprep.subr.mxu0 0.0
      %v3905 = vand.u32 %v3367, 4294901760
      %v3906 = vsub.f32 %v3367, %v3905
      %v3907 = vand.u32 %v3906, 4294901760
      %3908 = vmatpush1.msra.mxu0 %v3907
      %3909 = vmatprep.subr.mxu0 0.0
      %v3910 = vand.u32 %v3368, 4294901760
      %v3911 = vsub.f32 %v3368, %v3910
      %v3912 = vand.u32 %v3911, 4294901760
      %3913 = vmatpush1.msra.mxu0 %v3912
      %3914 = vmatprep.subr.mxu0 0.0
      %v3915 = vand.u32 %v3369, 4294901760
      %v3916 = vsub.f32 %v3369, %v3915
      %v3917 = vand.u32 %v3916, 4294901760
      %3918 = vmatpush1.msra.mxu0 %v3917
      %3919 = vmatprep.subr.mxu0 0.0
      %v3920 = vand.u32 %v3370, 4294901760
      %v3921 = vsub.f32 %v3370, %v3920
      %v3922 = vand.u32 %v3921, 4294901760
      %3923 = vmatpush1.msra.mxu0 %v3922
      %3924 = vmatprep.subr.mxu0 0.0
      %v3925 = vand.u32 %v3371, 4294901760
      %v3926 = vsub.f32 %v3371, %v3925
      %v3927 = vand.u32 %v3926, 4294901760
      %3928 = vmatpush1.msra.mxu0 %v3927
      %3929 = vmatprep.subr.mxu0 0.0
      %v3930 = vand.u32 %v3372, 4294901760
      %v3931 = vsub.f32 %v3372, %v3930
      %v3932 = vand.u32 %v3931, 4294901760
      %3933 = vmatpush1.msra.mxu0 %v3932
      %3934 = vmatprep.subr.mxu0 0.0
      %v3935 = vand.u32 %v3373, 4294901760
      %v3936 = vsub.f32 %v3373, %v3935
      %v3937 = vand.u32 %v3936, 4294901760
      %3938 = vmatpush1.msra.mxu0 %v3937
      %3939 = vmatprep.subr.mxu0 0.0
      %v3940 = vand.u32 %v3374, 4294901760
      %v3941 = vsub.f32 %v3374, %v3940
      %v3942 = vand.u32 %v3941, 4294901760
      %3943 = vmatpush1.msra.mxu0 %v3942
      %3944 = vmatprep.subr.mxu0 0.0
      %v3945 = vand.u32 %v3375, 4294901760
      %v3946 = vsub.f32 %v3375, %v3945
      %v3947 = vand.u32 %v3946, 4294901760
      %3948 = vmatpush1.msra.mxu0 %v3947
      %3949 = vmatprep.subr.mxu0 0.0
      %v3950 = vand.u32 %v3376, 4294901760
      %v3951 = vsub.f32 %v3376, %v3950
      %v3952 = vand.u32 %v3951, 4294901760
      %3953 = vmatpush1.msra.mxu0 %v3952
      %3954 = vmatprep.subr.mxu0 0.0
      %v3955 = vand.u32 %v3391, 4294901760
      %v3956 = vsub.f32 %v3391, %v3955
      %v3957 = vand.u32 %v3956, 4294901760
      %3958 = vmatpush1.msra.mxu0 %v3957
      %3959 = vmatprep.subr.mxu0 0.0
      %3960 = vmatpush1.msra.mxu0 0.0
      %3961 = vmatprep.subr.mxu0 0.0
      %3962 = vmatpush1.msra.mxu0 0.0
      %3963 = vmatprep.subr.mxu0 0.0
      %3964 = vmatpush1.msra.mxu0 0.0
      %3965 = vmatprep.subr.mxu0 0.0
      %3966 = vmatpush1.msra.mxu0 0.0
      %3967 = vmatprep.subr.mxu0 0.0
      %3968 = vmatpush1.msra.mxu0 0.0
      %3969 = vmatprep.subr.mxu0 0.0
      %3970 = vmatpush1.msra.mxu0 0.0
      %3971 = vmatprep.subr.mxu0 0.0
      %3972 = vmatpush1.msra.mxu0 0.0
      %3973 = vmatprep.subr.mxu0 0.0
      %3974 = vmatpush1.msra.mxu0 0.0
      %3975 = vmatprep.subr.mxu0 0.0
      %3976 = vmatpush1.msra.mxu0 0.0
      %3977 = vmatprep.subr.mxu0 0.0
      %3978 = vmatpush1.msra.mxu0 0.0
      %3979 = vmatprep.subr.mxu0 0.0
      %3980 = vmatpush1.msra.mxu0 0.0
      %3981 = vmatprep.subr.mxu0 0.0
      %3982 = vmatpush1.msra.mxu0 0.0
      %3983 = vmatprep.subr.mxu0 0.0
      %3984 = vmatpush1.msra.mxu0 0.0
      %3985 = vmatprep.subr.mxu0 0.0
      %3986 = vmatpush1.msra.mxu0 0.0
      %3987 = vmatprep.subr.mxu0 0.0
      %3988 = vmatpush1.msra.mxu0 0.0
      %3989 = vmatprep.subr.mxu0 0.0
      %3990 = vmatpush1.msra.mxu0 0.0
      %3991 = vmatprep.subr.mxu0 0.0
      %3992 = vmatpush1.msra.mxu0 0.0
      %3993 = vmatprep.subr.mxu0 0.0
      %3994 = vmatpush1.msra.mxu0 0.0
      %3995 = vmatprep.subr.mxu0 0.0
      %3996 = vmatpush1.msra.mxu0 0.0
      %3997 = vmatprep.mubr.f32.mxu0 0.0
      %v3998 = vand.u32 %v3379, 4294901760
      %3999 = vmatmul.mubr.f32.gmra.mrb[0].mxu0 %v3998
      %v4000 = vpop.f32.mrb[0].mxu0
      %v4001 = vadd.f32 %v3867, %v4000
      %v4002 = vpop.f32.mrb[0].mxu0
      %4003 = vmatprep.mubr.f32.mxu0 0.0
      %v4004 = vand.u32 %v3382, 4294901760
      %4005 = vmatmul.mubr.f32.gmra.mrb[0].mxu0 %v4004
      %v4006 = vpop.f32.mrb[0].mxu0
      %v4007 = vadd.f32 %v3875, %v4006
      %v4008 = vpop.f32.mrb[0].mxu0
      %4009 = vmatprep.mubr.f32.mxu0 0.0
      %v4010 = vand.u32 %v3385, 4294901760
      %4011 = vmatmul.mubr.f32.gmra.mrb[0].mxu0 %v4010
      %v4012 = vpop.f32.mrb[0].mxu0
      %v4013 = vadd.f32 %v3883, %v4012
      %v4014 = vpop.f32.mrb[0].mxu0
      %4015 = vmatprep.mubr.f32.mxu0 0.0
      %v4016 = vand.u32 %v3388, 4294901760
      %4017 = vmatmul.mubr.f32.gmra.mrb[0].mxu0 %v4016
      %v4018 = vpop.f32.mrb[0].mxu0
      %v4019 = vadd.f32 %v3891, %v4018
      %v4020 = vpop.f32.mrb[0].mxu0
      %4021 = vdwg.mxu0
      %4022 = vmatprep.subr.mxu0 0.0
      %v4023 = vand.u32 %v3365, 4294901760
      %4024 = vmatpush1.msra.mxu0 %v4023
      %4025 = vmatprep.subr.mxu0 0.0
      %v4026 = vand.u32 %v3366, 4294901760
      %4027 = vmatpush1.msra.mxu0 %v4026
      %4028 = vmatprep.subr.mxu0 0.0
      %v4029 = vand.u32 %v3367, 4294901760
      %4030 = vmatpush1.msra.mxu0 %v4029
      %4031 = vmatprep.subr.mxu0 0.0
      %v4032 = vand.u32 %v3368, 4294901760
      %4033 = vmatpush1.msra.mxu0 %v4032
      %4034 = vmatprep.subr.mxu0 0.0
      %v4035 = vand.u32 %v3369, 4294901760
      %4036 = vmatpush1.msra.mxu0 %v4035
      %4037 = vmatprep.subr.mxu0 0.0
      %v4038 = vand.u32 %v3370, 4294901760
      %4039 = vmatpush1.msra.mxu0 %v4038
      %4040 = vmatprep.subr.mxu0 0.0
      %v4041 = vand.u32 %v3371, 4294901760
      %4042 = vmatpush1.msra.mxu0 %v4041
      %4043 = vmatprep.subr.mxu0 0.0
      %v4044 = vand.u32 %v3372, 4294901760
      %4045 = vmatpush1.msra.mxu0 %v4044
      %4046 = vmatprep.subr.mxu0 0.0
      %v4047 = vand.u32 %v3373, 4294901760
      %4048 = vmatpush1.msra.mxu0 %v4047
      %4049 = vmatprep.subr.mxu0 0.0
      %v4050 = vand.u32 %v3374, 4294901760
      %4051 = vmatpush1.msra.mxu0 %v4050
      %4052 = vmatprep.subr.mxu0 0.0
      %v4053 = vand.u32 %v3375, 4294901760
      %4054 = vmatpush1.msra.mxu0 %v4053
      %4055 = vmatprep.subr.mxu0 0.0
      %v4056 = vand.u32 %v3376, 4294901760
      %4057 = vmatpush1.msra.mxu0 %v4056
      %4058 = vmatprep.subr.mxu0 0.0
      %v4059 = vand.u32 %v3391, 4294901760
      %4060 = vmatpush1.msra.mxu0 %v4059
      %4061 = vmatprep.subr.mxu0 0.0
      %4062 = vmatpush1.msra.mxu0 0.0
      %4063 = vmatprep.subr.mxu0 0.0
      %4064 = vmatpush1.msra.mxu0 0.0
      %4065 = vmatprep.subr.mxu0 0.0
      %4066 = vmatpush1.msra.mxu0 0.0
      %4067 = vmatprep.subr.mxu0 0.0
      %4068 = vmatpush1.msra.mxu0 0.0
      %4069 = vmatprep.subr.mxu0 0.0
      %4070 = vmatpush1.msra.mxu0 0.0
      %4071 = vmatprep.subr.mxu0 0.0
      %4072 = vmatpush1.msra.mxu0 0.0
      %4073 = vmatprep.subr.mxu0 0.0
      %4074 = vmatpush1.msra.mxu0 0.0
      %4075 = vmatprep.subr.mxu0 0.0
      %4076 = vmatpush1.msra.mxu0 0.0
      %4077 = vmatprep.subr.mxu0 0.0
      %4078 = vmatpush1.msra.mxu0 0.0
      %4079 = vmatprep.subr.mxu0 0.0
      %4080 = vmatpush1.msra.mxu0 0.0
      %4081 = vmatprep.subr.mxu0 0.0
      %4082 = vmatpush1.msra.mxu0 0.0
      %4083 = vmatprep.subr.mxu0 0.0
      %4084 = vmatpush1.msra.mxu0 0.0
      %4085 = vmatprep.subr.mxu0 0.0
      %4086 = vmatpush1.msra.mxu0 0.0
      %4087 = vmatprep.subr.mxu0 0.0
      %4088 = vmatpush1.msra.mxu0 0.0
      %4089 = vmatprep.subr.mxu0 0.0
      %4090 = vmatpush1.msra.mxu0 0.0
      %4091 = vmatprep.subr.mxu0 0.0
      %4092 = vmatpush1.msra.mxu0 0.0
      %4093 = vmatprep.subr.mxu0 0.0
      %4094 = vmatpush1.msra.mxu0 0.0
      %4095 = vmatprep.subr.mxu0 0.0
      %4096 = vmatpush1.msra.mxu0 0.0
      %4097 = vmatprep.subr.mxu0 0.0
      %4098 = vmatpush1.msra.mxu0 0.0
      %4099 = vmatprep.mubr.f32.mxu0 0.0
      %v4100 = vand.u32 %v3379, 4294901760
      %4101 = vmatmul.mubr.f32.gmra.mrb[0].mxu0 %v4100
      %v4102 = vpop.f32.mrb[0].mxu0
      %v4103 = vadd.f32 %v4001, %v4102
      %v4104 = vpop.f32.mrb[0].mxu0
      %4105 = vmatprep.mubr.f32.mxu0 0.0
      %v4106 = vand.u32 %v3382, 4294901760
      %4107 = vmatmul.mubr.f32.gmra.mrb[0].mxu0 %v4106
      %v4108 = vpop.f32.mrb[0].mxu0
      %v4109 = vadd.f32 %v4007, %v4108
      %v4110 = vpop.f32.mrb[0].mxu0
      %4111 = vmatprep.mubr.f32.mxu0 0.0
      %v4112 = vand.u32 %v3385, 4294901760
      %4113 = vmatmul.mubr.f32.gmra.mrb[0].mxu0 %v4112
      %v4114 = vpop.f32.mrb[0].mxu0
      %v4115 = vadd.f32 %v4013, %v4114
      %v4116 = vpop.f32.mrb[0].mxu0
      %4117 = vmatprep.mubr.f32.mxu0 0.0
      %v4118 = vand.u32 %v3388, 4294901760
      %4119 = vmatmul.mubr.f32.gmra.mrb[0].mxu0 %v4118
      %v4120 = vpop.f32.mrb[0].mxu0
      %v4121 = vadd.f32 %v4019, %v4120
      %v4122 = vpop.f32.mrb[0].mxu0
      %4123 = vdwg.mxu0
      %s4124 = scalar_lea.vmem %s1, 520
      %v4125 = vld [vmem:[%s4124] sm:$0xff]
      %v4126 = vld [vmem:[%s4124 + $0x8] sm:$0xff]
      %v4127 = vld [vmem:[%s4124 + $0x10] sm:$0xff]
      %v4128 = vld [vmem:[%s4124 + $0x18] sm:$0xff]
      %v4129 = vld [vmem:[%s4124 + $0x20] sm:$0xff]
      %v4130 = vld [vmem:[%s4124 + $0x28] sm:$0xff]
      %v4131 = vld [vmem:[%s4124 + $0x30] sm:$0xff]
      %v4132 = vld [vmem:[%s4124 + $0x38] sm:$0xff]
      %v4133 = vld [vmem:[%s4124 + $0x40] sm:$0xff]
      %v4134 = vld [vmem:[%s4124 + $0x48] sm:$0xff]
      %v4135 = vld [vmem:[%s4124 + $0x50] sm:$0xff]
      %v4136 = vld [vmem:[%s4124 + $0x58] sm:$0xff]
      %v4137 = vld [vmem:[%s4124 + $0x60] sm:$0x3f]
      %v4139 = vsel %vm397, %v4137, 0
      %4141 = vmatprep.subr.mxu0 0.0
      %v4142 = vand.u32 %v4125, 4294901760
      %4143 = vmatpush1.msra.mxu0 %v4142
      %4144 = vmatprep.subr.mxu0 0.0
      %v4145 = vand.u32 %v4126, 4294901760
      %4146 = vmatpush1.msra.mxu0 %v4145
      %4147 = vmatprep.subr.mxu0 0.0
      %v4148 = vand.u32 %v4127, 4294901760
      %4149 = vmatpush1.msra.mxu0 %v4148
      %4150 = vmatprep.subr.mxu0 0.0
      %v4151 = vand.u32 %v4128, 4294901760
      %4152 = vmatpush1.msra.mxu0 %v4151
      %4153 = vmatprep.subr.mxu0 0.0
      %v4154 = vand.u32 %v4129, 4294901760
      %4155 = vmatpush1.msra.mxu0 %v4154
      %4156 = vmatprep.subr.mxu0 0.0
      %v4157 = vand.u32 %v4130, 4294901760
      %4158 = vmatpush1.msra.mxu0 %v4157
      %4159 = vmatprep.subr.mxu0 0.0
      %v4160 = vand.u32 %v4131, 4294901760
      %4161 = vmatpush1.msra.mxu0 %v4160
      %4162 = vmatprep.subr.mxu0 0.0
      %v4163 = vand.u32 %v4132, 4294901760
      %4164 = vmatpush1.msra.mxu0 %v4163
      %4165 = vmatprep.subr.mxu0 0.0
      %v4166 = vand.u32 %v4133, 4294901760
      %4167 = vmatpush1.msra.mxu0 %v4166
      %4168 = vmatprep.subr.mxu0 0.0
      %v4169 = vand.u32 %v4134, 4294901760
      %4170 = vmatpush1.msra.mxu0 %v4169
      %4171 = vmatprep.subr.mxu0 0.0
      %v4172 = vand.u32 %v4135, 4294901760
      %4173 = vmatpush1.msra.mxu0 %v4172
      %4174 = vmatprep.subr.mxu0 0.0
      %v4175 = vand.u32 %v4136, 4294901760
      %4176 = vmatpush1.msra.mxu0 %v4175
      %4177 = vmatprep.subr.mxu0 0.0
      %v4178 = vand.u32 %v4139, 4294901760
      %4179 = vmatpush1.msra.mxu0 %v4178
      %4180 = vmatprep.subr.mxu0 0.0
      %4181 = vmatpush1.msra.mxu0 0.0
      %4182 = vmatprep.subr.mxu0 0.0
      %4183 = vmatpush1.msra.mxu0 0.0
      %4184 = vmatprep.subr.mxu0 0.0
      %4185 = vmatpush1.msra.mxu0 0.0
      %4186 = vmatprep.subr.mxu0 0.0
      %4187 = vmatpush1.msra.mxu0 0.0
      %4188 = vmatprep.subr.mxu0 0.0
      %4189 = vmatpush1.msra.mxu0 0.0
      %4190 = vmatprep.subr.mxu0 0.0
      %4191 = vmatpush1.msra.mxu0 0.0
      %4192 = vmatprep.subr.mxu0 0.0
      %4193 = vmatpush1.msra.mxu0 0.0
      %4194 = vmatprep.subr.mxu0 0.0
      %4195 = vmatpush1.msra.mxu0 0.0
      %4196 = vmatprep.subr.mxu0 0.0
      %4197 = vmatpush1.msra.mxu0 0.0
      %4198 = vmatprep.subr.mxu0 0.0
      %4199 = vmatpush1.msra.mxu0 0.0
      %4200 = vmatprep.subr.mxu0 0.0
      %4201 = vmatpush1.msra.mxu0 0.0
      %4202 = vmatprep.subr.mxu0 0.0
      %4203 = vmatpush1.msra.mxu0 0.0
      %4204 = vmatprep.subr.mxu0 0.0
      %4205 = vmatpush1.msra.mxu0 0.0
      %4206 = vmatprep.subr.mxu0 0.0
      %4207 = vmatpush1.msra.mxu0 0.0
      %4208 = vmatprep.subr.mxu0 0.0
      %4209 = vmatpush1.msra.mxu0 0.0
      %4210 = vmatprep.subr.mxu0 0.0
      %4211 = vmatpush1.msra.mxu0 0.0
      %4212 = vmatprep.subr.mxu0 0.0
      %4213 = vmatpush1.msra.mxu0 0.0
      %4214 = vmatprep.subr.mxu0 0.0
      %4215 = vmatpush1.msra.mxu0 0.0
      %4216 = vmatprep.subr.mxu0 0.0
      %4217 = vmatpush1.msra.mxu0 0.0
      %4218 = vmatprep.mubr.f32.mxu0 0.0
      %v4219 = vand.u32 %v3379, 4294901760
      %v4220 = vsub.f32 %v3379, %v4219
      %v4221 = vand.u32 %v4220, 4294901760
      %v4222 = vsub.f32 %v4220, %v4221
      %v4223 = vand.u32 %v4222, 4294901760
      %4224 = vmatmul.mubr.f32.gmra.mrb[0].mxu0 %v4223
      %v4225 = vpop.f32.mrb[0].mxu0
      %v4226 = vadd.f32 0.0, %v4225
      %v4227 = vpop.f32.mrb[0].mxu0
      %4228 = vmatprep.mubr.f32.mxu0 0.0
      %v4229 = vand.u32 %v3382, 4294901760
      %v4230 = vsub.f32 %v3382, %v4229
      %v4231 = vand.u32 %v4230, 4294901760
      %v4232 = vsub.f32 %v4230, %v4231
      %v4233 = vand.u32 %v4232, 4294901760
      %4234 = vmatmul.mubr.f32.gmra.mrb[0].mxu0 %v4233
      %v4235 = vpop.f32.mrb[0].mxu0
      %v4236 = vadd.f32 0.0, %v4235
      %v4237 = vpop.f32.mrb[0].mxu0
      %4238 = vmatprep.mubr.f32.mxu0 0.0
      %v4239 = vand.u32 %v3385, 4294901760
      %v4240 = vsub.f32 %v3385, %v4239
      %v4241 = vand.u32 %v4240, 4294901760
      %v4242 = vsub.f32 %v4240, %v4241
      %v4243 = vand.u32 %v4242, 4294901760
      %4244 = vmatmul.mubr.f32.gmra.mrb[0].mxu0 %v4243
      %v4245 = vpop.f32.mrb[0].mxu0
      %v4246 = vadd.f32 0.0, %v4245
      %v4247 = vpop.f32.mrb[0].mxu0
      %4248 = vmatprep.mubr.f32.mxu0 0.0
      %v4249 = vand.u32 %v3388, 4294901760
      %v4250 = vsub.f32 %v3388, %v4249
      %v4251 = vand.u32 %v4250, 4294901760
      %v4252 = vsub.f32 %v4250, %v4251
      %v4253 = vand.u32 %v4252, 4294901760
      %4254 = vmatmul.mubr.f32.gmra.mrb[0].mxu0 %v4253
      %v4255 = vpop.f32.mrb[0].mxu0
      %v4256 = vadd.f32 0.0, %v4255
      %v4257 = vpop.f32.mrb[0].mxu0
      %4258 = vdwg.mxu0
      %4259 = vmatprep.subr.mxu0 0.0
      %v4260 = vand.u32 %v4125, 4294901760
      %v4261 = vsub.f32 %v4125, %v4260
      %v4262 = vand.u32 %v4261, 4294901760
      %v4263 = vsub.f32 %v4261, %v4262
      %v4264 = vand.u32 %v4263, 4294901760
      %4265 = vmatpush1.msra.mxu0 %v4264
      %4266 = vmatprep.subr.mxu0 0.0
      %v4267 = vand.u32 %v4126, 4294901760
      %v4268 = vsub.f32 %v4126, %v4267
      %v4269 = vand.u32 %v4268, 4294901760
      %v4270 = vsub.f32 %v4268, %v4269
      %v4271 = vand.u32 %v4270, 4294901760
      %4272 = vmatpush1.msra.mxu0 %v4271
      %4273 = vmatprep.subr.mxu0 0.0
      %v4274 = vand.u32 %v4127, 4294901760
      %v4275 = vsub.f32 %v4127, %v4274
      %v4276 = vand.u32 %v4275, 4294901760
      %v4277 = vsub.f32 %v4275, %v4276
      %v4278 = vand.u32 %v4277, 4294901760
      %4279 = vmatpush1.msra.mxu0 %v4278
      %4280 = vmatprep.subr.mxu0 0.0
      %v4281 = vand.u32 %v4128, 4294901760
      %v4282 = vsub.f32 %v4128, %v4281
      %v4283 = vand.u32 %v4282, 4294901760
      %v4284 = vsub.f32 %v4282, %v4283
      %v4285 = vand.u32 %v4284, 4294901760
      %4286 = vmatpush1.msra.mxu0 %v4285
      %4287 = vmatprep.subr.mxu0 0.0
      %v4288 = vand.u32 %v4129, 4294901760
      %v4289 = vsub.f32 %v4129, %v4288
      %v4290 = vand.u32 %v4289, 4294901760
      %v4291 = vsub.f32 %v4289, %v4290
      %v4292 = vand.u32 %v4291, 4294901760
      %4293 = vmatpush1.msra.mxu0 %v4292
      %4294 = vmatprep.subr.mxu0 0.0
      %v4295 = vand.u32 %v4130, 4294901760
      %v4296 = vsub.f32 %v4130, %v4295
      %v4297 = vand.u32 %v4296, 4294901760
      %v4298 = vsub.f32 %v4296, %v4297
      %v4299 = vand.u32 %v4298, 4294901760
      %4300 = vmatpush1.msra.mxu0 %v4299
      %4301 = vmatprep.subr.mxu0 0.0
      %v4302 = vand.u32 %v4131, 4294901760
      %v4303 = vsub.f32 %v4131, %v4302
      %v4304 = vand.u32 %v4303, 4294901760
      %v4305 = vsub.f32 %v4303, %v4304
      %v4306 = vand.u32 %v4305, 4294901760
      %4307 = vmatpush1.msra.mxu0 %v4306
      %4308 = vmatprep.subr.mxu0 0.0
      %v4309 = vand.u32 %v4132, 4294901760
      %v4310 = vsub.f32 %v4132, %v4309
      %v4311 = vand.u32 %v4310, 4294901760
      %v4312 = vsub.f32 %v4310, %v4311
      %v4313 = vand.u32 %v4312, 4294901760
      %4314 = vmatpush1.msra.mxu0 %v4313
      %4315 = vmatprep.subr.mxu0 0.0
      %v4316 = vand.u32 %v4133, 4294901760
      %v4317 = vsub.f32 %v4133, %v4316
      %v4318 = vand.u32 %v4317, 4294901760
      %v4319 = vsub.f32 %v4317, %v4318
      %v4320 = vand.u32 %v4319, 4294901760
      %4321 = vmatpush1.msra.mxu0 %v4320
      %4322 = vmatprep.subr.mxu0 0.0
      %v4323 = vand.u32 %v4134, 4294901760
      %v4324 = vsub.f32 %v4134, %v4323
      %v4325 = vand.u32 %v4324, 4294901760
      %v4326 = vsub.f32 %v4324, %v4325
      %v4327 = vand.u32 %v4326, 4294901760
      %4328 = vmatpush1.msra.mxu0 %v4327
      %4329 = vmatprep.subr.mxu0 0.0
      %v4330 = vand.u32 %v4135, 4294901760
      %v4331 = vsub.f32 %v4135, %v4330
      %v4332 = vand.u32 %v4331, 4294901760
      %v4333 = vsub.f32 %v4331, %v4332
      %v4334 = vand.u32 %v4333, 4294901760
      %4335 = vmatpush1.msra.mxu0 %v4334
      %4336 = vmatprep.subr.mxu0 0.0
      %v4337 = vand.u32 %v4136, 4294901760
      %v4338 = vsub.f32 %v4136, %v4337
      %v4339 = vand.u32 %v4338, 4294901760
      %v4340 = vsub.f32 %v4338, %v4339
      %v4341 = vand.u32 %v4340, 4294901760
      %4342 = vmatpush1.msra.mxu0 %v4341
      %4343 = vmatprep.subr.mxu0 0.0
      %v4344 = vand.u32 %v4139, 4294901760
      %v4345 = vsub.f32 %v4139, %v4344
      %v4346 = vand.u32 %v4345, 4294901760
      %v4347 = vsub.f32 %v4345, %v4346
      %v4348 = vand.u32 %v4347, 4294901760
      %4349 = vmatpush1.msra.mxu0 %v4348
      %4350 = vmatprep.subr.mxu0 0.0
      %4351 = vmatpush1.msra.mxu0 0.0
      %4352 = vmatprep.subr.mxu0 0.0
      %4353 = vmatpush1.msra.mxu0 0.0
      %4354 = vmatprep.subr.mxu0 0.0
      %4355 = vmatpush1.msra.mxu0 0.0
      %4356 = vmatprep.subr.mxu0 0.0
      %4357 = vmatpush1.msra.mxu0 0.0
      %4358 = vmatprep.subr.mxu0 0.0
      %4359 = vmatpush1.msra.mxu0 0.0
      %4360 = vmatprep.subr.mxu0 0.0
      %4361 = vmatpush1.msra.mxu0 0.0
      %4362 = vmatprep.subr.mxu0 0.0
      %4363 = vmatpush1.msra.mxu0 0.0
      %4364 = vmatprep.subr.mxu0 0.0
      %4365 = vmatpush1.msra.mxu0 0.0
      %4366 = vmatprep.subr.mxu0 0.0
      %4367 = vmatpush1.msra.mxu0 0.0
      %4368 = vmatprep.subr.mxu0 0.0
      %4369 = vmatpush1.msra.mxu0 0.0
      %4370 = vmatprep.subr.mxu0 0.0
      %4371 = vmatpush1.msra.mxu0 0.0
      %4372 = vmatprep.subr.mxu0 0.0
      %4373 = vmatpush1.msra.mxu0 0.0
      %4374 = vmatprep.subr.mxu0 0.0
      %4375 = vmatpush1.msra.mxu0 0.0
      %4376 = vmatprep.subr.mxu0 0.0
      %4377 = vmatpush1.msra.mxu0 0.0
      %4378 = vmatprep.subr.mxu0 0.0
      %4379 = vmatpush1.msra.mxu0 0.0
      %4380 = vmatprep.subr.mxu0 0.0
      %4381 = vmatpush1.msra.mxu0 0.0
      %4382 = vmatprep.subr.mxu0 0.0
      %4383 = vmatpush1.msra.mxu0 0.0
      %4384 = vmatprep.subr.mxu0 0.0
      %4385 = vmatpush1.msra.mxu0 0.0
      %4386 = vmatprep.subr.mxu0 0.0
      %4387 = vmatpush1.msra.mxu0 0.0
      %4388 = vmatprep.mubr.f32.mxu0 0.0
      %v4389 = vand.u32 %v3379, 4294901760
      %4390 = vmatmul.mubr.f32.gmra.mrb[0].mxu0 %v4389
      %v4391 = vpop.f32.mrb[0].mxu0
      %v4392 = vadd.f32 %v4226, %v4391
      %v4393 = vpop.f32.mrb[0].mxu0
      %4394 = vmatprep.mubr.f32.mxu0 0.0
      %v4395 = vand.u32 %v3382, 4294901760
      %4396 = vmatmul.mubr.f32.gmra.mrb[0].mxu0 %v4395
      %v4397 = vpop.f32.mrb[0].mxu0
      %v4398 = vadd.f32 %v4236, %v4397
      %v4399 = vpop.f32.mrb[0].mxu0
      %4400 = vmatprep.mubr.f32.mxu0 0.0
      %v4401 = vand.u32 %v3385, 4294901760
      %4402 = vmatmul.mubr.f32.gmra.mrb[0].mxu0 %v4401
      %v4403 = vpop.f32.mrb[0].mxu0
      %v4404 = vadd.f32 %v4246, %v4403
      %v4405 = vpop.f32.mrb[0].mxu0
      %4406 = vmatprep.mubr.f32.mxu0 0.0
      %v4407 = vand.u32 %v3388, 4294901760
      %4408 = vmatmul.mubr.f32.gmra.mrb[0].mxu0 %v4407
      %v4409 = vpop.f32.mrb[0].mxu0
      %v4410 = vadd.f32 %v4256, %v4409
      %v4411 = vpop.f32.mrb[0].mxu0
      %4412 = vdwg.mxu0
      %4413 = vmatprep.subr.mxu0 0.0
      %v4414 = vand.u32 %v4125, 4294901760
      %v4415 = vsub.f32 %v4125, %v4414
      %4416 = vmatpush1.msra.mxu0 %v4415
      %4417 = vmatprep.subr.mxu0 0.0
      %v4418 = vand.u32 %v4126, 4294901760
      %v4419 = vsub.f32 %v4126, %v4418
      %4420 = vmatpush1.msra.mxu0 %v4419
      %4421 = vmatprep.subr.mxu0 0.0
      %v4422 = vand.u32 %v4127, 4294901760
      %v4423 = vsub.f32 %v4127, %v4422
      %4424 = vmatpush1.msra.mxu0 %v4423
      %4425 = vmatprep.subr.mxu0 0.0
      %v4426 = vand.u32 %v4128, 4294901760
      %v4427 = vsub.f32 %v4128, %v4426
      %4428 = vmatpush1.msra.mxu0 %v4427
      %4429 = vmatprep.subr.mxu0 0.0
      %v4430 = vand.u32 %v4129, 4294901760
      %v4431 = vsub.f32 %v4129, %v4430
      %4432 = vmatpush1.msra.mxu0 %v4431
      %4433 = vmatprep.subr.mxu0 0.0
      %v4434 = vand.u32 %v4130, 4294901760
      %v4435 = vsub.f32 %v4130, %v4434
      %4436 = vmatpush1.msra.mxu0 %v4435
      %4437 = vmatprep.subr.mxu0 0.0
      %v4438 = vand.u32 %v4131, 4294901760
      %v4439 = vsub.f32 %v4131, %v4438
      %4440 = vmatpush1.msra.mxu0 %v4439
      %4441 = vmatprep.subr.mxu0 0.0
      %v4442 = vand.u32 %v4132, 4294901760
      %v4443 = vsub.f32 %v4132, %v4442
      %4444 = vmatpush1.msra.mxu0 %v4443
      %4445 = vmatprep.subr.mxu0 0.0
      %v4446 = vand.u32 %v4133, 4294901760
      %v4447 = vsub.f32 %v4133, %v4446
      %4448 = vmatpush1.msra.mxu0 %v4447
      %4449 = vmatprep.subr.mxu0 0.0
      %v4450 = vand.u32 %v4134, 4294901760
      %v4451 = vsub.f32 %v4134, %v4450
      %4452 = vmatpush1.msra.mxu0 %v4451
      %4453 = vmatprep.subr.mxu0 0.0
      %v4454 = vand.u32 %v4135, 4294901760
      %v4455 = vsub.f32 %v4135, %v4454
      %4456 = vmatpush1.msra.mxu0 %v4455
      %4457 = vmatprep.subr.mxu0 0.0
      %v4458 = vand.u32 %v4136, 4294901760
      %v4459 = vsub.f32 %v4136, %v4458
      %4460 = vmatpush1.msra.mxu0 %v4459
      %4461 = vmatprep.subr.mxu0 0.0
      %v4462 = vand.u32 %v4139, 4294901760
      %v4463 = vsub.f32 %v4139, %v4462
      %4464 = vmatpush1.msra.mxu0 %v4463
      %4465 = vmatprep.subr.mxu0 0.0
      %4466 = vmatpush1.msra.mxu0 0.0
      %4467 = vmatprep.subr.mxu0 0.0
      %4468 = vmatpush1.msra.mxu0 0.0
      %4469 = vmatprep.subr.mxu0 0.0
      %4470 = vmatpush1.msra.mxu0 0.0
      %4471 = vmatprep.subr.mxu0 0.0
      %4472 = vmatpush1.msra.mxu0 0.0
      %4473 = vmatprep.subr.mxu0 0.0
      %4474 = vmatpush1.msra.mxu0 0.0
      %4475 = vmatprep.subr.mxu0 0.0
      %4476 = vmatpush1.msra.mxu0 0.0
      %4477 = vmatprep.subr.mxu0 0.0
      %4478 = vmatpush1.msra.mxu0 0.0
      %4479 = vmatprep.subr.mxu0 0.0
      %4480 = vmatpush1.msra.mxu0 0.0
      %4481 = vmatprep.subr.mxu0 0.0
      %4482 = vmatpush1.msra.mxu0 0.0
      %4483 = vmatprep.subr.mxu0 0.0
      %4484 = vmatpush1.msra.mxu0 0.0
      %4485 = vmatprep.subr.mxu0 0.0
      %4486 = vmatpush1.msra.mxu0 0.0
      %4487 = vmatprep.subr.mxu0 0.0
      %4488 = vmatpush1.msra.mxu0 0.0
      %4489 = vmatprep.subr.mxu0 0.0
      %4490 = vmatpush1.msra.mxu0 0.0
      %4491 = vmatprep.subr.mxu0 0.0
      %4492 = vmatpush1.msra.mxu0 0.0
      %4493 = vmatprep.subr.mxu0 0.0
      %4494 = vmatpush1.msra.mxu0 0.0
      %4495 = vmatprep.subr.mxu0 0.0
      %4496 = vmatpush1.msra.mxu0 0.0
      %4497 = vmatprep.subr.mxu0 0.0
      %4498 = vmatpush1.msra.mxu0 0.0
      %4499 = vmatprep.subr.mxu0 0.0
      %4500 = vmatpush1.msra.mxu0 0.0
      %4501 = vmatprep.subr.mxu0 0.0
      %4502 = vmatpush1.msra.mxu0 0.0
      %4503 = vmatprep.mubr.f32.mxu0 0.0
      %v4504 = vand.u32 %v3379, 4294901760
      %v4505 = vsub.f32 %v3379, %v4504
      %4506 = vmatmul.mubr.f32.gmra.mrb[0].mxu0 %v4505
      %v4507 = vpop.f32.mrb[0].mxu0
      %v4508 = vadd.f32 %v4392, %v4507
      %v4509 = vpop.f32.mrb[0].mxu0
      %4510 = vmatprep.mubr.f32.mxu0 0.0
      %v4511 = vand.u32 %v3382, 4294901760
      %v4512 = vsub.f32 %v3382, %v4511
      %4513 = vmatmul.mubr.f32.gmra.mrb[0].mxu0 %v4512
      %v4514 = vpop.f32.mrb[0].mxu0
      %v4515 = vadd.f32 %v4398, %v4514
      %v4516 = vpop.f32.mrb[0].mxu0
      %4517 = vmatprep.mubr.f32.mxu0 0.0
      %v4518 = vand.u32 %v3385, 4294901760
      %v4519 = vsub.f32 %v3385, %v4518
      %4520 = vmatmul.mubr.f32.gmra.mrb[0].mxu0 %v4519
      %v4521 = vpop.f32.mrb[0].mxu0
      %v4522 = vadd.f32 %v4404, %v4521
      %v4523 = vpop.f32.mrb[0].mxu0
      %4524 = vmatprep.mubr.f32.mxu0 0.0
      %v4525 = vand.u32 %v3388, 4294901760
      %v4526 = vsub.f32 %v3388, %v4525
      %4527 = vmatmul.mubr.f32.gmra.mrb[0].mxu0 %v4526
      %v4528 = vpop.f32.mrb[0].mxu0
      %v4529 = vadd.f32 %v4410, %v4528
      %v4530 = vpop.f32.mrb[0].mxu0
      %4531 = vdwg.mxu0
      %4532 = vmatprep.subr.mxu0 0.0
      %v4533 = vand.u32 %v4125, 4294901760
      %4534 = vmatpush1.msra.mxu0 %v4533
      %4535 = vmatprep.subr.mxu0 0.0
      %v4536 = vand.u32 %v4126, 4294901760
      %4537 = vmatpush1.msra.mxu0 %v4536
      %4538 = vmatprep.subr.mxu0 0.0
      %v4539 = vand.u32 %v4127, 4294901760
      %4540 = vmatpush1.msra.mxu0 %v4539
      %4541 = vmatprep.subr.mxu0 0.0
      %v4542 = vand.u32 %v4128, 4294901760
      %4543 = vmatpush1.msra.mxu0 %v4542
      %4544 = vmatprep.subr.mxu0 0.0
      %v4545 = vand.u32 %v4129, 4294901760
      %4546 = vmatpush1.msra.mxu0 %v4545
      %4547 = vmatprep.subr.mxu0 0.0
      %v4548 = vand.u32 %v4130, 4294901760
      %4549 = vmatpush1.msra.mxu0 %v4548
      %4550 = vmatprep.subr.mxu0 0.0
      %v4551 = vand.u32 %v4131, 4294901760
      %4552 = vmatpush1.msra.mxu0 %v4551
      %4553 = vmatprep.subr.mxu0 0.0
      %v4554 = vand.u32 %v4132, 4294901760
      %4555 = vmatpush1.msra.mxu0 %v4554
      %4556 = vmatprep.subr.mxu0 0.0
      %v4557 = vand.u32 %v4133, 4294901760
      %4558 = vmatpush1.msra.mxu0 %v4557
      %4559 = vmatprep.subr.mxu0 0.0
      %v4560 = vand.u32 %v4134, 4294901760
      %4561 = vmatpush1.msra.mxu0 %v4560
      %4562 = vmatprep.subr.mxu0 0.0
      %v4563 = vand.u32 %v4135, 4294901760
      %4564 = vmatpush1.msra.mxu0 %v4563
      %4565 = vmatprep.subr.mxu0 0.0
      %v4566 = vand.u32 %v4136, 4294901760
      %4567 = vmatpush1.msra.mxu0 %v4566
      %4568 = vmatprep.subr.mxu0 0.0
      %v4569 = vand.u32 %v4139, 4294901760
      %4570 = vmatpush1.msra.mxu0 %v4569
      %4571 = vmatprep.subr.mxu0 0.0
      %4572 = vmatpush1.msra.mxu0 0.0
      %4573 = vmatprep.subr.mxu0 0.0
      %4574 = vmatpush1.msra.mxu0 0.0
      %4575 = vmatprep.subr.mxu0 0.0
      %4576 = vmatpush1.msra.mxu0 0.0
      %4577 = vmatprep.subr.mxu0 0.0
      %4578 = vmatpush1.msra.mxu0 0.0
      %4579 = vmatprep.subr.mxu0 0.0
      %4580 = vmatpush1.msra.mxu0 0.0
      %4581 = vmatprep.subr.mxu0 0.0
      %4582 = vmatpush1.msra.mxu0 0.0
      %4583 = vmatprep.subr.mxu0 0.0
      %4584 = vmatpush1.msra.mxu0 0.0
      %4585 = vmatprep.subr.mxu0 0.0
      %4586 = vmatpush1.msra.mxu0 0.0
      %4587 = vmatprep.subr.mxu0 0.0
      %4588 = vmatpush1.msra.mxu0 0.0
      %4589 = vmatprep.subr.mxu0 0.0
      %4590 = vmatpush1.msra.mxu0 0.0
      %4591 = vmatprep.subr.mxu0 0.0
      %4592 = vmatpush1.msra.mxu0 0.0
      %4593 = vmatprep.subr.mxu0 0.0
      %4594 = vmatpush1.msra.mxu0 0.0
      %4595 = vmatprep.subr.mxu0 0.0
      %4596 = vmatpush1.msra.mxu0 0.0
      %4597 = vmatprep.subr.mxu0 0.0
      %4598 = vmatpush1.msra.mxu0 0.0
      %4599 = vmatprep.subr.mxu0 0.0
      %4600 = vmatpush1.msra.mxu0 0.0
      %4601 = vmatprep.subr.mxu0 0.0
      %4602 = vmatpush1.msra.mxu0 0.0
      %4603 = vmatprep.subr.mxu0 0.0
      %4604 = vmatpush1.msra.mxu0 0.0
      %4605 = vmatprep.subr.mxu0 0.0
      %4606 = vmatpush1.msra.mxu0 0.0
      %4607 = vmatprep.subr.mxu0 0.0
      %4608 = vmatpush1.msra.mxu0 0.0
      %4609 = vmatprep.mubr.f32.mxu0 0.0
      %v4610 = vand.u32 %v3379, 4294901760
      %v4611 = vsub.f32 %v3379, %v4610
      %v4612 = vand.u32 %v4611, 4294901760
      %4613 = vmatmul.mubr.f32.gmra.mrb[0].mxu0 %v4612
      %v4614 = vpop.f32.mrb[0].mxu0
      %v4615 = vadd.f32 %v4508, %v4614
      %v4616 = vpop.f32.mrb[0].mxu0
      %4617 = vmatprep.mubr.f32.mxu0 0.0
      %v4618 = vand.u32 %v3382, 4294901760
      %v4619 = vsub.f32 %v3382, %v4618
      %v4620 = vand.u32 %v4619, 4294901760
      %4621 = vmatmul.mubr.f32.gmra.mrb[0].mxu0 %v4620
      %v4622 = vpop.f32.mrb[0].mxu0
      %v4623 = vadd.f32 %v4515, %v4622
      %v4624 = vpop.f32.mrb[0].mxu0
      %4625 = vmatprep.mubr.f32.mxu0 0.0
      %v4626 = vand.u32 %v3385, 4294901760
      %v4627 = vsub.f32 %v3385, %v4626
      %v4628 = vand.u32 %v4627, 4294901760
      %4629 = vmatmul.mubr.f32.gmra.mrb[0].mxu0 %v4628
      %v4630 = vpop.f32.mrb[0].mxu0
      %v4631 = vadd.f32 %v4522, %v4630
      %v4632 = vpop.f32.mrb[0].mxu0
      %4633 = vmatprep.mubr.f32.mxu0 0.0
      %v4634 = vand.u32 %v3388, 4294901760
      %v4635 = vsub.f32 %v3388, %v4634
      %v4636 = vand.u32 %v4635, 4294901760
      %4637 = vmatmul.mubr.f32.gmra.mrb[0].mxu0 %v4636
      %v4638 = vpop.f32.mrb[0].mxu0
      %v4639 = vadd.f32 %v4529, %v4638
      %v4640 = vpop.f32.mrb[0].mxu0
      %4641 = vdwg.mxu0
      %4642 = vmatprep.subr.mxu0 0.0
      %v4643 = vand.u32 %v4125, 4294901760
      %v4644 = vsub.f32 %v4125, %v4643
      %v4645 = vand.u32 %v4644, 4294901760
      %4646 = vmatpush1.msra.mxu0 %v4645
      %4647 = vmatprep.subr.mxu0 0.0
      %v4648 = vand.u32 %v4126, 4294901760
      %v4649 = vsub.f32 %v4126, %v4648
      %v4650 = vand.u32 %v4649, 4294901760
      %4651 = vmatpush1.msra.mxu0 %v4650
      %4652 = vmatprep.subr.mxu0 0.0
      %v4653 = vand.u32 %v4127, 4294901760
      %v4654 = vsub.f32 %v4127, %v4653
      %v4655 = vand.u32 %v4654, 4294901760
      %4656 = vmatpush1.msra.mxu0 %v4655
      %4657 = vmatprep.subr.mxu0 0.0
      %v4658 = vand.u32 %v4128, 4294901760
      %v4659 = vsub.f32 %v4128, %v4658
      %v4660 = vand.u32 %v4659, 4294901760
      %4661 = vmatpush1.msra.mxu0 %v4660
      %4662 = vmatprep.subr.mxu0 0.0
      %v4663 = vand.u32 %v4129, 4294901760
      %v4664 = vsub.f32 %v4129, %v4663
      %v4665 = vand.u32 %v4664, 4294901760
      %4666 = vmatpush1.msra.mxu0 %v4665
      %4667 = vmatprep.subr.mxu0 0.0
      %v4668 = vand.u32 %v4130, 4294901760
      %v4669 = vsub.f32 %v4130, %v4668
      %v4670 = vand.u32 %v4669, 4294901760
      %4671 = vmatpush1.msra.mxu0 %v4670
      %4672 = vmatprep.subr.mxu0 0.0
      %v4673 = vand.u32 %v4131, 4294901760
      %v4674 = vsub.f32 %v4131, %v4673
      %v4675 = vand.u32 %v4674, 4294901760
      %4676 = vmatpush1.msra.mxu0 %v4675
      %4677 = vmatprep.subr.mxu0 0.0
      %v4678 = vand.u32 %v4132, 4294901760
      %v4679 = vsub.f32 %v4132, %v4678
      %v4680 = vand.u32 %v4679, 4294901760
      %4681 = vmatpush1.msra.mxu0 %v4680
      %4682 = vmatprep.subr.mxu0 0.0
      %v4683 = vand.u32 %v4133, 4294901760
      %v4684 = vsub.f32 %v4133, %v4683
      %v4685 = vand.u32 %v4684, 4294901760
      %4686 = vmatpush1.msra.mxu0 %v4685
      %4687 = vmatprep.subr.mxu0 0.0
      %v4688 = vand.u32 %v4134, 4294901760
      %v4689 = vsub.f32 %v4134, %v4688
      %v4690 = vand.u32 %v4689, 4294901760
      %4691 = vmatpush1.msra.mxu0 %v4690
      %4692 = vmatprep.subr.mxu0 0.0
      %v4693 = vand.u32 %v4135, 4294901760
      %v4694 = vsub.f32 %v4135, %v4693
      %v4695 = vand.u32 %v4694, 4294901760
      %4696 = vmatpush1.msra.mxu0 %v4695
      %4697 = vmatprep.subr.mxu0 0.0
      %v4698 = vand.u32 %v4136, 4294901760
      %v4699 = vsub.f32 %v4136, %v4698
      %v4700 = vand.u32 %v4699, 4294901760
      %4701 = vmatpush1.msra.mxu0 %v4700
      %4702 = vmatprep.subr.mxu0 0.0
      %v4703 = vand.u32 %v4139, 4294901760
      %v4704 = vsub.f32 %v4139, %v4703
      %v4705 = vand.u32 %v4704, 4294901760
      %4706 = vmatpush1.msra.mxu0 %v4705
      %4707 = vmatprep.subr.mxu0 0.0
      %4708 = vmatpush1.msra.mxu0 0.0
      %4709 = vmatprep.subr.mxu0 0.0
      %4710 = vmatpush1.msra.mxu0 0.0
      %4711 = vmatprep.subr.mxu0 0.0
      %4712 = vmatpush1.msra.mxu0 0.0
      %4713 = vmatprep.subr.mxu0 0.0
      %4714 = vmatpush1.msra.mxu0 0.0
      %4715 = vmatprep.subr.mxu0 0.0
      %4716 = vmatpush1.msra.mxu0 0.0
      %4717 = vmatprep.subr.mxu0 0.0
      %4718 = vmatpush1.msra.mxu0 0.0
      %4719 = vmatprep.subr.mxu0 0.0
      %4720 = vmatpush1.msra.mxu0 0.0
      %4721 = vmatprep.subr.mxu0 0.0
      %4722 = vmatpush1.msra.mxu0 0.0
      %4723 = vmatprep.subr.mxu0 0.0
      %4724 = vmatpush1.msra.mxu0 0.0
      %4725 = vmatprep.subr.mxu0 0.0
      %4726 = vmatpush1.msra.mxu0 0.0
      %4727 = vmatprep.subr.mxu0 0.0
      %4728 = vmatpush1.msra.mxu0 0.0
      %4729 = vmatprep.subr.mxu0 0.0
      %4730 = vmatpush1.msra.mxu0 0.0
      %4731 = vmatprep.subr.mxu0 0.0
      %4732 = vmatpush1.msra.mxu0 0.0
      %4733 = vmatprep.subr.mxu0 0.0
      %4734 = vmatpush1.msra.mxu0 0.0
      %4735 = vmatprep.subr.mxu0 0.0
      %4736 = vmatpush1.msra.mxu0 0.0
      %4737 = vmatprep.subr.mxu0 0.0
      %4738 = vmatpush1.msra.mxu0 0.0
      %4739 = vmatprep.subr.mxu0 0.0
      %4740 = vmatpush1.msra.mxu0 0.0
      %4741 = vmatprep.subr.mxu0 0.0
      %4742 = vmatpush1.msra.mxu0 0.0
      %4743 = vmatprep.subr.mxu0 0.0
      %4744 = vmatpush1.msra.mxu0 0.0
      %4745 = vmatprep.mubr.f32.mxu0 0.0
      %v4746 = vand.u32 %v3379, 4294901760
      %4747 = vmatmul.mubr.f32.gmra.mrb[0].mxu0 %v4746
      %v4748 = vpop.f32.mrb[0].mxu0
      %v4749 = vadd.f32 %v4615, %v4748
      %v4750 = vpop.f32.mrb[0].mxu0
      %4751 = vmatprep.mubr.f32.mxu0 0.0
      %v4752 = vand.u32 %v3382, 4294901760
      %4753 = vmatmul.mubr.f32.gmra.mrb[0].mxu0 %v4752
      %v4754 = vpop.f32.mrb[0].mxu0
      %v4755 = vadd.f32 %v4623, %v4754
      %v4756 = vpop.f32.mrb[0].mxu0
      %4757 = vmatprep.mubr.f32.mxu0 0.0
      %v4758 = vand.u32 %v3385, 4294901760
      %4759 = vmatmul.mubr.f32.gmra.mrb[0].mxu0 %v4758
      %v4760 = vpop.f32.mrb[0].mxu0
      %v4761 = vadd.f32 %v4631, %v4760
      %v4762 = vpop.f32.mrb[0].mxu0
      %4763 = vmatprep.mubr.f32.mxu0 0.0
      %v4764 = vand.u32 %v3388, 4294901760
      %4765 = vmatmul.mubr.f32.gmra.mrb[0].mxu0 %v4764
      %v4766 = vpop.f32.mrb[0].mxu0
      %v4767 = vadd.f32 %v4639, %v4766
      %v4768 = vpop.f32.mrb[0].mxu0
      %4769 = vdwg.mxu0
      %4770 = vmatprep.subr.mxu0 0.0
      %v4771 = vand.u32 %v4125, 4294901760
      %4772 = vmatpush1.msra.mxu0 %v4771
      %4773 = vmatprep.subr.mxu0 0.0
      %v4774 = vand.u32 %v4126, 4294901760
      %4775 = vmatpush1.msra.mxu0 %v4774
      %4776 = vmatprep.subr.mxu0 0.0
      %v4777 = vand.u32 %v4127, 4294901760
      %4778 = vmatpush1.msra.mxu0 %v4777
      %4779 = vmatprep.subr.mxu0 0.0
      %v4780 = vand.u32 %v4128, 4294901760
      %4781 = vmatpush1.msra.mxu0 %v4780
      %4782 = vmatprep.subr.mxu0 0.0
      %v4783 = vand.u32 %v4129, 4294901760
      %4784 = vmatpush1.msra.mxu0 %v4783
      %4785 = vmatprep.subr.mxu0 0.0
      %v4786 = vand.u32 %v4130, 4294901760
      %4787 = vmatpush1.msra.mxu0 %v4786
      %4788 = vmatprep.subr.mxu0 0.0
      %v4789 = vand.u32 %v4131, 4294901760
      %4790 = vmatpush1.msra.mxu0 %v4789
      %4791 = vmatprep.subr.mxu0 0.0
      %v4792 = vand.u32 %v4132, 4294901760
      %4793 = vmatpush1.msra.mxu0 %v4792
      %4794 = vmatprep.subr.mxu0 0.0
      %v4795 = vand.u32 %v4133, 4294901760
      %4796 = vmatpush1.msra.mxu0 %v4795
      %4797 = vmatprep.subr.mxu0 0.0
      %v4798 = vand.u32 %v4134, 4294901760
      %4799 = vmatpush1.msra.mxu0 %v4798
      %4800 = vmatprep.subr.mxu0 0.0
      %v4801 = vand.u32 %v4135, 4294901760
      %4802 = vmatpush1.msra.mxu0 %v4801
      %4803 = vmatprep.subr.mxu0 0.0
      %v4804 = vand.u32 %v4136, 4294901760
      %4805 = vmatpush1.msra.mxu0 %v4804
      %4806 = vmatprep.subr.mxu0 0.0
      %v4807 = vand.u32 %v4139, 4294901760
      %4808 = vmatpush1.msra.mxu0 %v4807
      %4809 = vmatprep.subr.mxu0 0.0
      %4810 = vmatpush1.msra.mxu0 0.0
      %4811 = vmatprep.subr.mxu0 0.0
      %4812 = vmatpush1.msra.mxu0 0.0
      %4813 = vmatprep.subr.mxu0 0.0
      %4814 = vmatpush1.msra.mxu0 0.0
      %4815 = vmatprep.subr.mxu0 0.0
      %4816 = vmatpush1.msra.mxu0 0.0
      %4817 = vmatprep.subr.mxu0 0.0
      %4818 = vmatpush1.msra.mxu0 0.0
      %4819 = vmatprep.subr.mxu0 0.0
      %4820 = vmatpush1.msra.mxu0 0.0
      %4821 = vmatprep.subr.mxu0 0.0
      %4822 = vmatpush1.msra.mxu0 0.0
      %4823 = vmatprep.subr.mxu0 0.0
      %4824 = vmatpush1.msra.mxu0 0.0
      %4825 = vmatprep.subr.mxu0 0.0
      %4826 = vmatpush1.msra.mxu0 0.0
      %4827 = vmatprep.subr.mxu0 0.0
      %4828 = vmatpush1.msra.mxu0 0.0
      %4829 = vmatprep.subr.mxu0 0.0
      %4830 = vmatpush1.msra.mxu0 0.0
      %4831 = vmatprep.subr.mxu0 0.0
      %4832 = vmatpush1.msra.mxu0 0.0
      %4833 = vmatprep.subr.mxu0 0.0
      %4834 = vmatpush1.msra.mxu0 0.0
      %4835 = vmatprep.subr.mxu0 0.0
      %4836 = vmatpush1.msra.mxu0 0.0
      %4837 = vmatprep.subr.mxu0 0.0
      %4838 = vmatpush1.msra.mxu0 0.0
      %4839 = vmatprep.subr.mxu0 0.0
      %4840 = vmatpush1.msra.mxu0 0.0
      %4841 = vmatprep.subr.mxu0 0.0
      %4842 = vmatpush1.msra.mxu0 0.0
      %4843 = vmatprep.subr.mxu0 0.0
      %4844 = vmatpush1.msra.mxu0 0.0
      %4845 = vmatprep.subr.mxu0 0.0
      %4846 = vmatpush1.msra.mxu0 0.0
      %4847 = vmatprep.mubr.f32.mxu0 0.0
      %v4848 = vand.u32 %v3379, 4294901760
      %4849 = vmatmul.mubr.f32.gmra.mrb[0].mxu0 %v4848
      %v4850 = vpop.f32.mrb[0].mxu0
      %v4851 = vadd.f32 %v4749, %v4850
      %v4852 = vpop.f32.mrb[0].mxu0
      %4853 = vmatprep.mubr.f32.mxu0 0.0
      %v4854 = vand.u32 %v3382, 4294901760
      %4855 = vmatmul.mubr.f32.gmra.mrb[0].mxu0 %v4854
      %v4856 = vpop.f32.mrb[0].mxu0
      %v4857 = vadd.f32 %v4755, %v4856
      %v4858 = vpop.f32.mrb[0].mxu0
      %4859 = vmatprep.mubr.f32.mxu0 0.0
      %v4860 = vand.u32 %v3385, 4294901760
      %4861 = vmatmul.mubr.f32.gmra.mrb[0].mxu0 %v4860
      %v4862 = vpop.f32.mrb[0].mxu0
      %v4863 = vadd.f32 %v4761, %v4862
      %v4864 = vpop.f32.mrb[0].mxu0
      %4865 = vmatprep.mubr.f32.mxu0 0.0
      %v4866 = vand.u32 %v3388, 4294901760
      %4867 = vmatmul.mubr.f32.gmra.mrb[0].mxu0 %v4866
      %v4868 = vpop.f32.mrb[0].mxu0
      %v4869 = vadd.f32 %v4767, %v4868
      %v4870 = vpop.f32.mrb[0].mxu0
      %4871 = vdwg.mxu0
      %v4872 = vadd.f32 %v2605, %v4103
      %v4873 = vadd.f32 %v2611, %v4109
      %v4874 = vadd.f32 %v2617, %v4115
      %v4875 = vadd.f32 %v2623, %v4121
      %v4876 = vadd.f32 %v3339, %v4851
      %v4877 = vadd.f32 %v3345, %v4857
      %v4878 = vadd.f32 %v3351, %v4863
      %v4879 = vadd.f32 %v3357, %v4869
      %v4880 = vmax.f32 %v4872, %v4876
      %v4881 = vmax.f32 %v4873, %v4877
      %v4882 = vmax.f32 %v4874, %v4878
      %v4883 = vmax.f32 %v4875, %v4879
      %v4884 = vld [vmem:[%s6] sm:$0xff]
      %v4885 = vld [vmem:[%s6 + $0x8] sm:$0xff]
      %vm4886 = vcmask 261120
      %v4888 = vsel %vm4886, %v4884, 0
      %v4891 = vsel %vm4886, %v4885, 0
      %4893 = vmatprep.subr.mxu0 0.0
      %v4894 = vand.u32 %v4880, 4294901760
      %4895 = vmatpush1.msra.mxu0 %v4894
      %4896 = vmatprep.subr.mxu0 0.0
      %v4897 = vand.u32 %v4881, 4294901760
      %4898 = vmatpush1.msra.mxu0 %v4897
      %4899 = vmatprep.subr.mxu0 0.0
      %v4900 = vand.u32 %v4882, 4294901760
      %4901 = vmatpush1.msra.mxu0 %v4900
      %4902 = vmatprep.subr.mxu0 0.0
      %v4903 = vand.u32 %v4883, 4294901760
      %4904 = vmatpush1.msra.mxu0 %v4903
      %4905 = vmatprep.subr.mxu0 0.0
      %4906 = vmatpush1.msra.mxu0 0.0
      %4907 = vmatprep.subr.mxu0 0.0
      %4908 = vmatpush1.msra.mxu0 0.0
      %4909 = vmatprep.subr.mxu0 0.0
      %4910 = vmatpush1.msra.mxu0 0.0
      %4911 = vmatprep.subr.mxu0 0.0
      %4912 = vmatpush1.msra.mxu0 0.0
      %4913 = vmatprep.subr.mxu0 0.0
      %4914 = vmatpush1.msra.mxu0 0.0
      %4915 = vmatprep.subr.mxu0 0.0
      %4916 = vmatpush1.msra.mxu0 0.0
      %4917 = vmatprep.subr.mxu0 0.0
      %4918 = vmatpush1.msra.mxu0 0.0
      %4919 = vmatprep.subr.mxu0 0.0
      %4920 = vmatpush1.msra.mxu0 0.0
      %4921 = vmatprep.subr.mxu0 0.0
      %4922 = vmatpush1.msra.mxu0 0.0
      %4923 = vmatprep.subr.mxu0 0.0
      %4924 = vmatpush1.msra.mxu0 0.0
      %4925 = vmatprep.subr.mxu0 0.0
      %4926 = vmatpush1.msra.mxu0 0.0
      %4927 = vmatprep.subr.mxu0 0.0
      %4928 = vmatpush1.msra.mxu0 0.0
      %4929 = vmatprep.subr.mxu0 0.0
      %4930 = vmatpush1.msra.mxu0 0.0
      %4931 = vmatprep.subr.mxu0 0.0
      %4932 = vmatpush1.msra.mxu0 0.0
      %4933 = vmatprep.subr.mxu0 0.0
      %4934 = vmatpush1.msra.mxu0 0.0
      %4935 = vmatprep.subr.mxu0 0.0
      %4936 = vmatpush1.msra.mxu0 0.0
      %4937 = vmatprep.subr.mxu0 0.0
      %4938 = vmatpush1.msra.mxu0 0.0
      %4939 = vmatprep.subr.mxu0 0.0
      %4940 = vmatpush1.msra.mxu0 0.0
      %4941 = vmatprep.subr.mxu0 0.0
      %4942 = vmatpush1.msra.mxu0 0.0
      %4943 = vmatprep.subr.mxu0 0.0
      %4944 = vmatpush1.msra.mxu0 0.0
      %4945 = vmatprep.subr.mxu0 0.0
      %4946 = vmatpush1.msra.mxu0 0.0
      %4947 = vmatprep.subr.mxu0 0.0
      %4948 = vmatpush1.msra.mxu0 0.0
      %4949 = vmatprep.subr.mxu0 0.0
      %4950 = vmatpush1.msra.mxu0 0.0
      %4951 = vmatprep.subr.mxu0 0.0
      %4952 = vmatpush1.msra.mxu0 0.0
      %4953 = vmatprep.subr.mxu0 0.0
      %4954 = vmatpush1.msra.mxu0 0.0
      %4955 = vmatprep.subr.mxu0 0.0
      %4956 = vmatpush1.msra.mxu0 0.0
      %4957 = vmatprep.subr.mxu0 0.0
      %4958 = vmatpush1.msra.mxu0 0.0
      %4959 = vmatprep.subr.mxu0 0.0
      %4960 = vmatpush1.msra.mxu0 0.0
      %4961 = vmatprep.mubr.f32.mxu0 0.0
      %v4962 = vand.u32 %v4888, 4294901760
      %v4963 = vsub.f32 %v4888, %v4962
      %v4964 = vand.u32 %v4963, 4294901760
      %v4965 = vsub.f32 %v4963, %v4964
      %v4966 = vand.u32 %v4965, 4294901760
      %4967 = vmatmul.mubr.f32.gmra.mrb[0].mxu0 %v4966
      %v4968 = vpop.f32.mrb[0].mxu0
      %v4969 = vadd.f32 0.0, %v4968
      %v4970 = vpop.f32.mrb[0].mxu0
      %4971 = vmatprep.mubr.f32.mxu0 0.0
      %v4972 = vand.u32 %v4891, 4294901760
      %v4973 = vsub.f32 %v4891, %v4972
      %v4974 = vand.u32 %v4973, 4294901760
      %v4975 = vsub.f32 %v4973, %v4974
      %v4976 = vand.u32 %v4975, 4294901760
      %4977 = vmatmul.mubr.f32.gmra.mrb[0].mxu0 %v4976
      %v4978 = vpop.f32.mrb[0].mxu0
      %v4979 = vadd.f32 0.0, %v4978
      %v4980 = vpop.f32.mrb[0].mxu0
      %4981 = vdwg.mxu0
      %4982 = vmatprep.subr.mxu0 0.0
      %v4983 = vand.u32 %v4880, 4294901760
      %v4984 = vsub.f32 %v4880, %v4983
      %v4985 = vand.u32 %v4984, 4294901760
      %v4986 = vsub.f32 %v4984, %v4985
      %v4987 = vand.u32 %v4986, 4294901760
      %4988 = vmatpush1.msra.mxu0 %v4987
      %4989 = vmatprep.subr.mxu0 0.0
      %v4990 = vand.u32 %v4881, 4294901760
      %v4991 = vsub.f32 %v4881, %v4990
      %v4992 = vand.u32 %v4991, 4294901760
      %v4993 = vsub.f32 %v4991, %v4992
      %v4994 = vand.u32 %v4993, 4294901760
      %4995 = vmatpush1.msra.mxu0 %v4994
      %4996 = vmatprep.subr.mxu0 0.0
      %v4997 = vand.u32 %v4882, 4294901760
      %v4998 = vsub.f32 %v4882, %v4997
      %v4999 = vand.u32 %v4998, 4294901760
      %v5000 = vsub.f32 %v4998, %v4999
      %v5001 = vand.u32 %v5000, 4294901760
      %5002 = vmatpush1.msra.mxu0 %v5001
      %5003 = vmatprep.subr.mxu0 0.0
      %v5004 = vand.u32 %v4883, 4294901760
      %v5005 = vsub.f32 %v4883, %v5004
      %v5006 = vand.u32 %v5005, 4294901760
      %v5007 = vsub.f32 %v5005, %v5006
      %v5008 = vand.u32 %v5007, 4294901760
      %5009 = vmatpush1.msra.mxu0 %v5008
      %5010 = vmatprep.subr.mxu0 0.0
      %5011 = vmatpush1.msra.mxu0 0.0
      %5012 = vmatprep.subr.mxu0 0.0
      %5013 = vmatpush1.msra.mxu0 0.0
      %5014 = vmatprep.subr.mxu0 0.0
      %5015 = vmatpush1.msra.mxu0 0.0
      %5016 = vmatprep.subr.mxu0 0.0
      %5017 = vmatpush1.msra.mxu0 0.0
      %5018 = vmatprep.subr.mxu0 0.0
      %5019 = vmatpush1.msra.mxu0 0.0
      %5020 = vmatprep.subr.mxu0 0.0
      %5021 = vmatpush1.msra.mxu0 0.0
      %5022 = vmatprep.subr.mxu0 0.0
      %5023 = vmatpush1.msra.mxu0 0.0
      %5024 = vmatprep.subr.mxu0 0.0
      %5025 = vmatpush1.msra.mxu0 0.0
      %5026 = vmatprep.subr.mxu0 0.0
      %5027 = vmatpush1.msra.mxu0 0.0
      %5028 = vmatprep.subr.mxu0 0.0
      %5029 = vmatpush1.msra.mxu0 0.0
      %5030 = vmatprep.subr.mxu0 0.0
      %5031 = vmatpush1.msra.mxu0 0.0
      %5032 = vmatprep.subr.mxu0 0.0
      %5033 = vmatpush1.msra.mxu0 0.0
      %5034 = vmatprep.subr.mxu0 0.0
      %5035 = vmatpush1.msra.mxu0 0.0
      %5036 = vmatprep.subr.mxu0 0.0
      %5037 = vmatpush1.msra.mxu0 0.0
      %5038 = vmatprep.subr.mxu0 0.0
      %5039 = vmatpush1.msra.mxu0 0.0
      %5040 = vmatprep.subr.mxu0 0.0
      %5041 = vmatpush1.msra.mxu0 0.0
      %5042 = vmatprep.subr.mxu0 0.0
      %5043 = vmatpush1.msra.mxu0 0.0
      %5044 = vmatprep.subr.mxu0 0.0
      %5045 = vmatpush1.msra.mxu0 0.0
      %5046 = vmatprep.subr.mxu0 0.0
      %5047 = vmatpush1.msra.mxu0 0.0
      %5048 = vmatprep.subr.mxu0 0.0
      %5049 = vmatpush1.msra.mxu0 0.0
      %5050 = vmatprep.subr.mxu0 0.0
      %5051 = vmatpush1.msra.mxu0 0.0
      %5052 = vmatprep.subr.mxu0 0.0
      %5053 = vmatpush1.msra.mxu0 0.0
      %5054 = vmatprep.subr.mxu0 0.0
      %5055 = vmatpush1.msra.mxu0 0.0
      %5056 = vmatprep.subr.mxu0 0.0
      %5057 = vmatpush1.msra.mxu0 0.0
      %5058 = vmatprep.subr.mxu0 0.0
      %5059 = vmatpush1.msra.mxu0 0.0
      %5060 = vmatprep.subr.mxu0 0.0
      %5061 = vmatpush1.msra.mxu0 0.0
      %5062 = vmatprep.subr.mxu0 0.0
      %5063 = vmatpush1.msra.mxu0 0.0
      %5064 = vmatprep.subr.mxu0 0.0
      %5065 = vmatpush1.msra.mxu0 0.0
      %5066 = vmatprep.mubr.f32.mxu0 0.0
      %v5067 = vand.u32 %v4888, 4294901760
      %5068 = vmatmul.mubr.f32.gmra.mrb[0].mxu0 %v5067
      %v5069 = vpop.f32.mrb[0].mxu0
      %v5070 = vadd.f32 %v4969, %v5069
      %v5071 = vpop.f32.mrb[0].mxu0
      %5072 = vmatprep.mubr.f32.mxu0 0.0
      %v5073 = vand.u32 %v4891, 4294901760
      %5074 = vmatmul.mubr.f32.gmra.mrb[0].mxu0 %v5073
      %v5075 = vpop.f32.mrb[0].mxu0
      %v5076 = vadd.f32 %v4979, %v5075
      %v5077 = vpop.f32.mrb[0].mxu0
      %5078 = vdwg.mxu0
      %5079 = vmatprep.subr.mxu0 0.0
      %v5080 = vand.u32 %v4880, 4294901760
      %v5081 = vsub.f32 %v4880, %v5080
      %5082 = vmatpush1.msra.mxu0 %v5081
      %5083 = vmatprep.subr.mxu0 0.0
      %v5084 = vand.u32 %v4881, 4294901760
      %v5085 = vsub.f32 %v4881, %v5084
      %5086 = vmatpush1.msra.mxu0 %v5085
      %5087 = vmatprep.subr.mxu0 0.0
      %v5088 = vand.u32 %v4882, 4294901760
      %v5089 = vsub.f32 %v4882, %v5088
      %5090 = vmatpush1.msra.mxu0 %v5089
      %5091 = vmatprep.subr.mxu0 0.0
      %v5092 = vand.u32 %v4883, 4294901760
      %v5093 = vsub.f32 %v4883, %v5092
      %5094 = vmatpush1.msra.mxu0 %v5093
      %5095 = vmatprep.subr.mxu0 0.0
      %5096 = vmatpush1.msra.mxu0 0.0
      %5097 = vmatprep.subr.mxu0 0.0
      %5098 = vmatpush1.msra.mxu0 0.0
      %5099 = vmatprep.subr.mxu0 0.0
      %5100 = vmatpush1.msra.mxu0 0.0
      %5101 = vmatprep.subr.mxu0 0.0
      %5102 = vmatpush1.msra.mxu0 0.0
      %5103 = vmatprep.subr.mxu0 0.0
      %5104 = vmatpush1.msra.mxu0 0.0
      %5105 = vmatprep.subr.mxu0 0.0
      %5106 = vmatpush1.msra.mxu0 0.0
      %5107 = vmatprep.subr.mxu0 0.0
      %5108 = vmatpush1.msra.mxu0 0.0
      %5109 = vmatprep.subr.mxu0 0.0
      %5110 = vmatpush1.msra.mxu0 0.0
      %5111 = vmatprep.subr.mxu0 0.0
      %5112 = vmatpush1.msra.mxu0 0.0
      %5113 = vmatprep.subr.mxu0 0.0
      %5114 = vmatpush1.msra.mxu0 0.0
      %5115 = vmatprep.subr.mxu0 0.0
      %5116 = vmatpush1.msra.mxu0 0.0
      %5117 = vmatprep.subr.mxu0 0.0
      %5118 = vmatpush1.msra.mxu0 0.0
      %5119 = vmatprep.subr.mxu0 0.0
      %5120 = vmatpush1.msra.mxu0 0.0
      %5121 = vmatprep.subr.mxu0 0.0
      %5122 = vmatpush1.msra.mxu0 0.0
      %5123 = vmatprep.subr.mxu0 0.0
      %5124 = vmatpush1.msra.mxu0 0.0
      %5125 = vmatprep.subr.mxu0 0.0
      %5126 = vmatpush1.msra.mxu0 0.0
      %5127 = vmatprep.subr.mxu0 0.0
      %5128 = vmatpush1.msra.mxu0 0.0
      %5129 = vmatprep.subr.mxu0 0.0
      %5130 = vmatpush1.msra.mxu0 0.0
      %5131 = vmatprep.subr.mxu0 0.0
      %5132 = vmatpush1.msra.mxu0 0.0
      %5133 = vmatprep.subr.mxu0 0.0
      %5134 = vmatpush1.msra.mxu0 0.0
      %5135 = vmatprep.subr.mxu0 0.0
      %5136 = vmatpush1.msra.mxu0 0.0
      %5137 = vmatprep.subr.mxu0 0.0
      %5138 = vmatpush1.msra.mxu0 0.0
      %5139 = vmatprep.subr.mxu0 0.0
      %5140 = vmatpush1.msra.mxu0 0.0
      %5141 = vmatprep.subr.mxu0 0.0
      %5142 = vmatpush1.msra.mxu0 0.0
      %5143 = vmatprep.subr.mxu0 0.0
      %5144 = vmatpush1.msra.mxu0 0.0
      %5145 = vmatprep.subr.mxu0 0.0
      %5146 = vmatpush1.msra.mxu0 0.0
      %5147 = vmatprep.subr.mxu0 0.0
      %5148 = vmatpush1.msra.mxu0 0.0
      %5149 = vmatprep.subr.mxu0 0.0
      %5150 = vmatpush1.msra.mxu0 0.0
      %5151 = vmatprep.mubr.f32.mxu0 0.0
      %v5152 = vand.u32 %v4888, 4294901760
      %v5153 = vsub.f32 %v4888, %v5152
      %5154 = vmatmul.mubr.f32.gmra.mrb[0].mxu0 %v5153
      %v5155 = vpop.f32.mrb[0].mxu0
      %v5156 = vadd.f32 %v5070, %v5155
      %v5157 = vpop.f32.mrb[0].mxu0
      %5158 = vmatprep.mubr.f32.mxu0 0.0
      %v5159 = vand.u32 %v4891, 4294901760
      %v5160 = vsub.f32 %v4891, %v5159
      %5161 = vmatmul.mubr.f32.gmra.mrb[0].mxu0 %v5160
      %v5162 = vpop.f32.mrb[0].mxu0
      %v5163 = vadd.f32 %v5076, %v5162
      %v5164 = vpop.f32.mrb[0].mxu0
      %5165 = vdwg.mxu0
      %5166 = vmatprep.subr.mxu0 0.0
      %v5167 = vand.u32 %v4880, 4294901760
      %5168 = vmatpush1.msra.mxu0 %v5167
      %5169 = vmatprep.subr.mxu0 0.0
      %v5170 = vand.u32 %v4881, 4294901760
      %5171 = vmatpush1.msra.mxu0 %v5170
      %5172 = vmatprep.subr.mxu0 0.0
      %v5173 = vand.u32 %v4882, 4294901760
      %5174 = vmatpush1.msra.mxu0 %v5173
      %5175 = vmatprep.subr.mxu0 0.0
      %v5176 = vand.u32 %v4883, 4294901760
      %5177 = vmatpush1.msra.mxu0 %v5176
      %5178 = vmatprep.subr.mxu0 0.0
      %5179 = vmatpush1.msra.mxu0 0.0
      %5180 = vmatprep.subr.mxu0 0.0
      %5181 = vmatpush1.msra.mxu0 0.0
      %5182 = vmatprep.subr.mxu0 0.0
      %5183 = vmatpush1.msra.mxu0 0.0
      %5184 = vmatprep.subr.mxu0 0.0
      %5185 = vmatpush1.msra.mxu0 0.0
      %5186 = vmatprep.subr.mxu0 0.0
      %5187 = vmatpush1.msra.mxu0 0.0
      %5188 = vmatprep.subr.mxu0 0.0
      %5189 = vmatpush1.msra.mxu0 0.0
      %5190 = vmatprep.subr.mxu0 0.0
      %5191 = vmatpush1.msra.mxu0 0.0
      %5192 = vmatprep.subr.mxu0 0.0
      %5193 = vmatpush1.msra.mxu0 0.0
      %5194 = vmatprep.subr.mxu0 0.0
      %5195 = vmatpush1.msra.mxu0 0.0
      %5196 = vmatprep.subr.mxu0 0.0
      %5197 = vmatpush1.msra.mxu0 0.0
      %5198 = vmatprep.subr.mxu0 0.0
      %5199 = vmatpush1.msra.mxu0 0.0
      %5200 = vmatprep.subr.mxu0 0.0
      %5201 = vmatpush1.msra.mxu0 0.0
      %5202 = vmatprep.subr.mxu0 0.0
      %5203 = vmatpush1.msra.mxu0 0.0
      %5204 = vmatprep.subr.mxu0 0.0
      %5205 = vmatpush1.msra.mxu0 0.0
      %5206 = vmatprep.subr.mxu0 0.0
      %5207 = vmatpush1.msra.mxu0 0.0
      %5208 = vmatprep.subr.mxu0 0.0
      %5209 = vmatpush1.msra.mxu0 0.0
      %5210 = vmatprep.subr.mxu0 0.0
      %5211 = vmatpush1.msra.mxu0 0.0
      %5212 = vmatprep.subr.mxu0 0.0
      %5213 = vmatpush1.msra.mxu0 0.0
      %5214 = vmatprep.subr.mxu0 0.0
      %5215 = vmatpush1.msra.mxu0 0.0
      %5216 = vmatprep.subr.mxu0 0.0
      %5217 = vmatpush1.msra.mxu0 0.0
      %5218 = vmatprep.subr.mxu0 0.0
      %5219 = vmatpush1.msra.mxu0 0.0
      %5220 = vmatprep.subr.mxu0 0.0
      %5221 = vmatpush1.msra.mxu0 0.0
      %5222 = vmatprep.subr.mxu0 0.0
      %5223 = vmatpush1.msra.mxu0 0.0
      %5224 = vmatprep.subr.mxu0 0.0
      %5225 = vmatpush1.msra.mxu0 0.0
      %5226 = vmatprep.subr.mxu0 0.0
      %5227 = vmatpush1.msra.mxu0 0.0
      %5228 = vmatprep.subr.mxu0 0.0
      %5229 = vmatpush1.msra.mxu0 0.0
      %5230 = vmatprep.subr.mxu0 0.0
      %5231 = vmatpush1.msra.mxu0 0.0
      %5232 = vmatprep.subr.mxu0 0.0
      %5233 = vmatpush1.msra.mxu0 0.0
      %5234 = vmatprep.mubr.f32.mxu0 0.0
      %v5235 = vand.u32 %v4888, 4294901760
      %v5236 = vsub.f32 %v4888, %v5235
      %v5237 = vand.u32 %v5236, 4294901760
      %5238 = vmatmul.mubr.f32.gmra.mrb[0].mxu0 %v5237
      %v5239 = vpop.f32.mrb[0].mxu0
      %v5240 = vadd.f32 %v5156, %v5239
      %v5241 = vpop.f32.mrb[0].mxu0
      %5242 = vmatprep.mubr.f32.mxu0 0.0
      %v5243 = vand.u32 %v4891, 4294901760
      %v5244 = vsub.f32 %v4891, %v5243
      %v5245 = vand.u32 %v5244, 4294901760
      %5246 = vmatmul.mubr.f32.gmra.mrb[0].mxu0 %v5245
      %v5247 = vpop.f32.mrb[0].mxu0
      %v5248 = vadd.f32 %v5163, %v5247
      %v5249 = vpop.f32.mrb[0].mxu0
      %5250 = vdwg.mxu0
      %5251 = vmatprep.subr.mxu0 0.0
      %v5252 = vand.u32 %v4880, 4294901760
      %v5253 = vsub.f32 %v4880, %v5252
      %v5254 = vand.u32 %v5253, 4294901760
      %5255 = vmatpush1.msra.mxu0 %v5254
      %5256 = vmatprep.subr.mxu0 0.0
      %v5257 = vand.u32 %v4881, 4294901760
      %v5258 = vsub.f32 %v4881, %v5257
      %v5259 = vand.u32 %v5258, 4294901760
      %5260 = vmatpush1.msra.mxu0 %v5259
      %5261 = vmatprep.subr.mxu0 0.0
      %v5262 = vand.u32 %v4882, 4294901760
      %v5263 = vsub.f32 %v4882, %v5262
      %v5264 = vand.u32 %v5263, 4294901760
      %5265 = vmatpush1.msra.mxu0 %v5264
      %5266 = vmatprep.subr.mxu0 0.0
      %v5267 = vand.u32 %v4883, 4294901760
      %v5268 = vsub.f32 %v4883, %v5267
      %v5269 = vand.u32 %v5268, 4294901760
      %5270 = vmatpush1.msra.mxu0 %v5269
      %5271 = vmatprep.subr.mxu0 0.0
      %5272 = vmatpush1.msra.mxu0 0.0
      %5273 = vmatprep.subr.mxu0 0.0
      %5274 = vmatpush1.msra.mxu0 0.0
      %5275 = vmatprep.subr.mxu0 0.0
      %5276 = vmatpush1.msra.mxu0 0.0
      %5277 = vmatprep.subr.mxu0 0.0
      %5278 = vmatpush1.msra.mxu0 0.0
      %5279 = vmatprep.subr.mxu0 0.0
      %5280 = vmatpush1.msra.mxu0 0.0
      %5281 = vmatprep.subr.mxu0 0.0
      %5282 = vmatpush1.msra.mxu0 0.0
      %5283 = vmatprep.subr.mxu0 0.0
      %5284 = vmatpush1.msra.mxu0 0.0
      %5285 = vmatprep.subr.mxu0 0.0
      %5286 = vmatpush1.msra.mxu0 0.0
      %5287 = vmatprep.subr.mxu0 0.0
      %5288 = vmatpush1.msra.mxu0 0.0
      %5289 = vmatprep.subr.mxu0 0.0
      %5290 = vmatpush1.msra.mxu0 0.0
      %5291 = vmatprep.subr.mxu0 0.0
      %5292 = vmatpush1.msra.mxu0 0.0
      %5293 = vmatprep.subr.mxu0 0.0
      %5294 = vmatpush1.msra.mxu0 0.0
      %5295 = vmatprep.subr.mxu0 0.0
      %5296 = vmatpush1.msra.mxu0 0.0
      %5297 = vmatprep.subr.mxu0 0.0
      %5298 = vmatpush1.msra.mxu0 0.0
      %5299 = vmatprep.subr.mxu0 0.0
      %5300 = vmatpush1.msra.mxu0 0.0
      %5301 = vmatprep.subr.mxu0 0.0
      %5302 = vmatpush1.msra.mxu0 0.0
      %5303 = vmatprep.subr.mxu0 0.0
      %5304 = vmatpush1.msra.mxu0 0.0
      %5305 = vmatprep.subr.mxu0 0.0
      %5306 = vmatpush1.msra.mxu0 0.0
      %5307 = vmatprep.subr.mxu0 0.0
      %5308 = vmatpush1.msra.mxu0 0.0
      %5309 = vmatprep.subr.mxu0 0.0
      %5310 = vmatpush1.msra.mxu0 0.0
      %5311 = vmatprep.subr.mxu0 0.0
      %5312 = vmatpush1.msra.mxu0 0.0
      %5313 = vmatprep.subr.mxu0 0.0
      %5314 = vmatpush1.msra.mxu0 0.0
      %5315 = vmatprep.subr.mxu0 0.0
      %5316 = vmatpush1.msra.mxu0 0.0
      %5317 = vmatprep.subr.mxu0 0.0
      %5318 = vmatpush1.msra.mxu0 0.0
      %5319 = vmatprep.subr.mxu0 0.0
      %5320 = vmatpush1.msra.mxu0 0.0
      %5321 = vmatprep.subr.mxu0 0.0
      %5322 = vmatpush1.msra.mxu0 0.0
      %5323 = vmatprep.subr.mxu0 0.0
      %5324 = vmatpush1.msra.mxu0 0.0
      %5325 = vmatprep.subr.mxu0 0.0
      %5326 = vmatpush1.msra.mxu0 0.0
      %5327 = vmatprep.mubr.f32.mxu0 0.0
      %v5328 = vand.u32 %v4888, 4294901760
      %5329 = vmatmul.mubr.f32.gmra.mrb[0].mxu0 %v5328
      %v5330 = vpop.f32.mrb[0].mxu0
      %v5331 = vadd.f32 %v5240, %v5330
      %v5332 = vpop.f32.mrb[0].mxu0
      %5333 = vmatprep.mubr.f32.mxu0 0.0
      %v5334 = vand.u32 %v4891, 4294901760
      %5335 = vmatmul.mubr.f32.gmra.mrb[0].mxu0 %v5334
      %v5336 = vpop.f32.mrb[0].mxu0
      %v5337 = vadd.f32 %v5248, %v5336
      %v5338 = vpop.f32.mrb[0].mxu0
      %5339 = vdwg.mxu0
      %5340 = vmatprep.subr.mxu0 0.0
      %v5341 = vand.u32 %v4880, 4294901760
      %5342 = vmatpush1.msra.mxu0 %v5341
      %5343 = vmatprep.subr.mxu0 0.0
      %v5344 = vand.u32 %v4881, 4294901760
      %5345 = vmatpush1.msra.mxu0 %v5344
      %5346 = vmatprep.subr.mxu0 0.0
      %v5347 = vand.u32 %v4882, 4294901760
      %5348 = vmatpush1.msra.mxu0 %v5347
      %5349 = vmatprep.subr.mxu0 0.0
      %v5350 = vand.u32 %v4883, 4294901760
      %5351 = vmatpush1.msra.mxu0 %v5350
      %5352 = vmatprep.subr.mxu0 0.0
      %5353 = vmatpush1.msra.mxu0 0.0
      %5354 = vmatprep.subr.mxu0 0.0
      %5355 = vmatpush1.msra.mxu0 0.0
      %5356 = vmatprep.subr.mxu0 0.0
      %5357 = vmatpush1.msra.mxu0 0.0
      %5358 = vmatprep.subr.mxu0 0.0
      %5359 = vmatpush1.msra.mxu0 0.0
      %5360 = vmatprep.subr.mxu0 0.0
      %5361 = vmatpush1.msra.mxu0 0.0
      %5362 = vmatprep.subr.mxu0 0.0
      %5363 = vmatpush1.msra.mxu0 0.0
      %5364 = vmatprep.subr.mxu0 0.0
      %5365 = vmatpush1.msra.mxu0 0.0
      %5366 = vmatprep.subr.mxu0 0.0
      %5367 = vmatpush1.msra.mxu0 0.0
      %5368 = vmatprep.subr.mxu0 0.0
      %5369 = vmatpush1.msra.mxu0 0.0
      %5370 = vmatprep.subr.mxu0 0.0
      %5371 = vmatpush1.msra.mxu0 0.0
      %5372 = vmatprep.subr.mxu0 0.0
      %5373 = vmatpush1.msra.mxu0 0.0
      %5374 = vmatprep.subr.mxu0 0.0
      %5375 = vmatpush1.msra.mxu0 0.0
      %5376 = vmatprep.subr.mxu0 0.0
      %5377 = vmatpush1.msra.mxu0 0.0
      %5378 = vmatprep.subr.mxu0 0.0
      %5379 = vmatpush1.msra.mxu0 0.0
      %5380 = vmatprep.subr.mxu0 0.0
      %5381 = vmatpush1.msra.mxu0 0.0
      %5382 = vmatprep.subr.mxu0 0.0
      %5383 = vmatpush1.msra.mxu0 0.0
      %5384 = vmatprep.subr.mxu0 0.0
      %5385 = vmatpush1.msra.mxu0 0.0
      %5386 = vmatprep.subr.mxu0 0.0
      %5387 = vmatpush1.msra.mxu0 0.0
      %5388 = vmatprep.subr.mxu0 0.0
      %5389 = vmatpush1.msra.mxu0 0.0
      %5390 = vmatprep.subr.mxu0 0.0
      %5391 = vmatpush1.msra.mxu0 0.0
      %5392 = vmatprep.subr.mxu0 0.0
      %5393 = vmatpush1.msra.mxu0 0.0
      %5394 = vmatprep.subr.mxu0 0.0
      %5395 = vmatpush1.msra.mxu0 0.0
      %5396 = vmatprep.subr.mxu0 0.0
      %5397 = vmatpush1.msra.mxu0 0.0
      %5398 = vmatprep.subr.mxu0 0.0
      %5399 = vmatpush1.msra.mxu0 0.0
      %5400 = vmatprep.subr.mxu0 0.0
      %5401 = vmatpush1.msra.mxu0 0.0
      %5402 = vmatprep.subr.mxu0 0.0
      %5403 = vmatpush1.msra.mxu0 0.0
      %5404 = vmatprep.subr.mxu0 0.0
      %5405 = vmatpush1.msra.mxu0 0.0
      %5406 = vmatprep.subr.mxu0 0.0
      %5407 = vmatpush1.msra.mxu0 0.0
      %5408 = vmatprep.mubr.f32.mxu0 0.0
      %v5409 = vand.u32 %v4888, 4294901760
      %5410 = vmatmul.mubr.f32.gmra.mrb[0].mxu0 %v5409
      %v5411 = vpop.f32.mrb[0].mxu0
      %v5412 = vadd.f32 %v5331, %v5411
      %v5413 = vpop.f32.mrb[0].mxu0
      %5414 = vmatprep.mubr.f32.mxu0 0.0
      %v5415 = vand.u32 %v4891, 4294901760
      %5416 = vmatmul.mubr.f32.gmra.mrb[0].mxu0 %v5415
      %v5417 = vpop.f32.mrb[0].mxu0
      %v5418 = vadd.f32 %v5337, %v5417
      %v5419 = vpop.f32.mrb[0].mxu0
      %5420 = vdwg.mxu0
      %s5421 = scalar_lea.vmem %s6, 16
      %v5422 = vld [vmem:[%s5421] sm:$0xff]
      %v5423 = vld [vmem:[%s5421 + $0x8] sm:$0xff]
      %v5425 = vsel %vm4886, %v5422, 0
      %v5428 = vsel %vm4886, %v5423, 0
      %5430 = vmatprep.subr.mxu0 0.0
      %v5431 = vand.u32 %v4880, 4294901760
      %5432 = vmatpush1.msra.mxu0 %v5431
      %5433 = vmatprep.subr.mxu0 0.0
      %v5434 = vand.u32 %v4881, 4294901760
      %5435 = vmatpush1.msra.mxu0 %v5434
      %5436 = vmatprep.subr.mxu0 0.0
      %v5437 = vand.u32 %v4882, 4294901760
      %5438 = vmatpush1.msra.mxu0 %v5437
      %5439 = vmatprep.subr.mxu0 0.0
      %v5440 = vand.u32 %v4883, 4294901760
      %5441 = vmatpush1.msra.mxu0 %v5440
      %5442 = vmatprep.subr.mxu0 0.0
      %5443 = vmatpush1.msra.mxu0 0.0
      %5444 = vmatprep.subr.mxu0 0.0
      %5445 = vmatpush1.msra.mxu0 0.0
      %5446 = vmatprep.subr.mxu0 0.0
      %5447 = vmatpush1.msra.mxu0 0.0
      %5448 = vmatprep.subr.mxu0 0.0
      %5449 = vmatpush1.msra.mxu0 0.0
      %5450 = vmatprep.subr.mxu0 0.0
      %5451 = vmatpush1.msra.mxu0 0.0
      %5452 = vmatprep.subr.mxu0 0.0
      %5453 = vmatpush1.msra.mxu0 0.0
      %5454 = vmatprep.subr.mxu0 0.0
      %5455 = vmatpush1.msra.mxu0 0.0
      %5456 = vmatprep.subr.mxu0 0.0
      %5457 = vmatpush1.msra.mxu0 0.0
      %5458 = vmatprep.subr.mxu0 0.0
      %5459 = vmatpush1.msra.mxu0 0.0
      %5460 = vmatprep.subr.mxu0 0.0
      %5461 = vmatpush1.msra.mxu0 0.0
      %5462 = vmatprep.subr.mxu0 0.0
      %5463 = vmatpush1.msra.mxu0 0.0
      %5464 = vmatprep.subr.mxu0 0.0
      %5465 = vmatpush1.msra.mxu0 0.0
      %5466 = vmatprep.subr.mxu0 0.0
      %5467 = vmatpush1.msra.mxu0 0.0
      %5468 = vmatprep.subr.mxu0 0.0
      %5469 = vmatpush1.msra.mxu0 0.0
      %5470 = vmatprep.subr.mxu0 0.0
      %5471 = vmatpush1.msra.mxu0 0.0
      %5472 = vmatprep.subr.mxu0 0.0
      %5473 = vmatpush1.msra.mxu0 0.0
      %5474 = vmatprep.subr.mxu0 0.0
      %5475 = vmatpush1.msra.mxu0 0.0
      %5476 = vmatprep.subr.mxu0 0.0
      %5477 = vmatpush1.msra.mxu0 0.0
      %5478 = vmatprep.subr.mxu0 0.0
      %5479 = vmatpush1.msra.mxu0 0.0
      %5480 = vmatprep.subr.mxu0 0.0
      %5481 = vmatpush1.msra.mxu0 0.0
      %5482 = vmatprep.subr.mxu0 0.0
      %5483 = vmatpush1.msra.mxu0 0.0
      %5484 = vmatprep.subr.mxu0 0.0
      %5485 = vmatpush1.msra.mxu0 0.0
      %5486 = vmatprep.subr.mxu0 0.0
      %5487 = vmatpush1.msra.mxu0 0.0
      %5488 = vmatprep.subr.mxu0 0.0
      %5489 = vmatpush1.msra.mxu0 0.0
      %5490 = vmatprep.subr.mxu0 0.0
      %5491 = vmatpush1.msra.mxu0 0.0
      %5492 = vmatprep.subr.mxu0 0.0
      %5493 = vmatpush1.msra.mxu0 0.0
      %5494 = vmatprep.subr.mxu0 0.0
      %5495 = vmatpush1.msra.mxu0 0.0
      %5496 = vmatprep.subr.mxu0 0.0
      %5497 = vmatpush1.msra.mxu0 0.0
      %5498 = vmatprep.mubr.f32.mxu0 0.0
      %v5499 = vand.u32 %v5425, 4294901760
      %v5500 = vsub.f32 %v5425, %v5499
      %v5501 = vand.u32 %v5500, 4294901760
      %v5502 = vsub.f32 %v5500, %v5501
      %v5503 = vand.u32 %v5502, 4294901760
      %5504 = vmatmul.mubr.f32.gmra.mrb[0].mxu0 %v5503
      %v5505 = vpop.f32.mrb[0].mxu0
      %v5506 = vadd.f32 0.0, %v5505
      %v5507 = vpop.f32.mrb[0].mxu0
      %5508 = vmatprep.mubr.f32.mxu0 0.0
      %v5509 = vand.u32 %v5428, 4294901760
      %v5510 = vsub.f32 %v5428, %v5509
      %v5511 = vand.u32 %v5510, 4294901760
      %v5512 = vsub.f32 %v5510, %v5511
      %v5513 = vand.u32 %v5512, 4294901760
      %5514 = vmatmul.mubr.f32.gmra.mrb[0].mxu0 %v5513
      %v5515 = vpop.f32.mrb[0].mxu0
      %v5516 = vadd.f32 0.0, %v5515
      %v5517 = vpop.f32.mrb[0].mxu0
      %5518 = vdwg.mxu0
      %5519 = vmatprep.subr.mxu0 0.0
      %v5520 = vand.u32 %v4880, 4294901760
      %v5521 = vsub.f32 %v4880, %v5520
      %v5522 = vand.u32 %v5521, 4294901760
      %v5523 = vsub.f32 %v5521, %v5522
      %v5524 = vand.u32 %v5523, 4294901760
      %5525 = vmatpush1.msra.mxu0 %v5524
      %5526 = vmatprep.subr.mxu0 0.0
      %v5527 = vand.u32 %v4881, 4294901760
      %v5528 = vsub.f32 %v4881, %v5527
      %v5529 = vand.u32 %v5528, 4294901760
      %v5530 = vsub.f32 %v5528, %v5529
      %v5531 = vand.u32 %v5530, 4294901760
      %5532 = vmatpush1.msra.mxu0 %v5531
      %5533 = vmatprep.subr.mxu0 0.0
      %v5534 = vand.u32 %v4882, 4294901760
      %v5535 = vsub.f32 %v4882, %v5534
      %v5536 = vand.u32 %v5535, 4294901760
      %v5537 = vsub.f32 %v5535, %v5536
      %v5538 = vand.u32 %v5537, 4294901760
      %5539 = vmatpush1.msra.mxu0 %v5538
      %5540 = vmatprep.subr.mxu0 0.0
      %v5541 = vand.u32 %v4883, 4294901760
      %v5542 = vsub.f32 %v4883, %v5541
      %v5543 = vand.u32 %v5542, 4294901760
      %v5544 = vsub.f32 %v5542, %v5543
      %v5545 = vand.u32 %v5544, 4294901760
      %5546 = vmatpush1.msra.mxu0 %v5545
      %5547 = vmatprep.subr.mxu0 0.0
      %5548 = vmatpush1.msra.mxu0 0.0
      %5549 = vmatprep.subr.mxu0 0.0
      %5550 = vmatpush1.msra.mxu0 0.0
      %5551 = vmatprep.subr.mxu0 0.0
      %5552 = vmatpush1.msra.mxu0 0.0
      %5553 = vmatprep.subr.mxu0 0.0
      %5554 = vmatpush1.msra.mxu0 0.0
      %5555 = vmatprep.subr.mxu0 0.0
      %5556 = vmatpush1.msra.mxu0 0.0
      %5557 = vmatprep.subr.mxu0 0.0
      %5558 = vmatpush1.msra.mxu0 0.0
      %5559 = vmatprep.subr.mxu0 0.0
      %5560 = vmatpush1.msra.mxu0 0.0
      %5561 = vmatprep.subr.mxu0 0.0
      %5562 = vmatpush1.msra.mxu0 0.0
      %5563 = vmatprep.subr.mxu0 0.0
      %5564 = vmatpush1.msra.mxu0 0.0
      %5565 = vmatprep.subr.mxu0 0.0
      %5566 = vmatpush1.msra.mxu0 0.0
      %5567 = vmatprep.subr.mxu0 0.0
      %5568 = vmatpush1.msra.mxu0 0.0
      %5569 = vmatprep.subr.mxu0 0.0
      %5570 = vmatpush1.msra.mxu0 0.0
      %5571 = vmatprep.subr.mxu0 0.0
      %5572 = vmatpush1.msra.mxu0 0.0
      %5573 = vmatprep.subr.mxu0 0.0
      %5574 = vmatpush1.msra.mxu0 0.0
      %5575 = vmatprep.subr.mxu0 0.0
      %5576 = vmatpush1.msra.mxu0 0.0
      %5577 = vmatprep.subr.mxu0 0.0
      %5578 = vmatpush1.msra.mxu0 0.0
      %5579 = vmatprep.subr.mxu0 0.0
      %5580 = vmatpush1.msra.mxu0 0.0
      %5581 = vmatprep.subr.mxu0 0.0
      %5582 = vmatpush1.msra.mxu0 0.0
      %5583 = vmatprep.subr.mxu0 0.0
      %5584 = vmatpush1.msra.mxu0 0.0
      %5585 = vmatprep.subr.mxu0 0.0
      %5586 = vmatpush1.msra.mxu0 0.0
      %5587 = vmatprep.subr.mxu0 0.0
      %5588 = vmatpush1.msra.mxu0 0.0
      %5589 = vmatprep.subr.mxu0 0.0
      %5590 = vmatpush1.msra.mxu0 0.0
      %5591 = vmatprep.subr.mxu0 0.0
      %5592 = vmatpush1.msra.mxu0 0.0
      %5593 = vmatprep.subr.mxu0 0.0
      %5594 = vmatpush1.msra.mxu0 0.0
      %5595 = vmatprep.subr.mxu0 0.0
      %5596 = vmatpush1.msra.mxu0 0.0
      %5597 = vmatprep.subr.mxu0 0.0
      %5598 = vmatpush1.msra.mxu0 0.0
      %5599 = vmatprep.subr.mxu0 0.0
      %5600 = vmatpush1.msra.mxu0 0.0
      %5601 = vmatprep.subr.mxu0 0.0
      %5602 = vmatpush1.msra.mxu0 0.0
      %5603 = vmatprep.mubr.f32.mxu0 0.0
      %v5604 = vand.u32 %v5425, 4294901760
      %5605 = vmatmul.mubr.f32.gmra.mrb[0].mxu0 %v5604
      %v5606 = vpop.f32.mrb[0].mxu0
      %v5607 = vadd.f32 %v5506, %v5606
      %v5608 = vpop.f32.mrb[0].mxu0
      %5609 = vmatprep.mubr.f32.mxu0 0.0
      %v5610 = vand.u32 %v5428, 4294901760
      %5611 = vmatmul.mubr.f32.gmra.mrb[0].mxu0 %v5610
      %v5612 = vpop.f32.mrb[0].mxu0
      %v5613 = vadd.f32 %v5516, %v5612
      %v5614 = vpop.f32.mrb[0].mxu0
      %5615 = vdwg.mxu0
      %5616 = vmatprep.subr.mxu0 0.0
      %v5617 = vand.u32 %v4880, 4294901760
      %v5618 = vsub.f32 %v4880, %v5617
      %5619 = vmatpush1.msra.mxu0 %v5618
      %5620 = vmatprep.subr.mxu0 0.0
      %v5621 = vand.u32 %v4881, 4294901760
      %v5622 = vsub.f32 %v4881, %v5621
      %5623 = vmatpush1.msra.mxu0 %v5622
      %5624 = vmatprep.subr.mxu0 0.0
      %v5625 = vand.u32 %v4882, 4294901760
      %v5626 = vsub.f32 %v4882, %v5625
      %5627 = vmatpush1.msra.mxu0 %v5626
      %5628 = vmatprep.subr.mxu0 0.0
      %v5629 = vand.u32 %v4883, 4294901760
      %v5630 = vsub.f32 %v4883, %v5629
      %5631 = vmatpush1.msra.mxu0 %v5630
      %5632 = vmatprep.subr.mxu0 0.0
      %5633 = vmatpush1.msra.mxu0 0.0
      %5634 = vmatprep.subr.mxu0 0.0
      %5635 = vmatpush1.msra.mxu0 0.0
      %5636 = vmatprep.subr.mxu0 0.0
      %5637 = vmatpush1.msra.mxu0 0.0
      %5638 = vmatprep.subr.mxu0 0.0
      %5639 = vmatpush1.msra.mxu0 0.0
      %5640 = vmatprep.subr.mxu0 0.0
      %5641 = vmatpush1.msra.mxu0 0.0
      %5642 = vmatprep.subr.mxu0 0.0
      %5643 = vmatpush1.msra.mxu0 0.0
      %5644 = vmatprep.subr.mxu0 0.0
      %5645 = vmatpush1.msra.mxu0 0.0
      %5646 = vmatprep.subr.mxu0 0.0
      %5647 = vmatpush1.msra.mxu0 0.0
      %5648 = vmatprep.subr.mxu0 0.0
      %5649 = vmatpush1.msra.mxu0 0.0
      %5650 = vmatprep.subr.mxu0 0.0
      %5651 = vmatpush1.msra.mxu0 0.0
      %5652 = vmatprep.subr.mxu0 0.0
      %5653 = vmatpush1.msra.mxu0 0.0
      %5654 = vmatprep.subr.mxu0 0.0
      %5655 = vmatpush1.msra.mxu0 0.0
      %5656 = vmatprep.subr.mxu0 0.0
      %5657 = vmatpush1.msra.mxu0 0.0
      %5658 = vmatprep.subr.mxu0 0.0
      %5659 = vmatpush1.msra.mxu0 0.0
      %5660 = vmatprep.subr.mxu0 0.0
      %5661 = vmatpush1.msra.mxu0 0.0
      %5662 = vmatprep.subr.mxu0 0.0
      %5663 = vmatpush1.msra.mxu0 0.0
      %5664 = vmatprep.subr.mxu0 0.0
      %5665 = vmatpush1.msra.mxu0 0.0
      %5666 = vmatprep.subr.mxu0 0.0
      %5667 = vmatpush1.msra.mxu0 0.0
      %5668 = vmatprep.subr.mxu0 0.0
      %5669 = vmatpush1.msra.mxu0 0.0
      %5670 = vmatprep.subr.mxu0 0.0
      %5671 = vmatpush1.msra.mxu0 0.0
      %5672 = vmatprep.subr.mxu0 0.0
      %5673 = vmatpush1.msra.mxu0 0.0
      %5674 = vmatprep.subr.mxu0 0.0
      %5675 = vmatpush1.msra.mxu0 0.0
      %5676 = vmatprep.subr.mxu0 0.0
      %5677 = vmatpush1.msra.mxu0 0.0
      %5678 = vmatprep.subr.mxu0 0.0
      %5679 = vmatpush1.msra.mxu0 0.0
      %5680 = vmatprep.subr.mxu0 0.0
      %5681 = vmatpush1.msra.mxu0 0.0
      %5682 = vmatprep.subr.mxu0 0.0
      %5683 = vmatpush1.msra.mxu0 0.0
      %5684 = vmatprep.subr.mxu0 0.0
      %5685 = vmatpush1.msra.mxu0 0.0
      %5686 = vmatprep.subr.mxu0 0.0
      %5687 = vmatpush1.msra.mxu0 0.0
      %5688 = vmatprep.mubr.f32.mxu0 0.0
      %v5689 = vand.u32 %v5425, 4294901760
      %v5690 = vsub.f32 %v5425, %v5689
      %5691 = vmatmul.mubr.f32.gmra.mrb[0].mxu0 %v5690
      %v5692 = vpop.f32.mrb[0].mxu0
      %v5693 = vadd.f32 %v5607, %v5692
      %v5694 = vpop.f32.mrb[0].mxu0
      %5695 = vmatprep.mubr.f32.mxu0 0.0
      %v5696 = vand.u32 %v5428, 4294901760
      %v5697 = vsub.f32 %v5428, %v5696
      %5698 = vmatmul.mubr.f32.gmra.mrb[0].mxu0 %v5697
      %v5699 = vpop.f32.mrb[0].mxu0
      %v5700 = vadd.f32 %v5613, %v5699
      %v5701 = vpop.f32.mrb[0].mxu0
      %5702 = vdwg.mxu0
      %5703 = vmatprep.subr.mxu0 0.0
      %v5704 = vand.u32 %v4880, 4294901760
      %5705 = vmatpush1.msra.mxu0 %v5704
      %5706 = vmatprep.subr.mxu0 0.0
      %v5707 = vand.u32 %v4881, 4294901760
      %5708 = vmatpush1.msra.mxu0 %v5707
      %5709 = vmatprep.subr.mxu0 0.0
      %v5710 = vand.u32 %v4882, 4294901760
      %5711 = vmatpush1.msra.mxu0 %v5710
      %5712 = vmatprep.subr.mxu0 0.0
      %v5713 = vand.u32 %v4883, 4294901760
      %5714 = vmatpush1.msra.mxu0 %v5713
      %5715 = vmatprep.subr.mxu0 0.0
      %5716 = vmatpush1.msra.mxu0 0.0
      %5717 = vmatprep.subr.mxu0 0.0
      %5718 = vmatpush1.msra.mxu0 0.0
      %5719 = vmatprep.subr.mxu0 0.0
      %5720 = vmatpush1.msra.mxu0 0.0
      %5721 = vmatprep.subr.mxu0 0.0
      %5722 = vmatpush1.msra.mxu0 0.0
      %5723 = vmatprep.subr.mxu0 0.0
      %5724 = vmatpush1.msra.mxu0 0.0
      %5725 = vmatprep.subr.mxu0 0.0
      %5726 = vmatpush1.msra.mxu0 0.0
      %5727 = vmatprep.subr.mxu0 0.0
      %5728 = vmatpush1.msra.mxu0 0.0
      %5729 = vmatprep.subr.mxu0 0.0
      %5730 = vmatpush1.msra.mxu0 0.0
      %5731 = vmatprep.subr.mxu0 0.0
      %5732 = vmatpush1.msra.mxu0 0.0
      %5733 = vmatprep.subr.mxu0 0.0
      %5734 = vmatpush1.msra.mxu0 0.0
      %5735 = vmatprep.subr.mxu0 0.0
      %5736 = vmatpush1.msra.mxu0 0.0
      %5737 = vmatprep.subr.mxu0 0.0
      %5738 = vmatpush1.msra.mxu0 0.0
      %5739 = vmatprep.subr.mxu0 0.0
      %5740 = vmatpush1.msra.mxu0 0.0
      %5741 = vmatprep.subr.mxu0 0.0
      %5742 = vmatpush1.msra.mxu0 0.0
      %5743 = vmatprep.subr.mxu0 0.0
      %5744 = vmatpush1.msra.mxu0 0.0
      %5745 = vmatprep.subr.mxu0 0.0
      %5746 = vmatpush1.msra.mxu0 0.0
      %5747 = vmatprep.subr.mxu0 0.0
      %5748 = vmatpush1.msra.mxu0 0.0
      %5749 = vmatprep.subr.mxu0 0.0
      %5750 = vmatpush1.msra.mxu0 0.0
      %5751 = vmatprep.subr.mxu0 0.0
      %5752 = vmatpush1.msra.mxu0 0.0
      %5753 = vmatprep.subr.mxu0 0.0
      %5754 = vmatpush1.msra.mxu0 0.0
      %5755 = vmatprep.subr.mxu0 0.0
      %5756 = vmatpush1.msra.mxu0 0.0
      %5757 = vmatprep.subr.mxu0 0.0
      %5758 = vmatpush1.msra.mxu0 0.0
      %5759 = vmatprep.subr.mxu0 0.0
      %5760 = vmatpush1.msra.mxu0 0.0
      %5761 = vmatprep.subr.mxu0 0.0
      %5762 = vmatpush1.msra.mxu0 0.0
      %5763 = vmatprep.subr.mxu0 0.0
      %5764 = vmatpush1.msra.mxu0 0.0
      %5765 = vmatprep.subr.mxu0 0.0
      %5766 = vmatpush1.msra.mxu0 0.0
      %5767 = vmatprep.subr.mxu0 0.0
      %5768 = vmatpush1.msra.mxu0 0.0
      %5769 = vmatprep.subr.mxu0 0.0
      %5770 = vmatpush1.msra.mxu0 0.0
      %5771 = vmatprep.mubr.f32.mxu0 0.0
      %v5772 = vand.u32 %v5425, 4294901760
      %v5773 = vsub.f32 %v5425, %v5772
      %v5774 = vand.u32 %v5773, 4294901760
      %5775 = vmatmul.mubr.f32.gmra.mrb[0].mxu0 %v5774
      %v5776 = vpop.f32.mrb[0].mxu0
      %v5777 = vadd.f32 %v5693, %v5776
      %v5778 = vpop.f32.mrb[0].mxu0
      %5779 = vmatprep.mubr.f32.mxu0 0.0
      %v5780 = vand.u32 %v5428, 4294901760
      %v5781 = vsub.f32 %v5428, %v5780
      %v5782 = vand.u32 %v5781, 4294901760
      %5783 = vmatmul.mubr.f32.gmra.mrb[0].mxu0 %v5782
      %v5784 = vpop.f32.mrb[0].mxu0
      %v5785 = vadd.f32 %v5700, %v5784
      %v5786 = vpop.f32.mrb[0].mxu0
      %5787 = vdwg.mxu0
      %5788 = vmatprep.subr.mxu0 0.0
      %v5789 = vand.u32 %v4880, 4294901760
      %v5790 = vsub.f32 %v4880, %v5789
      %v5791 = vand.u32 %v5790, 4294901760
      %5792 = vmatpush1.msra.mxu0 %v5791
      %5793 = vmatprep.subr.mxu0 0.0
      %v5794 = vand.u32 %v4881, 4294901760
      %v5795 = vsub.f32 %v4881, %v5794
      %v5796 = vand.u32 %v5795, 4294901760
      %5797 = vmatpush1.msra.mxu0 %v5796
      %5798 = vmatprep.subr.mxu0 0.0
      %v5799 = vand.u32 %v4882, 4294901760
      %v5800 = vsub.f32 %v4882, %v5799
      %v5801 = vand.u32 %v5800, 4294901760
      %5802 = vmatpush1.msra.mxu0 %v5801
      %5803 = vmatprep.subr.mxu0 0.0
      %v5804 = vand.u32 %v4883, 4294901760
      %v5805 = vsub.f32 %v4883, %v5804
      %v5806 = vand.u32 %v5805, 4294901760
      %5807 = vmatpush1.msra.mxu0 %v5806
      %5808 = vmatprep.subr.mxu0 0.0
      %5809 = vmatpush1.msra.mxu0 0.0
      %5810 = vmatprep.subr.mxu0 0.0
      %5811 = vmatpush1.msra.mxu0 0.0
      %5812 = vmatprep.subr.mxu0 0.0
      %5813 = vmatpush1.msra.mxu0 0.0
      %5814 = vmatprep.subr.mxu0 0.0
      %5815 = vmatpush1.msra.mxu0 0.0
      %5816 = vmatprep.subr.mxu0 0.0
      %5817 = vmatpush1.msra.mxu0 0.0
      %5818 = vmatprep.subr.mxu0 0.0
      %5819 = vmatpush1.msra.mxu0 0.0
      %5820 = vmatprep.subr.mxu0 0.0
      %5821 = vmatpush1.msra.mxu0 0.0
      %5822 = vmatprep.subr.mxu0 0.0
      %5823 = vmatpush1.msra.mxu0 0.0
      %5824 = vmatprep.subr.mxu0 0.0
      %5825 = vmatpush1.msra.mxu0 0.0
      %5826 = vmatprep.subr.mxu0 0.0
      %5827 = vmatpush1.msra.mxu0 0.0
      %5828 = vmatprep.subr.mxu0 0.0
      %5829 = vmatpush1.msra.mxu0 0.0
      %5830 = vmatprep.subr.mxu0 0.0
      %5831 = vmatpush1.msra.mxu0 0.0
      %5832 = vmatprep.subr.mxu0 0.0
      %5833 = vmatpush1.msra.mxu0 0.0
      %5834 = vmatprep.subr.mxu0 0.0
      %5835 = vmatpush1.msra.mxu0 0.0
      %5836 = vmatprep.subr.mxu0 0.0
      %5837 = vmatpush1.msra.mxu0 0.0
      %5838 = vmatprep.subr.mxu0 0.0
      %5839 = vmatpush1.msra.mxu0 0.0
      %5840 = vmatprep.subr.mxu0 0.0
      %5841 = vmatpush1.msra.mxu0 0.0
      %5842 = vmatprep.subr.mxu0 0.0
      %5843 = vmatpush1.msra.mxu0 0.0
      %5844 = vmatprep.subr.mxu0 0.0
      %5845 = vmatpush1.msra.mxu0 0.0
      %5846 = vmatprep.subr.mxu0 0.0
      %5847 = vmatpush1.msra.mxu0 0.0
      %5848 = vmatprep.subr.mxu0 0.0
      %5849 = vmatpush1.msra.mxu0 0.0
      %5850 = vmatprep.subr.mxu0 0.0
      %5851 = vmatpush1.msra.mxu0 0.0
      %5852 = vmatprep.subr.mxu0 0.0
      %5853 = vmatpush1.msra.mxu0 0.0
      %5854 = vmatprep.subr.mxu0 0.0
      %5855 = vmatpush1.msra.mxu0 0.0
      %5856 = vmatprep.subr.mxu0 0.0
      %5857 = vmatpush1.msra.mxu0 0.0
      %5858 = vmatprep.subr.mxu0 0.0
      %5859 = vmatpush1.msra.mxu0 0.0
      %5860 = vmatprep.subr.mxu0 0.0
      %5861 = vmatpush1.msra.mxu0 0.0
      %5862 = vmatprep.subr.mxu0 0.0
      %5863 = vmatpush1.msra.mxu0 0.0
      %5864 = vmatprep.mubr.f32.mxu0 0.0
      %v5865 = vand.u32 %v5425, 4294901760
      %5866 = vmatmul.mubr.f32.gmra.mrb[0].mxu0 %v5865
      %v5867 = vpop.f32.mrb[0].mxu0
      %v5868 = vadd.f32 %v5777, %v5867
      %v5869 = vpop.f32.mrb[0].mxu0
      %5870 = vmatprep.mubr.f32.mxu0 0.0
      %v5871 = vand.u32 %v5428, 4294901760
      %5872 = vmatmul.mubr.f32.gmra.mrb[0].mxu0 %v5871
      %v5873 = vpop.f32.mrb[0].mxu0
      %v5874 = vadd.f32 %v5785, %v5873
      %v5875 = vpop.f32.mrb[0].mxu0
      %5876 = vdwg.mxu0
      %5877 = vmatprep.subr.mxu0 0.0
      %v5878 = vand.u32 %v4880, 4294901760
      %5879 = vmatpush1.msra.mxu0 %v5878
      %5880 = vmatprep.subr.mxu0 0.0
      %v5881 = vand.u32 %v4881, 4294901760
      %5882 = vmatpush1.msra.mxu0 %v5881
      %5883 = vmatprep.subr.mxu0 0.0
      %v5884 = vand.u32 %v4882, 4294901760
      %5885 = vmatpush1.msra.mxu0 %v5884
      %5886 = vmatprep.subr.mxu0 0.0
      %v5887 = vand.u32 %v4883, 4294901760
      %5888 = vmatpush1.msra.mxu0 %v5887
      %5889 = vmatprep.subr.mxu0 0.0
      %5890 = vmatpush1.msra.mxu0 0.0
      %5891 = vmatprep.subr.mxu0 0.0
      %5892 = vmatpush1.msra.mxu0 0.0
      %5893 = vmatprep.subr.mxu0 0.0
      %5894 = vmatpush1.msra.mxu0 0.0
      %5895 = vmatprep.subr.mxu0 0.0
      %5896 = vmatpush1.msra.mxu0 0.0
      %5897 = vmatprep.subr.mxu0 0.0
      %5898 = vmatpush1.msra.mxu0 0.0
      %5899 = vmatprep.subr.mxu0 0.0
      %5900 = vmatpush1.msra.mxu0 0.0
      %5901 = vmatprep.subr.mxu0 0.0
      %5902 = vmatpush1.msra.mxu0 0.0
      %5903 = vmatprep.subr.mxu0 0.0
      %5904 = vmatpush1.msra.mxu0 0.0
      %5905 = vmatprep.subr.mxu0 0.0
      %5906 = vmatpush1.msra.mxu0 0.0
      %5907 = vmatprep.subr.mxu0 0.0
      %5908 = vmatpush1.msra.mxu0 0.0
      %5909 = vmatprep.subr.mxu0 0.0
      %5910 = vmatpush1.msra.mxu0 0.0
      %5911 = vmatprep.subr.mxu0 0.0
      %5912 = vmatpush1.msra.mxu0 0.0
      %5913 = vmatprep.subr.mxu0 0.0
      %5914 = vmatpush1.msra.mxu0 0.0
      %5915 = vmatprep.subr.mxu0 0.0
      %5916 = vmatpush1.msra.mxu0 0.0
      %5917 = vmatprep.subr.mxu0 0.0
      %5918 = vmatpush1.msra.mxu0 0.0
      %5919 = vmatprep.subr.mxu0 0.0
      %5920 = vmatpush1.msra.mxu0 0.0
      %5921 = vmatprep.subr.mxu0 0.0
      %5922 = vmatpush1.msra.mxu0 0.0
      %5923 = vmatprep.subr.mxu0 0.0
      %5924 = vmatpush1.msra.mxu0 0.0
      %5925 = vmatprep.subr.mxu0 0.0
      %5926 = vmatpush1.msra.mxu0 0.0
      %5927 = vmatprep.subr.mxu0 0.0
      %5928 = vmatpush1.msra.mxu0 0.0
      %5929 = vmatprep.subr.mxu0 0.0
      %5930 = vmatpush1.msra.mxu0 0.0
      %5931 = vmatprep.subr.mxu0 0.0
      %5932 = vmatpush1.msra.mxu0 0.0
      %5933 = vmatprep.subr.mxu0 0.0
      %5934 = vmatpush1.msra.mxu0 0.0
      %5935 = vmatprep.subr.mxu0 0.0
      %5936 = vmatpush1.msra.mxu0 0.0
      %5937 = vmatprep.subr.mxu0 0.0
      %5938 = vmatpush1.msra.mxu0 0.0
      %5939 = vmatprep.subr.mxu0 0.0
      %5940 = vmatpush1.msra.mxu0 0.0
      %5941 = vmatprep.subr.mxu0 0.0
      %5942 = vmatpush1.msra.mxu0 0.0
      %5943 = vmatprep.subr.mxu0 0.0
      %5944 = vmatpush1.msra.mxu0 0.0
      %5945 = vmatprep.mubr.f32.mxu0 0.0
      %v5946 = vand.u32 %v5425, 4294901760
      %5947 = vmatmul.mubr.f32.gmra.mrb[0].mxu0 %v5946
      %v5948 = vpop.f32.mrb[0].mxu0
      %v5949 = vadd.f32 %v5868, %v5948
      %v5950 = vpop.f32.mrb[0].mxu0
      %5951 = vmatprep.mubr.f32.mxu0 0.0
      %v5952 = vand.u32 %v5428, 4294901760
      %5953 = vmatmul.mubr.f32.gmra.mrb[0].mxu0 %v5952
      %v5954 = vpop.f32.mrb[0].mxu0
      %v5955 = vadd.f32 %v5874, %v5954
      %v5956 = vpop.f32.mrb[0].mxu0
      %5957 = vdwg.mxu0
      %v5958 = vmax.f32 %v5412, %v5949
      %v5959 = vmax.f32 %v5418, %v5955
      %vm5960 = vcmask 588800
      %5961 = vst.msk [vmem:[#allocation3] sm:$0xff] %vm5960, 1.0
      %5962 = vst.msk [vmem:[#allocation3 + $0x8] sm:$0xff] %vm5960, 1.0
      %vm5963 = vcmask 582656
      %5964 = vst.msk [vmem:[#allocation3 + $0x10] sm:$0x3] %vm5963, 1.0
      %vm5965 = vcmp.gt.f32.partialorder %v5958, 0.0
      %vm5966 = vcmp.gt.f32.partialorder %v5959, 0.0
      %vm5967 = vcmp.lt.f32.partialorder %v5958, 0.0
      %vm5968 = vcmp.lt.f32.partialorder %v5959, 0.0
      %v5969 = vsel %vm5967, -1.0, 0.0
      %v5970 = vsel %vm5968, -1.0, 0.0
      %v5971 = vsel %vm5965, 1.0, %v5969
      %v5972 = vsel %vm5966, 1.0, %v5970
      %5975 = vrot.lane.b32.xlu0 %v5971, 4
      %v5976 = vpop.permute.xlu0 %5975
      %5977 = vrot.lane.b32.xlu0 %v5972, 4
      %v5978 = vpop.permute.xlu0 %5977
      %vm5981 = vcmask 556064
      %5982 = vst.msk [vmem:[#allocation3 + $0x1] sm:$0xff] %vm5981, %v5976
      %5983 = vst.msk [vmem:[#allocation3 + $0x9] sm:$0xff] %vm5981, %v5978
      %v5984 = vld [vmem:[#allocation3] sm:$0xff]
      %v5985 = vld [vmem:[#allocation3 + $0x8] sm:$0xff]
      %v5986 = vld [vmem:[%s2] sm:$0xff]
      %v5987 = vld [vmem:[%s2 + $0x8] sm:$0xff]
      %v5988 = vld [vmem:[%s2 + $0x10] sm:$0xff]
      %v5989 = vld [vmem:[%s2 + $0x18] sm:$0xff]
      %v5990 = vld [vmem:[%s2 + $0x20] sm:$0xff]
      %v5991 = vld [vmem:[%s2 + $0x28] sm:$0xff]
      %v5992 = vld [vmem:[%s2 + $0x30] sm:$0xff]
      %v5993 = vld [vmem:[%s2 + $0x38] sm:$0xff]
      %v5994 = vld [vmem:[%s2 + $0x40] sm:$0xff]
      %s5995 = scalar_lea.vmem %s2, 72
      %v5996 = vld [vmem:[%s5995] sm:$0xff]
      %v5997 = vld [vmem:[%s5995 + $0x8] sm:$0xff]
      %v5998 = vld [vmem:[%s5995 + $0x10] sm:$0xff]
      %v5999 = vld [vmem:[%s5995 + $0x18] sm:$0xff]
      %v6000 = vld [vmem:[%s5995 + $0x20] sm:$0xff]
      %v6001 = vld [vmem:[%s5995 + $0x28] sm:$0xff]
      %v6002 = vld [vmem:[%s5995 + $0x30] sm:$0xff]
      %v6003 = vld [vmem:[%s5995 + $0x38] sm:$0xff]
      %v6004 = vld [vmem:[%s5995 + $0x40] sm:$0xff]
      %v6005 = vld [vmem:[#allocation3 + $0x1] sm:$0xff]
      %v6006 = vld [vmem:[#allocation3 + $0x9] sm:$0xff]
      %s6007 = scalar_lea.vmem %s2, 144
      %v6008 = vld [vmem:[%s6007] sm:$0xff]
      %v6009 = vld [vmem:[%s6007 + $0x8] sm:$0xff]
      %v6010 = vld [vmem:[%s6007 + $0x10] sm:$0xff]
      %v6011 = vld [vmem:[%s6007 + $0x18] sm:$0xff]
      %v6012 = vld [vmem:[%s6007 + $0x20] sm:$0xff]
      %v6013 = vld [vmem:[%s6007 + $0x28] sm:$0xff]
      %v6014 = vld [vmem:[%s6007 + $0x30] sm:$0xff]
      %v6015 = vld [vmem:[%s6007 + $0x38] sm:$0xff]
      %v6016 = vld [vmem:[%s6007 + $0x40] sm:$0xff]
      %v6018 = vsel %vm5960, %v6005, 0
      %v6021 = vsel %vm5960, %v6006, 0
      %6023 = vmatprep.subr.mxu0 0.0
      %6024 = vmatpush1.msra.mxu0 %v6008
      %6025 = vmatprep.subr.mxu0 0.0
      %6026 = vmatpush1.msra.mxu0 %v6009
      %6027 = vmatprep.subr.mxu0 0.0
      %6028 = vmatpush1.msra.mxu0 %v6010
      %6029 = vmatprep.subr.mxu0 0.0
      %6030 = vmatpush1.msra.mxu0 %v6011
      %6031 = vmatprep.subr.mxu0 0.0
      %6032 = vmatpush1.msra.mxu0 %v6012
      %6033 = vmatprep.subr.mxu0 0.0
      %6034 = vmatpush1.msra.mxu0 %v6013
      %6035 = vmatprep.subr.mxu0 0.0
      %6036 = vmatpush1.msra.mxu0 %v6014
      %6037 = vmatprep.subr.mxu0 0.0
      %6038 = vmatpush1.msra.mxu0 %v6015
      %6039 = vmatprep.subr.mxu0 0.0
      %6040 = vmatpush1.msra.mxu0 %v6016
      %6041 = vmatprep.subr.mxu0 0.0
      %6042 = vmatpush1.msra.mxu0 0.0
      %6043 = vmatprep.subr.mxu0 0.0
      %6044 = vmatpush1.msra.mxu0 0.0
      %6045 = vmatprep.subr.mxu0 0.0
      %6046 = vmatpush1.msra.mxu0 0.0
      %6047 = vmatprep.subr.mxu0 0.0
      %6048 = vmatpush1.msra.mxu0 0.0
      %6049 = vmatprep.subr.mxu0 0.0
      %6050 = vmatpush1.msra.mxu0 0.0
      %6051 = vmatprep.subr.mxu0 0.0
      %6052 = vmatpush1.msra.mxu0 0.0
      %6053 = vmatprep.subr.mxu0 0.0
      %6054 = vmatpush1.msra.mxu0 0.0
      %6055 = vmatprep.subr.mxu0 0.0
      %6056 = vmatpush1.msra.mxu0 0.0
      %6057 = vmatprep.subr.mxu0 0.0
      %6058 = vmatpush1.msra.mxu0 0.0
      %6059 = vmatprep.subr.mxu0 0.0
      %6060 = vmatpush1.msra.mxu0 0.0
      %6061 = vmatprep.subr.mxu0 0.0
      %6062 = vmatpush1.msra.mxu0 0.0
      %6063 = vmatprep.subr.mxu0 0.0
      %6064 = vmatpush1.msra.mxu0 0.0
      %6065 = vmatprep.subr.mxu0 0.0
      %6066 = vmatpush1.msra.mxu0 0.0
      %6067 = vmatprep.subr.mxu0 0.0
      %6068 = vmatpush1.msra.mxu0 0.0
      %6069 = vmatprep.subr.mxu0 0.0
      %6070 = vmatpush1.msra.mxu0 0.0
      %6071 = vmatprep.subr.mxu0 0.0
      %6072 = vmatpush1.msra.mxu0 0.0
      %6073 = vmatprep.subr.mxu0 0.0
      %6074 = vmatpush1.msra.mxu0 0.0
      %6075 = vmatprep.subr.mxu0 0.0
      %6076 = vmatpush1.msra.mxu0 0.0
      %6077 = vmatprep.subr.mxu0 0.0
      %6078 = vmatpush1.msra.mxu0 0.0
      %6079 = vmatprep.subr.mxu0 0.0
      %6080 = vmatpush1.msra.mxu0 0.0
      %6081 = vmatprep.subr.mxu0 0.0
      %6082 = vmatpush1.msra.mxu0 0.0
      %6083 = vmatprep.subr.mxu0 0.0
      %6084 = vmatpush1.msra.mxu0 0.0
      %6085 = vmatprep.subr.mxu0 0.0
      %6086 = vmatpush1.msra.mxu0 0.0
      %6087 = vmatprep.mubr.f32.mxu0 0.0
      %6088 = vmatmul.mubr.f32.gmra.mrb[0].mxu0 %v6018
      %v6089 = vpop.f32.mrb[0].mxu0
      %v6090 = vadd.f32 0.0, %v6089
      %v6091 = vpop.f32.mrb[0].mxu0
      %6092 = vmatprep.mubr.f32.mxu0 0.0
      %6093 = vmatmul.mubr.f32.gmra.mrb[0].mxu0 %v6021
      %v6094 = vpop.f32.mrb[0].mxu0
      %v6095 = vadd.f32 0.0, %v6094
      %v6096 = vpop.f32.mrb[0].mxu0
      %6097 = vdwg.mxu0
      %s6098 = scalar_lea.vmem %s2, 216
      %v6099 = vld [vmem:[%s6098] sm:$0xff]
      %v6100 = vld [vmem:[%s6098 + $0x8] sm:$0xff]
      %v6101 = vld [vmem:[%s6098 + $0x10] sm:$0xff]
      %v6102 = vld [vmem:[%s6098 + $0x18] sm:$0xff]
      %v6103 = vld [vmem:[%s6098 + $0x20] sm:$0xff]
      %v6104 = vld [vmem:[%s6098 + $0x28] sm:$0xff]
      %v6105 = vld [vmem:[%s6098 + $0x30] sm:$0xff]
      %v6106 = vld [vmem:[%s6098 + $0x38] sm:$0xff]
      %v6107 = vld [vmem:[%s6098 + $0x40] sm:$0xff]
      %6108 = vmatprep.subr.mxu0 0.0
      %6109 = vmatpush1.msra.mxu0 %v6099
      %6110 = vmatprep.subr.mxu0 0.0
      %6111 = vmatpush1.msra.mxu0 %v6100
      %6112 = vmatprep.subr.mxu0 0.0
      %6113 = vmatpush1.msra.mxu0 %v6101
      %6114 = vmatprep.subr.mxu0 0.0
      %6115 = vmatpush1.msra.mxu0 %v6102
      %6116 = vmatprep.subr.mxu0 0.0
      %6117 = vmatpush1.msra.mxu0 %v6103
      %6118 = vmatprep.subr.mxu0 0.0
      %6119 = vmatpush1.msra.mxu0 %v6104
      %6120 = vmatprep.subr.mxu0 0.0
      %6121 = vmatpush1.msra.mxu0 %v6105
      %6122 = vmatprep.subr.mxu0 0.0
      %6123 = vmatpush1.msra.mxu0 %v6106
      %6124 = vmatprep.subr.mxu0 0.0
      %6125 = vmatpush1.msra.mxu0 %v6107
      %6126 = vmatprep.subr.mxu0 0.0
      %6127 = vmatpush1.msra.mxu0 0.0
      %6128 = vmatprep.subr.mxu0 0.0
      %6129 = vmatpush1.msra.mxu0 0.0
      %6130 = vmatprep.subr.mxu0 0.0
      %6131 = vmatpush1.msra.mxu0 0.0
      %6132 = vmatprep.subr.mxu0 0.0
      %6133 = vmatpush1.msra.mxu0 0.0
      %6134 = vmatprep.subr.mxu0 0.0
      %6135 = vmatpush1.msra.mxu0 0.0
      %6136 = vmatprep.subr.mxu0 0.0
      %6137 = vmatpush1.msra.mxu0 0.0
      %6138 = vmatprep.subr.mxu0 0.0
      %6139 = vmatpush1.msra.mxu0 0.0
      %6140 = vmatprep.subr.mxu0 0.0
      %6141 = vmatpush1.msra.mxu0 0.0
      %6142 = vmatprep.subr.mxu0 0.0
      %6143 = vmatpush1.msra.mxu0 0.0
      %6144 = vmatprep.subr.mxu0 0.0
      %6145 = vmatpush1.msra.mxu0 0.0
      %6146 = vmatprep.subr.mxu0 0.0
      %6147 = vmatpush1.msra.mxu0 0.0
      %6148 = vmatprep.subr.mxu0 0.0
      %6149 = vmatpush1.msra.mxu0 0.0
      %6150 = vmatprep.subr.mxu0 0.0
      %6151 = vmatpush1.msra.mxu0 0.0
      %6152 = vmatprep.subr.mxu0 0.0
      %6153 = vmatpush1.msra.mxu0 0.0
      %6154 = vmatprep.subr.mxu0 0.0
      %6155 = vmatpush1.msra.mxu0 0.0
      %6156 = vmatprep.subr.mxu0 0.0
      %6157 = vmatpush1.msra.mxu0 0.0
      %6158 = vmatprep.subr.mxu0 0.0
      %6159 = vmatpush1.msra.mxu0 0.0
      %6160 = vmatprep.subr.mxu0 0.0
      %6161 = vmatpush1.msra.mxu0 0.0
      %6162 = vmatprep.subr.mxu0 0.0
      %6163 = vmatpush1.msra.mxu0 0.0
      %6164 = vmatprep.subr.mxu0 0.0
      %6165 = vmatpush1.msra.mxu0 0.0
      %6166 = vmatprep.subr.mxu0 0.0
      %6167 = vmatpush1.msra.mxu0 0.0
      %6168 = vmatprep.subr.mxu0 0.0
      %6169 = vmatpush1.msra.mxu0 0.0
      %6170 = vmatprep.subr.mxu0 0.0
      %6171 = vmatpush1.msra.mxu0 0.0
      %6172 = vmatprep.mubr.f32.mxu0 0.0
      %6173 = vmatmul.mubr.f32.gmra.mrb[0].mxu0 %v6018
      %v6174 = vpop.f32.mrb[0].mxu0
      %v6175 = vadd.f32 0.0, %v6174
      %v6176 = vpop.f32.mrb[0].mxu0
      %6177 = vmatprep.mubr.f32.mxu0 0.0
      %6178 = vmatmul.mubr.f32.gmra.mrb[0].mxu0 %v6021
      %v6179 = vpop.f32.mrb[0].mxu0
      %v6180 = vadd.f32 0.0, %v6179
      %v6181 = vpop.f32.mrb[0].mxu0
      %6182 = vdwg.mxu0
      %v6184 = vsel %vm5960, %v5984, 0
      %v6187 = vsel %vm5960, %v5985, 0
      %6189 = vmatprep.subr.mxu0 0.0
      %6190 = vmatpush1.msra.mxu0 %v5986
      %6191 = vmatprep.subr.mxu0 0.0
      %6192 = vmatpush1.msra.mxu0 %v5987
      %6193 = vmatprep.subr.mxu0 0.0
      %6194 = vmatpush1.msra.mxu0 %v5988
      %6195 = vmatprep.subr.mxu0 0.0
      %6196 = vmatpush1.msra.mxu0 %v5989
      %6197 = vmatprep.subr.mxu0 0.0
      %6198 = vmatpush1.msra.mxu0 %v5990
      %6199 = vmatprep.subr.mxu0 0.0
      %6200 = vmatpush1.msra.mxu0 %v5991
      %6201 = vmatprep.subr.mxu0 0.0
      %6202 = vmatpush1.msra.mxu0 %v5992
      %6203 = vmatprep.subr.mxu0 0.0
      %6204 = vmatpush1.msra.mxu0 %v5993
      %6205 = vmatprep.subr.mxu0 0.0
      %6206 = vmatpush1.msra.mxu0 %v5994
      %6207 = vmatprep.subr.mxu0 0.0
      %6208 = vmatpush1.msra.mxu0 0.0
      %6209 = vmatprep.subr.mxu0 0.0
      %6210 = vmatpush1.msra.mxu0 0.0
      %6211 = vmatprep.subr.mxu0 0.0
      %6212 = vmatpush1.msra.mxu0 0.0
      %6213 = vmatprep.subr.mxu0 0.0
      %6214 = vmatpush1.msra.mxu0 0.0
      %6215 = vmatprep.subr.mxu0 0.0
      %6216 = vmatpush1.msra.mxu0 0.0
      %6217 = vmatprep.subr.mxu0 0.0
      %6218 = vmatpush1.msra.mxu0 0.0
      %6219 = vmatprep.subr.mxu0 0.0
      %6220 = vmatpush1.msra.mxu0 0.0
      %6221 = vmatprep.subr.mxu0 0.0
      %6222 = vmatpush1.msra.mxu0 0.0
      %6223 = vmatprep.subr.mxu0 0.0
      %6224 = vmatpush1.msra.mxu0 0.0
      %6225 = vmatprep.subr.mxu0 0.0
      %6226 = vmatpush1.msra.mxu0 0.0
      %6227 = vmatprep.subr.mxu0 0.0
      %6228 = vmatpush1.msra.mxu0 0.0
      %6229 = vmatprep.subr.mxu0 0.0
      %6230 = vmatpush1.msra.mxu0 0.0
      %6231 = vmatprep.subr.mxu0 0.0
      %6232 = vmatpush1.msra.mxu0 0.0
      %6233 = vmatprep.subr.mxu0 0.0
      %6234 = vmatpush1.msra.mxu0 0.0
      %6235 = vmatprep.subr.mxu0 0.0
      %6236 = vmatpush1.msra.mxu0 0.0
      %6237 = vmatprep.subr.mxu0 0.0
      %6238 = vmatpush1.msra.mxu0 0.0
      %6239 = vmatprep.subr.mxu0 0.0
      %6240 = vmatpush1.msra.mxu0 0.0
      %6241 = vmatprep.subr.mxu0 0.0
      %6242 = vmatpush1.msra.mxu0 0.0
      %6243 = vmatprep.subr.mxu0 0.0
      %6244 = vmatpush1.msra.mxu0 0.0
      %6245 = vmatprep.subr.mxu0 0.0
      %6246 = vmatpush1.msra.mxu0 0.0
      %6247 = vmatprep.subr.mxu0 0.0
      %6248 = vmatpush1.msra.mxu0 0.0
      %6249 = vmatprep.subr.mxu0 0.0
      %6250 = vmatpush1.msra.mxu0 0.0
      %6251 = vmatprep.subr.mxu0 0.0
      %6252 = vmatpush1.msra.mxu0 0.0
      %6253 = vmatprep.mubr.f32.mxu0 0.0
      %6254 = vmatmul.mubr.f32.gmra.mrb[0].mxu0 %v6184
      %v6255 = vpop.f32.mrb[0].mxu0
      %v6256 = vadd.f32 %v6090, %v6255
      %v6257 = vpop.f32.mrb[0].mxu0
      %6258 = vmatprep.mubr.f32.mxu0 0.0
      %6259 = vmatmul.mubr.f32.gmra.mrb[0].mxu0 %v6187
      %v6260 = vpop.f32.mrb[0].mxu0
      %v6261 = vadd.f32 %v6095, %v6260
      %v6262 = vpop.f32.mrb[0].mxu0
      %6263 = vdwg.mxu0
      %6264 = vmatprep.subr.mxu0 0.0
      %6265 = vmatpush1.msra.mxu0 %v5996
      %6266 = vmatprep.subr.mxu0 0.0
      %6267 = vmatpush1.msra.mxu0 %v5997
      %6268 = vmatprep.subr.mxu0 0.0
      %6269 = vmatpush1.msra.mxu0 %v5998
      %6270 = vmatprep.subr.mxu0 0.0
      %6271 = vmatpush1.msra.mxu0 %v5999
      %6272 = vmatprep.subr.mxu0 0.0
      %6273 = vmatpush1.msra.mxu0 %v6000
      %6274 = vmatprep.subr.mxu0 0.0
      %6275 = vmatpush1.msra.mxu0 %v6001
      %6276 = vmatprep.subr.mxu0 0.0
      %6277 = vmatpush1.msra.mxu0 %v6002
      %6278 = vmatprep.subr.mxu0 0.0
      %6279 = vmatpush1.msra.mxu0 %v6003
      %6280 = vmatprep.subr.mxu0 0.0
      %6281 = vmatpush1.msra.mxu0 %v6004
      %6282 = vmatprep.subr.mxu0 0.0
      %6283 = vmatpush1.msra.mxu0 0.0
      %6284 = vmatprep.subr.mxu0 0.0
      %6285 = vmatpush1.msra.mxu0 0.0
      %6286 = vmatprep.subr.mxu0 0.0
      %6287 = vmatpush1.msra.mxu0 0.0
      %6288 = vmatprep.subr.mxu0 0.0
      %6289 = vmatpush1.msra.mxu0 0.0
      %6290 = vmatprep.subr.mxu0 0.0
      %6291 = vmatpush1.msra.mxu0 0.0
      %6292 = vmatprep.subr.mxu0 0.0
      %6293 = vmatpush1.msra.mxu0 0.0
      %6294 = vmatprep.subr.mxu0 0.0
      %6295 = vmatpush1.msra.mxu0 0.0
      %6296 = vmatprep.subr.mxu0 0.0
      %6297 = vmatpush1.msra.mxu0 0.0
      %6298 = vmatprep.subr.mxu0 0.0
      %6299 = vmatpush1.msra.mxu0 0.0
      %6300 = vmatprep.subr.mxu0 0.0
      %6301 = vmatpush1.msra.mxu0 0.0
      %6302 = vmatprep.subr.mxu0 0.0
      %6303 = vmatpush1.msra.mxu0 0.0
      %6304 = vmatprep.subr.mxu0 0.0
      %6305 = vmatpush1.msra.mxu0 0.0
      %6306 = vmatprep.subr.mxu0 0.0
      %6307 = vmatpush1.msra.mxu0 0.0
      %6308 = vmatprep.subr.mxu0 0.0
      %6309 = vmatpush1.msra.mxu0 0.0
      %6310 = vmatprep.subr.mxu0 0.0
      %6311 = vmatpush1.msra.mxu0 0.0
      %6312 = vmatprep.subr.mxu0 0.0
      %6313 = vmatpush1.msra.mxu0 0.0
      %6314 = vmatprep.subr.mxu0 0.0
      %6315 = vmatpush1.msra.mxu0 0.0
      %6316 = vmatprep.subr.mxu0 0.0
      %6317 = vmatpush1.msra.mxu0 0.0
      %6318 = vmatprep.subr.mxu0 0.0
      %6319 = vmatpush1.msra.mxu0 0.0
      %6320 = vmatprep.subr.mxu0 0.0
      %6321 = vmatpush1.msra.mxu0 0.0
      %6322 = vmatprep.subr.mxu0 0.0
      %6323 = vmatpush1.msra.mxu0 0.0
      %6324 = vmatprep.subr.mxu0 0.0
      %6325 = vmatpush1.msra.mxu0 0.0
      %6326 = vmatprep.subr.mxu0 0.0
      %6327 = vmatpush1.msra.mxu0 0.0
      %6328 = vmatprep.mubr.f32.mxu0 0.0
      %6329 = vmatmul.mubr.f32.gmra.mrb[0].mxu0 %v6184
      %v6330 = vpop.f32.mrb[0].mxu0
      %v6331 = vadd.f32 %v6175, %v6330
      %v6332 = vpop.f32.mrb[0].mxu0
      %6333 = vmatprep.mubr.f32.mxu0 0.0
      %6334 = vmatmul.mubr.f32.gmra.mrb[0].mxu0 %v6187
      %v6335 = vpop.f32.mrb[0].mxu0
      %v6336 = vadd.f32 %v6180, %v6335
      %v6337 = vpop.f32.mrb[0].mxu0
      %6338 = vdwg.mxu0
      %v6339 = vld [vmem:[#allocation3 + $0x2] sm:$0xff]
      %v6340 = vld [vmem:[#allocation3 + $0xa] sm:$0xff]
      %s6341 = scalar_lea.vmem %s2, 288
      %v6342 = vld [vmem:[%s6341] sm:$0xff]
      %v6343 = vld [vmem:[%s6341 + $0x8] sm:$0xff]
      %v6344 = vld [vmem:[%s6341 + $0x10] sm:$0xff]
      %v6345 = vld [vmem:[%s6341 + $0x18] sm:$0xff]
      %v6346 = vld [vmem:[%s6341 + $0x20] sm:$0xff]
      %v6347 = vld [vmem:[%s6341 + $0x28] sm:$0xff]
      %v6348 = vld [vmem:[%s6341 + $0x30] sm:$0xff]
      %v6349 = vld [vmem:[%s6341 + $0x38] sm:$0xff]
      %v6350 = vld [vmem:[%s6341 + $0x40] sm:$0xff]
      %v6352 = vsel %vm5960, %v6339, 0
      %v6355 = vsel %vm5960, %v6340, 0
      %6357 = vmatprep.subr.mxu0 0.0
      %6358 = vmatpush1.msra.mxu0 %v6342
      %6359 = vmatprep.subr.mxu0 0.0
      %6360 = vmatpush1.msra.mxu0 %v6343
      %6361 = vmatprep.subr.mxu0 0.0
      %6362 = vmatpush1.msra.mxu0 %v6344
      %6363 = vmatprep.subr.mxu0 0.0
      %6364 = vmatpush1.msra.mxu0 %v6345
      %6365 = vmatprep.subr.mxu0 0.0
      %6366 = vmatpush1.msra.mxu0 %v6346
      %6367 = vmatprep.subr.mxu0 0.0
      %6368 = vmatpush1.msra.mxu0 %v6347
      %6369 = vmatprep.subr.mxu0 0.0
      %6370 = vmatpush1.msra.mxu0 %v6348
      %6371 = vmatprep.subr.mxu0 0.0
      %6372 = vmatpush1.msra.mxu0 %v6349
      %6373 = vmatprep.subr.mxu0 0.0
      %6374 = vmatpush1.msra.mxu0 %v6350
      %6375 = vmatprep.subr.mxu0 0.0
      %6376 = vmatpush1.msra.mxu0 0.0
      %6377 = vmatprep.subr.mxu0 0.0
      %6378 = vmatpush1.msra.mxu0 0.0
      %6379 = vmatprep.subr.mxu0 0.0
      %6380 = vmatpush1.msra.mxu0 0.0
      %6381 = vmatprep.subr.mxu0 0.0
      %6382 = vmatpush1.msra.mxu0 0.0
      %6383 = vmatprep.subr.mxu0 0.0
      %6384 = vmatpush1.msra.mxu0 0.0
      %6385 = vmatprep.subr.mxu0 0.0
      %6386 = vmatpush1.msra.mxu0 0.0
      %6387 = vmatprep.subr.mxu0 0.0
      %6388 = vmatpush1.msra.mxu0 0.0
      %6389 = vmatprep.subr.mxu0 0.0
      %6390 = vmatpush1.msra.mxu0 0.0
      %6391 = vmatprep.subr.mxu0 0.0
      %6392 = vmatpush1.msra.mxu0 0.0
      %6393 = vmatprep.subr.mxu0 0.0
      %6394 = vmatpush1.msra.mxu0 0.0
      %6395 = vmatprep.subr.mxu0 0.0
      %6396 = vmatpush1.msra.mxu0 0.0
      %6397 = vmatprep.subr.mxu0 0.0
      %6398 = vmatpush1.msra.mxu0 0.0
      %6399 = vmatprep.subr.mxu0 0.0
      %6400 = vmatpush1.msra.mxu0 0.0
      %6401 = vmatprep.subr.mxu0 0.0
      %6402 = vmatpush1.msra.mxu0 0.0
      %6403 = vmatprep.subr.mxu0 0.0
      %6404 = vmatpush1.msra.mxu0 0.0
      %6405 = vmatprep.subr.mxu0 0.0
      %6406 = vmatpush1.msra.mxu0 0.0
      %6407 = vmatprep.subr.mxu0 0.0
      %6408 = vmatpush1.msra.mxu0 0.0
      %6409 = vmatprep.subr.mxu0 0.0
      %6410 = vmatpush1.msra.mxu0 0.0
      %6411 = vmatprep.subr.mxu0 0.0
      %6412 = vmatpush1.msra.mxu0 0.0
      %6413 = vmatprep.subr.mxu0 0.0
      %6414 = vmatpush1.msra.mxu0 0.0
      %6415 = vmatprep.subr.mxu0 0.0
      %6416 = vmatpush1.msra.mxu0 0.0
      %6417 = vmatprep.subr.mxu0 0.0
      %6418 = vmatpush1.msra.mxu0 0.0
      %6419 = vmatprep.subr.mxu0 0.0
      %6420 = vmatpush1.msra.mxu0 0.0
      %6421 = vmatprep.mubr.f32.mxu0 0.0
      %6422 = vmatmul.mubr.f32.gmra.mrb[0].mxu0 %v6352
      %v6423 = vpop.f32.mrb[0].mxu0
      %v6424 = vadd.f32 0.0, %v6423
      %v6425 = vpop.f32.mrb[0].mxu0
      %6426 = vmatprep.mubr.f32.mxu0 0.0
      %6427 = vmatmul.mubr.f32.gmra.mrb[0].mxu0 %v6355
      %v6428 = vpop.f32.mrb[0].mxu0
      %v6429 = vadd.f32 0.0, %v6428
      %v6430 = vpop.f32.mrb[0].mxu0
      %6431 = vdwg.mxu0
      %s6432 = scalar_lea.vmem %s2, 360
      %v6433 = vld [vmem:[%s6432] sm:$0xff]
      %v6434 = vld [vmem:[%s6432 + $0x8] sm:$0xff]
      %v6435 = vld [vmem:[%s6432 + $0x10] sm:$0xff]
      %v6436 = vld [vmem:[%s6432 + $0x18] sm:$0xff]
      %v6437 = vld [vmem:[%s6432 + $0x20] sm:$0xff]
      %v6438 = vld [vmem:[%s6432 + $0x28] sm:$0xff]
      %v6439 = vld [vmem:[%s6432 + $0x30] sm:$0xff]
      %v6440 = vld [vmem:[%s6432 + $0x38] sm:$0xff]
      %v6441 = vld [vmem:[%s6432 + $0x40] sm:$0xff]
      %6442 = vmatprep.subr.mxu0 0.0
      %6443 = vmatpush1.msra.mxu0 %v6433
      %6444 = vmatprep.subr.mxu0 0.0
      %6445 = vmatpush1.msra.mxu0 %v6434
      %6446 = vmatprep.subr.mxu0 0.0
      %6447 = vmatpush1.msra.mxu0 %v6435
      %6448 = vmatprep.subr.mxu0 0.0
      %6449 = vmatpush1.msra.mxu0 %v6436
      %6450 = vmatprep.subr.mxu0 0.0
      %6451 = vmatpush1.msra.mxu0 %v6437
      %6452 = vmatprep.subr.mxu0 0.0
      %6453 = vmatpush1.msra.mxu0 %v6438
      %6454 = vmatprep.subr.mxu0 0.0
      %6455 = vmatpush1.msra.mxu0 %v6439
      %6456 = vmatprep.subr.mxu0 0.0
      %6457 = vmatpush1.msra.mxu0 %v6440
      %6458 = vmatprep.subr.mxu0 0.0
      %6459 = vmatpush1.msra.mxu0 %v6441
      %6460 = vmatprep.subr.mxu0 0.0
      %6461 = vmatpush1.msra.mxu0 0.0
      %6462 = vmatprep.subr.mxu0 0.0
      %6463 = vmatpush1.msra.mxu0 0.0
      %6464 = vmatprep.subr.mxu0 0.0
      %6465 = vmatpush1.msra.mxu0 0.0
      %6466 = vmatprep.subr.mxu0 0.0
      %6467 = vmatpush1.msra.mxu0 0.0
      %6468 = vmatprep.subr.mxu0 0.0
      %6469 = vmatpush1.msra.mxu0 0.0
      %6470 = vmatprep.subr.mxu0 0.0
      %6471 = vmatpush1.msra.mxu0 0.0
      %6472 = vmatprep.subr.mxu0 0.0
      %6473 = vmatpush1.msra.mxu0 0.0
      %6474 = vmatprep.subr.mxu0 0.0
      %6475 = vmatpush1.msra.mxu0 0.0
      %6476 = vmatprep.subr.mxu0 0.0
      %6477 = vmatpush1.msra.mxu0 0.0
      %6478 = vmatprep.subr.mxu0 0.0
      %6479 = vmatpush1.msra.mxu0 0.0
      %6480 = vmatprep.subr.mxu0 0.0
      %6481 = vmatpush1.msra.mxu0 0.0
      %6482 = vmatprep.subr.mxu0 0.0
      %6483 = vmatpush1.msra.mxu0 0.0
      %6484 = vmatprep.subr.mxu0 0.0
      %6485 = vmatpush1.msra.mxu0 0.0
      %6486 = vmatprep.subr.mxu0 0.0
      %6487 = vmatpush1.msra.mxu0 0.0
      %6488 = vmatprep.subr.mxu0 0.0
      %6489 = vmatpush1.msra.mxu0 0.0
      %6490 = vmatprep.subr.mxu0 0.0
      %6491 = vmatpush1.msra.mxu0 0.0
      %6492 = vmatprep.subr.mxu0 0.0
      %6493 = vmatpush1.msra.mxu0 0.0
      %6494 = vmatprep.subr.mxu0 0.0
      %6495 = vmatpush1.msra.mxu0 0.0
      %6496 = vmatprep.subr.mxu0 0.0
      %6497 = vmatpush1.msra.mxu0 0.0
      %6498 = vmatprep.subr.mxu0 0.0
      %6499 = vmatpush1.msra.mxu0 0.0
      %6500 = vmatprep.subr.mxu0 0.0
      %6501 = vmatpush1.msra.mxu0 0.0
      %6502 = vmatprep.subr.mxu0 0.0
      %6503 = vmatpush1.msra.mxu0 0.0
      %6504 = vmatprep.subr.mxu0 0.0
      %6505 = vmatpush1.msra.mxu0 0.0
      %6506 = vmatprep.mubr.f32.mxu0 0.0
      %6507 = vmatmul.mubr.f32.gmra.mrb[0].mxu0 %v6352
      %v6508 = vpop.f32.mrb[0].mxu0
      %v6509 = vadd.f32 0.0, %v6508
      %v6510 = vpop.f32.mrb[0].mxu0
      %6511 = vmatprep.mubr.f32.mxu0 0.0
      %6512 = vmatmul.mubr.f32.gmra.mrb[0].mxu0 %v6355
      %v6513 = vpop.f32.mrb[0].mxu0
      %v6514 = vadd.f32 0.0, %v6513
      %v6515 = vpop.f32.mrb[0].mxu0
      %6516 = vdwg.mxu0
      %v6517 = vadd.f32 %v6256, %v6424
      %v6518 = vadd.f32 %v6261, %v6429
      %v6519 = vadd.f32 %v6331, %v6509
      %v6520 = vadd.f32 %v6336, %v6514
      %v6521 = vmax.f32 %v6517, %v6519
      %v6522 = vmax.f32 %v6518, %v6520
      %v6523 = vld [vmem:[%s7] sm:$0xff]
      %vm6524 = vcmask 130048
      %v6526 = vsel %vm6524, %v6523, 0
      %6528 = vmatprep.subr.mxu0 0.0
      %6529 = vmatpush1.msra.mxu0 %v6521
      %6530 = vmatprep.subr.mxu0 0.0
      %6531 = vmatpush1.msra.mxu0 %v6522
      %6532 = vmatprep.subr.mxu0 0.0
      %6533 = vmatpush1.msra.mxu0 0.0
      %6534 = vmatprep.subr.mxu0 0.0
      %6535 = vmatpush1.msra.mxu0 0.0
      %6536 = vmatprep.subr.mxu0 0.0
      %6537 = vmatpush1.msra.mxu0 0.0
      %6538 = vmatprep.subr.mxu0 0.0
      %6539 = vmatpush1.msra.mxu0 0.0
      %6540 = vmatprep.subr.mxu0 0.0
      %6541 = vmatpush1.msra.mxu0 0.0
      %6542 = vmatprep.subr.mxu0 0.0
      %6543 = vmatpush1.msra.mxu0 0.0
      %6544 = vmatprep.subr.mxu0 0.0
      %6545 = vmatpush1.msra.mxu0 0.0
      %6546 = vmatprep.subr.mxu0 0.0
      %6547 = vmatpush1.msra.mxu0 0.0
      %6548 = vmatprep.subr.mxu0 0.0
      %6549 = vmatpush1.msra.mxu0 0.0
      %6550 = vmatprep.subr.mxu0 0.0
      %6551 = vmatpush1.msra.mxu0 0.0
      %6552 = vmatprep.subr.mxu0 0.0
      %6553 = vmatpush1.msra.mxu0 0.0
      %6554 = vmatprep.subr.mxu0 0.0
      %6555 = vmatpush1.msra.mxu0 0.0
      %6556 = vmatprep.subr.mxu0 0.0
      %6557 = vmatpush1.msra.mxu0 0.0
      %6558 = vmatprep.subr.mxu0 0.0
      %6559 = vmatpush1.msra.mxu0 0.0
      %6560 = vmatprep.subr.mxu0 0.0
      %6561 = vmatpush1.msra.mxu0 0.0
      %6562 = vmatprep.subr.mxu0 0.0
      %6563 = vmatpush1.msra.mxu0 0.0
      %6564 = vmatprep.subr.mxu0 0.0
      %6565 = vmatpush1.msra.mxu0 0.0
      %6566 = vmatprep.subr.mxu0 0.0
      %6567 = vmatpush1.msra.mxu0 0.0
      %6568 = vmatprep.subr.mxu0 0.0
      %6569 = vmatpush1.msra.mxu0 0.0
      %6570 = vmatprep.subr.mxu0 0.0
      %6571 = vmatpush1.msra.mxu0 0.0
      %6572 = vmatprep.subr.mxu0 0.0
      %6573 = vmatpush1.msra.mxu0 0.0
      %6574 = vmatprep.subr.mxu0 0.0
      %6575 = vmatpush1.msra.mxu0 0.0
      %6576 = vmatprep.subr.mxu0 0.0
      %6577 = vmatpush1.msra.mxu0 0.0
      %6578 = vmatprep.subr.mxu0 0.0
      %6579 = vmatpush1.msra.mxu0 0.0
      %6580 = vmatprep.subr.mxu0 0.0
      %6581 = vmatpush1.msra.mxu0 0.0
      %6582 = vmatprep.subr.mxu0 0.0
      %6583 = vmatpush1.msra.mxu0 0.0
      %6584 = vmatprep.subr.mxu0 0.0
      %6585 = vmatpush1.msra.mxu0 0.0
      %6586 = vmatprep.subr.mxu0 0.0
      %6587 = vmatpush1.msra.mxu0 0.0
      %6588 = vmatprep.subr.mxu0 0.0
      %6589 = vmatpush1.msra.mxu0 0.0
      %6590 = vmatprep.subr.mxu0 0.0
      %6591 = vmatpush1.msra.mxu0 0.0
      %6592 = vmatprep.mubr.f32.mxu0 0.0
      %6593 = vmatmul.mubr.f32.gmra.mrb[0].mxu0 %v6526
      %v6594 = vpop.f32.mrb[0].mxu0
      %v6595 = vadd.f32 0.0, %v6594
      %v6596 = vpop.f32.mrb[0].mxu0
      %6597 = vdwg.mxu0
      %s6598 = scalar_lea.vmem %s7, 8
      %v6599 = vld [vmem:[%s6598] sm:$0xff]
      %v6601 = vsel %vm6524, %v6599, 0
      %6603 = vmatprep.subr.mxu0 0.0
      %6604 = vmatpush1.msra.mxu0 %v6521
      %6605 = vmatprep.subr.mxu0 0.0
      %6606 = vmatpush1.msra.mxu0 %v6522
      %6607 = vmatprep.subr.mxu0 0.0
      %6608 = vmatpush1.msra.mxu0 0.0
      %6609 = vmatprep.subr.mxu0 0.0
      %6610 = vmatpush1.msra.mxu0 0.0
      %6611 = vmatprep.subr.mxu0 0.0
      %6612 = vmatpush1.msra.mxu0 0.0
      %6613 = vmatprep.subr.mxu0 0.0
      %6614 = vmatpush1.msra.mxu0 0.0
      %6615 = vmatprep.subr.mxu0 0.0
      %6616 = vmatpush1.msra.mxu0 0.0
      %6617 = vmatprep.subr.mxu0 0.0
      %6618 = vmatpush1.msra.mxu0 0.0
      %6619 = vmatprep.subr.mxu0 0.0
      %6620 = vmatpush1.msra.mxu0 0.0
      %6621 = vmatprep.subr.mxu0 0.0
      %6622 = vmatpush1.msra.mxu0 0.0
      %6623 = vmatprep.subr.mxu0 0.0
      %6624 = vmatpush1.msra.mxu0 0.0
      %6625 = vmatprep.subr.mxu0 0.0
      %6626 = vmatpush1.msra.mxu0 0.0
      %6627 = vmatprep.subr.mxu0 0.0
      %6628 = vmatpush1.msra.mxu0 0.0
      %6629 = vmatprep.subr.mxu0 0.0
      %6630 = vmatpush1.msra.mxu0 0.0
      %6631 = vmatprep.subr.mxu0 0.0
      %6632 = vmatpush1.msra.mxu0 0.0
      %6633 = vmatprep.subr.mxu0 0.0
      %6634 = vmatpush1.msra.mxu0 0.0
      %6635 = vmatprep.subr.mxu0 0.0
      %6636 = vmatpush1.msra.mxu0 0.0
      %6637 = vmatprep.subr.mxu0 0.0
      %6638 = vmatpush1.msra.mxu0 0.0
      %6639 = vmatprep.subr.mxu0 0.0
      %6640 = vmatpush1.msra.mxu0 0.0
      %6641 = vmatprep.subr.mxu0 0.0
      %6642 = vmatpush1.msra.mxu0 0.0
      %6643 = vmatprep.subr.mxu0 0.0
      %6644 = vmatpush1.msra.mxu0 0.0
      %6645 = vmatprep.subr.mxu0 0.0
      %6646 = vmatpush1.msra.mxu0 0.0
      %6647 = vmatprep.subr.mxu0 0.0
      %6648 = vmatpush1.msra.mxu0 0.0
      %6649 = vmatprep.subr.mxu0 0.0
      %6650 = vmatpush1.msra.mxu0 0.0
      %6651 = vmatprep.subr.mxu0 0.0
      %6652 = vmatpush1.msra.mxu0 0.0
      %6653 = vmatprep.subr.mxu0 0.0
      %6654 = vmatpush1.msra.mxu0 0.0
      %6655 = vmatprep.subr.mxu0 0.0
      %6656 = vmatpush1.msra.mxu0 0.0
      %6657 = vmatprep.subr.mxu0 0.0
      %6658 = vmatpush1.msra.mxu0 0.0
      %6659 = vmatprep.subr.mxu0 0.0
      %6660 = vmatpush1.msra.mxu0 0.0
      %6661 = vmatprep.subr.mxu0 0.0
      %6662 = vmatpush1.msra.mxu0 0.0
      %6663 = vmatprep.subr.mxu0 0.0
      %6664 = vmatpush1.msra.mxu0 0.0
      %6665 = vmatprep.subr.mxu0 0.0
      %6666 = vmatpush1.msra.mxu0 0.0
      %6667 = vmatprep.mubr.f32.mxu0 0.0
      %6668 = vmatmul.mubr.f32.gmra.mrb[0].mxu0 %v6601
      %v6669 = vpop.f32.mrb[0].mxu0
      %v6670 = vadd.f32 0.0, %v6669
      %v6671 = vpop.f32.mrb[0].mxu0
      %6672 = vdwg.mxu0
      %v6673 = vmax.f32 %v6595, %v6670
      %vm6674 = vcmp.gt.f32.partialorder %v6673, 0.0
      %vm6675 = vcmp.lt.f32.partialorder %v6673, 0.0
      %v6676 = vsel %vm6675, -1.0, 0.0
      %v6677 = vsel %vm6674, 1.0, %v6676
      %vm6678 = vcmask 523264
      %6679 = vst.msk [vmem:[#allocation4] sm:$0xff] %vm6678, %v6677
      %v6680 = vld [vmem:[#allocation4] sm:$0x3f]
      %v6681 = vld [vmem:[%s3] sm:$0xff]
      %v6682 = vld [vmem:[%s3 + $0x8] sm:$0xff]
      %v6683 = vld [vmem:[%s3 + $0x10] sm:$0xff]
      %v6684 = vld [vmem:[%s3 + $0x18] sm:$0xff]
      %v6685 = vld [vmem:[%s3 + $0x20] sm:$0xff]
      %v6686 = vld [vmem:[%s3 + $0x28] sm:$0xff]
      %v6687 = vld [vmem:[%s3 + $0x30] sm:$0xff]
      %v6688 = vld [vmem:[%s3 + $0x38] sm:$0xff]
      %v6689 = vld [vmem:[#allocation4 + $0x1] sm:$0x3f]
      %s6690 = scalar_lea.vmem %s3, 64
      %v6691 = vld [vmem:[%s6690] sm:$0xff]
      %v6692 = vld [vmem:[%s6690 + $0x8] sm:$0xff]
      %v6693 = vld [vmem:[%s6690 + $0x10] sm:$0xff]
      %v6694 = vld [vmem:[%s6690 + $0x18] sm:$0xff]
      %v6695 = vld [vmem:[%s6690 + $0x20] sm:$0xff]
      %v6696 = vld [vmem:[%s6690 + $0x28] sm:$0xff]
      %v6697 = vld [vmem:[%s6690 + $0x30] sm:$0xff]
      %v6698 = vld [vmem:[%s6690 + $0x38] sm:$0xff]
      %v6700 = vsel %vm6678, %v6689, 0
      %6702 = vmatprep.subr.mxu0 0.0
      %6703 = vmatpush1.msra.mxu0 %v6691
      %6704 = vmatprep.subr.mxu0 0.0
      %6705 = vmatpush1.msra.mxu0 %v6692
      %6706 = vmatprep.subr.mxu0 0.0
      %6707 = vmatpush1.msra.mxu0 %v6693
      %6708 = vmatprep.subr.mxu0 0.0
      %6709 = vmatpush1.msra.mxu0 %v6694
      %6710 = vmatprep.subr.mxu0 0.0
      %6711 = vmatpush1.msra.mxu0 %v6695
      %6712 = vmatprep.subr.mxu0 0.0
      %6713 = vmatpush1.msra.mxu0 %v6696
      %6714 = vmatprep.subr.mxu0 0.0
      %6715 = vmatpush1.msra.mxu0 %v6697
      %6716 = vmatprep.subr.mxu0 0.0
      %6717 = vmatpush1.msra.mxu0 %v6698
      %6718 = vmatprep.subr.mxu0 0.0
      %6719 = vmatpush1.msra.mxu0 0.0
      %6720 = vmatprep.subr.mxu0 0.0
      %6721 = vmatpush1.msra.mxu0 0.0
      %6722 = vmatprep.subr.mxu0 0.0
      %6723 = vmatpush1.msra.mxu0 0.0
      %6724 = vmatprep.subr.mxu0 0.0
      %6725 = vmatpush1.msra.mxu0 0.0
      %6726 = vmatprep.subr.mxu0 0.0
      %6727 = vmatpush1.msra.mxu0 0.0
      %6728 = vmatprep.subr.mxu0 0.0
      %6729 = vmatpush1.msra.mxu0 0.0
      %6730 = vmatprep.subr.mxu0 0.0
      %6731 = vmatpush1.msra.mxu0 0.0
      %6732 = vmatprep.subr.mxu0 0.0
      %6733 = vmatpush1.msra.mxu0 0.0
      %6734 = vmatprep.subr.mxu0 0.0
      %6735 = vmatpush1.msra.mxu0 0.0
      %6736 = vmatprep.subr.mxu0 0.0
      %6737 = vmatpush1.msra.mxu0 0.0
      %6738 = vmatprep.subr.mxu0 0.0
      %6739 = vmatpush1.msra.mxu0 0.0
      %6740 = vmatprep.subr.mxu0 0.0
      %6741 = vmatpush1.msra.mxu0 0.0
      %6742 = vmatprep.subr.mxu0 0.0
      %6743 = vmatpush1.msra.mxu0 0.0
      %6744 = vmatprep.subr.mxu0 0.0
      %6745 = vmatpush1.msra.mxu0 0.0
      %6746 = vmatprep.subr.mxu0 0.0
      %6747 = vmatpush1.msra.mxu0 0.0
      %6748 = vmatprep.subr.mxu0 0.0
      %6749 = vmatpush1.msra.mxu0 0.0
      %6750 = vmatprep.subr.mxu0 0.0
      %6751 = vmatpush1.msra.mxu0 0.0
      %6752 = vmatprep.subr.mxu0 0.0
      %6753 = vmatpush1.msra.mxu0 0.0
      %6754 = vmatprep.subr.mxu0 0.0
      %6755 = vmatpush1.msra.mxu0 0.0
      %6756 = vmatprep.subr.mxu0 0.0
      %6757 = vmatpush1.msra.mxu0 0.0
      %6758 = vmatprep.subr.mxu0 0.0
      %6759 = vmatpush1.msra.mxu0 0.0
      %6760 = vmatprep.subr.mxu0 0.0
      %6761 = vmatpush1.msra.mxu0 0.0
      %6762 = vmatprep.subr.mxu0 0.0
      %6763 = vmatpush1.msra.mxu0 0.0
      %6764 = vmatprep.subr.mxu0 0.0
      %6765 = vmatpush1.msra.mxu0 0.0
      %6766 = vmatprep.mubr.f32.mxu0 0.0
      %6767 = vmatmul.mubr.f32.gmra.mrb[0].mxu0 %v6700
      %v6768 = vpop.f32.mrb[0].mxu0
      %v6769 = vadd.f32 0.0, %v6768
      %v6770 = vpop.f32.mrb[0].mxu0
      %6771 = vdwg.mxu0
      %v6773 = vsel %vm6678, %v6680, 0
      %6775 = vmatprep.subr.mxu0 0.0
      %6776 = vmatpush1.msra.mxu0 %v6681
      %6777 = vmatprep.subr.mxu0 0.0
      %6778 = vmatpush1.msra.mxu0 %v6682
      %6779 = vmatprep.subr.mxu0 0.0
      %6780 = vmatpush1.msra.mxu0 %v6683
      %6781 = vmatprep.subr.mxu0 0.0
      %6782 = vmatpush1.msra.mxu0 %v6684
      %6783 = vmatprep.subr.mxu0 0.0
      %6784 = vmatpush1.msra.mxu0 %v6685
      %6785 = vmatprep.subr.mxu0 0.0
      %6786 = vmatpush1.msra.mxu0 %v6686
      %6787 = vmatprep.subr.mxu0 0.0
      %6788 = vmatpush1.msra.mxu0 %v6687
      %6789 = vmatprep.subr.mxu0 0.0
      %6790 = vmatpush1.msra.mxu0 %v6688
      %6791 = vmatprep.subr.mxu0 0.0
      %6792 = vmatpush1.msra.mxu0 0.0
      %6793 = vmatprep.subr.mxu0 0.0
      %6794 = vmatpush1.msra.mxu0 0.0
      %6795 = vmatprep.subr.mxu0 0.0
      %6796 = vmatpush1.msra.mxu0 0.0
      %6797 = vmatprep.subr.mxu0 0.0
      %6798 = vmatpush1.msra.mxu0 0.0
      %6799 = vmatprep.subr.mxu0 0.0
      %6800 = vmatpush1.msra.mxu0 0.0
      %6801 = vmatprep.subr.mxu0 0.0
      %6802 = vmatpush1.msra.mxu0 0.0
      %6803 = vmatprep.subr.mxu0 0.0
      %6804 = vmatpush1.msra.mxu0 0.0
      %6805 = vmatprep.subr.mxu0 0.0
      %6806 = vmatpush1.msra.mxu0 0.0
      %6807 = vmatprep.subr.mxu0 0.0
      %6808 = vmatpush1.msra.mxu0 0.0
      %6809 = vmatprep.subr.mxu0 0.0
      %6810 = vmatpush1.msra.mxu0 0.0
      %6811 = vmatprep.subr.mxu0 0.0
      %6812 = vmatpush1.msra.mxu0 0.0
      %6813 = vmatprep.subr.mxu0 0.0
      %6814 = vmatpush1.msra.mxu0 0.0
      %6815 = vmatprep.subr.mxu0 0.0
      %6816 = vmatpush1.msra.mxu0 0.0
      %6817 = vmatprep.subr.mxu0 0.0
      %6818 = vmatpush1.msra.mxu0 0.0
      %6819 = vmatprep.subr.mxu0 0.0
      %6820 = vmatpush1.msra.mxu0 0.0
      %6821 = vmatprep.subr.mxu0 0.0
      %6822 = vmatpush1.msra.mxu0 0.0
      %6823 = vmatprep.subr.mxu0 0.0
      %6824 = vmatpush1.msra.mxu0 0.0
      %6825 = vmatprep.subr.mxu0 0.0
      %6826 = vmatpush1.msra.mxu0 0.0
      %6827 = vmatprep.subr.mxu0 0.0
      %6828 = vmatpush1.msra.mxu0 0.0
      %6829 = vmatprep.subr.mxu0 0.0
      %6830 = vmatpush1.msra.mxu0 0.0
      %6831 = vmatprep.subr.mxu0 0.0
      %6832 = vmatpush1.msra.mxu0 0.0
      %6833 = vmatprep.subr.mxu0 0.0
      %6834 = vmatpush1.msra.mxu0 0.0
      %6835 = vmatprep.subr.mxu0 0.0
      %6836 = vmatpush1.msra.mxu0 0.0
      %6837 = vmatprep.subr.mxu0 0.0
      %6838 = vmatpush1.msra.mxu0 0.0
      %6839 = vmatprep.mubr.f32.mxu0 0.0
      %6840 = vmatmul.mubr.f32.gmra.mrb[0].mxu0 %v6773
      %v6841 = vpop.f32.mrb[0].mxu0
      %v6842 = vadd.f32 %v6769, %v6841
      %v6843 = vpop.f32.mrb[0].mxu0
      %6844 = vdwg.mxu0
      %v6845 = vld [vmem:[#allocation4 + $0x2] sm:$0x3f]
      %s6846 = scalar_lea.vmem %s3, 128
      %v6847 = vld [vmem:[%s6846] sm:$0xff]
      %v6848 = vld [vmem:[%s6846 + $0x8] sm:$0xff]
      %v6849 = vld [vmem:[%s6846 + $0x10] sm:$0xff]
      %v6850 = vld [vmem:[%s6846 + $0x18] sm:$0xff]
      %v6851 = vld [vmem:[%s6846 + $0x20] sm:$0xff]
      %v6852 = vld [vmem:[%s6846 + $0x28] sm:$0xff]
      %v6853 = vld [vmem:[%s6846 + $0x30] sm:$0xff]
      %v6854 = vld [vmem:[%s6846 + $0x38] sm:$0xff]
      %v6856 = vsel %vm6678, %v6845, 0
      %6858 = vmatprep.subr.mxu0 0.0
      %6859 = vmatpush1.msra.mxu0 %v6847
      %6860 = vmatprep.subr.mxu0 0.0
      %6861 = vmatpush1.msra.mxu0 %v6848
      %6862 = vmatprep.subr.mxu0 0.0
      %6863 = vmatpush1.msra.mxu0 %v6849
      %6864 = vmatprep.subr.mxu0 0.0
      %6865 = vmatpush1.msra.mxu0 %v6850
      %6866 = vmatprep.subr.mxu0 0.0
      %6867 = vmatpush1.msra.mxu0 %v6851
      %6868 = vmatprep.subr.mxu0 0.0
      %6869 = vmatpush1.msra.mxu0 %v6852
      %6870 = vmatprep.subr.mxu0 0.0
      %6871 = vmatpush1.msra.mxu0 %v6853
      %6872 = vmatprep.subr.mxu0 0.0
      %6873 = vmatpush1.msra.mxu0 %v6854
      %6874 = vmatprep.subr.mxu0 0.0
      %6875 = vmatpush1.msra.mxu0 0.0
      %6876 = vmatprep.subr.mxu0 0.0
      %6877 = vmatpush1.msra.mxu0 0.0
      %6878 = vmatprep.subr.mxu0 0.0
      %6879 = vmatpush1.msra.mxu0 0.0
      %6880 = vmatprep.subr.mxu0 0.0
      %6881 = vmatpush1.msra.mxu0 0.0
      %6882 = vmatprep.subr.mxu0 0.0
      %6883 = vmatpush1.msra.mxu0 0.0
      %6884 = vmatprep.subr.mxu0 0.0
      %6885 = vmatpush1.msra.mxu0 0.0
      %6886 = vmatprep.subr.mxu0 0.0
      %6887 = vmatpush1.msra.mxu0 0.0
      %6888 = vmatprep.subr.mxu0 0.0
      %6889 = vmatpush1.msra.mxu0 0.0
      %6890 = vmatprep.subr.mxu0 0.0
      %6891 = vmatpush1.msra.mxu0 0.0
      %6892 = vmatprep.subr.mxu0 0.0
      %6893 = vmatpush1.msra.mxu0 0.0
      %6894 = vmatprep.subr.mxu0 0.0
      %6895 = vmatpush1.msra.mxu0 0.0
      %6896 = vmatprep.subr.mxu0 0.0
      %6897 = vmatpush1.msra.mxu0 0.0
      %6898 = vmatprep.subr.mxu0 0.0
      %6899 = vmatpush1.msra.mxu0 0.0
      %6900 = vmatprep.subr.mxu0 0.0
      %6901 = vmatpush1.msra.mxu0 0.0
      %6902 = vmatprep.subr.mxu0 0.0
      %6903 = vmatpush1.msra.mxu0 0.0
      %6904 = vmatprep.subr.mxu0 0.0
      %6905 = vmatpush1.msra.mxu0 0.0
      %6906 = vmatprep.subr.mxu0 0.0
      %6907 = vmatpush1.msra.mxu0 0.0
      %6908 = vmatprep.subr.mxu0 0.0
      %6909 = vmatpush1.msra.mxu0 0.0
      %6910 = vmatprep.subr.mxu0 0.0
      %6911 = vmatpush1.msra.mxu0 0.0
      %6912 = vmatprep.subr.mxu0 0.0
      %6913 = vmatpush1.msra.mxu0 0.0
      %6914 = vmatprep.subr.mxu0 0.0
      %6915 = vmatpush1.msra.mxu0 0.0
      %6916 = vmatprep.subr.mxu0 0.0
      %6917 = vmatpush1.msra.mxu0 0.0
      %6918 = vmatprep.subr.mxu0 0.0
      %6919 = vmatpush1.msra.mxu0 0.0
      %6920 = vmatprep.subr.mxu0 0.0
      %6921 = vmatpush1.msra.mxu0 0.0
      %6922 = vmatprep.mubr.f32.mxu0 0.0
      %6923 = vmatmul.mubr.f32.gmra.mrb[0].mxu0 %v6856
      %v6924 = vpop.f32.mrb[0].mxu0
      %v6925 = vadd.f32 0.0, %v6924
      %v6926 = vpop.f32.mrb[0].mxu0
      %6927 = vdwg.mxu0
      %v6928 = vadd.f32 %v6842, %v6925
      %vm6929 = vcmp.gt.f32.partialorder %v6928, 0.0
      %vm6930 = vcmp.lt.f32.partialorder %v6928, 0.0
      %v6931 = vsel %vm6930, -1.0, 0.0
      %v6932 = vsel %vm6929, 1.0, %v6931
      %vm6933 = vcmask 783360
      %6934 = vst.msk [vmem:[#allocation5] sm:$0x3f] %vm6933, %v6932
      %v6935 = vld [vmem:[#allocation5] sm:$0xf]
      %v6936 = vld [vmem:[%s4] sm:$0xff]
      %v6937 = vld [vmem:[%s4 + $0x8] sm:$0xff]
      %v6938 = vld [vmem:[%s4 + $0x10] sm:$0xff]
      %v6939 = vld [vmem:[%s4 + $0x18] sm:$0xff]
      %v6940 = vld [vmem:[%s4 + $0x20] sm:$0xff]
      %v6941 = vld [vmem:[%s4 + $0x28] sm:$0xff]
      %v6942 = vld [vmem:[%s4 + $0x30] sm:$0xff]
      %v6943 = vld [vmem:[%s4 + $0x38] sm:$0xff]
      %v6944 = vld [vmem:[%s4 + $0x40] sm:$0xff]
      %v6945 = vld [vmem:[%s4 + $0x48] sm:$0xff]
      %v6946 = vld [vmem:[%s4 + $0x50] sm:$0xff]
      %v6947 = vld [vmem:[%s4 + $0x58] sm:$0xff]
      %v6948 = vld [vmem:[#allocation5 + $0x1] sm:$0xf]
      %s6949 = scalar_lea.vmem %s4, 96
      %v6950 = vld [vmem:[%s6949] sm:$0xff]
      %v6951 = vld [vmem:[%s6949 + $0x8] sm:$0xff]
      %v6952 = vld [vmem:[%s6949 + $0x10] sm:$0xff]
      %v6953 = vld [vmem:[%s6949 + $0x18] sm:$0xff]
      %v6954 = vld [vmem:[%s6949 + $0x20] sm:$0xff]
      %v6955 = vld [vmem:[%s6949 + $0x28] sm:$0xff]
      %v6956 = vld [vmem:[%s6949 + $0x30] sm:$0xff]
      %v6957 = vld [vmem:[%s6949 + $0x38] sm:$0xff]
      %v6958 = vld [vmem:[%s6949 + $0x40] sm:$0xff]
      %v6959 = vld [vmem:[%s6949 + $0x48] sm:$0xff]
      %v6960 = vld [vmem:[%s6949 + $0x50] sm:$0xff]
      %v6961 = vld [vmem:[%s6949 + $0x58] sm:$0xff]
      %vm6962 = vcmask 785408
      %v6964 = vsel %vm6962, %v6948, 0
      %6966 = vmatprep.subr.mxu0 0.0
      %6967 = vmatpush1.msra.mxu0 %v6950
      %6968 = vmatprep.subr.mxu0 0.0
      %6969 = vmatpush1.msra.mxu0 %v6951
      %6970 = vmatprep.subr.mxu0 0.0
      %6971 = vmatpush1.msra.mxu0 %v6952
      %6972 = vmatprep.subr.mxu0 0.0
      %6973 = vmatpush1.msra.mxu0 %v6953
      %6974 = vmatprep.subr.mxu0 0.0
      %6975 = vmatpush1.msra.mxu0 %v6954
      %6976 = vmatprep.subr.mxu0 0.0
      %6977 = vmatpush1.msra.mxu0 %v6955
      %6978 = vmatprep.subr.mxu0 0.0
      %6979 = vmatpush1.msra.mxu0 %v6956
      %6980 = vmatprep.subr.mxu0 0.0
      %6981 = vmatpush1.msra.mxu0 %v6957
      %6982 = vmatprep.subr.mxu0 0.0
      %6983 = vmatpush1.msra.mxu0 %v6958
      %6984 = vmatprep.subr.mxu0 0.0
      %6985 = vmatpush1.msra.mxu0 %v6959
      %6986 = vmatprep.subr.mxu0 0.0
      %6987 = vmatpush1.msra.mxu0 %v6960
      %6988 = vmatprep.subr.mxu0 0.0
      %6989 = vmatpush1.msra.mxu0 %v6961
      %6990 = vmatprep.subr.mxu0 0.0
      %6991 = vmatpush1.msra.mxu0 0.0
      %6992 = vmatprep.subr.mxu0 0.0
      %6993 = vmatpush1.msra.mxu0 0.0
      %6994 = vmatprep.subr.mxu0 0.0
      %6995 = vmatpush1.msra.mxu0 0.0
      %6996 = vmatprep.subr.mxu0 0.0
      %6997 = vmatpush1.msra.mxu0 0.0
      %6998 = vmatprep.subr.mxu0 0.0
      %6999 = vmatpush1.msra.mxu0 0.0
      %7000 = vmatprep.subr.mxu0 0.0
      %7001 = vmatpush1.msra.mxu0 0.0
      %7002 = vmatprep.subr.mxu0 0.0
      %7003 = vmatpush1.msra.mxu0 0.0
      %7004 = vmatprep.subr.mxu0 0.0
      %7005 = vmatpush1.msra.mxu0 0.0
      %7006 = vmatprep.subr.mxu0 0.0
      %7007 = vmatpush1.msra.mxu0 0.0
      %7008 = vmatprep.subr.mxu0 0.0
      %7009 = vmatpush1.msra.mxu0 0.0
      %7010 = vmatprep.subr.mxu0 0.0
      %7011 = vmatpush1.msra.mxu0 0.0
      %7012 = vmatprep.subr.mxu0 0.0
      %7013 = vmatpush1.msra.mxu0 0.0
      %7014 = vmatprep.subr.mxu0 0.0
      %7015 = vmatpush1.msra.mxu0 0.0
      %7016 = vmatprep.subr.mxu0 0.0
      %7017 = vmatpush1.msra.mxu0 0.0
      %7018 = vmatprep.subr.mxu0 0.0
      %7019 = vmatpush1.msra.mxu0 0.0
      %7020 = vmatprep.subr.mxu0 0.0
      %7021 = vmatpush1.msra.mxu0 0.0
      %7022 = vmatprep.subr.mxu0 0.0
      %7023 = vmatpush1.msra.mxu0 0.0
      %7024 = vmatprep.subr.mxu0 0.0
      %7025 = vmatpush1.msra.mxu0 0.0
      %7026 = vmatprep.subr.mxu0 0.0
      %7027 = vmatpush1.msra.mxu0 0.0
      %7028 = vmatprep.subr.mxu0 0.0
      %7029 = vmatpush1.msra.mxu0 0.0
      %7030 = vmatprep.mubr.f32.mxu0 0.0
      %7031 = vmatmul.mubr.f32.gmra.mrb[0].mxu0 %v6964
      %v7032 = vpop.f32.mrb[0].mxu0
      %v7033 = vadd.f32 0.0, %v7032
      %v7034 = vpop.f32.mrb[0].mxu0
      %7035 = vdwg.mxu0
      %v7037 = vsel %vm6962, %v6935, 0
      %7039 = vmatprep.subr.mxu0 0.0
      %7040 = vmatpush1.msra.mxu0 %v6936
      %7041 = vmatprep.subr.mxu0 0.0
      %7042 = vmatpush1.msra.mxu0 %v6937
      %7043 = vmatprep.subr.mxu0 0.0
      %7044 = vmatpush1.msra.mxu0 %v6938
      %7045 = vmatprep.subr.mxu0 0.0
      %7046 = vmatpush1.msra.mxu0 %v6939
      %7047 = vmatprep.subr.mxu0 0.0
      %7048 = vmatpush1.msra.mxu0 %v6940
      %7049 = vmatprep.subr.mxu0 0.0
      %7050 = vmatpush1.msra.mxu0 %v6941
      %7051 = vmatprep.subr.mxu0 0.0
      %7052 = vmatpush1.msra.mxu0 %v6942
      %7053 = vmatprep.subr.mxu0 0.0
      %7054 = vmatpush1.msra.mxu0 %v6943
      %7055 = vmatprep.subr.mxu0 0.0
      %7056 = vmatpush1.msra.mxu0 %v6944
      %7057 = vmatprep.subr.mxu0 0.0
      %7058 = vmatpush1.msra.mxu0 %v6945
      %7059 = vmatprep.subr.mxu0 0.0
      %7060 = vmatpush1.msra.mxu0 %v6946
      %7061 = vmatprep.subr.mxu0 0.0
      %7062 = vmatpush1.msra.mxu0 %v6947
      %7063 = vmatprep.subr.mxu0 0.0
      %7064 = vmatpush1.msra.mxu0 0.0
      %7065 = vmatprep.subr.mxu0 0.0
      %7066 = vmatpush1.msra.mxu0 0.0
      %7067 = vmatprep.subr.mxu0 0.0
      %7068 = vmatpush1.msra.mxu0 0.0
      %7069 = vmatprep.subr.mxu0 0.0
      %7070 = vmatpush1.msra.mxu0 0.0
      %7071 = vmatprep.subr.mxu0 0.0
      %7072 = vmatpush1.msra.mxu0 0.0
      %7073 = vmatprep.subr.mxu0 0.0
      %7074 = vmatpush1.msra.mxu0 0.0
      %7075 = vmatprep.subr.mxu0 0.0
      %7076 = vmatpush1.msra.mxu0 0.0
      %7077 = vmatprep.subr.mxu0 0.0
      %7078 = vmatpush1.msra.mxu0 0.0
      %7079 = vmatprep.subr.mxu0 0.0
      %7080 = vmatpush1.msra.mxu0 0.0
      %7081 = vmatprep.subr.mxu0 0.0
      %7082 = vmatpush1.msra.mxu0 0.0
      %7083 = vmatprep.subr.mxu0 0.0
      %7084 = vmatpush1.msra.mxu0 0.0
      %7085 = vmatprep.subr.mxu0 0.0
      %7086 = vmatpush1.msra.mxu0 0.0
      %7087 = vmatprep.subr.mxu0 0.0
      %7088 = vmatpush1.msra.mxu0 0.0
      %7089 = vmatprep.subr.mxu0 0.0
      %7090 = vmatpush1.msra.mxu0 0.0
      %7091 = vmatprep.subr.mxu0 0.0
      %7092 = vmatpush1.msra.mxu0 0.0
      %7093 = vmatprep.subr.mxu0 0.0
      %7094 = vmatpush1.msra.mxu0 0.0
      %7095 = vmatprep.subr.mxu0 0.0
      %7096 = vmatpush1.msra.mxu0 0.0
      %7097 = vmatprep.subr.mxu0 0.0
      %7098 = vmatpush1.msra.mxu0 0.0
      %7099 = vmatprep.subr.mxu0 0.0
      %7100 = vmatpush1.msra.mxu0 0.0
      %7101 = vmatprep.subr.mxu0 0.0
      %7102 = vmatpush1.msra.mxu0 0.0
      %7103 = vmatprep.mubr.f32.mxu0 0.0
      %7104 = vmatmul.mubr.f32.gmra.mrb[0].mxu0 %v7037
      %v7105 = vpop.f32.mrb[0].mxu0
      %v7106 = vadd.f32 %v7033, %v7105
      %v7107 = vpop.f32.mrb[0].mxu0
      %7108 = vdwg.mxu0
      %v7109 = vld [vmem:[#allocation5 + $0x2] sm:$0xf]
      %s7110 = scalar_lea.vmem %s4, 192
      %v7111 = vld [vmem:[%s7110] sm:$0xff]
      %v7112 = vld [vmem:[%s7110 + $0x8] sm:$0xff]
      %v7113 = vld [vmem:[%s7110 + $0x10] sm:$0xff]
      %v7114 = vld [vmem:[%s7110 + $0x18] sm:$0xff]
      %v7115 = vld [vmem:[%s7110 + $0x20] sm:$0xff]
      %v7116 = vld [vmem:[%s7110 + $0x28] sm:$0xff]
      %v7117 = vld [vmem:[%s7110 + $0x30] sm:$0xff]
      %v7118 = vld [vmem:[%s7110 + $0x38] sm:$0xff]
      %v7119 = vld [vmem:[%s7110 + $0x40] sm:$0xff]
      %v7120 = vld [vmem:[%s7110 + $0x48] sm:$0xff]
      %v7121 = vld [vmem:[%s7110 + $0x50] sm:$0xff]
      %v7122 = vld [vmem:[%s7110 + $0x58] sm:$0xff]
      %v7124 = vsel %vm6962, %v7109, 0
      %7126 = vmatprep.subr.mxu0 0.0
      %7127 = vmatpush1.msra.mxu0 %v7111
      %7128 = vmatprep.subr.mxu0 0.0
      %7129 = vmatpush1.msra.mxu0 %v7112
      %7130 = vmatprep.subr.mxu0 0.0
      %7131 = vmatpush1.msra.mxu0 %v7113
      %7132 = vmatprep.subr.mxu0 0.0
      %7133 = vmatpush1.msra.mxu0 %v7114
      %7134 = vmatprep.subr.mxu0 0.0
      %7135 = vmatpush1.msra.mxu0 %v7115
      %7136 = vmatprep.subr.mxu0 0.0
      %7137 = vmatpush1.msra.mxu0 %v7116
      %7138 = vmatprep.subr.mxu0 0.0
      %7139 = vmatpush1.msra.mxu0 %v7117
      %7140 = vmatprep.subr.mxu0 0.0
      %7141 = vmatpush1.msra.mxu0 %v7118
      %7142 = vmatprep.subr.mxu0 0.0
      %7143 = vmatpush1.msra.mxu0 %v7119
      %7144 = vmatprep.subr.mxu0 0.0
      %7145 = vmatpush1.msra.mxu0 %v7120
      %7146 = vmatprep.subr.mxu0 0.0
      %7147 = vmatpush1.msra.mxu0 %v7121
      %7148 = vmatprep.subr.mxu0 0.0
      %7149 = vmatpush1.msra.mxu0 %v7122
      %7150 = vmatprep.subr.mxu0 0.0
      %7151 = vmatpush1.msra.mxu0 0.0
      %7152 = vmatprep.subr.mxu0 0.0
      %7153 = vmatpush1.msra.mxu0 0.0
      %7154 = vmatprep.subr.mxu0 0.0
      %7155 = vmatpush1.msra.mxu0 0.0
      %7156 = vmatprep.subr.mxu0 0.0
      %7157 = vmatpush1.msra.mxu0 0.0
      %7158 = vmatprep.subr.mxu0 0.0
      %7159 = vmatpush1.msra.mxu0 0.0
      %7160 = vmatprep.subr.mxu0 0.0
      %7161 = vmatpush1.msra.mxu0 0.0
      %7162 = vmatprep.subr.mxu0 0.0
      %7163 = vmatpush1.msra.mxu0 0.0
      %7164 = vmatprep.subr.mxu0 0.0
      %7165 = vmatpush1.msra.mxu0 0.0
      %7166 = vmatprep.subr.mxu0 0.0
      %7167 = vmatpush1.msra.mxu0 0.0
      %7168 = vmatprep.subr.mxu0 0.0
      %7169 = vmatpush1.msra.mxu0 0.0
      %7170 = vmatprep.subr.mxu0 0.0
      %7171 = vmatpush1.msra.mxu0 0.0
      %7172 = vmatprep.subr.mxu0 0.0
      %7173 = vmatpush1.msra.mxu0 0.0
      %7174 = vmatprep.subr.mxu0 0.0
      %7175 = vmatpush1.msra.mxu0 0.0
      %7176 = vmatprep.subr.mxu0 0.0
      %7177 = vmatpush1.msra.mxu0 0.0
      %7178 = vmatprep.subr.mxu0 0.0
      %7179 = vmatpush1.msra.mxu0 0.0
      %7180 = vmatprep.subr.mxu0 0.0
      %7181 = vmatpush1.msra.mxu0 0.0
      %7182 = vmatprep.subr.mxu0 0.0
      %7183 = vmatpush1.msra.mxu0 0.0
      %7184 = vmatprep.subr.mxu0 0.0
      %7185 = vmatpush1.msra.mxu0 0.0
      %7186 = vmatprep.subr.mxu0 0.0
      %7187 = vmatpush1.msra.mxu0 0.0
      %7188 = vmatprep.subr.mxu0 0.0
      %7189 = vmatpush1.msra.mxu0 0.0
      %7190 = vmatprep.mubr.f32.mxu0 0.0
      %7191 = vmatmul.mubr.f32.gmra.mrb[0].mxu0 %v7124
      %v7192 = vpop.f32.mrb[0].mxu0
      %v7193 = vadd.f32 0.0, %v7192
      %v7194 = vpop.f32.mrb[0].mxu0
      %7195 = vdwg.mxu0
      %v7196 = vadd.f32 %v7106, %v7193
      %vm7197 = vcmp.gt.f32.partialorder %v7196, 0.0
      %vm7198 = vcmp.lt.f32.partialorder %v7196, 0.0
      %v7199 = vsel %vm7198, -1.0, 0.0
      %v7200 = vsel %vm7197, 1.0, %v7199
      %7201 = vst [vmem:[#allocation6] sm:$0xf] %v7200
      %v7202 = vld [vmem:[#allocation6] sm:$0x3]
      %v7203 = vld [vmem:[%s5] sm:$0xff]
      %v7204 = vld [vmem:[%s5 + $0x8] sm:$0xff]
      %v7205 = vld [vmem:[%s5 + $0x10] sm:$0xff]
      %v7206 = vld [vmem:[%s5 + $0x18] sm:$0xff]
      %v7207 = vld [vmem:[%s5 + $0x20] sm:$0xff]
      %v7208 = vld [vmem:[%s5 + $0x28] sm:$0xff]
      %v7209 = vld [vmem:[%s5 + $0x30] sm:$0xff]
      %v7210 = vld [vmem:[%s5 + $0x38] sm:$0xff]
      %v7211 = vld [vmem:[%s5 + $0x40] sm:$0xff]
      %v7212 = vld [vmem:[%s5 + $0x48] sm:$0xff]
      %v7213 = vld [vmem:[%s5 + $0x50] sm:$0xff]
      %v7214 = vld [vmem:[%s5 + $0x58] sm:$0xff]
      %v7215 = vld [vmem:[%s5 + $0x60] sm:$0xff]
      %v7216 = vld [vmem:[%s5 + $0x68] sm:$0xff]
      %v7217 = vld [vmem:[%s5 + $0x70] sm:$0xff]
      %v7218 = vld [vmem:[%s5 + $0x78] sm:$0xff]
      %v7219 = vld [vmem:[#allocation6 + $0x1] sm:$0x3]
      %s7220 = scalar_lea.vmem %s5, 128
      %v7221 = vld [vmem:[%s7220] sm:$0xff]
      %v7222 = vld [vmem:[%s7220 + $0x8] sm:$0xff]
      %v7223 = vld [vmem:[%s7220 + $0x10] sm:$0xff]
      %v7224 = vld [vmem:[%s7220 + $0x18] sm:$0xff]
      %v7225 = vld [vmem:[%s7220 + $0x20] sm:$0xff]
      %v7226 = vld [vmem:[%s7220 + $0x28] sm:$0xff]
      %v7227 = vld [vmem:[%s7220 + $0x30] sm:$0xff]
      %v7228 = vld [vmem:[%s7220 + $0x38] sm:$0xff]
      %v7229 = vld [vmem:[%s7220 + $0x40] sm:$0xff]
      %v7230 = vld [vmem:[%s7220 + $0x48] sm:$0xff]
      %v7231 = vld [vmem:[%s7220 + $0x50] sm:$0xff]
      %v7232 = vld [vmem:[%s7220 + $0x58] sm:$0xff]
      %v7233 = vld [vmem:[%s7220 + $0x60] sm:$0xff]
      %v7234 = vld [vmem:[%s7220 + $0x68] sm:$0xff]
      %v7235 = vld [vmem:[%s7220 + $0x70] sm:$0xff]
      %v7236 = vld [vmem:[%s7220 + $0x78] sm:$0xff]
      %7237 = vmatprep.subr.mxu0 0.0
      %7238 = vmatpush1.msra.mxu0 %v7221
      %7239 = vmatprep.subr.mxu0 0.0
      %7240 = vmatpush1.msra.mxu0 %v7222
      %7241 = vmatprep.subr.mxu0 0.0
      %7242 = vmatpush1.msra.mxu0 %v7223
      %7243 = vmatprep.subr.mxu0 0.0
      %7244 = vmatpush1.msra.mxu0 %v7224
      %7245 = vmatprep.subr.mxu0 0.0
      %7246 = vmatpush1.msra.mxu0 %v7225
      %7247 = vmatprep.subr.mxu0 0.0
      %7248 = vmatpush1.msra.mxu0 %v7226
      %7249 = vmatprep.subr.mxu0 0.0
      %7250 = vmatpush1.msra.mxu0 %v7227
      %7251 = vmatprep.subr.mxu0 0.0
      %7252 = vmatpush1.msra.mxu0 %v7228
      %7253 = vmatprep.subr.mxu0 0.0
      %7254 = vmatpush1.msra.mxu0 %v7229
      %7255 = vmatprep.subr.mxu0 0.0
      %7256 = vmatpush1.msra.mxu0 %v7230
      %7257 = vmatprep.subr.mxu0 0.0
      %7258 = vmatpush1.msra.mxu0 %v7231
      %7259 = vmatprep.subr.mxu0 0.0
      %7260 = vmatpush1.msra.mxu0 %v7232
      %7261 = vmatprep.subr.mxu0 0.0
      %7262 = vmatpush1.msra.mxu0 %v7233
      %7263 = vmatprep.subr.mxu0 0.0
      %7264 = vmatpush1.msra.mxu0 %v7234
      %7265 = vmatprep.subr.mxu0 0.0
      %7266 = vmatpush1.msra.mxu0 %v7235
      %7267 = vmatprep.subr.mxu0 0.0
      %7268 = vmatpush1.msra.mxu0 %v7236
      %7269 = vmatprep.subr.mxu0 0.0
      %7270 = vmatpush1.msra.mxu0 0.0
      %7271 = vmatprep.subr.mxu0 0.0
      %7272 = vmatpush1.msra.mxu0 0.0
      %7273 = vmatprep.subr.mxu0 0.0
      %7274 = vmatpush1.msra.mxu0 0.0
      %7275 = vmatprep.subr.mxu0 0.0
      %7276 = vmatpush1.msra.mxu0 0.0
      %7277 = vmatprep.subr.mxu0 0.0
      %7278 = vmatpush1.msra.mxu0 0.0
      %7279 = vmatprep.subr.mxu0 0.0
      %7280 = vmatpush1.msra.mxu0 0.0
      %7281 = vmatprep.subr.mxu0 0.0
      %7282 = vmatpush1.msra.mxu0 0.0
      %7283 = vmatprep.subr.mxu0 0.0
      %7284 = vmatpush1.msra.mxu0 0.0
      %7285 = vmatprep.subr.mxu0 0.0
      %7286 = vmatpush1.msra.mxu0 0.0
      %7287 = vmatprep.subr.mxu0 0.0
      %7288 = vmatpush1.msra.mxu0 0.0
      %7289 = vmatprep.subr.mxu0 0.0
      %7290 = vmatpush1.msra.mxu0 0.0
      %7291 = vmatprep.subr.mxu0 0.0
      %7292 = vmatpush1.msra.mxu0 0.0
      %7293 = vmatprep.subr.mxu0 0.0
      %7294 = vmatpush1.msra.mxu0 0.0
      %7295 = vmatprep.subr.mxu0 0.0
      %7296 = vmatpush1.msra.mxu0 0.0
      %7297 = vmatprep.subr.mxu0 0.0
      %7298 = vmatpush1.msra.mxu0 0.0
      %7299 = vmatprep.subr.mxu0 0.0
      %7300 = vmatpush1.msra.mxu0 0.0
      %7301 = vmatprep.mubr.f32.mxu0 0.0
      %7302 = vmatmul.mubr.f32.gmra.mrb[0].mxu0 %v7219
      %v7303 = vpop.f32.mrb[0].mxu0
      %v7304 = vadd.f32 0.0, %v7303
      %v7305 = vpop.f32.mrb[0].mxu0
      %7306 = vdwg.mxu0
      %7307 = vmatprep.subr.mxu0 0.0
      %7308 = vmatpush1.msra.mxu0 %v7203
      %7309 = vmatprep.subr.mxu0 0.0
      %7310 = vmatpush1.msra.mxu0 %v7204
      %7311 = vmatprep.subr.mxu0 0.0
      %7312 = vmatpush1.msra.mxu0 %v7205
      %7313 = vmatprep.subr.mxu0 0.0
      %7314 = vmatpush1.msra.mxu0 %v7206
      %7315 = vmatprep.subr.mxu0 0.0
      %7316 = vmatpush1.msra.mxu0 %v7207
      %7317 = vmatprep.subr.mxu0 0.0
      %7318 = vmatpush1.msra.mxu0 %v7208
      %7319 = vmatprep.subr.mxu0 0.0
      %7320 = vmatpush1.msra.mxu0 %v7209
      %7321 = vmatprep.subr.mxu0 0.0
      %7322 = vmatpush1.msra.mxu0 %v7210
      %7323 = vmatprep.subr.mxu0 0.0
      %7324 = vmatpush1.msra.mxu0 %v7211
      %7325 = vmatprep.subr.mxu0 0.0
      %7326 = vmatpush1.msra.mxu0 %v7212
      %7327 = vmatprep.subr.mxu0 0.0
      %7328 = vmatpush1.msra.mxu0 %v7213
      %7329 = vmatprep.subr.mxu0 0.0
      %7330 = vmatpush1.msra.mxu0 %v7214
      %7331 = vmatprep.subr.mxu0 0.0
      %7332 = vmatpush1.msra.mxu0 %v7215
      %7333 = vmatprep.subr.mxu0 0.0
      %7334 = vmatpush1.msra.mxu0 %v7216
      %7335 = vmatprep.subr.mxu0 0.0
      %7336 = vmatpush1.msra.mxu0 %v7217
      %7337 = vmatprep.subr.mxu0 0.0
      %7338 = vmatpush1.msra.mxu0 %v7218
      %7339 = vmatprep.subr.mxu0 0.0
      %7340 = vmatpush1.msra.mxu0 0.0
      %7341 = vmatprep.subr.mxu0 0.0
      %7342 = vmatpush1.msra.mxu0 0.0
      %7343 = vmatprep.subr.mxu0 0.0
      %7344 = vmatpush1.msra.mxu0 0.0
      %7345 = vmatprep.subr.mxu0 0.0
      %7346 = vmatpush1.msra.mxu0 0.0
      %7347 = vmatprep.subr.mxu0 0.0
      %7348 = vmatpush1.msra.mxu0 0.0
      %7349 = vmatprep.subr.mxu0 0.0
      %7350 = vmatpush1.msra.mxu0 0.0
      %7351 = vmatprep.subr.mxu0 0.0
      %7352 = vmatpush1.msra.mxu0 0.0
      %7353 = vmatprep.subr.mxu0 0.0
      %7354 = vmatpush1.msra.mxu0 0.0
      %7355 = vmatprep.subr.mxu0 0.0
      %7356 = vmatpush1.msra.mxu0 0.0
      %7357 = vmatprep.subr.mxu0 0.0
      %7358 = vmatpush1.msra.mxu0 0.0
      %7359 = vmatprep.subr.mxu0 0.0
      %7360 = vmatpush1.msra.mxu0 0.0
      %7361 = vmatprep.subr.mxu0 0.0
      %7362 = vmatpush1.msra.mxu0 0.0
      %7363 = vmatprep.subr.mxu0 0.0
      %7364 = vmatpush1.msra.mxu0 0.0
      %7365 = vmatprep.subr.mxu0 0.0
      %7366 = vmatpush1.msra.mxu0 0.0
      %7367 = vmatprep.subr.mxu0 0.0
      %7368 = vmatpush1.msra.mxu0 0.0
      %7369 = vmatprep.subr.mxu0 0.0
      %7370 = vmatpush1.msra.mxu0 0.0
      %7371 = vmatprep.mubr.f32.mxu0 0.0
      %7372 = vmatmul.mubr.f32.gmra.mrb[0].mxu0 %v7202
      %v7373 = vpop.f32.mrb[0].mxu0
      %v7374 = vadd.f32 %v7304, %v7373
      %v7375 = vpop.f32.mrb[0].mxu0
      %7376 = vdwg.mxu0
      %v7377 = vld [vmem:[#allocation6 + $0x2] sm:$0x3]
      %s7378 = scalar_lea.vmem %s5, 256
      %v7379 = vld [vmem:[%s7378] sm:$0xff]
      %v7380 = vld [vmem:[%s7378 + $0x8] sm:$0xff]
      %v7381 = vld [vmem:[%s7378 + $0x10] sm:$0xff]
      %v7382 = vld [vmem:[%s7378 + $0x18] sm:$0xff]
      %v7383 = vld [vmem:[%s7378 + $0x20] sm:$0xff]
      %v7384 = vld [vmem:[%s7378 + $0x28] sm:$0xff]
      %v7385 = vld [vmem:[%s7378 + $0x30] sm:$0xff]
      %v7386 = vld [vmem:[%s7378 + $0x38] sm:$0xff]
      %v7387 = vld [vmem:[%s7378 + $0x40] sm:$0xff]
      %v7388 = vld [vmem:[%s7378 + $0x48] sm:$0xff]
      %v7389 = vld [vmem:[%s7378 + $0x50] sm:$0xff]
      %v7390 = vld [vmem:[%s7378 + $0x58] sm:$0xff]
      %v7391 = vld [vmem:[%s7378 + $0x60] sm:$0xff]
      %v7392 = vld [vmem:[%s7378 + $0x68] sm:$0xff]
      %v7393 = vld [vmem:[%s7378 + $0x70] sm:$0xff]
      %v7394 = vld [vmem:[%s7378 + $0x78] sm:$0xff]
      %7395 = vmatprep.subr.mxu0 0.0
      %7396 = vmatpush1.msra.mxu0 %v7379
      %7397 = vmatprep.subr.mxu0 0.0
      %7398 = vmatpush1.msra.mxu0 %v7380
      %7399 = vmatprep.subr.mxu0 0.0
      %7400 = vmatpush1.msra.mxu0 %v7381
      %7401 = vmatprep.subr.mxu0 0.0
      %7402 = vmatpush1.msra.mxu0 %v7382
      %7403 = vmatprep.subr.mxu0 0.0
      %7404 = vmatpush1.msra.mxu0 %v7383
      %7405 = vmatprep.subr.mxu0 0.0
      %7406 = vmatpush1.msra.mxu0 %v7384
      %7407 = vmatprep.subr.mxu0 0.0
      %7408 = vmatpush1.msra.mxu0 %v7385
      %7409 = vmatprep.subr.mxu0 0.0
      %7410 = vmatpush1.msra.mxu0 %v7386
      %7411 = vmatprep.subr.mxu0 0.0
      %7412 = vmatpush1.msra.mxu0 %v7387
      %7413 = vmatprep.subr.mxu0 0.0
      %7414 = vmatpush1.msra.mxu0 %v7388
      %7415 = vmatprep.subr.mxu0 0.0
      %7416 = vmatpush1.msra.mxu0 %v7389
      %7417 = vmatprep.subr.mxu0 0.0
      %7418 = vmatpush1.msra.mxu0 %v7390
      %7419 = vmatprep.subr.mxu0 0.0
      %7420 = vmatpush1.msra.mxu0 %v7391
      %7421 = vmatprep.subr.mxu0 0.0
      %7422 = vmatpush1.msra.mxu0 %v7392
      %7423 = vmatprep.subr.mxu0 0.0
      %7424 = vmatpush1.msra.mxu0 %v7393
      %7425 = vmatprep.subr.mxu0 0.0
      %7426 = vmatpush1.msra.mxu0 %v7394
      %7427 = vmatprep.subr.mxu0 0.0
      %7428 = vmatpush1.msra.mxu0 0.0
      %7429 = vmatprep.subr.mxu0 0.0
      %7430 = vmatpush1.msra.mxu0 0.0
      %7431 = vmatprep.subr.mxu0 0.0
      %7432 = vmatpush1.msra.mxu0 0.0
      %7433 = vmatprep.subr.mxu0 0.0
      %7434 = vmatpush1.msra.mxu0 0.0
      %7435 = vmatprep.subr.mxu0 0.0
      %7436 = vmatpush1.msra.mxu0 0.0
      %7437 = vmatprep.subr.mxu0 0.0
      %7438 = vmatpush1.msra.mxu0 0.0
      %7439 = vmatprep.subr.mxu0 0.0
      %7440 = vmatpush1.msra.mxu0 0.0
      %7441 = vmatprep.subr.mxu0 0.0
      %7442 = vmatpush1.msra.mxu0 0.0
      %7443 = vmatprep.subr.mxu0 0.0
      %7444 = vmatpush1.msra.mxu0 0.0
      %7445 = vmatprep.subr.mxu0 0.0
      %7446 = vmatpush1.msra.mxu0 0.0
      %7447 = vmatprep.subr.mxu0 0.0
      %7448 = vmatpush1.msra.mxu0 0.0
      %7449 = vmatprep.subr.mxu0 0.0
      %7450 = vmatpush1.msra.mxu0 0.0
      %7451 = vmatprep.subr.mxu0 0.0
      %7452 = vmatpush1.msra.mxu0 0.0
      %7453 = vmatprep.subr.mxu0 0.0
      %7454 = vmatpush1.msra.mxu0 0.0
      %7455 = vmatprep.subr.mxu0 0.0
      %7456 = vmatpush1.msra.mxu0 0.0
      %7457 = vmatprep.subr.mxu0 0.0
      %7458 = vmatpush1.msra.mxu0 0.0
      %7459 = vmatprep.mubr.f32.mxu0 0.0
      %7460 = vmatmul.mubr.f32.gmra.mrb[0].mxu0 %v7377
      %v7461 = vpop.f32.mrb[0].mxu0
      %v7462 = vadd.f32 0.0, %v7461
      %v7463 = vpop.f32.mrb[0].mxu0
      %7464 = vdwg.mxu0
      %v7465 = vadd.f32 %v7374, %v7462
      %v7466 = vmax.f32 %v7465, -1.0
      %v7467 = vmin.f32 %v7466, 1.0
      %vm7468 = vcmask 25600
      %7469 = vst.msk [vmem:[%s303] sm:$0x3] %vm7468, %v7467
      %p7470 = scmp.lt.s32.totalorder %s19, 1
      %s7471 = scalar_select %p7470, %s19, 1
      %s7472 = smul.addr %s7471, 2
      %s7473 = scalar_lea.vmem %s8, %s7472
      // Predicated region
      $region53: #{mcnet_forward.1} parent=51 // pred_check
        %p7474 = pneg %p210
      $region54: #{mcnet_forward.1} parent=51 // pred_check_branch
        %7476 = sbr.rel (%p7474) target = $region56
      $region55: #{mcnet_forward.1} parent=51 // pred_region
        _
      $region56: #{mcnet_forward.1} parent=51 // pred_fallthru
        _
    $region52: #{mcnet_forward.1} parent=5 // pred_fallthru
      _
    %p7477 = scmp.le.s32.totalorder 2, %s14
    // Predicated region
    $region57: #{mcnet_forward.1} parent=5 // pred_check
      %p7478 = pneg %p7477
    $region58: #{mcnet_forward.1} parent=5 // pred_check_branch
      %7480 = sbr.rel (%p7478) target = $region60
    $region59: #{mcnet_forward.1} parent=5 // pred_region
      %s7481 = ssub.s32 %s14, 2
      // Predicated region
      $region61: #{mcnet_forward.1} parent=59 // pred_check
        %p7482 = pneg %p216
      $region62: #{mcnet_forward.1} parent=59 // pred_check_branch
        %7484 = sbr.rel (%p7482) target = $region64
      $region63: #{mcnet_forward.1} parent=59 // pred_region
        %p7485 = scmp.lt.s32.totalorder %s20, 1
        %s7486 = scalar_select %p7485, %s20, 1
        %s7487 = smul.addr %s7486, 2
        %s7488 = scalar_lea.vmem %s8, %s7487
      $region64: #{mcnet_forward.1} parent=59 // pred_fallthru
        _
    $region60: #{mcnet_forward.1} parent=5 // pred_fallthru
      _
  $region6: #{mcnet_forward.1} parent=0 // loop_footer
    %s18 = sadd.s32 1, %s14
  $region7: #{mcnet_forward.1} parent=0 // loop_footer_branch
    %13 = sbr.rel target = $region3
  $region8: #{mcnet_forward.1} parent=0 // loop_exit
    _

</llo_original>
